<compile_context>
chip_gen: v6e
topology: v6e:2x2x1
jax: 0.10.0
libtpu: 0.0.40
codegen_flags: <defaults>
</compile_context>

<pallas_src>
import jax
import jax.numpy as jnp
from jax.experimental import pallas as pl
from jax.experimental.pallas import tpu as pltpu


def _round_up(a, b):
    return ((a + b - 1) // b) * b


def _make_kernel(kernel_sizes, num_words, tap_w, tn, gather_in_kernel, vocab_pad):
    kernel_sizes = tuple(int(k) for k in kernel_sizes)
    k_max = max(kernel_sizes)
    rows = tn * num_words

    def _body(emb2d, wall_ref, tmask_ref, cbias_ref, fcw_ref, fcb_ref, um_ref, out_ref):
        # Fused conv as shifted matmuls: tap-major weights mean every per-tap
        # slice is a whole 128-lane slab; the time shift is a sublane rotation.
        acc = jnp.dot(emb2d, wall_ref[:, 0:tap_w],
                      preferred_element_type=jnp.float32)              # (rows, tap_w) f32
        for k in range(1, k_max):                                      # static unroll
            p_k = jnp.dot(emb2d, wall_ref[:, k * tap_w:(k + 1) * tap_w],
                          preferred_element_type=jnp.float32)
            # roll by rows-k  <=>  acc[r] += p_k[r + k]; rows that cross an
            # utterance boundary (or wrap) are time positions >= W-k, which the
            # validity mask below removes from the max.
            acc = acc + pltpu.roll(p_k, rows - k, 0)

        acc = acc.reshape(tn, num_words, tap_w) + tmask_ref[...]       # mask invalid t
        pooled = jnp.max(acc, axis=1)                                  # (tn, tap_w)

        # Conv bias + ReLU after the pool (they commute); dropout = identity.
        hidden = jnp.maximum(pooled + cbias_ref[...], 0.0)             # f32

        # FC on the bf16 MXU path (f32 accumulation), padded to 128 output lanes.
        feats = jnp.dot(hidden.astype(fcw_ref.dtype), fcw_ref[...],
                        preferred_element_type=jnp.float32) + fcb_ref[...]
        feats = jnp.maximum(feats, 0.0) * um_ref[...]                  # utterance mask
        out_ref[...] = feats.astype(out_ref.dtype)

    if gather_in_kernel:
        def kernel(ids_ref, tab_ref, wall_ref, tmask_ref, cbias_ref,
                   fcw_ref, fcb_ref, um_ref, out_ref):
            # Embedding gather on the MXU: one-hot(ids) @ table (table resident
            # in VMEM).  One-hot rows pick exact bf16 table entries, so the
            # f32->bf16 cast below is exact.
            ids = ids_ref[...]                                          # (tn, W) i32
            iota = jax.lax.broadcasted_iota(
                jnp.int32, (tn, num_words, vocab_pad), 2)
            onehot = jnp.where(ids[:, :, None] == iota, 1.0, 0.0
                               ).astype(tab_ref.dtype)                  # (tn, W, Vp) bf16
            emb = jnp.dot(onehot.reshape(rows, vocab_pad), tab_ref[...],
                          preferred_element_type=jnp.float32)           # (rows, Dp) f32
            _body(emb.astype(wall_ref.dtype), wall_ref, tmask_ref, cbias_ref,
                  fcw_ref, fcb_ref, um_ref, out_ref)
        return kernel

    def kernel(emb_ref, wall_ref, tmask_ref, cbias_ref, fcw_ref, fcb_ref,
               um_ref, out_ref):
        emb = emb_ref[...]                                              # (tn, W, D) bf16
        _body(emb.reshape(rows, emb.shape[-1]), wall_ref, tmask_ref, cbias_ref,
              fcw_ref, fcb_ref, um_ref, out_ref)
    return kernel


def cnn_feature_extractor_forward(x, umask, params, kernel_sizes, *,
                                  tn=256, compute_dtype=jnp.bfloat16,
                                  in_kernel_gather_max_vocab=512):
    """x: (num_utt, batch, num_words) int ids; umask: (batch, num_utt).
    Returns (batch, num_utt, output_size) float32, matching the PyTorch module
    (eval mode: dropout = identity)."""
    kernel_sizes = tuple(int(k) for k in kernel_sizes)
    num_utt, batch, num_words = x.shape
    k_max = max(kernel_sizes)
    assert num_words >= k_max, "need num_words >= max kernel size"

    n_rows = num_utt * batch
    emb_tab = params["embedding"]
    vocab, emb_dim = emb_tab.shape
    filters = params["conv_w"][0].shape[0]
    n_branch = len(kernel_sizes)
    out_dim = params["fc_w"].shape[0]

    tap_w = _round_up(n_branch * filters, 128)        # lane-padded per-tap block width
    o_pad = _round_up(out_dim, 128)                   # lane-dense FC output

    # Row tiling (multiple of 8).  NOTE(v7x): pick tn so n_pad // tn is even so
    # both TensorCores get work on the "parallel" grid axis.
    tn = max(8, min(_round_up(tn, 8), _round_up(n_rows, 8)))
    n_pad = _round_up(n_rows, tn)

    gather_in_kernel = vocab <= in_kernel_gather_max_vocab
    d_eff = _round_up(emb_dim, 128) if gather_in_kernel else emb_dim

    # Fused conv weight, tap-major: tap k of every branch grouped into one
    # 128-lane block; branches shorter than tap k contribute zero columns.
    blocks = []
    for k in range(k_max):
        blk = jnp.zeros((d_eff, tap_w), jnp.float32)
        for b, (w, ksz) in enumerate(zip(params["conv_w"], kernel_sizes)):
            if k < ksz:
                blk = blk.at[:emb_dim, b * filters:(b + 1) * filters].set(
                    jnp.transpose(w[:, :, k]))
        blocks.append(blk)
    w_all = jnp.concatenate(blocks, axis=1).astype(compute_dtype)  # (d_eff, k_max*tap_w)

    cbias = jnp.zeros((1, tap_w), jnp.float32)
    cbias = cbias.at[0, :n_branch * filters].set(jnp.concatenate(params["conv_b"]))

    # Additive time-validity mask: position t of branch b is valid iff t < W-K_b+1.
    valid_len = [num_words] * tap_w
    for b, ksz in enumerate(kernel_sizes):
        for c in range(filters):
            valid_len[b * filters + c] = num_words - ksz + 1
    valid_len = jnp.array(valid_len, jnp.int32)
    t_idx = jnp.arange(num_words, dtype=jnp.int32)[:, None]
    tmask = jnp.where(t_idx < valid_len[None, :], 0.0, -1e30
                      ).astype(jnp.float32)[None]                  # (1, W, tap_w)

    fc_w = jnp.zeros((tap_w, o_pad), jnp.float32)
    fc_w = fc_w.at[:n_branch * filters, :out_dim].set(jnp.transpose(params["fc_w"]))
    fc_w = fc_w.astype(compute_dtype)
    fc_b = jnp.zeros((1, o_pad), jnp.float32).at[0, :out_dim].set(params["fc_b"])

    # Utterance mask, flattened in torch's (num_utt, batch) row order.
    mask_flat = jnp.transpose(umask.astype(jnp.float32)).reshape(n_rows, 1)
    mask_flat = jnp.pad(mask_flat, ((0, n_pad - n_rows), (0, 0)))

    vocab_pad = _round_up(vocab, 128) if gather_in_kernel else 0
    kernel = _make_kernel(kernel_sizes, num_words, tap_w, tn,
                          gather_in_kernel, vocab_pad)

    common_specs = [
        pl.BlockSpec(w_all.shape, lambda i: (0, 0)),
        pl.BlockSpec(tmask.shape, lambda i: (0, 0, 0)),
        pl.BlockSpec(cbias.shape, lambda i: (0, 0)),
        pl.BlockSpec(fc_w.shape, lambda i: (0, 0)),
        pl.BlockSpec(fc_b.shape, lambda i: (0, 0)),
        pl.BlockSpec((tn, 1), lambda i: (i, 0)),
    ]
    common_args = [w_all, tmask, cbias, fc_w, fc_b, mask_flat]

    if gather_in_kernel:
        tab = jnp.zeros((vocab_pad, d_eff), jnp.float32)
        tab = tab.at[:vocab, :emb_dim].set(emb_tab).astype(compute_dtype)
        ids = x.reshape(n_rows, num_words).astype(jnp.int32)
        ids = jnp.pad(ids, ((0, n_pad - n_rows), (0, 0)))
        first_specs = [pl.BlockSpec((tn, num_words), lambda i: (i, 0)),
                       pl.BlockSpec(tab.shape, lambda i: (0, 0))]
        first_args = [ids, tab]
    else:
        # Fallback for large vocabularies: host-side gather, D left unpadded so
        # the memory-bound (N, W, D) read is not inflated.
        emb = jnp.take(emb_tab.astype(compute_dtype),
                       x.reshape(n_rows, num_words).astype(jnp.int32), axis=0)
        emb = jnp.pad(emb, ((0, n_pad - n_rows), (0, 0), (0, 0)))
        first_specs = [pl.BlockSpec((tn, num_words, emb_dim), lambda i: (i, 0, 0))]
        first_args = [emb]

    out = pl.pallas_call(
        kernel,
        out_shape=jax.ShapeDtypeStruct((n_pad, o_pad), jnp.float32),
        grid=(n_pad // tn,),
        in_specs=first_specs + common_specs,
        out_specs=pl.BlockSpec((tn, o_pad), lambda i: (i, 0)),
        compiler_params=pltpu.CompilerParams(
            dimension_semantics=("parallel",),
            vmem_limit_bytes=48 * 1024 * 1024,   # headroom for tn<=512, < v7x 64 MiB
        ),
    )(*first_args, *common_args)

    feats = out[:n_rows, :out_dim].reshape(num_utt, batch, out_dim)
    return jnp.transpose(feats, (1, 0, 2))                          # (batch, num_utt, O)


def _reference(x, umask, params, kernel_sizes, compute_dtype=jnp.bfloat16):
    """Pure-JAX mirror of the PyTorch forward (eval mode).  The embedding table,
    conv weights, fc weights and the fc input are rounded through
    `compute_dtype` so the comparison matches the kernel's bf16-input /
    f32-accumulate MXU path."""
    num_utt, batch, W = x.shape
    N = num_utt * batch
    hi = jax.lax.Precision.HIGHEST
    rnd = lambda a: a.astype(compute_dtype).astype(jnp.float32)
    emb = jnp.take(rnd(params["embedding"]),
                   x.reshape(N, W).astype(jnp.int32), axis=0)
    emb_ncw = jnp.transpose(emb, (0, 2, 1))
    pooled = []
    for w, b in zip(params["conv_w"], params["conv_b"]):
        out = jax.lax.conv_general_dilated(
            emb_ncw, rnd(w), window_strides=(1,), padding="VALID",
            dimension_numbers=("NCH", "OIH", "NCH"), precision=hi)
        out = jax.nn.relu(out + b[None, :, None])
        pooled.append(jnp.max(out, axis=2))
    concat = jnp.concatenate(pooled, axis=1)
    feats = jax.nn.relu(jnp.dot(rnd(concat), rnd(params["fc_w"]).T, precision=hi)
                        + params["fc_b"])
    feats = feats.reshape(num_utt, batch, -1)
    mask = jnp.transpose(umask.astype(jnp.float32))[:, :, None]
    return jnp.transpose(feats * mask, (1, 0, 2))


if __name__ == "__main__":
    # Small shapes consistent with the module.
    vocab_size, embedding_dim = 50, 32
    filters, kernel_sizes, output_size = 16, (3, 4, 5), 32
    num_utt, batch, num_words = 12, 8, 16       # N = 96 -> padded to 128 -> grid = 2

    key = jax.random.PRNGKey(0)
    k_emb, k_x, k_m, *k_conv = jax.random.split(key, 3 + 2 * len(kernel_sizes) + 2)

    params = {
        "embedding": jax.random.normal(k_emb, (vocab_size, embedding_dim), jnp.float32),
        "conv_w": [
            0.1 * jax.random.normal(k_conv[2 * i], (filters, embedding_dim, K), jnp.float32)
            for i, K in enumerate(kernel_sizes)
        ],
        "conv_b": [
            0.1 * jax.random.normal(k_conv[2 * i + 1], (filters,), jnp.float32)
            for i, _ in enumerate(kernel_sizes)
        ],
        "fc_w": 0.1 * jax.random.normal(
            k_conv[-2], (output_size, len(kernel_sizes) * filters), jnp.float32),
        "fc_b": 0.1 * jax.random.normal(k_conv[-1], (output_size,), jnp.float32),
    }

    x = jax.random.randint(k_x, (num_utt, batch, num_words), 0, vocab_size, jnp.int32)
    umask = (jax.random.uniform(k_m, (batch, num_utt)) > 0.3).astype(jnp.float32)

    ref = _reference(x, umask, params, kernel_sizes)

    # Primary path: in-kernel one-hot gather (table resident in VMEM).
    out = cnn_feature_extractor_forward(x, umask, params, kernel_sizes, tn=64)
    out = jax.block_until_ready(out)
    assert out.shape == (batch, num_utt, output_size)
    err = float(jnp.max(jnp.abs(out - ref)))
    assert jnp.allclose(out, ref, atol=5e-3, rtol=5e-3), f"gather path max abs err {err}"

    # Fallback path: host-side gather (exercises the large-vocab code path).
    out_fb = cnn_feature_extractor_forward(x, umask, params, kernel_sizes, tn=64,
                                           in_kernel_gather_max_vocab=0)
    out_fb = jax.block_until_ready(out_fb)
    err_fb = float(jnp.max(jnp.abs(out_fb - ref)))
    assert jnp.allclose(out_fb, ref, atol=5e-3, rtol=5e-3), f"fallback max abs err {err_fb}"

    print("KERNEL_OK")
</pallas_src>

<mosaic_0001>
module attributes {stable_mosaic.version = 11 : i64} {
  func.func @kernel(%arg0: i32, %arg1: memref<64x16xi32, #tpu.memory_space<vmem>>, %arg2: memref<128x128xbf16, #tpu.memory_space<vmem>>, %arg3: memref<128x640xbf16, #tpu.memory_space<vmem>>, %arg4: memref<1x16x128xf32, #tpu.memory_space<vmem>>, %arg5: memref<1x128xf32, #tpu.memory_space<vmem>>, %arg6: memref<128x128xbf16, #tpu.memory_space<vmem>>, %arg7: memref<1x128xf32, #tpu.memory_space<vmem>>, %arg8: memref<64x1xf32, #tpu.memory_space<vmem>>, %arg9: memref<64x128xf32, #tpu.memory_space<vmem>>) attributes {dimension_semantics = [#tpu.dimension_semantics<parallel>], iteration_bounds = array<i64: 2>, scalar_prefetch = 0 : i64, scratch_operands = 0 : i64, tpu.core_type = #tpu.core_type<tc>, window_params = [{transform_indices = @transform_0, window_bounds = array<i64: 64, 16>}, {pipeline_mode = #tpu.pipeline_mode<synchronous>, transform_indices = @transform_1, window_bounds = array<i64: 128, 128>}, {pipeline_mode = #tpu.pipeline_mode<synchronous>, transform_indices = @transform_2, window_bounds = array<i64: 128, 640>}, {pipeline_mode = #tpu.pipeline_mode<synchronous>, transform_indices = @transform_3, window_bounds = array<i64: 1, 16, 128>}, {pipeline_mode = #tpu.pipeline_mode<synchronous>, transform_indices = @transform_4, window_bounds = array<i64: 1, 128>}, {pipeline_mode = #tpu.pipeline_mode<synchronous>, transform_indices = @transform_5, window_bounds = array<i64: 128, 128>}, {pipeline_mode = #tpu.pipeline_mode<synchronous>, transform_indices = @transform_6, window_bounds = array<i64: 1, 128>}, {transform_indices = @transform_7, window_bounds = array<i64: 64, 1>}, {transform_indices = @transform_8, window_bounds = array<i64: 64, 128>}]} {
    %c0 = arith.constant 0 : index
    %c0_0 = arith.constant 0 : index
    %0 = vector.load %arg1[%c0, %c0_0] : memref<64x16xi32, #tpu.memory_space<vmem>>, vector<64x16xi32>
    %1 = tpu.iota {dimensions = array<i32: 2>} : vector<64x16x128xi32>
    %2 = vector.shape_cast %0 : vector<64x16xi32> to vector<64x16x1xi32>
    %3 = vector.broadcast %2 : vector<64x16x1xi32> to vector<64x16x128xi32>
    %4 = arith.cmpi eq, %3, %1 : vector<64x16x128xi32>
    %cst = arith.constant 1.000000e+00 : f32
    %cst_1 = arith.constant 0.000000e+00 : f32
    %5 = vector.broadcast %cst : f32 to vector<64x16x128xf32>
    %6 = vector.broadcast %cst_1 : f32 to vector<64x16x128xf32>
    %7 = arith.select %4, %5, %6 : vector<64x16x128xi1>, vector<64x16x128xf32>
    %8 = arith.truncf %7 : vector<64x16x128xf32> to vector<64x16x128xbf16>
    %9 = vector.shape_cast %8 : vector<64x16x128xbf16> to vector<1024x128xbf16>
    %c0_2 = arith.constant 0 : index
    %c0_3 = arith.constant 0 : index
    %10 = vector.load %arg2[%c0_2, %c0_3] : memref<128x128xbf16, #tpu.memory_space<vmem>>, vector<128x128xbf16>
    %cst_4 = arith.constant dense<0.000000e+00> : vector<1024x128xf32>
    %11 = tpu.matmul %9, %10, %cst_4 {dimension_numbers = #tpu.dot_dimension_numbers<[1], [0], [0], [1], [0, 0, 1, 1], [], []>} : vector<1024x128xbf16>, vector<128x128xbf16>, vector<1024x128xf32> -> vector<1024x128xf32>
    %12 = arith.truncf %11 : vector<1024x128xf32> to vector<1024x128xbf16>
    %c0_5 = arith.constant 0 : index
    %c0_6 = arith.constant 0 : index
    %13 = vector.load %arg3[%c0_5, %c0_6] : memref<128x640xbf16, #tpu.memory_space<vmem>>, vector<128x128xbf16>
    %cst_7 = arith.constant dense<0.000000e+00> : vector<1024x128xf32>
    %14 = tpu.matmul %12, %13, %cst_7 {dimension_numbers = #tpu.dot_dimension_numbers<[1], [0], [0], [1], [0, 0, 1, 1], [], []>} : vector<1024x128xbf16>, vector<128x128xbf16>, vector<1024x128xf32> -> vector<1024x128xf32>
    %c0_8 = arith.constant 0 : index
    %c128 = arith.constant 128 : index
    %15 = vector.load %arg3[%c0_8, %c128] : memref<128x640xbf16, #tpu.memory_space<vmem>>, vector<128x128xbf16>
    %cst_9 = arith.constant dense<0.000000e+00> : vector<1024x128xf32>
    %16 = tpu.matmul %12, %15, %cst_9 {dimension_numbers = #tpu.dot_dimension_numbers<[1], [0], [0], [1], [0, 0, 1, 1], [], []>} : vector<1024x128xbf16>, vector<128x128xbf16>, vector<1024x128xf32> -> vector<1024x128xf32>
    %c1023_i32 = arith.constant 1023 : i32
    %17 = tpu.dynamic_rotate %16 by %c1023_i32 dim 0 : vector<1024x128xf32>, i32 -> vector<1024x128xf32>
    %18 = arith.addf %14, %17 : vector<1024x128xf32>
    %c0_10 = arith.constant 0 : index
    %c256 = arith.constant 256 : index
    %19 = vector.load %arg3[%c0_10, %c256] : memref<128x640xbf16, #tpu.memory_space<vmem>>, vector<128x128xbf16>
    %cst_11 = arith.constant dense<0.000000e+00> : vector<1024x128xf32>
    %20 = tpu.matmul %12, %19, %cst_11 {dimension_numbers = #tpu.dot_dimension_numbers<[1], [0], [0], [1], [0, 0, 1, 1], [], []>} : vector<1024x128xbf16>, vector<128x128xbf16>, vector<1024x128xf32> -> vector<1024x128xf32>
    %c1022_i32 = arith.constant 1022 : i32
    %21 = tpu.dynamic_rotate %20 by %c1022_i32 dim 0 : vector<1024x128xf32>, i32 -> vector<1024x128xf32>
    %22 = arith.addf %18, %21 : vector<1024x128xf32>
    %c0_12 = arith.constant 0 : index
    %c384 = arith.constant 384 : index
    %23 = vector.load %arg3[%c0_12, %c384] : memref<128x640xbf16, #tpu.memory_space<vmem>>, vector<128x128xbf16>
    %cst_13 = arith.constant dense<0.000000e+00> : vector<1024x128xf32>
    %24 = tpu.matmul %12, %23, %cst_13 {dimension_numbers = #tpu.dot_dimension_numbers<[1], [0], [0], [1], [0, 0, 1, 1], [], []>} : vector<1024x128xbf16>, vector<128x128xbf16>, vector<1024x128xf32> -> vector<1024x128xf32>
    %c1021_i32 = arith.constant 1021 : i32
    %25 = tpu.dynamic_rotate %24 by %c1021_i32 dim 0 : vector<1024x128xf32>, i32 -> vector<1024x128xf32>
    %26 = arith.addf %22, %25 : vector<1024x128xf32>
    %c0_14 = arith.constant 0 : index
    %c512 = arith.constant 512 : index
    %27 = vector.load %arg3[%c0_14, %c512] : memref<128x640xbf16, #tpu.memory_space<vmem>>, vector<128x128xbf16>
    %cst_15 = arith.constant dense<0.000000e+00> : vector<1024x128xf32>
    %28 = tpu.matmul %12, %27, %cst_15 {dimension_numbers = #tpu.dot_dimension_numbers<[1], [0], [0], [1], [0, 0, 1, 1], [], []>} : vector<1024x128xbf16>, vector<128x128xbf16>, vector<1024x128xf32> -> vector<1024x128xf32>
    %c1020_i32 = arith.constant 1020 : i32
    %29 = tpu.dynamic_rotate %28 by %c1020_i32 dim 0 : vector<1024x128xf32>, i32 -> vector<1024x128xf32>
    %30 = arith.addf %26, %29 : vector<1024x128xf32>
    %31 = vector.shape_cast %30 : vector<1024x128xf32> to vector<64x16x128xf32>
    %c0_16 = arith.constant 0 : index
    %c0_17 = arith.constant 0 : index
    %c0_18 = arith.constant 0 : index
    %32 = vector.load %arg4[%c0_16, %c0_17, %c0_18] : memref<1x16x128xf32, #tpu.memory_space<vmem>>, vector<1x16x128xf32>
    %33 = vector.broadcast %32 : vector<1x16x128xf32> to vector<64x16x128xf32>
    %34 = arith.addf %31, %33 : vector<64x16x128xf32>
    %cst_19 = arith.constant dense<0xFF800000> : vector<64x128xf32>
    %35 = vector.multi_reduction <maximumf>, %34, %cst_19 [1] : vector<64x16x128xf32> to vector<64x128xf32>
    %c0_20 = arith.constant 0 : index
    %c0_21 = arith.constant 0 : index
    %36 = vector.load %arg5[%c0_20, %c0_21] : memref<1x128xf32, #tpu.memory_space<vmem>>, vector<1x128xf32>
    %37 = vector.broadcast %36 : vector<1x128xf32> to vector<64x128xf32>
    %38 = arith.addf %35, %37 : vector<64x128xf32>
    %cst_22 = arith.constant 0.000000e+00 : f32
    %39 = vector.broadcast %cst_22 : f32 to vector<64x128xf32>
    %40 = arith.maximumf %38, %39 : vector<64x128xf32>
    %41 = arith.truncf %40 : vector<64x128xf32> to vector<64x128xbf16>
    %c0_23 = arith.constant 0 : index
    %c0_24 = arith.constant 0 : index
    %42 = vector.load %arg6[%c0_23, %c0_24] : memref<128x128xbf16, #tpu.memory_space<vmem>>, vector<128x128xbf16>
    %cst_25 = arith.constant dense<0.000000e+00> : vector<64x128xf32>
    %43 = tpu.matmul %41, %42, %cst_25 {dimension_numbers = #tpu.dot_dimension_numbers<[1], [0], [0], [1], [0, 0, 1, 1], [], []>} : vector<64x128xbf16>, vector<128x128xbf16>, vector<64x128xf32> -> vector<64x128xf32>
    %c0_26 = arith.constant 0 : index
    %c0_27 = arith.constant 0 : index
    %44 = vector.load %arg7[%c0_26, %c0_27] : memref<1x128xf32, #tpu.memory_space<vmem>>, vector<1x128xf32>
    %45 = vector.broadcast %44 : vector<1x128xf32> to vector<64x128xf32>
    %46 = arith.addf %43, %45 : vector<64x128xf32>
    %cst_28 = arith.constant 0.000000e+00 : f32
    %47 = vector.broadcast %cst_28 : f32 to vector<64x128xf32>
    %48 = arith.maximumf %46, %47 : vector<64x128xf32>
    %c0_29 = arith.constant 0 : index
    %c0_30 = arith.constant 0 : index
    %49 = vector.load %arg8[%c0_29, %c0_30] : memref<64x1xf32, #tpu.memory_space<vmem>>, vector<64x1xf32>
    %50 = vector.broadcast %49 : vector<64x1xf32> to vector<64x128xf32>
    %51 = arith.mulf %48, %50 : vector<64x128xf32>
    %c0_31 = arith.constant 0 : index
    %c0_32 = arith.constant 0 : index
    %52 = vector.load %arg9[%c0_31, %c0_32] : memref<64x128xf32, #tpu.memory_space<vmem>>, vector<64x128xf32>
    tpu.vector_store %arg9[%c0_31, %c0_32], %51 {strides = array<i32>} : memref<64x128xf32, #tpu.memory_space<vmem>>, vector<64x128xf32>,
    return
  }
  func.func @transform_0(%arg0: i32) -> (i32, i32) {
    %c0_i32 = arith.constant 0 : i32
    %c0_i32_0 = arith.constant 0 : i32
    return %arg0, %c0_i32 : i32, i32
  }
  func.func @transform_1(%arg0: i32) -> (i32, i32) {
    %c0_i32 = arith.constant 0 : i32
    %c0_i32_0 = arith.constant 0 : i32
    %c0_i32_1 = arith.constant 0 : i32
    return %c0_i32, %c0_i32_0 : i32, i32
  }
  func.func @transform_2(%arg0: i32) -> (i32, i32) {
    %c0_i32 = arith.constant 0 : i32
    %c0_i32_0 = arith.constant 0 : i32
    %c0_i32_1 = arith.constant 0 : i32
    return %c0_i32, %c0_i32_0 : i32, i32
  }
  func.func @transform_3(%arg0: i32) -> (i32, i32, i32) {
    %c0_i32 = arith.constant 0 : i32
    %c0_i32_0 = arith.constant 0 : i32
    %c0_i32_1 = arith.constant 0 : i32
    %c0_i32_2 = arith.constant 0 : i32
    return %c0_i32, %c0_i32_0, %c0_i32_1 : i32, i32, i32
  }
  func.func @transform_4(%arg0: i32) -> (i32, i32) {
    %c0_i32 = arith.constant 0 : i32
    %c0_i32_0 = arith.constant 0 : i32
    %c0_i32_1 = arith.constant 0 : i32
    return %c0_i32, %c0_i32_0 : i32, i32
  }
  func.func @transform_5(%arg0: i32) -> (i32, i32) {
    %c0_i32 = arith.constant 0 : i32
    %c0_i32_0 = arith.constant 0 : i32
    %c0_i32_1 = arith.constant 0 : i32
    return %c0_i32, %c0_i32_0 : i32, i32
  }
  func.func @transform_6(%arg0: i32) -> (i32, i32) {
    %c0_i32 = arith.constant 0 : i32
    %c0_i32_0 = arith.constant 0 : i32
    %c0_i32_1 = arith.constant 0 : i32
    return %c0_i32, %c0_i32_0 : i32, i32
  }
  func.func @transform_7(%arg0: i32) -> (i32, i32) {
    %c0_i32 = arith.constant 0 : i32
    %c0_i32_0 = arith.constant 0 : i32
    return %arg0, %c0_i32 : i32, i32
  }
  func.func @transform_8(%arg0: i32) -> (i32, i32) {
    %c0_i32 = arith.constant 0 : i32
    %c0_i32_0 = arith.constant 0 : i32
    return %arg0, %c0_i32 : i32, i32
  }
}

</mosaic_0001>

<llo_original>
// kernel: tpu_custom_call.1
$region0: #{tpu_custom_call.1}
  #allocation0 [shape = 'u32[]', space=smem, size = 0x4, offset = 0x4, fixed_abs, tag = 'smem constant byte address 0x4 - core index']
  #allocation1 [shape = 'u32[144,128]{1,0:T(1,128)}', space=vmem, size = 0x12000, scoped, tag = 'internal scratch']
  %s0 = inlined_call_operand.vmem [shape: s32[128,16], index: 0, kind: input, shape index: {}]
  %s1 = inlined_call_operand.vmem [shape: bf16[128,128], index: 1, kind: input, shape index: {}]
  %s2 = inlined_call_operand.hbm [shape: bf16[128,640], index: 2, kind: input, shape index: {}]
  %s3 = inlined_call_operand.vmem [shape: f32[1,16,128], index: 3, kind: input, shape index: {}]
  %s4 = inlined_call_operand.vmem [shape: f32[1,128], index: 4, kind: input, shape index: {}]
  %s5 = inlined_call_operand.vmem [shape: bf16[128,128], index: 5, kind: input, shape index: {}]
  %s6 = inlined_call_operand.vmem [shape: f32[1,128], index: 6, kind: input, shape index: {}]
  %s7 = inlined_call_operand.vmem [shape: f32[128,1], index: 7, kind: input, shape index: {}]
  %s8 = inlined_call_operand.hbm [shape: f32[128,128], index: 8, kind: output, shape index: {}]
  %s9 = sld [smem:[#allocation0]]
  $region69: #{tpu_custom_call.1} parent=0
    _
  %s11 = ssub.s32 1, %s9
  %s12 = scalar_select 0, %s11, %s9
  $region1: #{tpu_custom_call.1} parent=0
    #allocation2 [shape = 'u8[163840]{0}', space=vmem, size = 0x28000, scoped, tag = 'input window, operand 2, single buffered']
    #allocation3 [shape = 's32[2]{0}', space=sflag, size = 0x8, scoped, tag = 'scoped memory for tpu_custom_call.1']
    #allocation4 [shape = 's32[2]{0}', space=sflag, size = 0x8, scoped, tag = 'scoped memory for tpu_custom_call.1']
    #allocation5 [shape = 'u8[65536]{0}', space=vmem, size = 0x10000, scoped, tag = 'output window, operand 0']
    %13 = vsyncpa [#allocation3], 0
    %14 = vsyncpa [#allocation4], 0
    %s15 = scalar_lea.sflag [#allocation4], 1
    %16 = vsyncpa %s15, 0
    loop: start=0, step=1, limit=4
    $region2: #{tpu_custom_call.1} parent=1 // loop_pre_header
      _
    $region3: #{tpu_custom_call.1} parent=1 // loop_header
      %s18 = sphi 0, %s22
      %p19 = scmp.ge.s32.totalorder %s18, 4
      %s28 = sphi 0, %s30
      %s31 = sphi 0, %s28
      %s32 = sphi 0, %s31
      %s48 = sphi 0, %s32
      %s52 = sphi 0, %s52
      %s54 = sphi 0, %s52
      %s55 = sphi 0, %s54
      %s69 = sphi 0, %s55
      %s73 = sphi 0, %s73
      %s75 = sphi 0, %s73
      %s76 = sphi 0, %s75
      %s90 = sphi 0, %s76
      %s94 = sphi 0, %s94
      %s96 = sphi 0, %s94
      %s97 = sphi 0, %s96
      %s111 = sphi 0, %s97
      %s115 = sphi 0, %s115
      %s117 = sphi 0, %s115
      %s118 = sphi 0, %s117
      %s132 = sphi 0, %s118
      %s136 = sphi 0, %s136
      %s138 = sphi 0, %s136
      %s139 = sphi 0, %s138
      %s153 = sphi 0, %s139
      %s157 = sphi 0, %s157
      %s159 = sphi 0, %s157
      %s160 = sphi 0, %s159
      %s174 = sphi 0, %s160
      %s180 = sphi 0, %s182
      %s183 = sphi 0, %s180
      %s184 = sphi 0, %s183
      %s200 = sphi 0, %s184
      %s206 = sphi 0, %s208
      %s209 = sphi 0, %s206
      %s210 = sphi 0, %s209
      %s226 = sphi 0, %s210
    $region4: #{tpu_custom_call.1} parent=1 // loop_header_branch
      %21 = sbr.rel (%p19) target = $region8
    $region5: #{tpu_custom_call.1} parent=1 // loop_body
      %s23 = ssub.s32 %s18, 1
      %s24 = ssub.s32 %s18, 2
      %s25 = sadd.s32 %s18, 1
      %s26 = ssub.s32 %s18, %s25
      %p27 = scmp.eq.s32.totalorder %s26, 0
      %s29 = sadd.s32 %s28, 1
      %s30 = scalar_select %p27, %s28, %s29
      %p33 = pneg %p27
      %p34 = scmp.eq.s32.totalorder %s18, 1
      %p35 = por %p33, %p34
      %p36 = scmp.ne.s32.totalorder %s28, %s31
      %p37 = scmp.eq.s32.totalorder %s18, 0
      %p38 = por %p36, %p37
      %p39 = scmp.ne.s32.totalorder %s28, %s31
      %p40 = scmp.eq.s32.totalorder %s23, 1
      %p41 = por %p39, %p40
      %p42 = scmp.ne.s32.totalorder %s31, %s32
      %p43 = scmp.eq.s32.totalorder %s23, 0
      %p44 = por %p42, %p43
      %p45 = scmp.ne.s32.totalorder %s31, %s32
      %p46 = scmp.eq.s32.totalorder %s24, 1
      %p47 = por %p45, %p46
      %p49 = scmp.ne.s32.totalorder %s32, %s48
      %p50 = scmp.eq.s32.totalorder %s24, 0
      %p51 = por %p49, %p50
      %s53 = sadd.s32 %s52, 1
      %p56 = scmp.eq.s32.totalorder %s18, 1
      %p57 = scmp.ne.s32.totalorder %s52, %s54
      %p58 = scmp.eq.s32.totalorder %s18, 0
      %p59 = por %p57, %p58
      %p60 = scmp.ne.s32.totalorder %s52, %s54
      %p61 = scmp.eq.s32.totalorder %s23, 1
      %p62 = por %p60, %p61
      %p63 = scmp.ne.s32.totalorder %s54, %s55
      %p64 = scmp.eq.s32.totalorder %s23, 0
      %p65 = por %p63, %p64
      %p66 = scmp.ne.s32.totalorder %s54, %s55
      %p67 = scmp.eq.s32.totalorder %s24, 1
      %p68 = por %p66, %p67
      %p70 = scmp.ne.s32.totalorder %s55, %s69
      %p71 = scmp.eq.s32.totalorder %s24, 0
      %p72 = por %p70, %p71
      %s74 = sadd.s32 %s73, 1
      %p77 = scmp.eq.s32.totalorder %s18, 1
      %p78 = scmp.ne.s32.totalorder %s73, %s75
      %p79 = scmp.eq.s32.totalorder %s18, 0
      %p80 = por %p78, %p79
      %p81 = scmp.ne.s32.totalorder %s73, %s75
      %p82 = scmp.eq.s32.totalorder %s23, 1
      %p83 = por %p81, %p82
      %p84 = scmp.ne.s32.totalorder %s75, %s76
      %p85 = scmp.eq.s32.totalorder %s23, 0
      %p86 = por %p84, %p85
      %p87 = scmp.ne.s32.totalorder %s75, %s76
      %p88 = scmp.eq.s32.totalorder %s24, 1
      %p89 = por %p87, %p88
      %p91 = scmp.ne.s32.totalorder %s76, %s90
      %p92 = scmp.eq.s32.totalorder %s24, 0
      %p93 = por %p91, %p92
      %s95 = sadd.s32 %s94, 1
      %p98 = scmp.eq.s32.totalorder %s18, 1
      %p99 = scmp.ne.s32.totalorder %s94, %s96
      %p100 = scmp.eq.s32.totalorder %s18, 0
      %p101 = por %p99, %p100
      %p102 = scmp.ne.s32.totalorder %s94, %s96
      %p103 = scmp.eq.s32.totalorder %s23, 1
      %p104 = por %p102, %p103
      %p105 = scmp.ne.s32.totalorder %s96, %s97
      %p106 = scmp.eq.s32.totalorder %s23, 0
      %p107 = por %p105, %p106
      %p108 = scmp.ne.s32.totalorder %s96, %s97
      %p109 = scmp.eq.s32.totalorder %s24, 1
      %p110 = por %p108, %p109
      %p112 = scmp.ne.s32.totalorder %s97, %s111
      %p113 = scmp.eq.s32.totalorder %s24, 0
      %p114 = por %p112, %p113
      %s116 = sadd.s32 %s115, 1
      %p119 = scmp.eq.s32.totalorder %s18, 1
      %p120 = scmp.ne.s32.totalorder %s115, %s117
      %p121 = scmp.eq.s32.totalorder %s18, 0
      %p122 = por %p120, %p121
      %p123 = scmp.ne.s32.totalorder %s115, %s117
      %p124 = scmp.eq.s32.totalorder %s23, 1
      %p125 = por %p123, %p124
      %p126 = scmp.ne.s32.totalorder %s117, %s118
      %p127 = scmp.eq.s32.totalorder %s23, 0
      %p128 = por %p126, %p127
      %p129 = scmp.ne.s32.totalorder %s117, %s118
      %p130 = scmp.eq.s32.totalorder %s24, 1
      %p131 = por %p129, %p130
      %p133 = scmp.ne.s32.totalorder %s118, %s132
      %p134 = scmp.eq.s32.totalorder %s24, 0
      %p135 = por %p133, %p134
      %s137 = sadd.s32 %s136, 1
      %p140 = scmp.eq.s32.totalorder %s18, 1
      %p141 = scmp.ne.s32.totalorder %s136, %s138
      %p142 = scmp.eq.s32.totalorder %s18, 0
      %p143 = por %p141, %p142
      %p144 = scmp.ne.s32.totalorder %s136, %s138
      %p145 = scmp.eq.s32.totalorder %s23, 1
      %p146 = por %p144, %p145
      %p147 = scmp.ne.s32.totalorder %s138, %s139
      %p148 = scmp.eq.s32.totalorder %s23, 0
      %p149 = por %p147, %p148
      %p150 = scmp.ne.s32.totalorder %s138, %s139
      %p151 = scmp.eq.s32.totalorder %s24, 1
      %p152 = por %p150, %p151
      %p154 = scmp.ne.s32.totalorder %s139, %s153
      %p155 = scmp.eq.s32.totalorder %s24, 0
      %p156 = por %p154, %p155
      %s158 = sadd.s32 %s157, 1
      %p161 = scmp.eq.s32.totalorder %s18, 1
      %p162 = scmp.ne.s32.totalorder %s157, %s159
      %p163 = scmp.eq.s32.totalorder %s18, 0
      %p164 = por %p162, %p163
      %p165 = scmp.ne.s32.totalorder %s157, %s159
      %p166 = scmp.eq.s32.totalorder %s23, 1
      %p167 = por %p165, %p166
      %p168 = scmp.ne.s32.totalorder %s159, %s160
      %p169 = scmp.eq.s32.totalorder %s23, 0
      %p170 = por %p168, %p169
      %p171 = scmp.ne.s32.totalorder %s159, %s160
      %p172 = scmp.eq.s32.totalorder %s24, 1
      %p173 = por %p171, %p172
      %p175 = scmp.ne.s32.totalorder %s160, %s174
      %p176 = scmp.eq.s32.totalorder %s24, 0
      %p177 = por %p175, %p176
      %s178 = ssub.s32 %s18, %s25
      %p179 = scmp.eq.s32.totalorder %s178, 0
      %s181 = sadd.s32 %s180, 1
      %s182 = scalar_select %p179, %s180, %s181
      %p185 = pneg %p179
      %p186 = scmp.eq.s32.totalorder %s18, 1
      %p187 = por %p185, %p186
      %p188 = scmp.ne.s32.totalorder %s180, %s183
      %p189 = scmp.eq.s32.totalorder %s18, 0
      %p190 = por %p188, %p189
      %p191 = scmp.ne.s32.totalorder %s180, %s183
      %p192 = scmp.eq.s32.totalorder %s23, 1
      %p193 = por %p191, %p192
      %p194 = scmp.ne.s32.totalorder %s183, %s184
      %p195 = scmp.eq.s32.totalorder %s23, 0
      %p196 = por %p194, %p195
      %p197 = scmp.ne.s32.totalorder %s183, %s184
      %p198 = scmp.eq.s32.totalorder %s24, 1
      %p199 = por %p197, %p198
      %p201 = scmp.ne.s32.totalorder %s184, %s200
      %p202 = scmp.eq.s32.totalorder %s24, 0
      %p203 = por %p201, %p202
      %s204 = ssub.s32 %s18, %s25
      %p205 = scmp.eq.s32.totalorder %s204, 0
      %s207 = sadd.s32 %s206, 1
      %s208 = scalar_select %p205, %s206, %s207
      %p211 = pneg %p205
      %p212 = scmp.eq.s32.totalorder %s18, 1
      %p213 = por %p211, %p212
      %p214 = scmp.ne.s32.totalorder %s206, %s209
      %p215 = scmp.eq.s32.totalorder %s18, 0
      %p216 = por %p214, %p215
      %p217 = scmp.ne.s32.totalorder %s206, %s209
      %p218 = scmp.eq.s32.totalorder %s23, 1
      %p219 = por %p217, %p218
      %p220 = scmp.ne.s32.totalorder %s209, %s210
      %p221 = scmp.eq.s32.totalorder %s23, 0
      %p222 = por %p220, %p221
      %p223 = scmp.ne.s32.totalorder %s209, %s210
      %p224 = scmp.eq.s32.totalorder %s24, 1
      %p225 = por %p223, %p224
      %p227 = scmp.ne.s32.totalorder %s210, %s226
      %p228 = scmp.eq.s32.totalorder %s24, 0
      %p229 = por %p227, %p228
      %p230 = scmp.le.s32.totalorder 1, %s18
      %p231 = scmp.lt.s32.totalorder %s18, 3
      %p232 = pnand %p230, %p231
      %p233 = pneg %p232
      // Predicated region
      $region9: #{tpu_custom_call.1} parent=5 // pred_check
        _
      $region10: #{tpu_custom_call.1} parent=5 // pred_check_branch
        %235 = sbr.rel (%p232) target = $region12
      $region11: #{tpu_custom_call.1} parent=5 // pred_region
        %s236 = ssub.s32 %s18, 1
        // Predicated region
        $region13: #{tpu_custom_call.1} parent=11 // pred_check
          %p237 = pneg %p65
        $region14: #{tpu_custom_call.1} parent=11 // pred_check_branch
          %239 = sbr.rel (%p237) target = $region16
        $region15: #{tpu_custom_call.1} parent=11 // pred_region
          _
        $region16: #{tpu_custom_call.1} parent=11 // pred_fallthru
          _
        // Predicated region
        $region17: #{tpu_custom_call.1} parent=11 // pred_check
          %p240 = pneg %p86
        $region18: #{tpu_custom_call.1} parent=11 // pred_check_branch
          %242 = sbr.rel (%p240) target = $region20
        $region19: #{tpu_custom_call.1} parent=11 // pred_region
          %s244 = ssub.s32 5120, 5120
          %245 = vsyncadd [#allocation3], %s244
          %s246 = sshll.u32 [#allocation2], 4
          %s247 = int_to_ptr.vmem [resolvable:$true] %s246
          %252 = dma.hbm_to_vmem [thread:$0]  %s2, 5120, %s247, [#allocation3], 320, 320, 20
        $region20: #{tpu_custom_call.1} parent=11 // pred_fallthru
          _
        // Predicated region
        $region21: #{tpu_custom_call.1} parent=11 // pred_check
          %p253 = pneg %p107
        $region22: #{tpu_custom_call.1} parent=11 // pred_check_branch
          %255 = sbr.rel (%p253) target = $region24
        $region23: #{tpu_custom_call.1} parent=11 // pred_region
          _
        $region24: #{tpu_custom_call.1} parent=11 // pred_fallthru
          _
        // Predicated region
        $region25: #{tpu_custom_call.1} parent=11 // pred_check
          %p256 = pneg %p128
        $region26: #{tpu_custom_call.1} parent=11 // pred_check_branch
          %258 = sbr.rel (%p256) target = $region28
        $region27: #{tpu_custom_call.1} parent=11 // pred_region
          _
        $region28: #{tpu_custom_call.1} parent=11 // pred_fallthru
          _
        // Predicated region
        $region29: #{tpu_custom_call.1} parent=11 // pred_check
          %p259 = pneg %p149
        $region30: #{tpu_custom_call.1} parent=11 // pred_check_branch
          %261 = sbr.rel (%p259) target = $region32
        $region31: #{tpu_custom_call.1} parent=11 // pred_region
          _
        $region32: #{tpu_custom_call.1} parent=11 // pred_fallthru
          _
        // Predicated region
        $region33: #{tpu_custom_call.1} parent=11 // pred_check
          %p262 = pneg %p170
        $region34: #{tpu_custom_call.1} parent=11 // pred_check_branch
          %264 = sbr.rel (%p262) target = $region36
        $region35: #{tpu_custom_call.1} parent=11 // pred_region
          _
        $region36: #{tpu_custom_call.1} parent=11 // pred_fallthru
          _
      $region12: #{tpu_custom_call.1} parent=5 // pred_fallthru
        _
      %p265 = scmp.lt.s32.totalorder %s18, 2
      // Predicated region
      $region37: #{tpu_custom_call.1} parent=5 // pred_check
        %p266 = pneg %p265
      $region38: #{tpu_custom_call.1} parent=5 // pred_check_branch
        %268 = sbr.rel (%p266) target = $region40
      $region39: #{tpu_custom_call.1} parent=5 // pred_region
        // Predicated region
        $region41: #{tpu_custom_call.1} parent=39 // pred_check
          %p269 = pneg %p38
        $region42: #{tpu_custom_call.1} parent=39 // pred_check_branch
          %271 = sbr.rel (%p269) target = $region44
        $region43: #{tpu_custom_call.1} parent=39 // pred_region
          %s272 = smul.u32 8, %s18
          %p273 = scmp.lt.s32.totalorder %s272, 15
          %s274 = scalar_select %p273, %s272, 15
          %s275 = smul.addr %s274, 8
          %s276 = scalar_lea.vmem %s0, %s275
          %s277 = smul.u32 8, %s18
        $region44: #{tpu_custom_call.1} parent=39 // pred_fallthru
          _
        // Predicated region
        $region45: #{tpu_custom_call.1} parent=39 // pred_check
          %p278 = pneg %p190
        $region46: #{tpu_custom_call.1} parent=39 // pred_check_branch
          %280 = sbr.rel (%p278) target = $region48
        $region47: #{tpu_custom_call.1} parent=39 // pred_region
          %s281 = smul.u32 8, %s18
          %p282 = scmp.lt.s32.totalorder %s281, 15
          %s283 = scalar_select %p282, %s281, 15
          %s284 = smul.addr %s283, 8
          %s285 = scalar_lea.vmem %s7, %s284
          %s286 = smul.u32 8, %s18
        $region48: #{tpu_custom_call.1} parent=39 // pred_fallthru
          _
      $region40: #{tpu_custom_call.1} parent=5 // pred_fallthru
        _
      %p287 = scmp.le.s32.totalorder 1, %s18
      %p288 = scmp.lt.s32.totalorder %s18, 3
      %p289 = pnand %p287, %p288
      %p290 = pneg %p289
      // Predicated region
      $region49: #{tpu_custom_call.1} parent=5 // pred_check
        _
      $region50: #{tpu_custom_call.1} parent=5 // pred_check_branch
        %292 = sbr.rel (%p289) target = $region52
      $region51: #{tpu_custom_call.1} parent=5 // pred_region
        %s293 = ssub.s32 %s18, 1
        // Predicated region
        $region53: #{tpu_custom_call.1} parent=51 // pred_check
          %p294 = pneg %p86
        $region54: #{tpu_custom_call.1} parent=51 // pred_check_branch
          %296 = sbr.rel (%p294) target = $region56
        $region55: #{tpu_custom_call.1} parent=51 // pred_region
          %297 = dma.done [#allocation3], 5120
        $region56: #{tpu_custom_call.1} parent=51 // pred_fallthru
          _
        %s298 = smul.u32 8, %s23
        %p299 = scmp.lt.s32.totalorder %s298, 15
        %s300 = scalar_select %p299, %s298, 15
        %s301 = smul.addr %s300, 8
        %s302 = scalar_lea.vmem %s0, %s301
        %p303 = pneg %p44
        %p304 = pneg %p41
        %p305 = pneg %p65
        %p306 = pneg %p62
        %p307 = pneg %p86
        %p308 = pneg %p83
        %p309 = pneg %p107
        %p310 = pneg %p104
        %p311 = pneg %p128
        %p312 = pneg %p125
        %p313 = pneg %p149
        %p314 = pneg %p146
        %p315 = pneg %p170
        %p316 = pneg %p167
        %s317 = smul.u32 8, %s23
        %p318 = scmp.lt.s32.totalorder %s317, 15
        %s319 = scalar_select %p318, %s317, 15
        %s320 = smul.addr %s319, 8
        %s321 = scalar_lea.vmem %s7, %s320
        %p322 = pneg %p196
        %p323 = pneg %p193
        %p324 = pneg %p222
        %p325 = pneg %p219
        %s326 = sand.u32 %s209, 1
        %s327 = scalar_lea.sflag [#allocation4], %s326
        %s328 = sand.u32 %s209, 1
        %s329 = smul.addr %s328, 64
        %s330 = scalar_lea.vmem [#allocation5], %s329
        %s331 = smul.u32 8, %s23
        %p332 = scmp.lt.s32.totalorder %s331, 15
        %s333 = scalar_select %p332, %s331, 15
        %s334 = smul.addr %s333, 8
        %s335 = scalar_lea.vmem %s0, %s334
        %s336 = smul.u32 8, %s23
        %s337 = smul.u32 8, %s23
        %p338 = scmp.lt.s32.totalorder %s337, 15
        %s339 = scalar_select %p338, %s337, 15
        %s340 = smul.addr %s339, 8
        %s341 = scalar_lea.vmem %s7, %s340
        %s342 = smul.u32 8, %s23
        %s343 = smul.u32 8, %s23
        %v345 = vld [vmem:[%s335] sm:$0xff]
        %v346 = vld [vmem:[%s335 + $0x8] sm:$0xff]
        %v347 = vld [vmem:[%s335 + $0x10] sm:$0xff]
        %v348 = vld [vmem:[%s335 + $0x18] sm:$0xff]
        %v349 = vld [vmem:[%s335 + $0x20] sm:$0xff]
        %v350 = vld [vmem:[%s335 + $0x28] sm:$0xff]
        %v351 = vld [vmem:[%s335 + $0x30] sm:$0xff]
        %v352 = vld [vmem:[%s335 + $0x38] sm:$0xff]
        %v353 = vlaneseq
        %v354 = vand.u32 %v353, 127
        %v355 = vlaneseq
        %v356 = vshrl.u32 %v355, 7
        %v357 = vsub.s32 0, %v356
        %v358 = vrot.slane %v345, %v357
        %360 = vbcast.lane.b32.xlu0 %v358, 256
        %v361 = vpop.permute.xlu0 %360
        %s363 = sor.u32 256, 8
        %364 = vbcast.lane.b32.xlu0 %v358, %s363
        %v365 = vpop.permute.xlu0 %364
        %v366 = vlaneseq
        %v367 = vshrl.u32 %v366, 7
        %v368 = vsub.s32 1, %v367
        %v369 = vrot.slane %v345, %v368
        %371 = vbcast.lane.b32.xlu0 %v369, 256
        %v372 = vpop.permute.xlu0 %371
        %s374 = sor.u32 256, 8
        %375 = vbcast.lane.b32.xlu0 %v369, %s374
        %v376 = vpop.permute.xlu0 %375
        %v377 = vlaneseq
        %v378 = vshrl.u32 %v377, 7
        %v379 = vsub.s32 2, %v378
        %v380 = vrot.slane %v345, %v379
        %382 = vbcast.lane.b32.xlu0 %v380, 256
        %v383 = vpop.permute.xlu0 %382
        %s385 = sor.u32 256, 8
        %386 = vbcast.lane.b32.xlu0 %v380, %s385
        %v387 = vpop.permute.xlu0 %386
        %v388 = vlaneseq
        %v389 = vshrl.u32 %v388, 7
        %v390 = vsub.s32 3, %v389
        %v391 = vrot.slane %v345, %v390
        %393 = vbcast.lane.b32.xlu0 %v391, 256
        %v394 = vpop.permute.xlu0 %393
        %s396 = sor.u32 256, 8
        %397 = vbcast.lane.b32.xlu0 %v391, %s396
        %v398 = vpop.permute.xlu0 %397
        %v399 = vlaneseq
        %v400 = vshrl.u32 %v399, 7
        %v401 = vsub.s32 4, %v400
        %v402 = vrot.slane %v345, %v401
        %404 = vbcast.lane.b32.xlu0 %v402, 256
        %v405 = vpop.permute.xlu0 %404
        %s407 = sor.u32 256, 8
        %408 = vbcast.lane.b32.xlu0 %v402, %s407
        %v409 = vpop.permute.xlu0 %408
        %v410 = vlaneseq
        %v411 = vshrl.u32 %v410, 7
        %v412 = vsub.s32 5, %v411
        %v413 = vrot.slane %v345, %v412
        %415 = vbcast.lane.b32.xlu0 %v413, 256
        %v416 = vpop.permute.xlu0 %415
        %s418 = sor.u32 256, 8
        %419 = vbcast.lane.b32.xlu0 %v413, %s418
        %v420 = vpop.permute.xlu0 %419
        %v421 = vlaneseq
        %v422 = vshrl.u32 %v421, 7
        %v423 = vsub.s32 6, %v422
        %v424 = vrot.slane %v345, %v423
        %426 = vbcast.lane.b32.xlu0 %v424, 256
        %v427 = vpop.permute.xlu0 %426
        %s429 = sor.u32 256, 8
        %430 = vbcast.lane.b32.xlu0 %v424, %s429
        %v431 = vpop.permute.xlu0 %430
        %v432 = vlaneseq
        %v433 = vshrl.u32 %v432, 7
        %v434 = vsub.s32 7, %v433
        %v435 = vrot.slane %v345, %v434
        %437 = vbcast.lane.b32.xlu0 %v435, 256
        %v438 = vpop.permute.xlu0 %437
        %s440 = sor.u32 256, 8
        %441 = vbcast.lane.b32.xlu0 %v435, %s440
        %v442 = vpop.permute.xlu0 %441
        %v443 = vlaneseq
        %v444 = vshrl.u32 %v443, 7
        %v445 = vsub.s32 0, %v444
        %v446 = vrot.slane %v346, %v445
        %448 = vbcast.lane.b32.xlu0 %v446, 256
        %v449 = vpop.permute.xlu0 %448
        %s451 = sor.u32 256, 8
        %452 = vbcast.lane.b32.xlu0 %v446, %s451
        %v453 = vpop.permute.xlu0 %452
        %v454 = vlaneseq
        %v455 = vshrl.u32 %v454, 7
        %v456 = vsub.s32 1, %v455
        %v457 = vrot.slane %v346, %v456
        %459 = vbcast.lane.b32.xlu0 %v457, 256
        %v460 = vpop.permute.xlu0 %459
        %s462 = sor.u32 256, 8
        %463 = vbcast.lane.b32.xlu0 %v457, %s462
        %v464 = vpop.permute.xlu0 %463
        %v465 = vlaneseq
        %v466 = vshrl.u32 %v465, 7
        %v467 = vsub.s32 2, %v466
        %v468 = vrot.slane %v346, %v467
        %470 = vbcast.lane.b32.xlu0 %v468, 256
        %v471 = vpop.permute.xlu0 %470
        %s473 = sor.u32 256, 8
        %474 = vbcast.lane.b32.xlu0 %v468, %s473
        %v475 = vpop.permute.xlu0 %474
        %v476 = vlaneseq
        %v477 = vshrl.u32 %v476, 7
        %v478 = vsub.s32 3, %v477
        %v479 = vrot.slane %v346, %v478
        %481 = vbcast.lane.b32.xlu0 %v479, 256
        %v482 = vpop.permute.xlu0 %481
        %s484 = sor.u32 256, 8
        %485 = vbcast.lane.b32.xlu0 %v479, %s484
        %v486 = vpop.permute.xlu0 %485
        %v487 = vlaneseq
        %v488 = vshrl.u32 %v487, 7
        %v489 = vsub.s32 4, %v488
        %v490 = vrot.slane %v346, %v489
        %492 = vbcast.lane.b32.xlu0 %v490, 256
        %v493 = vpop.permute.xlu0 %492
        %s495 = sor.u32 256, 8
        %496 = vbcast.lane.b32.xlu0 %v490, %s495
        %v497 = vpop.permute.xlu0 %496
        %v498 = vlaneseq
        %v499 = vshrl.u32 %v498, 7
        %v500 = vsub.s32 5, %v499
        %v501 = vrot.slane %v346, %v500
        %503 = vbcast.lane.b32.xlu0 %v501, 256
        %v504 = vpop.permute.xlu0 %503
        %s506 = sor.u32 256, 8
        %507 = vbcast.lane.b32.xlu0 %v501, %s506
        %v508 = vpop.permute.xlu0 %507
        %v509 = vlaneseq
        %v510 = vshrl.u32 %v509, 7
        %v511 = vsub.s32 6, %v510
        %v512 = vrot.slane %v346, %v511
        %514 = vbcast.lane.b32.xlu0 %v512, 256
        %v515 = vpop.permute.xlu0 %514
        %s517 = sor.u32 256, 8
        %518 = vbcast.lane.b32.xlu0 %v512, %s517
        %v519 = vpop.permute.xlu0 %518
        %v520 = vlaneseq
        %v521 = vshrl.u32 %v520, 7
        %v522 = vsub.s32 7, %v521
        %v523 = vrot.slane %v346, %v522
        %525 = vbcast.lane.b32.xlu0 %v523, 256
        %v526 = vpop.permute.xlu0 %525
        %s528 = sor.u32 256, 8
        %529 = vbcast.lane.b32.xlu0 %v523, %s528
        %v530 = vpop.permute.xlu0 %529
        %v531 = vlaneseq
        %v532 = vshrl.u32 %v531, 7
        %v533 = vsub.s32 0, %v532
        %v534 = vrot.slane %v347, %v533
        %536 = vbcast.lane.b32.xlu0 %v534, 256
        %v537 = vpop.permute.xlu0 %536
        %s539 = sor.u32 256, 8
        %540 = vbcast.lane.b32.xlu0 %v534, %s539
        %v541 = vpop.permute.xlu0 %540
        %v542 = vlaneseq
        %v543 = vshrl.u32 %v542, 7
        %v544 = vsub.s32 1, %v543
        %v545 = vrot.slane %v347, %v544
        %547 = vbcast.lane.b32.xlu0 %v545, 256
        %v548 = vpop.permute.xlu0 %547
        %s550 = sor.u32 256, 8
        %551 = vbcast.lane.b32.xlu0 %v545, %s550
        %v552 = vpop.permute.xlu0 %551
        %v553 = vlaneseq
        %v554 = vshrl.u32 %v553, 7
        %v555 = vsub.s32 2, %v554
        %v556 = vrot.slane %v347, %v555
        %558 = vbcast.lane.b32.xlu0 %v556, 256
        %v559 = vpop.permute.xlu0 %558
        %s561 = sor.u32 256, 8
        %562 = vbcast.lane.b32.xlu0 %v556, %s561
        %v563 = vpop.permute.xlu0 %562
        %v564 = vlaneseq
        %v565 = vshrl.u32 %v564, 7
        %v566 = vsub.s32 3, %v565
        %v567 = vrot.slane %v347, %v566
        %569 = vbcast.lane.b32.xlu0 %v567, 256
        %v570 = vpop.permute.xlu0 %569
        %s572 = sor.u32 256, 8
        %573 = vbcast.lane.b32.xlu0 %v567, %s572
        %v574 = vpop.permute.xlu0 %573
        %v575 = vlaneseq
        %v576 = vshrl.u32 %v575, 7
        %v577 = vsub.s32 4, %v576
        %v578 = vrot.slane %v347, %v577
        %580 = vbcast.lane.b32.xlu0 %v578, 256
        %v581 = vpop.permute.xlu0 %580
        %s583 = sor.u32 256, 8
        %584 = vbcast.lane.b32.xlu0 %v578, %s583
        %v585 = vpop.permute.xlu0 %584
        %v586 = vlaneseq
        %v587 = vshrl.u32 %v586, 7
        %v588 = vsub.s32 5, %v587
        %v589 = vrot.slane %v347, %v588
        %591 = vbcast.lane.b32.xlu0 %v589, 256
        %v592 = vpop.permute.xlu0 %591
        %s594 = sor.u32 256, 8
        %595 = vbcast.lane.b32.xlu0 %v589, %s594
        %v596 = vpop.permute.xlu0 %595
        %v597 = vlaneseq
        %v598 = vshrl.u32 %v597, 7
        %v599 = vsub.s32 6, %v598
        %v600 = vrot.slane %v347, %v599
        %602 = vbcast.lane.b32.xlu0 %v600, 256
        %v603 = vpop.permute.xlu0 %602
        %s605 = sor.u32 256, 8
        %606 = vbcast.lane.b32.xlu0 %v600, %s605
        %v607 = vpop.permute.xlu0 %606
        %v608 = vlaneseq
        %v609 = vshrl.u32 %v608, 7
        %v610 = vsub.s32 7, %v609
        %v611 = vrot.slane %v347, %v610
        %613 = vbcast.lane.b32.xlu0 %v611, 256
        %v614 = vpop.permute.xlu0 %613
        %s616 = sor.u32 256, 8
        %617 = vbcast.lane.b32.xlu0 %v611, %s616
        %v618 = vpop.permute.xlu0 %617
        %v619 = vlaneseq
        %v620 = vshrl.u32 %v619, 7
        %v621 = vsub.s32 0, %v620
        %v622 = vrot.slane %v348, %v621
        %624 = vbcast.lane.b32.xlu0 %v622, 256
        %v625 = vpop.permute.xlu0 %624
        %s627 = sor.u32 256, 8
        %628 = vbcast.lane.b32.xlu0 %v622, %s627
        %v629 = vpop.permute.xlu0 %628
        %v630 = vlaneseq
        %v631 = vshrl.u32 %v630, 7
        %v632 = vsub.s32 1, %v631
        %v633 = vrot.slane %v348, %v632
        %635 = vbcast.lane.b32.xlu0 %v633, 256
        %v636 = vpop.permute.xlu0 %635
        %s638 = sor.u32 256, 8
        %639 = vbcast.lane.b32.xlu0 %v633, %s638
        %v640 = vpop.permute.xlu0 %639
        %v641 = vlaneseq
        %v642 = vshrl.u32 %v641, 7
        %v643 = vsub.s32 2, %v642
        %v644 = vrot.slane %v348, %v643
        %646 = vbcast.lane.b32.xlu0 %v644, 256
        %v647 = vpop.permute.xlu0 %646
        %s649 = sor.u32 256, 8
        %650 = vbcast.lane.b32.xlu0 %v644, %s649
        %v651 = vpop.permute.xlu0 %650
        %v652 = vlaneseq
        %v653 = vshrl.u32 %v652, 7
        %v654 = vsub.s32 3, %v653
        %v655 = vrot.slane %v348, %v654
        %657 = vbcast.lane.b32.xlu0 %v655, 256
        %v658 = vpop.permute.xlu0 %657
        %s660 = sor.u32 256, 8
        %661 = vbcast.lane.b32.xlu0 %v655, %s660
        %v662 = vpop.permute.xlu0 %661
        %v663 = vlaneseq
        %v664 = vshrl.u32 %v663, 7
        %v665 = vsub.s32 4, %v664
        %v666 = vrot.slane %v348, %v665
        %668 = vbcast.lane.b32.xlu0 %v666, 256
        %v669 = vpop.permute.xlu0 %668
        %s671 = sor.u32 256, 8
        %672 = vbcast.lane.b32.xlu0 %v666, %s671
        %v673 = vpop.permute.xlu0 %672
        %v674 = vlaneseq
        %v675 = vshrl.u32 %v674, 7
        %v676 = vsub.s32 5, %v675
        %v677 = vrot.slane %v348, %v676
        %679 = vbcast.lane.b32.xlu0 %v677, 256
        %v680 = vpop.permute.xlu0 %679
        %s682 = sor.u32 256, 8
        %683 = vbcast.lane.b32.xlu0 %v677, %s682
        %v684 = vpop.permute.xlu0 %683
        %v685 = vlaneseq
        %v686 = vshrl.u32 %v685, 7
        %v687 = vsub.s32 6, %v686
        %v688 = vrot.slane %v348, %v687
        %690 = vbcast.lane.b32.xlu0 %v688, 256
        %v691 = vpop.permute.xlu0 %690
        %s693 = sor.u32 256, 8
        %694 = vbcast.lane.b32.xlu0 %v688, %s693
        %v695 = vpop.permute.xlu0 %694
        %v696 = vlaneseq
        %v697 = vshrl.u32 %v696, 7
        %v698 = vsub.s32 7, %v697
        %v699 = vrot.slane %v348, %v698
        %701 = vbcast.lane.b32.xlu0 %v699, 256
        %v702 = vpop.permute.xlu0 %701
        %s704 = sor.u32 256, 8
        %705 = vbcast.lane.b32.xlu0 %v699, %s704
        %v706 = vpop.permute.xlu0 %705
        %v707 = vlaneseq
        %v708 = vshrl.u32 %v707, 7
        %v709 = vsub.s32 0, %v708
        %v710 = vrot.slane %v349, %v709
        %712 = vbcast.lane.b32.xlu0 %v710, 256
        %v713 = vpop.permute.xlu0 %712
        %s715 = sor.u32 256, 8
        %716 = vbcast.lane.b32.xlu0 %v710, %s715
        %v717 = vpop.permute.xlu0 %716
        %v718 = vlaneseq
        %v719 = vshrl.u32 %v718, 7
        %v720 = vsub.s32 1, %v719
        %v721 = vrot.slane %v349, %v720
        %723 = vbcast.lane.b32.xlu0 %v721, 256
        %v724 = vpop.permute.xlu0 %723
        %s726 = sor.u32 256, 8
        %727 = vbcast.lane.b32.xlu0 %v721, %s726
        %v728 = vpop.permute.xlu0 %727
        %v729 = vlaneseq
        %v730 = vshrl.u32 %v729, 7
        %v731 = vsub.s32 2, %v730
        %v732 = vrot.slane %v349, %v731
        %734 = vbcast.lane.b32.xlu0 %v732, 256
        %v735 = vpop.permute.xlu0 %734
        %s737 = sor.u32 256, 8
        %738 = vbcast.lane.b32.xlu0 %v732, %s737
        %v739 = vpop.permute.xlu0 %738
        %v740 = vlaneseq
        %v741 = vshrl.u32 %v740, 7
        %v742 = vsub.s32 3, %v741
        %v743 = vrot.slane %v349, %v742
        %745 = vbcast.lane.b32.xlu0 %v743, 256
        %v746 = vpop.permute.xlu0 %745
        %s748 = sor.u32 256, 8
        %749 = vbcast.lane.b32.xlu0 %v743, %s748
        %v750 = vpop.permute.xlu0 %749
        %v751 = vlaneseq
        %v752 = vshrl.u32 %v751, 7
        %v753 = vsub.s32 4, %v752
        %v754 = vrot.slane %v349, %v753
        %756 = vbcast.lane.b32.xlu0 %v754, 256
        %v757 = vpop.permute.xlu0 %756
        %s759 = sor.u32 256, 8
        %760 = vbcast.lane.b32.xlu0 %v754, %s759
        %v761 = vpop.permute.xlu0 %760
        %v762 = vlaneseq
        %v763 = vshrl.u32 %v762, 7
        %v764 = vsub.s32 5, %v763
        %v765 = vrot.slane %v349, %v764
        %767 = vbcast.lane.b32.xlu0 %v765, 256
        %v768 = vpop.permute.xlu0 %767
        %s770 = sor.u32 256, 8
        %771 = vbcast.lane.b32.xlu0 %v765, %s770
        %v772 = vpop.permute.xlu0 %771
        %v773 = vlaneseq
        %v774 = vshrl.u32 %v773, 7
        %v775 = vsub.s32 6, %v774
        %v776 = vrot.slane %v349, %v775
        %778 = vbcast.lane.b32.xlu0 %v776, 256
        %v779 = vpop.permute.xlu0 %778
        %s781 = sor.u32 256, 8
        %782 = vbcast.lane.b32.xlu0 %v776, %s781
        %v783 = vpop.permute.xlu0 %782
        %v784 = vlaneseq
        %v785 = vshrl.u32 %v784, 7
        %v786 = vsub.s32 7, %v785
        %v787 = vrot.slane %v349, %v786
        %789 = vbcast.lane.b32.xlu0 %v787, 256
        %v790 = vpop.permute.xlu0 %789
        %s792 = sor.u32 256, 8
        %793 = vbcast.lane.b32.xlu0 %v787, %s792
        %v794 = vpop.permute.xlu0 %793
        %v795 = vlaneseq
        %v796 = vshrl.u32 %v795, 7
        %v797 = vsub.s32 0, %v796
        %v798 = vrot.slane %v350, %v797
        %800 = vbcast.lane.b32.xlu0 %v798, 256
        %v801 = vpop.permute.xlu0 %800
        %s803 = sor.u32 256, 8
        %804 = vbcast.lane.b32.xlu0 %v798, %s803
        %v805 = vpop.permute.xlu0 %804
        %v806 = vlaneseq
        %v807 = vshrl.u32 %v806, 7
        %v808 = vsub.s32 1, %v807
        %v809 = vrot.slane %v350, %v808
        %811 = vbcast.lane.b32.xlu0 %v809, 256
        %v812 = vpop.permute.xlu0 %811
        %s814 = sor.u32 256, 8
        %815 = vbcast.lane.b32.xlu0 %v809, %s814
        %v816 = vpop.permute.xlu0 %815
        %v817 = vlaneseq
        %v818 = vshrl.u32 %v817, 7
        %v819 = vsub.s32 2, %v818
        %v820 = vrot.slane %v350, %v819
        %822 = vbcast.lane.b32.xlu0 %v820, 256
        %v823 = vpop.permute.xlu0 %822
        %s825 = sor.u32 256, 8
        %826 = vbcast.lane.b32.xlu0 %v820, %s825
        %v827 = vpop.permute.xlu0 %826
        %v828 = vlaneseq
        %v829 = vshrl.u32 %v828, 7
        %v830 = vsub.s32 3, %v829
        %v831 = vrot.slane %v350, %v830
        %833 = vbcast.lane.b32.xlu0 %v831, 256
        %v834 = vpop.permute.xlu0 %833
        %s836 = sor.u32 256, 8
        %837 = vbcast.lane.b32.xlu0 %v831, %s836
        %v838 = vpop.permute.xlu0 %837
        %v839 = vlaneseq
        %v840 = vshrl.u32 %v839, 7
        %v841 = vsub.s32 4, %v840
        %v842 = vrot.slane %v350, %v841
        %844 = vbcast.lane.b32.xlu0 %v842, 256
        %v845 = vpop.permute.xlu0 %844
        %s847 = sor.u32 256, 8
        %848 = vbcast.lane.b32.xlu0 %v842, %s847
        %v849 = vpop.permute.xlu0 %848
        %v850 = vlaneseq
        %v851 = vshrl.u32 %v850, 7
        %v852 = vsub.s32 5, %v851
        %v853 = vrot.slane %v350, %v852
        %855 = vbcast.lane.b32.xlu0 %v853, 256
        %v856 = vpop.permute.xlu0 %855
        %s858 = sor.u32 256, 8
        %859 = vbcast.lane.b32.xlu0 %v853, %s858
        %v860 = vpop.permute.xlu0 %859
        %v861 = vlaneseq
        %v862 = vshrl.u32 %v861, 7
        %v863 = vsub.s32 6, %v862
        %v864 = vrot.slane %v350, %v863
        %866 = vbcast.lane.b32.xlu0 %v864, 256
        %v867 = vpop.permute.xlu0 %866
        %s869 = sor.u32 256, 8
        %870 = vbcast.lane.b32.xlu0 %v864, %s869
        %v871 = vpop.permute.xlu0 %870
        %v872 = vlaneseq
        %v873 = vshrl.u32 %v872, 7
        %v874 = vsub.s32 7, %v873
        %v875 = vrot.slane %v350, %v874
        %877 = vbcast.lane.b32.xlu0 %v875, 256
        %v878 = vpop.permute.xlu0 %877
        %s880 = sor.u32 256, 8
        %881 = vbcast.lane.b32.xlu0 %v875, %s880
        %v882 = vpop.permute.xlu0 %881
        %v883 = vlaneseq
        %v884 = vshrl.u32 %v883, 7
        %v885 = vsub.s32 0, %v884
        %v886 = vrot.slane %v351, %v885
        %888 = vbcast.lane.b32.xlu0 %v886, 256
        %v889 = vpop.permute.xlu0 %888
        %s891 = sor.u32 256, 8
        %892 = vbcast.lane.b32.xlu0 %v886, %s891
        %v893 = vpop.permute.xlu0 %892
        %v894 = vlaneseq
        %v895 = vshrl.u32 %v894, 7
        %v896 = vsub.s32 1, %v895
        %v897 = vrot.slane %v351, %v896
        %899 = vbcast.lane.b32.xlu0 %v897, 256
        %v900 = vpop.permute.xlu0 %899
        %s902 = sor.u32 256, 8
        %903 = vbcast.lane.b32.xlu0 %v897, %s902
        %v904 = vpop.permute.xlu0 %903
        %v905 = vlaneseq
        %v906 = vshrl.u32 %v905, 7
        %v907 = vsub.s32 2, %v906
        %v908 = vrot.slane %v351, %v907
        %910 = vbcast.lane.b32.xlu0 %v908, 256
        %v911 = vpop.permute.xlu0 %910
        %s913 = sor.u32 256, 8
        %914 = vbcast.lane.b32.xlu0 %v908, %s913
        %v915 = vpop.permute.xlu0 %914
        %v916 = vlaneseq
        %v917 = vshrl.u32 %v916, 7
        %v918 = vsub.s32 3, %v917
        %v919 = vrot.slane %v351, %v918
        %921 = vbcast.lane.b32.xlu0 %v919, 256
        %v922 = vpop.permute.xlu0 %921
        %s924 = sor.u32 256, 8
        %925 = vbcast.lane.b32.xlu0 %v919, %s924
        %v926 = vpop.permute.xlu0 %925
        %v927 = vlaneseq
        %v928 = vshrl.u32 %v927, 7
        %v929 = vsub.s32 4, %v928
        %v930 = vrot.slane %v351, %v929
        %932 = vbcast.lane.b32.xlu0 %v930, 256
        %v933 = vpop.permute.xlu0 %932
        %s935 = sor.u32 256, 8
        %936 = vbcast.lane.b32.xlu0 %v930, %s935
        %v937 = vpop.permute.xlu0 %936
        %v938 = vlaneseq
        %v939 = vshrl.u32 %v938, 7
        %v940 = vsub.s32 5, %v939
        %v941 = vrot.slane %v351, %v940
        %943 = vbcast.lane.b32.xlu0 %v941, 256
        %v944 = vpop.permute.xlu0 %943
        %s946 = sor.u32 256, 8
        %947 = vbcast.lane.b32.xlu0 %v941, %s946
        %v948 = vpop.permute.xlu0 %947
        %v949 = vlaneseq
        %v950 = vshrl.u32 %v949, 7
        %v951 = vsub.s32 6, %v950
        %v952 = vrot.slane %v351, %v951
        %954 = vbcast.lane.b32.xlu0 %v952, 256
        %v955 = vpop.permute.xlu0 %954
        %s957 = sor.u32 256, 8
        %958 = vbcast.lane.b32.xlu0 %v952, %s957
        %v959 = vpop.permute.xlu0 %958
        %v960 = vlaneseq
        %v961 = vshrl.u32 %v960, 7
        %v962 = vsub.s32 7, %v961
        %v963 = vrot.slane %v351, %v962
        %965 = vbcast.lane.b32.xlu0 %v963, 256
        %v966 = vpop.permute.xlu0 %965
        %s968 = sor.u32 256, 8
        %969 = vbcast.lane.b32.xlu0 %v963, %s968
        %v970 = vpop.permute.xlu0 %969
        %v971 = vlaneseq
        %v972 = vshrl.u32 %v971, 7
        %v973 = vsub.s32 0, %v972
        %v974 = vrot.slane %v352, %v973
        %976 = vbcast.lane.b32.xlu0 %v974, 256
        %v977 = vpop.permute.xlu0 %976
        %s979 = sor.u32 256, 8
        %980 = vbcast.lane.b32.xlu0 %v974, %s979
        %v981 = vpop.permute.xlu0 %980
        %v982 = vlaneseq
        %v983 = vshrl.u32 %v982, 7
        %v984 = vsub.s32 1, %v983
        %v985 = vrot.slane %v352, %v984
        %987 = vbcast.lane.b32.xlu0 %v985, 256
        %v988 = vpop.permute.xlu0 %987
        %s990 = sor.u32 256, 8
        %991 = vbcast.lane.b32.xlu0 %v985, %s990
        %v992 = vpop.permute.xlu0 %991
        %v993 = vlaneseq
        %v994 = vshrl.u32 %v993, 7
        %v995 = vsub.s32 2, %v994
        %v996 = vrot.slane %v352, %v995
        %998 = vbcast.lane.b32.xlu0 %v996, 256
        %v999 = vpop.permute.xlu0 %998
        %s1001 = sor.u32 256, 8
        %1002 = vbcast.lane.b32.xlu0 %v996, %s1001
        %v1003 = vpop.permute.xlu0 %1002
        %v1004 = vlaneseq
        %v1005 = vshrl.u32 %v1004, 7
        %v1006 = vsub.s32 3, %v1005
        %v1007 = vrot.slane %v352, %v1006
        %1009 = vbcast.lane.b32.xlu0 %v1007, 256
        %v1010 = vpop.permute.xlu0 %1009
        %s1012 = sor.u32 256, 8
        %1013 = vbcast.lane.b32.xlu0 %v1007, %s1012
        %v1014 = vpop.permute.xlu0 %1013
        %v1015 = vlaneseq
        %v1016 = vshrl.u32 %v1015, 7
        %v1017 = vsub.s32 4, %v1016
        %v1018 = vrot.slane %v352, %v1017
        %1020 = vbcast.lane.b32.xlu0 %v1018, 256
        %v1021 = vpop.permute.xlu0 %1020
        %s1023 = sor.u32 256, 8
        %1024 = vbcast.lane.b32.xlu0 %v1018, %s1023
        %v1025 = vpop.permute.xlu0 %1024
        %v1026 = vlaneseq
        %v1027 = vshrl.u32 %v1026, 7
        %v1028 = vsub.s32 5, %v1027
        %v1029 = vrot.slane %v352, %v1028
        %1031 = vbcast.lane.b32.xlu0 %v1029, 256
        %v1032 = vpop.permute.xlu0 %1031
        %s1034 = sor.u32 256, 8
        %1035 = vbcast.lane.b32.xlu0 %v1029, %s1034
        %v1036 = vpop.permute.xlu0 %1035
        %v1037 = vlaneseq
        %v1038 = vshrl.u32 %v1037, 7
        %v1039 = vsub.s32 6, %v1038
        %v1040 = vrot.slane %v352, %v1039
        %1042 = vbcast.lane.b32.xlu0 %v1040, 256
        %v1043 = vpop.permute.xlu0 %1042
        %s1045 = sor.u32 256, 8
        %1046 = vbcast.lane.b32.xlu0 %v1040, %s1045
        %v1047 = vpop.permute.xlu0 %1046
        %v1048 = vlaneseq
        %v1049 = vshrl.u32 %v1048, 7
        %v1050 = vsub.s32 7, %v1049
        %v1051 = vrot.slane %v352, %v1050
        %1053 = vbcast.lane.b32.xlu0 %v1051, 256
        %v1054 = vpop.permute.xlu0 %1053
        %s1056 = sor.u32 256, 8
        %1057 = vbcast.lane.b32.xlu0 %v1051, %s1056
        %v1058 = vpop.permute.xlu0 %1057
        %vm1059 = vcmp.eq.s32.totalorder %v361, %v354
        %vm1060 = vcmp.eq.s32.totalorder %v365, %v354
        %vm1061 = vcmp.eq.s32.totalorder %v372, %v354
        %vm1062 = vcmp.eq.s32.totalorder %v376, %v354
        %vm1063 = vcmp.eq.s32.totalorder %v383, %v354
        %vm1064 = vcmp.eq.s32.totalorder %v387, %v354
        %vm1065 = vcmp.eq.s32.totalorder %v394, %v354
        %vm1066 = vcmp.eq.s32.totalorder %v398, %v354
        %vm1067 = vcmp.eq.s32.totalorder %v405, %v354
        %vm1068 = vcmp.eq.s32.totalorder %v409, %v354
        %vm1069 = vcmp.eq.s32.totalorder %v416, %v354
        %vm1070 = vcmp.eq.s32.totalorder %v420, %v354
        %vm1071 = vcmp.eq.s32.totalorder %v427, %v354
        %vm1072 = vcmp.eq.s32.totalorder %v431, %v354
        %vm1073 = vcmp.eq.s32.totalorder %v438, %v354
        %vm1074 = vcmp.eq.s32.totalorder %v442, %v354
        %vm1075 = vcmp.eq.s32.totalorder %v449, %v354
        %vm1076 = vcmp.eq.s32.totalorder %v453, %v354
        %vm1077 = vcmp.eq.s32.totalorder %v460, %v354
        %vm1078 = vcmp.eq.s32.totalorder %v464, %v354
        %vm1079 = vcmp.eq.s32.totalorder %v471, %v354
        %vm1080 = vcmp.eq.s32.totalorder %v475, %v354
        %vm1081 = vcmp.eq.s32.totalorder %v482, %v354
        %vm1082 = vcmp.eq.s32.totalorder %v486, %v354
        %vm1083 = vcmp.eq.s32.totalorder %v493, %v354
        %vm1084 = vcmp.eq.s32.totalorder %v497, %v354
        %vm1085 = vcmp.eq.s32.totalorder %v504, %v354
        %vm1086 = vcmp.eq.s32.totalorder %v508, %v354
        %vm1087 = vcmp.eq.s32.totalorder %v515, %v354
        %vm1088 = vcmp.eq.s32.totalorder %v519, %v354
        %vm1089 = vcmp.eq.s32.totalorder %v526, %v354
        %vm1090 = vcmp.eq.s32.totalorder %v530, %v354
        %vm1091 = vcmp.eq.s32.totalorder %v537, %v354
        %vm1092 = vcmp.eq.s32.totalorder %v541, %v354
        %vm1093 = vcmp.eq.s32.totalorder %v548, %v354
        %vm1094 = vcmp.eq.s32.totalorder %v552, %v354
        %vm1095 = vcmp.eq.s32.totalorder %v559, %v354
        %vm1096 = vcmp.eq.s32.totalorder %v563, %v354
        %vm1097 = vcmp.eq.s32.totalorder %v570, %v354
        %vm1098 = vcmp.eq.s32.totalorder %v574, %v354
        %vm1099 = vcmp.eq.s32.totalorder %v581, %v354
        %vm1100 = vcmp.eq.s32.totalorder %v585, %v354
        %vm1101 = vcmp.eq.s32.totalorder %v592, %v354
        %vm1102 = vcmp.eq.s32.totalorder %v596, %v354
        %vm1103 = vcmp.eq.s32.totalorder %v603, %v354
        %vm1104 = vcmp.eq.s32.totalorder %v607, %v354
        %vm1105 = vcmp.eq.s32.totalorder %v614, %v354
        %vm1106 = vcmp.eq.s32.totalorder %v618, %v354
        %vm1107 = vcmp.eq.s32.totalorder %v625, %v354
        %vm1108 = vcmp.eq.s32.totalorder %v629, %v354
        %vm1109 = vcmp.eq.s32.totalorder %v636, %v354
        %vm1110 = vcmp.eq.s32.totalorder %v640, %v354
        %vm1111 = vcmp.eq.s32.totalorder %v647, %v354
        %vm1112 = vcmp.eq.s32.totalorder %v651, %v354
        %vm1113 = vcmp.eq.s32.totalorder %v658, %v354
        %vm1114 = vcmp.eq.s32.totalorder %v662, %v354
        %vm1115 = vcmp.eq.s32.totalorder %v669, %v354
        %vm1116 = vcmp.eq.s32.totalorder %v673, %v354
        %vm1117 = vcmp.eq.s32.totalorder %v680, %v354
        %vm1118 = vcmp.eq.s32.totalorder %v684, %v354
        %vm1119 = vcmp.eq.s32.totalorder %v691, %v354
        %vm1120 = vcmp.eq.s32.totalorder %v695, %v354
        %vm1121 = vcmp.eq.s32.totalorder %v702, %v354
        %vm1122 = vcmp.eq.s32.totalorder %v706, %v354
        %vm1123 = vcmp.eq.s32.totalorder %v713, %v354
        %vm1124 = vcmp.eq.s32.totalorder %v717, %v354
        %vm1125 = vcmp.eq.s32.totalorder %v724, %v354
        %vm1126 = vcmp.eq.s32.totalorder %v728, %v354
        %vm1127 = vcmp.eq.s32.totalorder %v735, %v354
        %vm1128 = vcmp.eq.s32.totalorder %v739, %v354
        %vm1129 = vcmp.eq.s32.totalorder %v746, %v354
        %vm1130 = vcmp.eq.s32.totalorder %v750, %v354
        %vm1131 = vcmp.eq.s32.totalorder %v757, %v354
        %vm1132 = vcmp.eq.s32.totalorder %v761, %v354
        %vm1133 = vcmp.eq.s32.totalorder %v768, %v354
        %vm1134 = vcmp.eq.s32.totalorder %v772, %v354
        %vm1135 = vcmp.eq.s32.totalorder %v779, %v354
        %vm1136 = vcmp.eq.s32.totalorder %v783, %v354
        %vm1137 = vcmp.eq.s32.totalorder %v790, %v354
        %vm1138 = vcmp.eq.s32.totalorder %v794, %v354
        %vm1139 = vcmp.eq.s32.totalorder %v801, %v354
        %vm1140 = vcmp.eq.s32.totalorder %v805, %v354
        %vm1141 = vcmp.eq.s32.totalorder %v812, %v354
        %vm1142 = vcmp.eq.s32.totalorder %v816, %v354
        %vm1143 = vcmp.eq.s32.totalorder %v823, %v354
        %vm1144 = vcmp.eq.s32.totalorder %v827, %v354
        %vm1145 = vcmp.eq.s32.totalorder %v834, %v354
        %vm1146 = vcmp.eq.s32.totalorder %v838, %v354
        %vm1147 = vcmp.eq.s32.totalorder %v845, %v354
        %vm1148 = vcmp.eq.s32.totalorder %v849, %v354
        %vm1149 = vcmp.eq.s32.totalorder %v856, %v354
        %vm1150 = vcmp.eq.s32.totalorder %v860, %v354
        %vm1151 = vcmp.eq.s32.totalorder %v867, %v354
        %vm1152 = vcmp.eq.s32.totalorder %v871, %v354
        %vm1153 = vcmp.eq.s32.totalorder %v878, %v354
        %vm1154 = vcmp.eq.s32.totalorder %v882, %v354
        %vm1155 = vcmp.eq.s32.totalorder %v889, %v354
        %vm1156 = vcmp.eq.s32.totalorder %v893, %v354
        %vm1157 = vcmp.eq.s32.totalorder %v900, %v354
        %vm1158 = vcmp.eq.s32.totalorder %v904, %v354
        %vm1159 = vcmp.eq.s32.totalorder %v911, %v354
        %vm1160 = vcmp.eq.s32.totalorder %v915, %v354
        %vm1161 = vcmp.eq.s32.totalorder %v922, %v354
        %vm1162 = vcmp.eq.s32.totalorder %v926, %v354
        %vm1163 = vcmp.eq.s32.totalorder %v933, %v354
        %vm1164 = vcmp.eq.s32.totalorder %v937, %v354
        %vm1165 = vcmp.eq.s32.totalorder %v944, %v354
        %vm1166 = vcmp.eq.s32.totalorder %v948, %v354
        %vm1167 = vcmp.eq.s32.totalorder %v955, %v354
        %vm1168 = vcmp.eq.s32.totalorder %v959, %v354
        %vm1169 = vcmp.eq.s32.totalorder %v966, %v354
        %vm1170 = vcmp.eq.s32.totalorder %v970, %v354
        %vm1171 = vcmp.eq.s32.totalorder %v977, %v354
        %vm1172 = vcmp.eq.s32.totalorder %v981, %v354
        %vm1173 = vcmp.eq.s32.totalorder %v988, %v354
        %vm1174 = vcmp.eq.s32.totalorder %v992, %v354
        %vm1175 = vcmp.eq.s32.totalorder %v999, %v354
        %vm1176 = vcmp.eq.s32.totalorder %v1003, %v354
        %vm1177 = vcmp.eq.s32.totalorder %v1010, %v354
        %vm1178 = vcmp.eq.s32.totalorder %v1014, %v354
        %vm1179 = vcmp.eq.s32.totalorder %v1021, %v354
        %vm1180 = vcmp.eq.s32.totalorder %v1025, %v354
        %vm1181 = vcmp.eq.s32.totalorder %v1032, %v354
        %vm1182 = vcmp.eq.s32.totalorder %v1036, %v354
        %vm1183 = vcmp.eq.s32.totalorder %v1043, %v354
        %vm1184 = vcmp.eq.s32.totalorder %v1047, %v354
        %vm1185 = vcmp.eq.s32.totalorder %v1054, %v354
        %vm1186 = vcmp.eq.s32.totalorder %v1058, %v354
        %v1187 = vsel %vm1059, 1.0, 0.0
        %v1188 = vsel %vm1060, 1.0, 0.0
        %v1189 = vsel %vm1061, 1.0, 0.0
        %v1190 = vsel %vm1062, 1.0, 0.0
        %v1191 = vsel %vm1063, 1.0, 0.0
        %v1192 = vsel %vm1064, 1.0, 0.0
        %v1193 = vsel %vm1065, 1.0, 0.0
        %v1194 = vsel %vm1066, 1.0, 0.0
        %v1195 = vsel %vm1067, 1.0, 0.0
        %v1196 = vsel %vm1068, 1.0, 0.0
        %v1197 = vsel %vm1069, 1.0, 0.0
        %v1198 = vsel %vm1070, 1.0, 0.0
        %v1199 = vsel %vm1071, 1.0, 0.0
        %v1200 = vsel %vm1072, 1.0, 0.0
        %v1201 = vsel %vm1073, 1.0, 0.0
        %v1202 = vsel %vm1074, 1.0, 0.0
        %v1203 = vsel %vm1075, 1.0, 0.0
        %v1204 = vsel %vm1076, 1.0, 0.0
        %v1205 = vsel %vm1077, 1.0, 0.0
        %v1206 = vsel %vm1078, 1.0, 0.0
        %v1207 = vsel %vm1079, 1.0, 0.0
        %v1208 = vsel %vm1080, 1.0, 0.0
        %v1209 = vsel %vm1081, 1.0, 0.0
        %v1210 = vsel %vm1082, 1.0, 0.0
        %v1211 = vsel %vm1083, 1.0, 0.0
        %v1212 = vsel %vm1084, 1.0, 0.0
        %v1213 = vsel %vm1085, 1.0, 0.0
        %v1214 = vsel %vm1086, 1.0, 0.0
        %v1215 = vsel %vm1087, 1.0, 0.0
        %v1216 = vsel %vm1088, 1.0, 0.0
        %v1217 = vsel %vm1089, 1.0, 0.0
        %v1218 = vsel %vm1090, 1.0, 0.0
        %v1219 = vsel %vm1091, 1.0, 0.0
        %v1220 = vsel %vm1092, 1.0, 0.0
        %v1221 = vsel %vm1093, 1.0, 0.0
        %v1222 = vsel %vm1094, 1.0, 0.0
        %v1223 = vsel %vm1095, 1.0, 0.0
        %v1224 = vsel %vm1096, 1.0, 0.0
        %v1225 = vsel %vm1097, 1.0, 0.0
        %v1226 = vsel %vm1098, 1.0, 0.0
        %v1227 = vsel %vm1099, 1.0, 0.0
        %v1228 = vsel %vm1100, 1.0, 0.0
        %v1229 = vsel %vm1101, 1.0, 0.0
        %v1230 = vsel %vm1102, 1.0, 0.0
        %v1231 = vsel %vm1103, 1.0, 0.0
        %v1232 = vsel %vm1104, 1.0, 0.0
        %v1233 = vsel %vm1105, 1.0, 0.0
        %v1234 = vsel %vm1106, 1.0, 0.0
        %v1235 = vsel %vm1107, 1.0, 0.0
        %v1236 = vsel %vm1108, 1.0, 0.0
        %v1237 = vsel %vm1109, 1.0, 0.0
        %v1238 = vsel %vm1110, 1.0, 0.0
        %v1239 = vsel %vm1111, 1.0, 0.0
        %v1240 = vsel %vm1112, 1.0, 0.0
        %v1241 = vsel %vm1113, 1.0, 0.0
        %v1242 = vsel %vm1114, 1.0, 0.0
        %v1243 = vsel %vm1115, 1.0, 0.0
        %v1244 = vsel %vm1116, 1.0, 0.0
        %v1245 = vsel %vm1117, 1.0, 0.0
        %v1246 = vsel %vm1118, 1.0, 0.0
        %v1247 = vsel %vm1119, 1.0, 0.0
        %v1248 = vsel %vm1120, 1.0, 0.0
        %v1249 = vsel %vm1121, 1.0, 0.0
        %v1250 = vsel %vm1122, 1.0, 0.0
        %v1251 = vsel %vm1123, 1.0, 0.0
        %v1252 = vsel %vm1124, 1.0, 0.0
        %v1253 = vsel %vm1125, 1.0, 0.0
        %v1254 = vsel %vm1126, 1.0, 0.0
        %v1255 = vsel %vm1127, 1.0, 0.0
        %v1256 = vsel %vm1128, 1.0, 0.0
        %v1257 = vsel %vm1129, 1.0, 0.0
        %v1258 = vsel %vm1130, 1.0, 0.0
        %v1259 = vsel %vm1131, 1.0, 0.0
        %v1260 = vsel %vm1132, 1.0, 0.0
        %v1261 = vsel %vm1133, 1.0, 0.0
        %v1262 = vsel %vm1134, 1.0, 0.0
        %v1263 = vsel %vm1135, 1.0, 0.0
        %v1264 = vsel %vm1136, 1.0, 0.0
        %v1265 = vsel %vm1137, 1.0, 0.0
        %v1266 = vsel %vm1138, 1.0, 0.0
        %v1267 = vsel %vm1139, 1.0, 0.0
        %v1268 = vsel %vm1140, 1.0, 0.0
        %v1269 = vsel %vm1141, 1.0, 0.0
        %v1270 = vsel %vm1142, 1.0, 0.0
        %v1271 = vsel %vm1143, 1.0, 0.0
        %v1272 = vsel %vm1144, 1.0, 0.0
        %v1273 = vsel %vm1145, 1.0, 0.0
        %v1274 = vsel %vm1146, 1.0, 0.0
        %v1275 = vsel %vm1147, 1.0, 0.0
        %v1276 = vsel %vm1148, 1.0, 0.0
        %v1277 = vsel %vm1149, 1.0, 0.0
        %v1278 = vsel %vm1150, 1.0, 0.0
        %v1279 = vsel %vm1151, 1.0, 0.0
        %v1280 = vsel %vm1152, 1.0, 0.0
        %v1281 = vsel %vm1153, 1.0, 0.0
        %v1282 = vsel %vm1154, 1.0, 0.0
        %v1283 = vsel %vm1155, 1.0, 0.0
        %v1284 = vsel %vm1156, 1.0, 0.0
        %v1285 = vsel %vm1157, 1.0, 0.0
        %v1286 = vsel %vm1158, 1.0, 0.0
        %v1287 = vsel %vm1159, 1.0, 0.0
        %v1288 = vsel %vm1160, 1.0, 0.0
        %v1289 = vsel %vm1161, 1.0, 0.0
        %v1290 = vsel %vm1162, 1.0, 0.0
        %v1291 = vsel %vm1163, 1.0, 0.0
        %v1292 = vsel %vm1164, 1.0, 0.0
        %v1293 = vsel %vm1165, 1.0, 0.0
        %v1294 = vsel %vm1166, 1.0, 0.0
        %v1295 = vsel %vm1167, 1.0, 0.0
        %v1296 = vsel %vm1168, 1.0, 0.0
        %v1297 = vsel %vm1169, 1.0, 0.0
        %v1298 = vsel %vm1170, 1.0, 0.0
        %v1299 = vsel %vm1171, 1.0, 0.0
        %v1300 = vsel %vm1172, 1.0, 0.0
        %v1301 = vsel %vm1173, 1.0, 0.0
        %v1302 = vsel %vm1174, 1.0, 0.0
        %v1303 = vsel %vm1175, 1.0, 0.0
        %v1304 = vsel %vm1176, 1.0, 0.0
        %v1305 = vsel %vm1177, 1.0, 0.0
        %v1306 = vsel %vm1178, 1.0, 0.0
        %v1307 = vsel %vm1179, 1.0, 0.0
        %v1308 = vsel %vm1180, 1.0, 0.0
        %v1309 = vsel %vm1181, 1.0, 0.0
        %v1310 = vsel %vm1182, 1.0, 0.0
        %v1311 = vsel %vm1183, 1.0, 0.0
        %v1312 = vsel %vm1184, 1.0, 0.0
        %v1313 = vsel %vm1185, 1.0, 0.0
        %v1314 = vsel %vm1186, 1.0, 0.0
        %v1315 = vpack.c.bf16 %v1188, %v1187
        %v1316 = vpack.c.bf16 %v1190, %v1189
        %v1317 = vpack.c.bf16 %v1192, %v1191
        %v1318 = vpack.c.bf16 %v1194, %v1193
        %v1319 = vpack.c.bf16 %v1196, %v1195
        %v1320 = vpack.c.bf16 %v1198, %v1197
        %v1321 = vpack.c.bf16 %v1200, %v1199
        %v1322 = vpack.c.bf16 %v1202, %v1201
        %v1323 = vpack.c.bf16 %v1204, %v1203
        %v1324 = vpack.c.bf16 %v1206, %v1205
        %v1325 = vpack.c.bf16 %v1208, %v1207
        %v1326 = vpack.c.bf16 %v1210, %v1209
        %v1327 = vpack.c.bf16 %v1212, %v1211
        %v1328 = vpack.c.bf16 %v1214, %v1213
        %v1329 = vpack.c.bf16 %v1216, %v1215
        %v1330 = vpack.c.bf16 %v1218, %v1217
        %v1331 = vpack.c.bf16 %v1220, %v1219
        %v1332 = vpack.c.bf16 %v1222, %v1221
        %v1333 = vpack.c.bf16 %v1224, %v1223
        %v1334 = vpack.c.bf16 %v1226, %v1225
        %v1335 = vpack.c.bf16 %v1228, %v1227
        %v1336 = vpack.c.bf16 %v1230, %v1229
        %v1337 = vpack.c.bf16 %v1232, %v1231
        %v1338 = vpack.c.bf16 %v1234, %v1233
        %v1339 = vpack.c.bf16 %v1236, %v1235
        %v1340 = vpack.c.bf16 %v1238, %v1237
        %v1341 = vpack.c.bf16 %v1240, %v1239
        %v1342 = vpack.c.bf16 %v1242, %v1241
        %v1343 = vpack.c.bf16 %v1244, %v1243
        %v1344 = vpack.c.bf16 %v1246, %v1245
        %v1345 = vpack.c.bf16 %v1248, %v1247
        %v1346 = vpack.c.bf16 %v1250, %v1249
        %v1347 = vpack.c.bf16 %v1252, %v1251
        %v1348 = vpack.c.bf16 %v1254, %v1253
        %v1349 = vpack.c.bf16 %v1256, %v1255
        %v1350 = vpack.c.bf16 %v1258, %v1257
        %v1351 = vpack.c.bf16 %v1260, %v1259
        %v1352 = vpack.c.bf16 %v1262, %v1261
        %v1353 = vpack.c.bf16 %v1264, %v1263
        %v1354 = vpack.c.bf16 %v1266, %v1265
        %v1355 = vpack.c.bf16 %v1268, %v1267
        %v1356 = vpack.c.bf16 %v1270, %v1269
        %v1357 = vpack.c.bf16 %v1272, %v1271
        %v1358 = vpack.c.bf16 %v1274, %v1273
        %v1359 = vpack.c.bf16 %v1276, %v1275
        %v1360 = vpack.c.bf16 %v1278, %v1277
        %v1361 = vpack.c.bf16 %v1280, %v1279
        %v1362 = vpack.c.bf16 %v1282, %v1281
        %v1363 = vpack.c.bf16 %v1284, %v1283
        %v1364 = vpack.c.bf16 %v1286, %v1285
        %v1365 = vpack.c.bf16 %v1288, %v1287
        %v1366 = vpack.c.bf16 %v1290, %v1289
        %v1367 = vpack.c.bf16 %v1292, %v1291
        %v1368 = vpack.c.bf16 %v1294, %v1293
        %v1369 = vpack.c.bf16 %v1296, %v1295
        %v1370 = vpack.c.bf16 %v1298, %v1297
        %v1371 = vpack.c.bf16 %v1300, %v1299
        %v1372 = vpack.c.bf16 %v1302, %v1301
        %v1373 = vpack.c.bf16 %v1304, %v1303
        %v1374 = vpack.c.bf16 %v1306, %v1305
        %v1375 = vpack.c.bf16 %v1308, %v1307
        %v1376 = vpack.c.bf16 %v1310, %v1309
        %v1377 = vpack.c.bf16 %v1312, %v1311
        %v1378 = vpack.c.bf16 %v1314, %v1313
        %v1379 = vld [vmem:[%s1] sm:$0xf]
        %v1380 = vld [vmem:[%s1 + $0x4] sm:$0xf]
        %v1381 = vld [vmem:[%s1 + $0x8] sm:$0xf]
        %v1382 = vld [vmem:[%s1 + $0xc] sm:$0xf]
        %v1383 = vld [vmem:[%s1 + $0x10] sm:$0xf]
        %v1384 = vld [vmem:[%s1 + $0x14] sm:$0xf]
        %v1385 = vld [vmem:[%s1 + $0x18] sm:$0xf]
        %v1386 = vld [vmem:[%s1 + $0x1c] sm:$0xf]
        %v1387 = vld [vmem:[%s1 + $0x20] sm:$0xf]
        %v1388 = vld [vmem:[%s1 + $0x24] sm:$0xf]
        %v1389 = vld [vmem:[%s1 + $0x28] sm:$0xf]
        %v1390 = vld [vmem:[%s1 + $0x2c] sm:$0xf]
        %v1391 = vld [vmem:[%s1 + $0x30] sm:$0xf]
        %v1392 = vld [vmem:[%s1 + $0x34] sm:$0xf]
        %v1393 = vld [vmem:[%s1 + $0x38] sm:$0xf]
        %v1394 = vld [vmem:[%s1 + $0x3c] sm:$0xf]
        %v1411 = vunpack.c.l.b16 %v1379
        %v1412 = vunpack.c.l.b16 %v1380
        %v1413 = vunpack.c.l.b16 %v1381
        %v1414 = vunpack.c.l.b16 %v1382
        %v1415 = vunpack.c.l.b16 %v1383
        %v1416 = vunpack.c.l.b16 %v1384
        %v1417 = vunpack.c.l.b16 %v1385
        %v1418 = vunpack.c.l.b16 %v1386
        %v1419 = vunpack.c.l.b16 %v1387
        %v1420 = vunpack.c.l.b16 %v1388
        %v1421 = vunpack.c.l.b16 %v1389
        %v1422 = vunpack.c.l.b16 %v1390
        %v1423 = vunpack.c.l.b16 %v1391
        %v1424 = vunpack.c.l.b16 %v1392
        %v1425 = vunpack.c.l.b16 %v1393
        %v1426 = vunpack.c.l.b16 %v1394
        %v1427 = vpack.c.b16 %v1412, %v1411
        %v1428 = vpack.c.b16 %v1414, %v1413
        %v1429 = vpack.c.b16 %v1416, %v1415
        %v1430 = vpack.c.b16 %v1418, %v1417
        %v1431 = vpack.c.b16 %v1420, %v1419
        %v1432 = vpack.c.b16 %v1422, %v1421
        %v1433 = vpack.c.b16 %v1424, %v1423
        %v1434 = vpack.c.b16 %v1426, %v1425
        %1443 = vmatprep.subr.bf16.mxu0 0
        %1444 = vmatpush1.bf16.msra.mxu0 %v1434
        %1445 = vmatprep.subr.bf16.mxu0 0
        %1446 = vmatpush1.bf16.msra.mxu0 %v1433
        %1447 = vmatprep.subr.bf16.mxu0 0
        %1448 = vmatpush1.bf16.msra.mxu0 %v1432
        %1449 = vmatprep.subr.bf16.mxu0 0
        %1450 = vmatpush1.bf16.msra.mxu0 %v1431
        %1451 = vmatprep.subr.bf16.mxu0 0
        %1452 = vmatpush1.bf16.msra.mxu0 %v1430
        %1453 = vmatprep.subr.bf16.mxu0 0
        %1454 = vmatpush1.bf16.msra.mxu0 %v1429
        %1455 = vmatprep.subr.bf16.mxu0 0
        %1456 = vmatpush1.bf16.msra.mxu0 %v1428
        %1457 = vmatprep.subr.bf16.mxu0 0
        %1458 = vmatpush1.bf16.msra.mxu0 %v1427
        %1459 = vmatprep.subr.bf16.mxu0 0
        %1460 = vmatpush2.bf16.msra.mxu0 0
        %1461 = vmatprep.subr.bf16.mxu0 0
        %1462 = vmatpush2.bf16.msra.mxu0 0
        %1463 = vmatprep.subr.bf16.mxu0 0
        %1464 = vmatpush2.bf16.msra.mxu0 0
        %1465 = vmatprep.subr.bf16.mxu0 0
        %1466 = vmatpush2.bf16.msra.mxu0 0
        %1467 = vmatprep.subr.bf16.mxu0 0
        %1468 = vmatpush2.bf16.msra.mxu0 0
        %1469 = vmatprep.subr.bf16.mxu0 0
        %1470 = vmatpush2.bf16.msra.mxu0 0
        %1471 = vmatprep.subr.bf16.mxu0 0
        %1472 = vmatpush2.bf16.msra.mxu0 0
        %1473 = vmatprep.subr.bf16.mxu0 0
        %1474 = vmatpush2.bf16.msra.mxu0 0
        %1475 = vmatprep.mubr.bf16.mxu0 0
        %1476 = vmatmul.mubr.bf16.gmra.mxu0 %v1315
        %v1477 = vpop.f32.mrf.mxu0
        %v1478 = vadd.f32 0.0, %v1477
        %v1479 = vpop.f32.mrf.mxu0
        %v1480 = vpop.f32.mrf.mxu0
        %v1481 = vadd.f32 0.0, %v1480
        %v1482 = vpop.f32.mrf.mxu0
        %1483 = vmatprep.mubr.bf16.mxu0 0
        %1484 = vmatmul.mubr.bf16.gmra.mxu0 %v1316
        %v1485 = vpop.f32.mrf.mxu0
        %v1486 = vadd.f32 0.0, %v1485
        %v1487 = vpop.f32.mrf.mxu0
        %v1488 = vpop.f32.mrf.mxu0
        %v1489 = vadd.f32 0.0, %v1488
        %v1490 = vpop.f32.mrf.mxu0
        %1491 = vmatprep.mubr.bf16.mxu0 0
        %1492 = vmatmul.mubr.bf16.gmra.mxu0 %v1317
        %v1493 = vpop.f32.mrf.mxu0
        %v1494 = vadd.f32 0.0, %v1493
        %v1495 = vpop.f32.mrf.mxu0
        %v1496 = vpop.f32.mrf.mxu0
        %v1497 = vadd.f32 0.0, %v1496
        %v1498 = vpop.f32.mrf.mxu0
        %1499 = vmatprep.mubr.bf16.mxu0 0
        %1500 = vmatmul.mubr.bf16.gmra.mxu0 %v1318
        %v1501 = vpop.f32.mrf.mxu0
        %v1502 = vadd.f32 0.0, %v1501
        %v1503 = vpop.f32.mrf.mxu0
        %v1504 = vpop.f32.mrf.mxu0
        %v1505 = vadd.f32 0.0, %v1504
        %v1506 = vpop.f32.mrf.mxu0
        %1507 = vmatprep.mubr.bf16.mxu0 0
        %1508 = vmatmul.mubr.bf16.gmra.mxu0 %v1319
        %v1509 = vpop.f32.mrf.mxu0
        %v1510 = vadd.f32 0.0, %v1509
        %v1511 = vpop.f32.mrf.mxu0
        %v1512 = vpop.f32.mrf.mxu0
        %v1513 = vadd.f32 0.0, %v1512
        %v1514 = vpop.f32.mrf.mxu0
        %1515 = vmatprep.mubr.bf16.mxu0 0
        %1516 = vmatmul.mubr.bf16.gmra.mxu0 %v1320
        %v1517 = vpop.f32.mrf.mxu0
        %v1518 = vadd.f32 0.0, %v1517
        %v1519 = vpop.f32.mrf.mxu0
        %v1520 = vpop.f32.mrf.mxu0
        %v1521 = vadd.f32 0.0, %v1520
        %v1522 = vpop.f32.mrf.mxu0
        %1523 = vmatprep.mubr.bf16.mxu0 0
        %1524 = vmatmul.mubr.bf16.gmra.mxu0 %v1321
        %v1525 = vpop.f32.mrf.mxu0
        %v1526 = vadd.f32 0.0, %v1525
        %v1527 = vpop.f32.mrf.mxu0
        %v1528 = vpop.f32.mrf.mxu0
        %v1529 = vadd.f32 0.0, %v1528
        %v1530 = vpop.f32.mrf.mxu0
        %1531 = vmatprep.mubr.bf16.mxu0 0
        %1532 = vmatmul.mubr.bf16.gmra.mxu0 %v1322
        %v1533 = vpop.f32.mrf.mxu0
        %v1534 = vadd.f32 0.0, %v1533
        %v1535 = vpop.f32.mrf.mxu0
        %v1536 = vpop.f32.mrf.mxu0
        %v1537 = vadd.f32 0.0, %v1536
        %v1538 = vpop.f32.mrf.mxu0
        %1539 = vmatprep.mubr.bf16.mxu0 0
        %1540 = vmatmul.mubr.bf16.gmra.mxu0 %v1323
        %v1541 = vpop.f32.mrf.mxu0
        %v1542 = vadd.f32 0.0, %v1541
        %v1543 = vpop.f32.mrf.mxu0
        %v1544 = vpop.f32.mrf.mxu0
        %v1545 = vadd.f32 0.0, %v1544
        %v1546 = vpop.f32.mrf.mxu0
        %1547 = vmatprep.mubr.bf16.mxu0 0
        %1548 = vmatmul.mubr.bf16.gmra.mxu0 %v1324
        %v1549 = vpop.f32.mrf.mxu0
        %v1550 = vadd.f32 0.0, %v1549
        %v1551 = vpop.f32.mrf.mxu0
        %v1552 = vpop.f32.mrf.mxu0
        %v1553 = vadd.f32 0.0, %v1552
        %v1554 = vpop.f32.mrf.mxu0
        %1555 = vmatprep.mubr.bf16.mxu0 0
        %1556 = vmatmul.mubr.bf16.gmra.mxu0 %v1325
        %v1557 = vpop.f32.mrf.mxu0
        %v1558 = vadd.f32 0.0, %v1557
        %v1559 = vpop.f32.mrf.mxu0
        %v1560 = vpop.f32.mrf.mxu0
        %v1561 = vadd.f32 0.0, %v1560
        %v1562 = vpop.f32.mrf.mxu0
        %1563 = vmatprep.mubr.bf16.mxu0 0
        %1564 = vmatmul.mubr.bf16.gmra.mxu0 %v1326
        %v1565 = vpop.f32.mrf.mxu0
        %v1566 = vadd.f32 0.0, %v1565
        %v1567 = vpop.f32.mrf.mxu0
        %v1568 = vpop.f32.mrf.mxu0
        %v1569 = vadd.f32 0.0, %v1568
        %v1570 = vpop.f32.mrf.mxu0
        %1571 = vmatprep.mubr.bf16.mxu0 0
        %1572 = vmatmul.mubr.bf16.gmra.mxu0 %v1327
        %v1573 = vpop.f32.mrf.mxu0
        %v1574 = vadd.f32 0.0, %v1573
        %v1575 = vpop.f32.mrf.mxu0
        %v1576 = vpop.f32.mrf.mxu0
        %v1577 = vadd.f32 0.0, %v1576
        %v1578 = vpop.f32.mrf.mxu0
        %1579 = vmatprep.mubr.bf16.mxu0 0
        %1580 = vmatmul.mubr.bf16.gmra.mxu0 %v1328
        %v1581 = vpop.f32.mrf.mxu0
        %v1582 = vadd.f32 0.0, %v1581
        %v1583 = vpop.f32.mrf.mxu0
        %v1584 = vpop.f32.mrf.mxu0
        %v1585 = vadd.f32 0.0, %v1584
        %v1586 = vpop.f32.mrf.mxu0
        %1587 = vmatprep.mubr.bf16.mxu0 0
        %1588 = vmatmul.mubr.bf16.gmra.mxu0 %v1329
        %v1589 = vpop.f32.mrf.mxu0
        %v1590 = vadd.f32 0.0, %v1589
        %v1591 = vpop.f32.mrf.mxu0
        %v1592 = vpop.f32.mrf.mxu0
        %v1593 = vadd.f32 0.0, %v1592
        %v1594 = vpop.f32.mrf.mxu0
        %1595 = vmatprep.mubr.bf16.mxu0 0
        %1596 = vmatmul.mubr.bf16.gmra.mxu0 %v1330
        %v1597 = vpop.f32.mrf.mxu0
        %v1598 = vadd.f32 0.0, %v1597
        %v1599 = vpop.f32.mrf.mxu0
        %v1600 = vpop.f32.mrf.mxu0
        %v1601 = vadd.f32 0.0, %v1600
        %v1602 = vpop.f32.mrf.mxu0
        %1603 = vmatprep.mubr.bf16.mxu0 0
        %1604 = vmatmul.mubr.bf16.gmra.mxu0 %v1331
        %v1605 = vpop.f32.mrf.mxu0
        %v1606 = vadd.f32 0.0, %v1605
        %v1607 = vpop.f32.mrf.mxu0
        %v1608 = vpop.f32.mrf.mxu0
        %v1609 = vadd.f32 0.0, %v1608
        %v1610 = vpop.f32.mrf.mxu0
        %1611 = vmatprep.mubr.bf16.mxu0 0
        %1612 = vmatmul.mubr.bf16.gmra.mxu0 %v1332
        %v1613 = vpop.f32.mrf.mxu0
        %v1614 = vadd.f32 0.0, %v1613
        %v1615 = vpop.f32.mrf.mxu0
        %v1616 = vpop.f32.mrf.mxu0
        %v1617 = vadd.f32 0.0, %v1616
        %v1618 = vpop.f32.mrf.mxu0
        %1619 = vmatprep.mubr.bf16.mxu0 0
        %1620 = vmatmul.mubr.bf16.gmra.mxu0 %v1333
        %v1621 = vpop.f32.mrf.mxu0
        %v1622 = vadd.f32 0.0, %v1621
        %v1623 = vpop.f32.mrf.mxu0
        %v1624 = vpop.f32.mrf.mxu0
        %v1625 = vadd.f32 0.0, %v1624
        %v1626 = vpop.f32.mrf.mxu0
        %1627 = vmatprep.mubr.bf16.mxu0 0
        %1628 = vmatmul.mubr.bf16.gmra.mxu0 %v1334
        %v1629 = vpop.f32.mrf.mxu0
        %v1630 = vadd.f32 0.0, %v1629
        %v1631 = vpop.f32.mrf.mxu0
        %v1632 = vpop.f32.mrf.mxu0
        %v1633 = vadd.f32 0.0, %v1632
        %v1634 = vpop.f32.mrf.mxu0
        %1635 = vmatprep.mubr.bf16.mxu0 0
        %1636 = vmatmul.mubr.bf16.gmra.mxu0 %v1335
        %v1637 = vpop.f32.mrf.mxu0
        %v1638 = vadd.f32 0.0, %v1637
        %v1639 = vpop.f32.mrf.mxu0
        %v1640 = vpop.f32.mrf.mxu0
        %v1641 = vadd.f32 0.0, %v1640
        %v1642 = vpop.f32.mrf.mxu0
        %1643 = vmatprep.mubr.bf16.mxu0 0
        %1644 = vmatmul.mubr.bf16.gmra.mxu0 %v1336
        %v1645 = vpop.f32.mrf.mxu0
        %v1646 = vadd.f32 0.0, %v1645
        %v1647 = vpop.f32.mrf.mxu0
        %v1648 = vpop.f32.mrf.mxu0
        %v1649 = vadd.f32 0.0, %v1648
        %v1650 = vpop.f32.mrf.mxu0
        %1651 = vmatprep.mubr.bf16.mxu0 0
        %1652 = vmatmul.mubr.bf16.gmra.mxu0 %v1337
        %v1653 = vpop.f32.mrf.mxu0
        %v1654 = vadd.f32 0.0, %v1653
        %v1655 = vpop.f32.mrf.mxu0
        %v1656 = vpop.f32.mrf.mxu0
        %v1657 = vadd.f32 0.0, %v1656
        %v1658 = vpop.f32.mrf.mxu0
        %1659 = vmatprep.mubr.bf16.mxu0 0
        %1660 = vmatmul.mubr.bf16.gmra.mxu0 %v1338
        %v1661 = vpop.f32.mrf.mxu0
        %v1662 = vadd.f32 0.0, %v1661
        %v1663 = vpop.f32.mrf.mxu0
        %v1664 = vpop.f32.mrf.mxu0
        %v1665 = vadd.f32 0.0, %v1664
        %v1666 = vpop.f32.mrf.mxu0
        %1667 = vmatprep.mubr.bf16.mxu0 0
        %1668 = vmatmul.mubr.bf16.gmra.mxu0 %v1339
        %v1669 = vpop.f32.mrf.mxu0
        %v1670 = vadd.f32 0.0, %v1669
        %v1671 = vpop.f32.mrf.mxu0
        %v1672 = vpop.f32.mrf.mxu0
        %v1673 = vadd.f32 0.0, %v1672
        %v1674 = vpop.f32.mrf.mxu0
        %1675 = vmatprep.mubr.bf16.mxu0 0
        %1676 = vmatmul.mubr.bf16.gmra.mxu0 %v1340
        %v1677 = vpop.f32.mrf.mxu0
        %v1678 = vadd.f32 0.0, %v1677
        %v1679 = vpop.f32.mrf.mxu0
        %v1680 = vpop.f32.mrf.mxu0
        %v1681 = vadd.f32 0.0, %v1680
        %v1682 = vpop.f32.mrf.mxu0
        %1683 = vmatprep.mubr.bf16.mxu0 0
        %1684 = vmatmul.mubr.bf16.gmra.mxu0 %v1341
        %v1685 = vpop.f32.mrf.mxu0
        %v1686 = vadd.f32 0.0, %v1685
        %v1687 = vpop.f32.mrf.mxu0
        %v1688 = vpop.f32.mrf.mxu0
        %v1689 = vadd.f32 0.0, %v1688
        %v1690 = vpop.f32.mrf.mxu0
        %1691 = vmatprep.mubr.bf16.mxu0 0
        %1692 = vmatmul.mubr.bf16.gmra.mxu0 %v1342
        %v1693 = vpop.f32.mrf.mxu0
        %v1694 = vadd.f32 0.0, %v1693
        %v1695 = vpop.f32.mrf.mxu0
        %v1696 = vpop.f32.mrf.mxu0
        %v1697 = vadd.f32 0.0, %v1696
        %v1698 = vpop.f32.mrf.mxu0
        %1699 = vmatprep.mubr.bf16.mxu0 0
        %1700 = vmatmul.mubr.bf16.gmra.mxu0 %v1343
        %v1701 = vpop.f32.mrf.mxu0
        %v1702 = vadd.f32 0.0, %v1701
        %v1703 = vpop.f32.mrf.mxu0
        %v1704 = vpop.f32.mrf.mxu0
        %v1705 = vadd.f32 0.0, %v1704
        %v1706 = vpop.f32.mrf.mxu0
        %1707 = vmatprep.mubr.bf16.mxu0 0
        %1708 = vmatmul.mubr.bf16.gmra.mxu0 %v1344
        %v1709 = vpop.f32.mrf.mxu0
        %v1710 = vadd.f32 0.0, %v1709
        %v1711 = vpop.f32.mrf.mxu0
        %v1712 = vpop.f32.mrf.mxu0
        %v1713 = vadd.f32 0.0, %v1712
        %v1714 = vpop.f32.mrf.mxu0
        %1715 = vmatprep.mubr.bf16.mxu0 0
        %1716 = vmatmul.mubr.bf16.gmra.mxu0 %v1345
        %v1717 = vpop.f32.mrf.mxu0
        %v1718 = vadd.f32 0.0, %v1717
        %v1719 = vpop.f32.mrf.mxu0
        %v1720 = vpop.f32.mrf.mxu0
        %v1721 = vadd.f32 0.0, %v1720
        %v1722 = vpop.f32.mrf.mxu0
        %1723 = vmatprep.mubr.bf16.mxu0 0
        %1724 = vmatmul.mubr.bf16.gmra.mxu0 %v1346
        %v1725 = vpop.f32.mrf.mxu0
        %v1726 = vadd.f32 0.0, %v1725
        %v1727 = vpop.f32.mrf.mxu0
        %v1728 = vpop.f32.mrf.mxu0
        %v1729 = vadd.f32 0.0, %v1728
        %v1730 = vpop.f32.mrf.mxu0
        %1731 = vmatprep.mubr.bf16.mxu0 0
        %1732 = vmatmul.mubr.bf16.gmra.mxu0 %v1347
        %v1733 = vpop.f32.mrf.mxu0
        %v1734 = vadd.f32 0.0, %v1733
        %v1735 = vpop.f32.mrf.mxu0
        %v1736 = vpop.f32.mrf.mxu0
        %v1737 = vadd.f32 0.0, %v1736
        %v1738 = vpop.f32.mrf.mxu0
        %1739 = vmatprep.mubr.bf16.mxu0 0
        %1740 = vmatmul.mubr.bf16.gmra.mxu0 %v1348
        %v1741 = vpop.f32.mrf.mxu0
        %v1742 = vadd.f32 0.0, %v1741
        %v1743 = vpop.f32.mrf.mxu0
        %v1744 = vpop.f32.mrf.mxu0
        %v1745 = vadd.f32 0.0, %v1744
        %v1746 = vpop.f32.mrf.mxu0
        %1747 = vmatprep.mubr.bf16.mxu0 0
        %1748 = vmatmul.mubr.bf16.gmra.mxu0 %v1349
        %v1749 = vpop.f32.mrf.mxu0
        %v1750 = vadd.f32 0.0, %v1749
        %v1751 = vpop.f32.mrf.mxu0
        %v1752 = vpop.f32.mrf.mxu0
        %v1753 = vadd.f32 0.0, %v1752
        %v1754 = vpop.f32.mrf.mxu0
        %1755 = vmatprep.mubr.bf16.mxu0 0
        %1756 = vmatmul.mubr.bf16.gmra.mxu0 %v1350
        %v1757 = vpop.f32.mrf.mxu0
        %v1758 = vadd.f32 0.0, %v1757
        %v1759 = vpop.f32.mrf.mxu0
        %v1760 = vpop.f32.mrf.mxu0
        %v1761 = vadd.f32 0.0, %v1760
        %v1762 = vpop.f32.mrf.mxu0
        %1763 = vmatprep.mubr.bf16.mxu0 0
        %1764 = vmatmul.mubr.bf16.gmra.mxu0 %v1351
        %v1765 = vpop.f32.mrf.mxu0
        %v1766 = vadd.f32 0.0, %v1765
        %v1767 = vpop.f32.mrf.mxu0
        %v1768 = vpop.f32.mrf.mxu0
        %v1769 = vadd.f32 0.0, %v1768
        %v1770 = vpop.f32.mrf.mxu0
        %1771 = vmatprep.mubr.bf16.mxu0 0
        %1772 = vmatmul.mubr.bf16.gmra.mxu0 %v1352
        %v1773 = vpop.f32.mrf.mxu0
        %v1774 = vadd.f32 0.0, %v1773
        %v1775 = vpop.f32.mrf.mxu0
        %v1776 = vpop.f32.mrf.mxu0
        %v1777 = vadd.f32 0.0, %v1776
        %v1778 = vpop.f32.mrf.mxu0
        %1779 = vmatprep.mubr.bf16.mxu0 0
        %1780 = vmatmul.mubr.bf16.gmra.mxu0 %v1353
        %v1781 = vpop.f32.mrf.mxu0
        %v1782 = vadd.f32 0.0, %v1781
        %v1783 = vpop.f32.mrf.mxu0
        %v1784 = vpop.f32.mrf.mxu0
        %v1785 = vadd.f32 0.0, %v1784
        %v1786 = vpop.f32.mrf.mxu0
        %1787 = vmatprep.mubr.bf16.mxu0 0
        %1788 = vmatmul.mubr.bf16.gmra.mxu0 %v1354
        %v1789 = vpop.f32.mrf.mxu0
        %v1790 = vadd.f32 0.0, %v1789
        %v1791 = vpop.f32.mrf.mxu0
        %v1792 = vpop.f32.mrf.mxu0
        %v1793 = vadd.f32 0.0, %v1792
        %v1794 = vpop.f32.mrf.mxu0
        %1795 = vmatprep.mubr.bf16.mxu0 0
        %1796 = vmatmul.mubr.bf16.gmra.mxu0 %v1355
        %v1797 = vpop.f32.mrf.mxu0
        %v1798 = vadd.f32 0.0, %v1797
        %v1799 = vpop.f32.mrf.mxu0
        %v1800 = vpop.f32.mrf.mxu0
        %v1801 = vadd.f32 0.0, %v1800
        %v1802 = vpop.f32.mrf.mxu0
        %1803 = vmatprep.mubr.bf16.mxu0 0
        %1804 = vmatmul.mubr.bf16.gmra.mxu0 %v1356
        %v1805 = vpop.f32.mrf.mxu0
        %v1806 = vadd.f32 0.0, %v1805
        %v1807 = vpop.f32.mrf.mxu0
        %v1808 = vpop.f32.mrf.mxu0
        %v1809 = vadd.f32 0.0, %v1808
        %v1810 = vpop.f32.mrf.mxu0
        %1811 = vmatprep.mubr.bf16.mxu0 0
        %1812 = vmatmul.mubr.bf16.gmra.mxu0 %v1357
        %v1813 = vpop.f32.mrf.mxu0
        %v1814 = vadd.f32 0.0, %v1813
        %v1815 = vpop.f32.mrf.mxu0
        %v1816 = vpop.f32.mrf.mxu0
        %v1817 = vadd.f32 0.0, %v1816
        %v1818 = vpop.f32.mrf.mxu0
        %1819 = vmatprep.mubr.bf16.mxu0 0
        %1820 = vmatmul.mubr.bf16.gmra.mxu0 %v1358
        %v1821 = vpop.f32.mrf.mxu0
        %v1822 = vadd.f32 0.0, %v1821
        %v1823 = vpop.f32.mrf.mxu0
        %v1824 = vpop.f32.mrf.mxu0
        %v1825 = vadd.f32 0.0, %v1824
        %v1826 = vpop.f32.mrf.mxu0
        %1827 = vmatprep.mubr.bf16.mxu0 0
        %1828 = vmatmul.mubr.bf16.gmra.mxu0 %v1359
        %v1829 = vpop.f32.mrf.mxu0
        %v1830 = vadd.f32 0.0, %v1829
        %v1831 = vpop.f32.mrf.mxu0
        %v1832 = vpop.f32.mrf.mxu0
        %v1833 = vadd.f32 0.0, %v1832
        %v1834 = vpop.f32.mrf.mxu0
        %1835 = vmatprep.mubr.bf16.mxu0 0
        %1836 = vmatmul.mubr.bf16.gmra.mxu0 %v1360
        %v1837 = vpop.f32.mrf.mxu0
        %v1838 = vadd.f32 0.0, %v1837
        %v1839 = vpop.f32.mrf.mxu0
        %v1840 = vpop.f32.mrf.mxu0
        %v1841 = vadd.f32 0.0, %v1840
        %v1842 = vpop.f32.mrf.mxu0
        %1843 = vmatprep.mubr.bf16.mxu0 0
        %1844 = vmatmul.mubr.bf16.gmra.mxu0 %v1361
        %v1845 = vpop.f32.mrf.mxu0
        %v1846 = vadd.f32 0.0, %v1845
        %v1847 = vpop.f32.mrf.mxu0
        %v1848 = vpop.f32.mrf.mxu0
        %v1849 = vadd.f32 0.0, %v1848
        %v1850 = vpop.f32.mrf.mxu0
        %1851 = vmatprep.mubr.bf16.mxu0 0
        %1852 = vmatmul.mubr.bf16.gmra.mxu0 %v1362
        %v1853 = vpop.f32.mrf.mxu0
        %v1854 = vadd.f32 0.0, %v1853
        %v1855 = vpop.f32.mrf.mxu0
        %v1856 = vpop.f32.mrf.mxu0
        %v1857 = vadd.f32 0.0, %v1856
        %v1858 = vpop.f32.mrf.mxu0
        %1859 = vmatprep.mubr.bf16.mxu0 0
        %1860 = vmatmul.mubr.bf16.gmra.mxu0 %v1363
        %v1861 = vpop.f32.mrf.mxu0
        %v1862 = vadd.f32 0.0, %v1861
        %v1863 = vpop.f32.mrf.mxu0
        %v1864 = vpop.f32.mrf.mxu0
        %v1865 = vadd.f32 0.0, %v1864
        %v1866 = vpop.f32.mrf.mxu0
        %1867 = vmatprep.mubr.bf16.mxu0 0
        %1868 = vmatmul.mubr.bf16.gmra.mxu0 %v1364
        %v1869 = vpop.f32.mrf.mxu0
        %v1870 = vadd.f32 0.0, %v1869
        %v1871 = vpop.f32.mrf.mxu0
        %v1872 = vpop.f32.mrf.mxu0
        %v1873 = vadd.f32 0.0, %v1872
        %v1874 = vpop.f32.mrf.mxu0
        %1875 = vmatprep.mubr.bf16.mxu0 0
        %1876 = vmatmul.mubr.bf16.gmra.mxu0 %v1365
        %v1877 = vpop.f32.mrf.mxu0
        %v1878 = vadd.f32 0.0, %v1877
        %v1879 = vpop.f32.mrf.mxu0
        %v1880 = vpop.f32.mrf.mxu0
        %v1881 = vadd.f32 0.0, %v1880
        %v1882 = vpop.f32.mrf.mxu0
        %1883 = vmatprep.mubr.bf16.mxu0 0
        %1884 = vmatmul.mubr.bf16.gmra.mxu0 %v1366
        %v1885 = vpop.f32.mrf.mxu0
        %v1886 = vadd.f32 0.0, %v1885
        %v1887 = vpop.f32.mrf.mxu0
        %v1888 = vpop.f32.mrf.mxu0
        %v1889 = vadd.f32 0.0, %v1888
        %v1890 = vpop.f32.mrf.mxu0
        %1891 = vmatprep.mubr.bf16.mxu0 0
        %1892 = vmatmul.mubr.bf16.gmra.mxu0 %v1367
        %v1893 = vpop.f32.mrf.mxu0
        %v1894 = vadd.f32 0.0, %v1893
        %v1895 = vpop.f32.mrf.mxu0
        %v1896 = vpop.f32.mrf.mxu0
        %v1897 = vadd.f32 0.0, %v1896
        %v1898 = vpop.f32.mrf.mxu0
        %1899 = vmatprep.mubr.bf16.mxu0 0
        %1900 = vmatmul.mubr.bf16.gmra.mxu0 %v1368
        %v1901 = vpop.f32.mrf.mxu0
        %v1902 = vadd.f32 0.0, %v1901
        %v1903 = vpop.f32.mrf.mxu0
        %v1904 = vpop.f32.mrf.mxu0
        %v1905 = vadd.f32 0.0, %v1904
        %v1906 = vpop.f32.mrf.mxu0
        %1907 = vmatprep.mubr.bf16.mxu0 0
        %1908 = vmatmul.mubr.bf16.gmra.mxu0 %v1369
        %v1909 = vpop.f32.mrf.mxu0
        %v1910 = vadd.f32 0.0, %v1909
        %v1911 = vpop.f32.mrf.mxu0
        %v1912 = vpop.f32.mrf.mxu0
        %v1913 = vadd.f32 0.0, %v1912
        %v1914 = vpop.f32.mrf.mxu0
        %1915 = vmatprep.mubr.bf16.mxu0 0
        %1916 = vmatmul.mubr.bf16.gmra.mxu0 %v1370
        %v1917 = vpop.f32.mrf.mxu0
        %v1918 = vadd.f32 0.0, %v1917
        %v1919 = vpop.f32.mrf.mxu0
        %v1920 = vpop.f32.mrf.mxu0
        %v1921 = vadd.f32 0.0, %v1920
        %v1922 = vpop.f32.mrf.mxu0
        %1923 = vmatprep.mubr.bf16.mxu0 0
        %1924 = vmatmul.mubr.bf16.gmra.mxu0 %v1371
        %v1925 = vpop.f32.mrf.mxu0
        %v1926 = vadd.f32 0.0, %v1925
        %v1927 = vpop.f32.mrf.mxu0
        %v1928 = vpop.f32.mrf.mxu0
        %v1929 = vadd.f32 0.0, %v1928
        %v1930 = vpop.f32.mrf.mxu0
        %1931 = vmatprep.mubr.bf16.mxu0 0
        %1932 = vmatmul.mubr.bf16.gmra.mxu0 %v1372
        %v1933 = vpop.f32.mrf.mxu0
        %v1934 = vadd.f32 0.0, %v1933
        %v1935 = vpop.f32.mrf.mxu0
        %v1936 = vpop.f32.mrf.mxu0
        %v1937 = vadd.f32 0.0, %v1936
        %v1938 = vpop.f32.mrf.mxu0
        %1939 = vmatprep.mubr.bf16.mxu0 0
        %1940 = vmatmul.mubr.bf16.gmra.mxu0 %v1373
        %v1941 = vpop.f32.mrf.mxu0
        %v1942 = vadd.f32 0.0, %v1941
        %v1943 = vpop.f32.mrf.mxu0
        %v1944 = vpop.f32.mrf.mxu0
        %v1945 = vadd.f32 0.0, %v1944
        %v1946 = vpop.f32.mrf.mxu0
        %1947 = vmatprep.mubr.bf16.mxu0 0
        %1948 = vmatmul.mubr.bf16.gmra.mxu0 %v1374
        %v1949 = vpop.f32.mrf.mxu0
        %v1950 = vadd.f32 0.0, %v1949
        %v1951 = vpop.f32.mrf.mxu0
        %v1952 = vpop.f32.mrf.mxu0
        %v1953 = vadd.f32 0.0, %v1952
        %v1954 = vpop.f32.mrf.mxu0
        %1955 = vmatprep.mubr.bf16.mxu0 0
        %1956 = vmatmul.mubr.bf16.gmra.mxu0 %v1375
        %v1957 = vpop.f32.mrf.mxu0
        %v1958 = vadd.f32 0.0, %v1957
        %v1959 = vpop.f32.mrf.mxu0
        %v1960 = vpop.f32.mrf.mxu0
        %v1961 = vadd.f32 0.0, %v1960
        %v1962 = vpop.f32.mrf.mxu0
        %1963 = vmatprep.mubr.bf16.mxu0 0
        %1964 = vmatmul.mubr.bf16.gmra.mxu0 %v1376
        %v1965 = vpop.f32.mrf.mxu0
        %v1966 = vadd.f32 0.0, %v1965
        %v1967 = vpop.f32.mrf.mxu0
        %v1968 = vpop.f32.mrf.mxu0
        %v1969 = vadd.f32 0.0, %v1968
        %v1970 = vpop.f32.mrf.mxu0
        %1971 = vmatprep.mubr.bf16.mxu0 0
        %1972 = vmatmul.mubr.bf16.gmra.mxu0 %v1377
        %v1973 = vpop.f32.mrf.mxu0
        %v1974 = vadd.f32 0.0, %v1973
        %v1975 = vpop.f32.mrf.mxu0
        %v1976 = vpop.f32.mrf.mxu0
        %v1977 = vadd.f32 0.0, %v1976
        %v1978 = vpop.f32.mrf.mxu0
        %1979 = vmatprep.mubr.bf16.mxu0 0
        %1980 = vmatmul.mubr.bf16.gmra.mxu0 %v1378
        %v1981 = vpop.f32.mrf.mxu0
        %v1982 = vadd.f32 0.0, %v1981
        %v1983 = vpop.f32.mrf.mxu0
        %v1984 = vpop.f32.mrf.mxu0
        %v1985 = vadd.f32 0.0, %v1984
        %v1986 = vpop.f32.mrf.mxu0
        %1987 = vdwg.mxu0
        %v1988 = vpack.c.bf16 %v1481, %v1478
        %v1989 = vpack.c.bf16 %v1489, %v1486
        %v1990 = vpack.c.bf16 %v1497, %v1494
        %v1991 = vpack.c.bf16 %v1505, %v1502
        %v1992 = vpack.c.bf16 %v1513, %v1510
        %v1993 = vpack.c.bf16 %v1521, %v1518
        %v1994 = vpack.c.bf16 %v1529, %v1526
        %v1995 = vpack.c.bf16 %v1537, %v1534
        %v1996 = vpack.c.bf16 %v1545, %v1542
        %v1997 = vpack.c.bf16 %v1553, %v1550
        %v1998 = vpack.c.bf16 %v1561, %v1558
        %v1999 = vpack.c.bf16 %v1569, %v1566
        %v2000 = vpack.c.bf16 %v1577, %v1574
        %v2001 = vpack.c.bf16 %v1585, %v1582
        %v2002 = vpack.c.bf16 %v1593, %v1590
        %v2003 = vpack.c.bf16 %v1601, %v1598
        %v2004 = vpack.c.bf16 %v1609, %v1606
        %v2005 = vpack.c.bf16 %v1617, %v1614
        %v2006 = vpack.c.bf16 %v1625, %v1622
        %v2007 = vpack.c.bf16 %v1633, %v1630
        %v2008 = vpack.c.bf16 %v1641, %v1638
        %v2009 = vpack.c.bf16 %v1649, %v1646
        %v2010 = vpack.c.bf16 %v1657, %v1654
        %v2011 = vpack.c.bf16 %v1665, %v1662
        %v2012 = vpack.c.bf16 %v1673, %v1670
        %v2013 = vpack.c.bf16 %v1681, %v1678
        %v2014 = vpack.c.bf16 %v1689, %v1686
        %v2015 = vpack.c.bf16 %v1697, %v1694
        %v2016 = vpack.c.bf16 %v1705, %v1702
        %v2017 = vpack.c.bf16 %v1713, %v1710
        %v2018 = vpack.c.bf16 %v1721, %v1718
        %v2019 = vpack.c.bf16 %v1729, %v1726
        %v2020 = vpack.c.bf16 %v1737, %v1734
        %v2021 = vpack.c.bf16 %v1745, %v1742
        %v2022 = vpack.c.bf16 %v1753, %v1750
        %v2023 = vpack.c.bf16 %v1761, %v1758
        %v2024 = vpack.c.bf16 %v1769, %v1766
        %v2025 = vpack.c.bf16 %v1777, %v1774
        %v2026 = vpack.c.bf16 %v1785, %v1782
        %v2027 = vpack.c.bf16 %v1793, %v1790
        %v2028 = vpack.c.bf16 %v1801, %v1798
        %v2029 = vpack.c.bf16 %v1809, %v1806
        %v2030 = vpack.c.bf16 %v1817, %v1814
        %v2031 = vpack.c.bf16 %v1825, %v1822
        %v2032 = vpack.c.bf16 %v1833, %v1830
        %v2033 = vpack.c.bf16 %v1841, %v1838
        %v2034 = vpack.c.bf16 %v1849, %v1846
        %v2035 = vpack.c.bf16 %v1857, %v1854
        %v2036 = vpack.c.bf16 %v1865, %v1862
        %v2037 = vpack.c.bf16 %v1873, %v1870
        %v2038 = vpack.c.bf16 %v1881, %v1878
        %v2039 = vpack.c.bf16 %v1889, %v1886
        %v2040 = vpack.c.bf16 %v1897, %v1894
        %v2041 = vpack.c.bf16 %v1905, %v1902
        %v2042 = vpack.c.bf16 %v1913, %v1910
        %v2043 = vpack.c.bf16 %v1921, %v1918
        %v2044 = vpack.c.bf16 %v1929, %v1926
        %v2045 = vpack.c.bf16 %v1937, %v1934
        %v2046 = vpack.c.bf16 %v1945, %v1942
        %v2047 = vpack.c.bf16 %v1953, %v1950
        %v2048 = vpack.c.bf16 %v1961, %v1958
        %v2049 = vpack.c.bf16 %v1969, %v1966
        %v2050 = vpack.c.bf16 %v1977, %v1974
        %v2051 = vpack.c.bf16 %v1985, %v1982
        %v2052 = vld [vmem:[#allocation2] sm:$0xf]
        %v2053 = vld [vmem:[#allocation2 + $0x14] sm:$0xf]
        %v2054 = vld [vmem:[#allocation2 + $0x28] sm:$0xf]
        %v2055 = vld [vmem:[#allocation2 + $0x3c] sm:$0xf]
        %v2056 = vld [vmem:[#allocation2 + $0x50] sm:$0xf]
        %v2057 = vld [vmem:[#allocation2 + $0x64] sm:$0xf]
        %v2058 = vld [vmem:[#allocation2 + $0x78] sm:$0xf]
        %v2059 = vld [vmem:[#allocation2 + $0x8c] sm:$0xf]
        %v2060 = vld [vmem:[#allocation2 + $0xa0] sm:$0xf]
        %v2061 = vld [vmem:[#allocation2 + $0xb4] sm:$0xf]
        %v2062 = vld [vmem:[#allocation2 + $0xc8] sm:$0xf]
        %v2063 = vld [vmem:[#allocation2 + $0xdc] sm:$0xf]
        %v2064 = vld [vmem:[#allocation2 + $0xf0] sm:$0xf]
        %v2065 = vld [vmem:[#allocation2 + $0x104] sm:$0xf]
        %v2066 = vld [vmem:[#allocation2 + $0x118] sm:$0xf]
        %v2067 = vld [vmem:[#allocation2 + $0x12c] sm:$0xf]
        %v2068 = vld [vmem:[#allocation2 + $0x4] sm:$0xf]
        %v2069 = vld [vmem:[#allocation2 + $0x18] sm:$0xf]
        %v2070 = vld [vmem:[#allocation2 + $0x2c] sm:$0xf]
        %v2071 = vld [vmem:[#allocation2 + $0x40] sm:$0xf]
        %v2072 = vld [vmem:[#allocation2 + $0x54] sm:$0xf]
        %v2073 = vld [vmem:[#allocation2 + $0x68] sm:$0xf]
        %v2074 = vld [vmem:[#allocation2 + $0x7c] sm:$0xf]
        %v2075 = vld [vmem:[#allocation2 + $0x90] sm:$0xf]
        %v2076 = vld [vmem:[#allocation2 + $0xa4] sm:$0xf]
        %v2077 = vld [vmem:[#allocation2 + $0xb8] sm:$0xf]
        %v2078 = vld [vmem:[#allocation2 + $0xcc] sm:$0xf]
        %v2079 = vld [vmem:[#allocation2 + $0xe0] sm:$0xf]
        %v2080 = vld [vmem:[#allocation2 + $0xf4] sm:$0xf]
        %v2081 = vld [vmem:[#allocation2 + $0x108] sm:$0xf]
        %v2082 = vld [vmem:[#allocation2 + $0x11c] sm:$0xf]
        %v2083 = vld [vmem:[#allocation2 + $0x130] sm:$0xf]
        %v2100 = vunpack.c.l.b16 %v2068
        %v2101 = vunpack.c.l.b16 %v2069
        %v2102 = vunpack.c.l.b16 %v2070
        %v2103 = vunpack.c.l.b16 %v2071
        %v2104 = vunpack.c.l.b16 %v2072
        %v2105 = vunpack.c.l.b16 %v2073
        %v2106 = vunpack.c.l.b16 %v2074
        %v2107 = vunpack.c.l.b16 %v2075
        %v2108 = vunpack.c.l.b16 %v2076
        %v2109 = vunpack.c.l.b16 %v2077
        %v2110 = vunpack.c.l.b16 %v2078
        %v2111 = vunpack.c.l.b16 %v2079
        %v2112 = vunpack.c.l.b16 %v2080
        %v2113 = vunpack.c.l.b16 %v2081
        %v2114 = vunpack.c.l.b16 %v2082
        %v2115 = vunpack.c.l.b16 %v2083
        %v2116 = vpack.c.b16 %v2101, %v2100
        %v2117 = vpack.c.b16 %v2103, %v2102
        %v2118 = vpack.c.b16 %v2105, %v2104
        %v2119 = vpack.c.b16 %v2107, %v2106
        %v2120 = vpack.c.b16 %v2109, %v2108
        %v2121 = vpack.c.b16 %v2111, %v2110
        %v2122 = vpack.c.b16 %v2113, %v2112
        %v2123 = vpack.c.b16 %v2115, %v2114
        %2132 = vmatprep.subr.bf16.mxu0 0
        %2133 = vmatpush1.bf16.msra.mxu0 %v2123
        %2134 = vmatprep.subr.bf16.mxu0 0
        %2135 = vmatpush1.bf16.msra.mxu0 %v2122
        %2136 = vmatprep.subr.bf16.mxu0 0
        %2137 = vmatpush1.bf16.msra.mxu0 %v2121
        %2138 = vmatprep.subr.bf16.mxu0 0
        %2139 = vmatpush1.bf16.msra.mxu0 %v2120
        %2140 = vmatprep.subr.bf16.mxu0 0
        %2141 = vmatpush1.bf16.msra.mxu0 %v2119
        %2142 = vmatprep.subr.bf16.mxu0 0
        %2143 = vmatpush1.bf16.msra.mxu0 %v2118
        %2144 = vmatprep.subr.bf16.mxu0 0
        %2145 = vmatpush1.bf16.msra.mxu0 %v2117
        %2146 = vmatprep.subr.bf16.mxu0 0
        %2147 = vmatpush1.bf16.msra.mxu0 %v2116
        %2148 = vmatprep.subr.bf16.mxu0 0
        %2149 = vmatpush2.bf16.msra.mxu0 0
        %2150 = vmatprep.subr.bf16.mxu0 0
        %2151 = vmatpush2.bf16.msra.mxu0 0
        %2152 = vmatprep.subr.bf16.mxu0 0
        %2153 = vmatpush2.bf16.msra.mxu0 0
        %2154 = vmatprep.subr.bf16.mxu0 0
        %2155 = vmatpush2.bf16.msra.mxu0 0
        %2156 = vmatprep.subr.bf16.mxu0 0
        %2157 = vmatpush2.bf16.msra.mxu0 0
        %2158 = vmatprep.subr.bf16.mxu0 0
        %2159 = vmatpush2.bf16.msra.mxu0 0
        %2160 = vmatprep.subr.bf16.mxu0 0
        %2161 = vmatpush2.bf16.msra.mxu0 0
        %2162 = vmatprep.subr.bf16.mxu0 0
        %2163 = vmatpush2.bf16.msra.mxu0 0
        %2164 = vmatprep.mubr.bf16.mxu0 0
        %2165 = vmatmul.mubr.bf16.gmra.mxu0 %v1988
        %v2166 = vpop.f32.mrf.mxu0
        %v2167 = vadd.f32 0.0, %v2166
        %v2168 = vpop.f32.mrf.mxu0
        %v2169 = vpop.f32.mrf.mxu0
        %v2170 = vadd.f32 0.0, %v2169
        %v2171 = vpop.f32.mrf.mxu0
        %2172 = vmatprep.mubr.bf16.mxu0 0
        %2173 = vmatmul.mubr.bf16.gmra.mxu0 %v1989
        %v2174 = vpop.f32.mrf.mxu0
        %v2175 = vadd.f32 0.0, %v2174
        %v2176 = vpop.f32.mrf.mxu0
        %v2177 = vpop.f32.mrf.mxu0
        %v2178 = vadd.f32 0.0, %v2177
        %v2179 = vpop.f32.mrf.mxu0
        %2180 = vmatprep.mubr.bf16.mxu0 0
        %2181 = vmatmul.mubr.bf16.gmra.mxu0 %v1990
        %v2182 = vpop.f32.mrf.mxu0
        %v2183 = vadd.f32 0.0, %v2182
        %v2184 = vpop.f32.mrf.mxu0
        %v2185 = vpop.f32.mrf.mxu0
        %v2186 = vadd.f32 0.0, %v2185
        %v2187 = vpop.f32.mrf.mxu0
        %2188 = vmatprep.mubr.bf16.mxu0 0
        %2189 = vmatmul.mubr.bf16.gmra.mxu0 %v1991
        %v2190 = vpop.f32.mrf.mxu0
        %v2191 = vadd.f32 0.0, %v2190
        %v2192 = vpop.f32.mrf.mxu0
        %v2193 = vpop.f32.mrf.mxu0
        %v2194 = vadd.f32 0.0, %v2193
        %v2195 = vpop.f32.mrf.mxu0
        %2196 = vmatprep.mubr.bf16.mxu0 0
        %2197 = vmatmul.mubr.bf16.gmra.mxu0 %v1992
        %v2198 = vpop.f32.mrf.mxu0
        %v2199 = vadd.f32 0.0, %v2198
        %v2200 = vpop.f32.mrf.mxu0
        %v2201 = vpop.f32.mrf.mxu0
        %v2202 = vadd.f32 0.0, %v2201
        %v2203 = vpop.f32.mrf.mxu0
        %2204 = vmatprep.mubr.bf16.mxu0 0
        %2205 = vmatmul.mubr.bf16.gmra.mxu0 %v1993
        %v2206 = vpop.f32.mrf.mxu0
        %v2207 = vadd.f32 0.0, %v2206
        %v2208 = vpop.f32.mrf.mxu0
        %v2209 = vpop.f32.mrf.mxu0
        %v2210 = vadd.f32 0.0, %v2209
        %v2211 = vpop.f32.mrf.mxu0
        %2212 = vmatprep.mubr.bf16.mxu0 0
        %2213 = vmatmul.mubr.bf16.gmra.mxu0 %v1994
        %v2214 = vpop.f32.mrf.mxu0
        %v2215 = vadd.f32 0.0, %v2214
        %v2216 = vpop.f32.mrf.mxu0
        %v2217 = vpop.f32.mrf.mxu0
        %v2218 = vadd.f32 0.0, %v2217
        %v2219 = vpop.f32.mrf.mxu0
        %2220 = vmatprep.mubr.bf16.mxu0 0
        %2221 = vmatmul.mubr.bf16.gmra.mxu0 %v1995
        %v2222 = vpop.f32.mrf.mxu0
        %v2223 = vadd.f32 0.0, %v2222
        %v2224 = vpop.f32.mrf.mxu0
        %v2225 = vpop.f32.mrf.mxu0
        %v2226 = vadd.f32 0.0, %v2225
        %v2227 = vpop.f32.mrf.mxu0
        %2228 = vmatprep.mubr.bf16.mxu0 0
        %2229 = vmatmul.mubr.bf16.gmra.mxu0 %v1996
        %v2230 = vpop.f32.mrf.mxu0
        %v2231 = vadd.f32 0.0, %v2230
        %v2232 = vpop.f32.mrf.mxu0
        %v2233 = vpop.f32.mrf.mxu0
        %v2234 = vadd.f32 0.0, %v2233
        %v2235 = vpop.f32.mrf.mxu0
        %2236 = vmatprep.mubr.bf16.mxu0 0
        %2237 = vmatmul.mubr.bf16.gmra.mxu0 %v1997
        %v2238 = vpop.f32.mrf.mxu0
        %v2239 = vadd.f32 0.0, %v2238
        %v2240 = vpop.f32.mrf.mxu0
        %v2241 = vpop.f32.mrf.mxu0
        %v2242 = vadd.f32 0.0, %v2241
        %v2243 = vpop.f32.mrf.mxu0
        %2244 = vmatprep.mubr.bf16.mxu0 0
        %2245 = vmatmul.mubr.bf16.gmra.mxu0 %v1998
        %v2246 = vpop.f32.mrf.mxu0
        %v2247 = vadd.f32 0.0, %v2246
        %v2248 = vpop.f32.mrf.mxu0
        %v2249 = vpop.f32.mrf.mxu0
        %v2250 = vadd.f32 0.0, %v2249
        %v2251 = vpop.f32.mrf.mxu0
        %2252 = vmatprep.mubr.bf16.mxu0 0
        %2253 = vmatmul.mubr.bf16.gmra.mxu0 %v1999
        %v2254 = vpop.f32.mrf.mxu0
        %v2255 = vadd.f32 0.0, %v2254
        %v2256 = vpop.f32.mrf.mxu0
        %v2257 = vpop.f32.mrf.mxu0
        %v2258 = vadd.f32 0.0, %v2257
        %v2259 = vpop.f32.mrf.mxu0
        %2260 = vmatprep.mubr.bf16.mxu0 0
        %2261 = vmatmul.mubr.bf16.gmra.mxu0 %v2000
        %v2262 = vpop.f32.mrf.mxu0
        %v2263 = vadd.f32 0.0, %v2262
        %v2264 = vpop.f32.mrf.mxu0
        %v2265 = vpop.f32.mrf.mxu0
        %v2266 = vadd.f32 0.0, %v2265
        %v2267 = vpop.f32.mrf.mxu0
        %2268 = vmatprep.mubr.bf16.mxu0 0
        %2269 = vmatmul.mubr.bf16.gmra.mxu0 %v2001
        %v2270 = vpop.f32.mrf.mxu0
        %v2271 = vadd.f32 0.0, %v2270
        %v2272 = vpop.f32.mrf.mxu0
        %v2273 = vpop.f32.mrf.mxu0
        %v2274 = vadd.f32 0.0, %v2273
        %v2275 = vpop.f32.mrf.mxu0
        %2276 = vmatprep.mubr.bf16.mxu0 0
        %2277 = vmatmul.mubr.bf16.gmra.mxu0 %v2002
        %v2278 = vpop.f32.mrf.mxu0
        %v2279 = vadd.f32 0.0, %v2278
        %v2280 = vpop.f32.mrf.mxu0
        %v2281 = vpop.f32.mrf.mxu0
        %v2282 = vadd.f32 0.0, %v2281
        %v2283 = vpop.f32.mrf.mxu0
        %2284 = vmatprep.mubr.bf16.mxu0 0
        %2285 = vmatmul.mubr.bf16.gmra.mxu0 %v2003
        %v2286 = vpop.f32.mrf.mxu0
        %v2287 = vadd.f32 0.0, %v2286
        %v2288 = vpop.f32.mrf.mxu0
        %v2289 = vpop.f32.mrf.mxu0
        %v2290 = vadd.f32 0.0, %v2289
        %v2291 = vpop.f32.mrf.mxu0
        %2292 = vmatprep.mubr.bf16.mxu0 0
        %2293 = vmatmul.mubr.bf16.gmra.mxu0 %v2004
        %v2294 = vpop.f32.mrf.mxu0
        %v2295 = vadd.f32 0.0, %v2294
        %v2296 = vpop.f32.mrf.mxu0
        %v2297 = vpop.f32.mrf.mxu0
        %v2298 = vadd.f32 0.0, %v2297
        %v2299 = vpop.f32.mrf.mxu0
        %2300 = vmatprep.mubr.bf16.mxu0 0
        %2301 = vmatmul.mubr.bf16.gmra.mxu0 %v2005
        %v2302 = vpop.f32.mrf.mxu0
        %v2303 = vadd.f32 0.0, %v2302
        %v2304 = vpop.f32.mrf.mxu0
        %v2305 = vpop.f32.mrf.mxu0
        %v2306 = vadd.f32 0.0, %v2305
        %v2307 = vpop.f32.mrf.mxu0
        %2308 = vmatprep.mubr.bf16.mxu0 0
        %2309 = vmatmul.mubr.bf16.gmra.mxu0 %v2006
        %v2310 = vpop.f32.mrf.mxu0
        %v2311 = vadd.f32 0.0, %v2310
        %v2312 = vpop.f32.mrf.mxu0
        %v2313 = vpop.f32.mrf.mxu0
        %v2314 = vadd.f32 0.0, %v2313
        %v2315 = vpop.f32.mrf.mxu0
        %2316 = vmatprep.mubr.bf16.mxu0 0
        %2317 = vmatmul.mubr.bf16.gmra.mxu0 %v2007
        %v2318 = vpop.f32.mrf.mxu0
        %v2319 = vadd.f32 0.0, %v2318
        %v2320 = vpop.f32.mrf.mxu0
        %v2321 = vpop.f32.mrf.mxu0
        %v2322 = vadd.f32 0.0, %v2321
        %v2323 = vpop.f32.mrf.mxu0
        %2324 = vmatprep.mubr.bf16.mxu0 0
        %2325 = vmatmul.mubr.bf16.gmra.mxu0 %v2008
        %v2326 = vpop.f32.mrf.mxu0
        %v2327 = vadd.f32 0.0, %v2326
        %v2328 = vpop.f32.mrf.mxu0
        %v2329 = vpop.f32.mrf.mxu0
        %v2330 = vadd.f32 0.0, %v2329
        %v2331 = vpop.f32.mrf.mxu0
        %2332 = vmatprep.mubr.bf16.mxu0 0
        %2333 = vmatmul.mubr.bf16.gmra.mxu0 %v2009
        %v2334 = vpop.f32.mrf.mxu0
        %v2335 = vadd.f32 0.0, %v2334
        %v2336 = vpop.f32.mrf.mxu0
        %v2337 = vpop.f32.mrf.mxu0
        %v2338 = vadd.f32 0.0, %v2337
        %v2339 = vpop.f32.mrf.mxu0
        %2340 = vmatprep.mubr.bf16.mxu0 0
        %2341 = vmatmul.mubr.bf16.gmra.mxu0 %v2010
        %v2342 = vpop.f32.mrf.mxu0
        %v2343 = vadd.f32 0.0, %v2342
        %v2344 = vpop.f32.mrf.mxu0
        %v2345 = vpop.f32.mrf.mxu0
        %v2346 = vadd.f32 0.0, %v2345
        %v2347 = vpop.f32.mrf.mxu0
        %2348 = vmatprep.mubr.bf16.mxu0 0
        %2349 = vmatmul.mubr.bf16.gmra.mxu0 %v2011
        %v2350 = vpop.f32.mrf.mxu0
        %v2351 = vadd.f32 0.0, %v2350
        %v2352 = vpop.f32.mrf.mxu0
        %v2353 = vpop.f32.mrf.mxu0
        %v2354 = vadd.f32 0.0, %v2353
        %v2355 = vpop.f32.mrf.mxu0
        %2356 = vmatprep.mubr.bf16.mxu0 0
        %2357 = vmatmul.mubr.bf16.gmra.mxu0 %v2012
        %v2358 = vpop.f32.mrf.mxu0
        %v2359 = vadd.f32 0.0, %v2358
        %v2360 = vpop.f32.mrf.mxu0
        %v2361 = vpop.f32.mrf.mxu0
        %v2362 = vadd.f32 0.0, %v2361
        %v2363 = vpop.f32.mrf.mxu0
        %2364 = vmatprep.mubr.bf16.mxu0 0
        %2365 = vmatmul.mubr.bf16.gmra.mxu0 %v2013
        %v2366 = vpop.f32.mrf.mxu0
        %v2367 = vadd.f32 0.0, %v2366
        %v2368 = vpop.f32.mrf.mxu0
        %v2369 = vpop.f32.mrf.mxu0
        %v2370 = vadd.f32 0.0, %v2369
        %v2371 = vpop.f32.mrf.mxu0
        %2372 = vmatprep.mubr.bf16.mxu0 0
        %2373 = vmatmul.mubr.bf16.gmra.mxu0 %v2014
        %v2374 = vpop.f32.mrf.mxu0
        %v2375 = vadd.f32 0.0, %v2374
        %v2376 = vpop.f32.mrf.mxu0
        %v2377 = vpop.f32.mrf.mxu0
        %v2378 = vadd.f32 0.0, %v2377
        %v2379 = vpop.f32.mrf.mxu0
        %2380 = vmatprep.mubr.bf16.mxu0 0
        %2381 = vmatmul.mubr.bf16.gmra.mxu0 %v2015
        %v2382 = vpop.f32.mrf.mxu0
        %v2383 = vadd.f32 0.0, %v2382
        %v2384 = vpop.f32.mrf.mxu0
        %v2385 = vpop.f32.mrf.mxu0
        %v2386 = vadd.f32 0.0, %v2385
        %v2387 = vpop.f32.mrf.mxu0
        %2388 = vmatprep.mubr.bf16.mxu0 0
        %2389 = vmatmul.mubr.bf16.gmra.mxu0 %v2016
        %v2390 = vpop.f32.mrf.mxu0
        %v2391 = vadd.f32 0.0, %v2390
        %v2392 = vpop.f32.mrf.mxu0
        %v2393 = vpop.f32.mrf.mxu0
        %v2394 = vadd.f32 0.0, %v2393
        %v2395 = vpop.f32.mrf.mxu0
        %2396 = vmatprep.mubr.bf16.mxu0 0
        %2397 = vmatmul.mubr.bf16.gmra.mxu0 %v2017
        %v2398 = vpop.f32.mrf.mxu0
        %v2399 = vadd.f32 0.0, %v2398
        %v2400 = vpop.f32.mrf.mxu0
        %v2401 = vpop.f32.mrf.mxu0
        %v2402 = vadd.f32 0.0, %v2401
        %v2403 = vpop.f32.mrf.mxu0
        %2404 = vmatprep.mubr.bf16.mxu0 0
        %2405 = vmatmul.mubr.bf16.gmra.mxu0 %v2018
        %v2406 = vpop.f32.mrf.mxu0
        %v2407 = vadd.f32 0.0, %v2406
        %v2408 = vpop.f32.mrf.mxu0
        %v2409 = vpop.f32.mrf.mxu0
        %v2410 = vadd.f32 0.0, %v2409
        %v2411 = vpop.f32.mrf.mxu0
        %2412 = vmatprep.mubr.bf16.mxu0 0
        %2413 = vmatmul.mubr.bf16.gmra.mxu0 %v2019
        %v2414 = vpop.f32.mrf.mxu0
        %v2415 = vadd.f32 0.0, %v2414
        %v2416 = vpop.f32.mrf.mxu0
        %v2417 = vpop.f32.mrf.mxu0
        %v2418 = vadd.f32 0.0, %v2417
        %v2419 = vpop.f32.mrf.mxu0
        %2420 = vmatprep.mubr.bf16.mxu0 0
        %2421 = vmatmul.mubr.bf16.gmra.mxu0 %v2020
        %v2422 = vpop.f32.mrf.mxu0
        %v2423 = vadd.f32 0.0, %v2422
        %v2424 = vpop.f32.mrf.mxu0
        %v2425 = vpop.f32.mrf.mxu0
        %v2426 = vadd.f32 0.0, %v2425
        %v2427 = vpop.f32.mrf.mxu0
        %2428 = vmatprep.mubr.bf16.mxu0 0
        %2429 = vmatmul.mubr.bf16.gmra.mxu0 %v2021
        %v2430 = vpop.f32.mrf.mxu0
        %v2431 = vadd.f32 0.0, %v2430
        %v2432 = vpop.f32.mrf.mxu0
        %v2433 = vpop.f32.mrf.mxu0
        %v2434 = vadd.f32 0.0, %v2433
        %v2435 = vpop.f32.mrf.mxu0
        %2436 = vmatprep.mubr.bf16.mxu0 0
        %2437 = vmatmul.mubr.bf16.gmra.mxu0 %v2022
        %v2438 = vpop.f32.mrf.mxu0
        %v2439 = vadd.f32 0.0, %v2438
        %v2440 = vpop.f32.mrf.mxu0
        %v2441 = vpop.f32.mrf.mxu0
        %v2442 = vadd.f32 0.0, %v2441
        %v2443 = vpop.f32.mrf.mxu0
        %2444 = vmatprep.mubr.bf16.mxu0 0
        %2445 = vmatmul.mubr.bf16.gmra.mxu0 %v2023
        %v2446 = vpop.f32.mrf.mxu0
        %v2447 = vadd.f32 0.0, %v2446
        %v2448 = vpop.f32.mrf.mxu0
        %v2449 = vpop.f32.mrf.mxu0
        %v2450 = vadd.f32 0.0, %v2449
        %v2451 = vpop.f32.mrf.mxu0
        %2452 = vmatprep.mubr.bf16.mxu0 0
        %2453 = vmatmul.mubr.bf16.gmra.mxu0 %v2024
        %v2454 = vpop.f32.mrf.mxu0
        %v2455 = vadd.f32 0.0, %v2454
        %v2456 = vpop.f32.mrf.mxu0
        %v2457 = vpop.f32.mrf.mxu0
        %v2458 = vadd.f32 0.0, %v2457
        %v2459 = vpop.f32.mrf.mxu0
        %2460 = vmatprep.mubr.bf16.mxu0 0
        %2461 = vmatmul.mubr.bf16.gmra.mxu0 %v2025
        %v2462 = vpop.f32.mrf.mxu0
        %v2463 = vadd.f32 0.0, %v2462
        %v2464 = vpop.f32.mrf.mxu0
        %v2465 = vpop.f32.mrf.mxu0
        %v2466 = vadd.f32 0.0, %v2465
        %v2467 = vpop.f32.mrf.mxu0
        %2468 = vmatprep.mubr.bf16.mxu0 0
        %2469 = vmatmul.mubr.bf16.gmra.mxu0 %v2026
        %v2470 = vpop.f32.mrf.mxu0
        %v2471 = vadd.f32 0.0, %v2470
        %v2472 = vpop.f32.mrf.mxu0
        %v2473 = vpop.f32.mrf.mxu0
        %v2474 = vadd.f32 0.0, %v2473
        %v2475 = vpop.f32.mrf.mxu0
        %2476 = vmatprep.mubr.bf16.mxu0 0
        %2477 = vmatmul.mubr.bf16.gmra.mxu0 %v2027
        %v2478 = vpop.f32.mrf.mxu0
        %v2479 = vadd.f32 0.0, %v2478
        %v2480 = vpop.f32.mrf.mxu0
        %v2481 = vpop.f32.mrf.mxu0
        %v2482 = vadd.f32 0.0, %v2481
        %v2483 = vpop.f32.mrf.mxu0
        %2484 = vmatprep.mubr.bf16.mxu0 0
        %2485 = vmatmul.mubr.bf16.gmra.mxu0 %v2028
        %v2486 = vpop.f32.mrf.mxu0
        %v2487 = vadd.f32 0.0, %v2486
        %v2488 = vpop.f32.mrf.mxu0
        %v2489 = vpop.f32.mrf.mxu0
        %v2490 = vadd.f32 0.0, %v2489
        %v2491 = vpop.f32.mrf.mxu0
        %2492 = vmatprep.mubr.bf16.mxu0 0
        %2493 = vmatmul.mubr.bf16.gmra.mxu0 %v2029
        %v2494 = vpop.f32.mrf.mxu0
        %v2495 = vadd.f32 0.0, %v2494
        %v2496 = vpop.f32.mrf.mxu0
        %v2497 = vpop.f32.mrf.mxu0
        %v2498 = vadd.f32 0.0, %v2497
        %v2499 = vpop.f32.mrf.mxu0
        %2500 = vmatprep.mubr.bf16.mxu0 0
        %2501 = vmatmul.mubr.bf16.gmra.mxu0 %v2030
        %v2502 = vpop.f32.mrf.mxu0
        %v2503 = vadd.f32 0.0, %v2502
        %v2504 = vpop.f32.mrf.mxu0
        %v2505 = vpop.f32.mrf.mxu0
        %v2506 = vadd.f32 0.0, %v2505
        %v2507 = vpop.f32.mrf.mxu0
        %2508 = vmatprep.mubr.bf16.mxu0 0
        %2509 = vmatmul.mubr.bf16.gmra.mxu0 %v2031
        %v2510 = vpop.f32.mrf.mxu0
        %v2511 = vadd.f32 0.0, %v2510
        %v2512 = vpop.f32.mrf.mxu0
        %v2513 = vpop.f32.mrf.mxu0
        %v2514 = vadd.f32 0.0, %v2513
        %v2515 = vpop.f32.mrf.mxu0
        %2516 = vmatprep.mubr.bf16.mxu0 0
        %2517 = vmatmul.mubr.bf16.gmra.mxu0 %v2032
        %v2518 = vpop.f32.mrf.mxu0
        %v2519 = vadd.f32 0.0, %v2518
        %v2520 = vpop.f32.mrf.mxu0
        %v2521 = vpop.f32.mrf.mxu0
        %v2522 = vadd.f32 0.0, %v2521
        %v2523 = vpop.f32.mrf.mxu0
        %2524 = vmatprep.mubr.bf16.mxu0 0
        %2525 = vmatmul.mubr.bf16.gmra.mxu0 %v2033
        %v2526 = vpop.f32.mrf.mxu0
        %v2527 = vadd.f32 0.0, %v2526
        %v2528 = vpop.f32.mrf.mxu0
        %v2529 = vpop.f32.mrf.mxu0
        %v2530 = vadd.f32 0.0, %v2529
        %v2531 = vpop.f32.mrf.mxu0
        %2532 = vmatprep.mubr.bf16.mxu0 0
        %2533 = vmatmul.mubr.bf16.gmra.mxu0 %v2034
        %v2534 = vpop.f32.mrf.mxu0
        %v2535 = vadd.f32 0.0, %v2534
        %v2536 = vpop.f32.mrf.mxu0
        %v2537 = vpop.f32.mrf.mxu0
        %v2538 = vadd.f32 0.0, %v2537
        %v2539 = vpop.f32.mrf.mxu0
        %2540 = vmatprep.mubr.bf16.mxu0 0
        %2541 = vmatmul.mubr.bf16.gmra.mxu0 %v2035
        %v2542 = vpop.f32.mrf.mxu0
        %v2543 = vadd.f32 0.0, %v2542
        %v2544 = vpop.f32.mrf.mxu0
        %v2545 = vpop.f32.mrf.mxu0
        %v2546 = vadd.f32 0.0, %v2545
        %v2547 = vpop.f32.mrf.mxu0
        %2548 = vmatprep.mubr.bf16.mxu0 0
        %2549 = vmatmul.mubr.bf16.gmra.mxu0 %v2036
        %v2550 = vpop.f32.mrf.mxu0
        %v2551 = vadd.f32 0.0, %v2550
        %v2552 = vpop.f32.mrf.mxu0
        %v2553 = vpop.f32.mrf.mxu0
        %v2554 = vadd.f32 0.0, %v2553
        %v2555 = vpop.f32.mrf.mxu0
        %2556 = vmatprep.mubr.bf16.mxu0 0
        %2557 = vmatmul.mubr.bf16.gmra.mxu0 %v2037
        %v2558 = vpop.f32.mrf.mxu0
        %v2559 = vadd.f32 0.0, %v2558
        %v2560 = vpop.f32.mrf.mxu0
        %v2561 = vpop.f32.mrf.mxu0
        %v2562 = vadd.f32 0.0, %v2561
        %v2563 = vpop.f32.mrf.mxu0
        %2564 = vmatprep.mubr.bf16.mxu0 0
        %2565 = vmatmul.mubr.bf16.gmra.mxu0 %v2038
        %v2566 = vpop.f32.mrf.mxu0
        %v2567 = vadd.f32 0.0, %v2566
        %v2568 = vpop.f32.mrf.mxu0
        %v2569 = vpop.f32.mrf.mxu0
        %v2570 = vadd.f32 0.0, %v2569
        %v2571 = vpop.f32.mrf.mxu0
        %2572 = vmatprep.mubr.bf16.mxu0 0
        %2573 = vmatmul.mubr.bf16.gmra.mxu0 %v2039
        %v2574 = vpop.f32.mrf.mxu0
        %v2575 = vadd.f32 0.0, %v2574
        %v2576 = vpop.f32.mrf.mxu0
        %v2577 = vpop.f32.mrf.mxu0
        %v2578 = vadd.f32 0.0, %v2577
        %v2579 = vpop.f32.mrf.mxu0
        %2580 = vmatprep.mubr.bf16.mxu0 0
        %2581 = vmatmul.mubr.bf16.gmra.mxu0 %v2040
        %v2582 = vpop.f32.mrf.mxu0
        %v2583 = vadd.f32 0.0, %v2582
        %v2584 = vpop.f32.mrf.mxu0
        %v2585 = vpop.f32.mrf.mxu0
        %v2586 = vadd.f32 0.0, %v2585
        %v2587 = vpop.f32.mrf.mxu0
        %2588 = vmatprep.mubr.bf16.mxu0 0
        %2589 = vmatmul.mubr.bf16.gmra.mxu0 %v2041
        %v2590 = vpop.f32.mrf.mxu0
        %v2591 = vadd.f32 0.0, %v2590
        %v2592 = vpop.f32.mrf.mxu0
        %v2593 = vpop.f32.mrf.mxu0
        %v2594 = vadd.f32 0.0, %v2593
        %v2595 = vpop.f32.mrf.mxu0
        %2596 = vmatprep.mubr.bf16.mxu0 0
        %2597 = vmatmul.mubr.bf16.gmra.mxu0 %v2042
        %v2598 = vpop.f32.mrf.mxu0
        %v2599 = vadd.f32 0.0, %v2598
        %v2600 = vpop.f32.mrf.mxu0
        %v2601 = vpop.f32.mrf.mxu0
        %v2602 = vadd.f32 0.0, %v2601
        %v2603 = vpop.f32.mrf.mxu0
        %2604 = vmatprep.mubr.bf16.mxu0 0
        %2605 = vmatmul.mubr.bf16.gmra.mxu0 %v2043
        %v2606 = vpop.f32.mrf.mxu0
        %v2607 = vadd.f32 0.0, %v2606
        %v2608 = vpop.f32.mrf.mxu0
        %v2609 = vpop.f32.mrf.mxu0
        %v2610 = vadd.f32 0.0, %v2609
        %v2611 = vpop.f32.mrf.mxu0
        %2612 = vmatprep.mubr.bf16.mxu0 0
        %2613 = vmatmul.mubr.bf16.gmra.mxu0 %v2044
        %v2614 = vpop.f32.mrf.mxu0
        %v2615 = vadd.f32 0.0, %v2614
        %v2616 = vpop.f32.mrf.mxu0
        %v2617 = vpop.f32.mrf.mxu0
        %v2618 = vadd.f32 0.0, %v2617
        %v2619 = vpop.f32.mrf.mxu0
        %2620 = vmatprep.mubr.bf16.mxu0 0
        %2621 = vmatmul.mubr.bf16.gmra.mxu0 %v2045
        %v2622 = vpop.f32.mrf.mxu0
        %v2623 = vadd.f32 0.0, %v2622
        %v2624 = vpop.f32.mrf.mxu0
        %v2625 = vpop.f32.mrf.mxu0
        %v2626 = vadd.f32 0.0, %v2625
        %v2627 = vpop.f32.mrf.mxu0
        %2628 = vmatprep.mubr.bf16.mxu0 0
        %2629 = vmatmul.mubr.bf16.gmra.mxu0 %v2046
        %v2630 = vpop.f32.mrf.mxu0
        %v2631 = vadd.f32 0.0, %v2630
        %v2632 = vpop.f32.mrf.mxu0
        %v2633 = vpop.f32.mrf.mxu0
        %v2634 = vadd.f32 0.0, %v2633
        %v2635 = vpop.f32.mrf.mxu0
        %2636 = vmatprep.mubr.bf16.mxu0 0
        %2637 = vmatmul.mubr.bf16.gmra.mxu0 %v2047
        %v2638 = vpop.f32.mrf.mxu0
        %v2639 = vadd.f32 0.0, %v2638
        %v2640 = vpop.f32.mrf.mxu0
        %v2641 = vpop.f32.mrf.mxu0
        %v2642 = vadd.f32 0.0, %v2641
        %v2643 = vpop.f32.mrf.mxu0
        %2644 = vmatprep.mubr.bf16.mxu0 0
        %2645 = vmatmul.mubr.bf16.gmra.mxu0 %v2048
        %v2646 = vpop.f32.mrf.mxu0
        %v2647 = vadd.f32 0.0, %v2646
        %v2648 = vpop.f32.mrf.mxu0
        %v2649 = vpop.f32.mrf.mxu0
        %v2650 = vadd.f32 0.0, %v2649
        %v2651 = vpop.f32.mrf.mxu0
        %2652 = vmatprep.mubr.bf16.mxu0 0
        %2653 = vmatmul.mubr.bf16.gmra.mxu0 %v2049
        %v2654 = vpop.f32.mrf.mxu0
        %v2655 = vadd.f32 0.0, %v2654
        %v2656 = vpop.f32.mrf.mxu0
        %v2657 = vpop.f32.mrf.mxu0
        %v2658 = vadd.f32 0.0, %v2657
        %v2659 = vpop.f32.mrf.mxu0
        %2660 = vmatprep.mubr.bf16.mxu0 0
        %2661 = vmatmul.mubr.bf16.gmra.mxu0 %v2050
        %v2662 = vpop.f32.mrf.mxu0
        %v2663 = vadd.f32 0.0, %v2662
        %v2664 = vpop.f32.mrf.mxu0
        %v2665 = vpop.f32.mrf.mxu0
        %v2666 = vadd.f32 0.0, %v2665
        %v2667 = vpop.f32.mrf.mxu0
        %2668 = vmatprep.mubr.bf16.mxu0 0
        %2669 = vmatmul.mubr.bf16.gmra.mxu0 %v2051
        %v2670 = vpop.f32.mrf.mxu0
        %v2671 = vadd.f32 0.0, %v2670
        %v2672 = vpop.f32.mrf.mxu0
        %v2673 = vpop.f32.mrf.mxu0
        %v2674 = vadd.f32 0.0, %v2673
        %v2675 = vpop.f32.mrf.mxu0
        %2676 = vdwg.mxu0
        %v2677 = vrot.slane %v2167, 1
        %v2678 = vrot.slane %v2170, 1
        %v2679 = vrot.slane %v2175, 1
        %v2680 = vrot.slane %v2178, 1
        %v2681 = vrot.slane %v2183, 1
        %v2682 = vrot.slane %v2186, 1
        %v2683 = vrot.slane %v2191, 1
        %v2684 = vrot.slane %v2194, 1
        %v2685 = vrot.slane %v2199, 1
        %v2686 = vrot.slane %v2202, 1
        %v2687 = vrot.slane %v2207, 1
        %v2688 = vrot.slane %v2210, 1
        %v2689 = vrot.slane %v2215, 1
        %v2690 = vrot.slane %v2218, 1
        %v2691 = vrot.slane %v2223, 1
        %v2692 = vrot.slane %v2226, 1
        %v2693 = vrot.slane %v2231, 1
        %v2694 = vrot.slane %v2234, 1
        %v2695 = vrot.slane %v2239, 1
        %v2696 = vrot.slane %v2242, 1
        %v2697 = vrot.slane %v2247, 1
        %v2698 = vrot.slane %v2250, 1
        %v2699 = vrot.slane %v2255, 1
        %v2700 = vrot.slane %v2258, 1
        %v2701 = vrot.slane %v2263, 1
        %v2702 = vrot.slane %v2266, 1
        %v2703 = vrot.slane %v2271, 1
        %v2704 = vrot.slane %v2274, 1
        %v2705 = vrot.slane %v2279, 1
        %v2706 = vrot.slane %v2282, 1
        %v2707 = vrot.slane %v2287, 1
        %v2708 = vrot.slane %v2290, 1
        %v2709 = vrot.slane %v2295, 1
        %v2710 = vrot.slane %v2298, 1
        %v2711 = vrot.slane %v2303, 1
        %v2712 = vrot.slane %v2306, 1
        %v2713 = vrot.slane %v2311, 1
        %v2714 = vrot.slane %v2314, 1
        %v2715 = vrot.slane %v2319, 1
        %v2716 = vrot.slane %v2322, 1
        %v2717 = vrot.slane %v2327, 1
        %v2718 = vrot.slane %v2330, 1
        %v2719 = vrot.slane %v2335, 1
        %v2720 = vrot.slane %v2338, 1
        %v2721 = vrot.slane %v2343, 1
        %v2722 = vrot.slane %v2346, 1
        %v2723 = vrot.slane %v2351, 1
        %v2724 = vrot.slane %v2354, 1
        %v2725 = vrot.slane %v2359, 1
        %v2726 = vrot.slane %v2362, 1
        %v2727 = vrot.slane %v2367, 1
        %v2728 = vrot.slane %v2370, 1
        %v2729 = vrot.slane %v2375, 1
        %v2730 = vrot.slane %v2378, 1
        %v2731 = vrot.slane %v2383, 1
        %v2732 = vrot.slane %v2386, 1
        %v2733 = vrot.slane %v2391, 1
        %v2734 = vrot.slane %v2394, 1
        %v2735 = vrot.slane %v2399, 1
        %v2736 = vrot.slane %v2402, 1
        %v2737 = vrot.slane %v2407, 1
        %v2738 = vrot.slane %v2410, 1
        %v2739 = vrot.slane %v2415, 1
        %v2740 = vrot.slane %v2418, 1
        %v2741 = vrot.slane %v2423, 1
        %v2742 = vrot.slane %v2426, 1
        %v2743 = vrot.slane %v2431, 1
        %v2744 = vrot.slane %v2434, 1
        %v2745 = vrot.slane %v2439, 1
        %v2746 = vrot.slane %v2442, 1
        %v2747 = vrot.slane %v2447, 1
        %v2748 = vrot.slane %v2450, 1
        %v2749 = vrot.slane %v2455, 1
        %v2750 = vrot.slane %v2458, 1
        %v2751 = vrot.slane %v2463, 1
        %v2752 = vrot.slane %v2466, 1
        %v2753 = vrot.slane %v2471, 1
        %v2754 = vrot.slane %v2474, 1
        %v2755 = vrot.slane %v2479, 1
        %v2756 = vrot.slane %v2482, 1
        %v2757 = vrot.slane %v2487, 1
        %v2758 = vrot.slane %v2490, 1
        %v2759 = vrot.slane %v2495, 1
        %v2760 = vrot.slane %v2498, 1
        %v2761 = vrot.slane %v2503, 1
        %v2762 = vrot.slane %v2506, 1
        %v2763 = vrot.slane %v2511, 1
        %v2764 = vrot.slane %v2514, 1
        %v2765 = vrot.slane %v2519, 1
        %v2766 = vrot.slane %v2522, 1
        %v2767 = vrot.slane %v2527, 1
        %v2768 = vrot.slane %v2530, 1
        %v2769 = vrot.slane %v2535, 1
        %v2770 = vrot.slane %v2538, 1
        %v2771 = vrot.slane %v2543, 1
        %v2772 = vrot.slane %v2546, 1
        %v2773 = vrot.slane %v2551, 1
        %v2774 = vrot.slane %v2554, 1
        %v2775 = vrot.slane %v2559, 1
        %v2776 = vrot.slane %v2562, 1
        %v2777 = vrot.slane %v2567, 1
        %v2778 = vrot.slane %v2570, 1
        %v2779 = vrot.slane %v2575, 1
        %v2780 = vrot.slane %v2578, 1
        %v2781 = vrot.slane %v2583, 1
        %v2782 = vrot.slane %v2586, 1
        %v2783 = vrot.slane %v2591, 1
        %v2784 = vrot.slane %v2594, 1
        %v2785 = vrot.slane %v2599, 1
        %v2786 = vrot.slane %v2602, 1
        %v2787 = vrot.slane %v2607, 1
        %v2788 = vrot.slane %v2610, 1
        %v2789 = vrot.slane %v2615, 1
        %v2790 = vrot.slane %v2618, 1
        %v2791 = vrot.slane %v2623, 1
        %v2792 = vrot.slane %v2626, 1
        %v2793 = vrot.slane %v2631, 1
        %v2794 = vrot.slane %v2634, 1
        %v2795 = vrot.slane %v2639, 1
        %v2796 = vrot.slane %v2642, 1
        %v2797 = vrot.slane %v2647, 1
        %v2798 = vrot.slane %v2650, 1
        %v2799 = vrot.slane %v2655, 1
        %v2800 = vrot.slane %v2658, 1
        %v2801 = vrot.slane %v2663, 1
        %v2802 = vrot.slane %v2666, 1
        %v2803 = vrot.slane %v2671, 1
        %v2804 = vrot.slane %v2674, 1
        %v2805 = vlaneseq
        %v2806 = vshrl.u32 %v2805, 7
        %vm2807 = vcmp.lt.s32.totalorder %v2806, 7
        %v2808 = vsel %vm2807, %v2803, %v2804
        %v2809 = vsel %vm2807, %v2802, %v2803
        %v2810 = vsel %vm2807, %v2801, %v2802
        %v2811 = vsel %vm2807, %v2800, %v2801
        %v2812 = vsel %vm2807, %v2799, %v2800
        %v2813 = vsel %vm2807, %v2798, %v2799
        %v2814 = vsel %vm2807, %v2797, %v2798
        %v2815 = vsel %vm2807, %v2796, %v2797
        %v2816 = vsel %vm2807, %v2795, %v2796
        %v2817 = vsel %vm2807, %v2794, %v2795
        %v2818 = vsel %vm2807, %v2793, %v2794
        %v2819 = vsel %vm2807, %v2792, %v2793
        %v2820 = vsel %vm2807, %v2791, %v2792
        %v2821 = vsel %vm2807, %v2790, %v2791
        %v2822 = vsel %vm2807, %v2789, %v2790
        %v2823 = vsel %vm2807, %v2788, %v2789
        %v2824 = vsel %vm2807, %v2787, %v2788
        %v2825 = vsel %vm2807, %v2786, %v2787
        %v2826 = vsel %vm2807, %v2785, %v2786
        %v2827 = vsel %vm2807, %v2784, %v2785
        %v2828 = vsel %vm2807, %v2783, %v2784
        %v2829 = vsel %vm2807, %v2782, %v2783
        %v2830 = vsel %vm2807, %v2781, %v2782
        %v2831 = vsel %vm2807, %v2780, %v2781
        %v2832 = vsel %vm2807, %v2779, %v2780
        %v2833 = vsel %vm2807, %v2778, %v2779
        %v2834 = vsel %vm2807, %v2777, %v2778
        %v2835 = vsel %vm2807, %v2776, %v2777
        %v2836 = vsel %vm2807, %v2775, %v2776
        %v2837 = vsel %vm2807, %v2774, %v2775
        %v2838 = vsel %vm2807, %v2773, %v2774
        %v2839 = vsel %vm2807, %v2772, %v2773
        %v2840 = vsel %vm2807, %v2771, %v2772
        %v2841 = vsel %vm2807, %v2770, %v2771
        %v2842 = vsel %vm2807, %v2769, %v2770
        %v2843 = vsel %vm2807, %v2768, %v2769
        %v2844 = vsel %vm2807, %v2767, %v2768
        %v2845 = vsel %vm2807, %v2766, %v2767
        %v2846 = vsel %vm2807, %v2765, %v2766
        %v2847 = vsel %vm2807, %v2764, %v2765
        %v2848 = vsel %vm2807, %v2763, %v2764
        %v2849 = vsel %vm2807, %v2762, %v2763
        %v2850 = vsel %vm2807, %v2761, %v2762
        %v2851 = vsel %vm2807, %v2760, %v2761
        %v2852 = vsel %vm2807, %v2759, %v2760
        %v2853 = vsel %vm2807, %v2758, %v2759
        %v2854 = vsel %vm2807, %v2757, %v2758
        %v2855 = vsel %vm2807, %v2756, %v2757
        %v2856 = vsel %vm2807, %v2755, %v2756
        %v2857 = vsel %vm2807, %v2754, %v2755
        %v2858 = vsel %vm2807, %v2753, %v2754
        %v2859 = vsel %vm2807, %v2752, %v2753
        %v2860 = vsel %vm2807, %v2751, %v2752
        %v2861 = vsel %vm2807, %v2750, %v2751
        %v2862 = vsel %vm2807, %v2749, %v2750
        %v2863 = vsel %vm2807, %v2748, %v2749
        %v2864 = vsel %vm2807, %v2747, %v2748
        %v2865 = vsel %vm2807, %v2746, %v2747
        %v2866 = vsel %vm2807, %v2745, %v2746
        %v2867 = vsel %vm2807, %v2744, %v2745
        %v2868 = vsel %vm2807, %v2743, %v2744
        %v2869 = vsel %vm2807, %v2742, %v2743
        %v2870 = vsel %vm2807, %v2741, %v2742
        %v2871 = vsel %vm2807, %v2740, %v2741
        %v2872 = vsel %vm2807, %v2739, %v2740
        %v2873 = vsel %vm2807, %v2738, %v2739
        %v2874 = vsel %vm2807, %v2737, %v2738
        %v2875 = vsel %vm2807, %v2736, %v2737
        %v2876 = vsel %vm2807, %v2735, %v2736
        %v2877 = vsel %vm2807, %v2734, %v2735
        %v2878 = vsel %vm2807, %v2733, %v2734
        %v2879 = vsel %vm2807, %v2732, %v2733
        %v2880 = vsel %vm2807, %v2731, %v2732
        %v2881 = vsel %vm2807, %v2730, %v2731
        %v2882 = vsel %vm2807, %v2729, %v2730
        %v2883 = vsel %vm2807, %v2728, %v2729
        %v2884 = vsel %vm2807, %v2727, %v2728
        %v2885 = vsel %vm2807, %v2726, %v2727
        %v2886 = vsel %vm2807, %v2725, %v2726
        %v2887 = vsel %vm2807, %v2724, %v2725
        %v2888 = vsel %vm2807, %v2723, %v2724
        %v2889 = vsel %vm2807, %v2722, %v2723
        %v2890 = vsel %vm2807, %v2721, %v2722
        %v2891 = vsel %vm2807, %v2720, %v2721
        %v2892 = vsel %vm2807, %v2719, %v2720
        %v2893 = vsel %vm2807, %v2718, %v2719
        %v2894 = vsel %vm2807, %v2717, %v2718
        %v2895 = vsel %vm2807, %v2716, %v2717
        %v2896 = vsel %vm2807, %v2715, %v2716
        %v2897 = vsel %vm2807, %v2714, %v2715
        %v2898 = vsel %vm2807, %v2713, %v2714
        %v2899 = vsel %vm2807, %v2712, %v2713
        %v2900 = vsel %vm2807, %v2711, %v2712
        %v2901 = vsel %vm2807, %v2710, %v2711
        %v2902 = vsel %vm2807, %v2709, %v2710
        %v2903 = vsel %vm2807, %v2708, %v2709
        %v2904 = vsel %vm2807, %v2707, %v2708
        %v2905 = vsel %vm2807, %v2706, %v2707
        %v2906 = vsel %vm2807, %v2705, %v2706
        %v2907 = vsel %vm2807, %v2704, %v2705
        %v2908 = vsel %vm2807, %v2703, %v2704
        %v2909 = vsel %vm2807, %v2702, %v2703
        %v2910 = vsel %vm2807, %v2701, %v2702
        %v2911 = vsel %vm2807, %v2700, %v2701
        %v2912 = vsel %vm2807, %v2699, %v2700
        %v2913 = vsel %vm2807, %v2698, %v2699
        %v2914 = vsel %vm2807, %v2697, %v2698
        %v2915 = vsel %vm2807, %v2696, %v2697
        %v2916 = vsel %vm2807, %v2695, %v2696
        %v2917 = vsel %vm2807, %v2694, %v2695
        %v2918 = vsel %vm2807, %v2693, %v2694
        %v2919 = vsel %vm2807, %v2692, %v2693
        %v2920 = vsel %vm2807, %v2691, %v2692
        %v2921 = vsel %vm2807, %v2690, %v2691
        %v2922 = vsel %vm2807, %v2689, %v2690
        %v2923 = vsel %vm2807, %v2688, %v2689
        %v2924 = vsel %vm2807, %v2687, %v2688
        %v2925 = vsel %vm2807, %v2686, %v2687
        %v2926 = vsel %vm2807, %v2685, %v2686
        %v2927 = vsel %vm2807, %v2684, %v2685
        %v2928 = vsel %vm2807, %v2683, %v2684
        %v2929 = vsel %vm2807, %v2682, %v2683
        %v2930 = vsel %vm2807, %v2681, %v2682
        %v2931 = vsel %vm2807, %v2680, %v2681
        %v2932 = vsel %vm2807, %v2679, %v2680
        %v2933 = vsel %vm2807, %v2678, %v2679
        %v2934 = vsel %vm2807, %v2677, %v2678
        %v2935 = vsel %vm2807, %v2804, %v2677
        %v2952 = vunpack.c.l.b16 %v2052
        %v2953 = vunpack.c.l.b16 %v2053
        %v2954 = vunpack.c.l.b16 %v2054
        %v2955 = vunpack.c.l.b16 %v2055
        %v2956 = vunpack.c.l.b16 %v2056
        %v2957 = vunpack.c.l.b16 %v2057
        %v2958 = vunpack.c.l.b16 %v2058
        %v2959 = vunpack.c.l.b16 %v2059
        %v2960 = vunpack.c.l.b16 %v2060
        %v2961 = vunpack.c.l.b16 %v2061
        %v2962 = vunpack.c.l.b16 %v2062
        %v2963 = vunpack.c.l.b16 %v2063
        %v2964 = vunpack.c.l.b16 %v2064
        %v2965 = vunpack.c.l.b16 %v2065
        %v2966 = vunpack.c.l.b16 %v2066
        %v2967 = vunpack.c.l.b16 %v2067
        %v2968 = vpack.c.b16 %v2953, %v2952
        %v2969 = vpack.c.b16 %v2955, %v2954
        %v2970 = vpack.c.b16 %v2957, %v2956
        %v2971 = vpack.c.b16 %v2959, %v2958
        %v2972 = vpack.c.b16 %v2961, %v2960
        %v2973 = vpack.c.b16 %v2963, %v2962
        %v2974 = vpack.c.b16 %v2965, %v2964
        %v2975 = vpack.c.b16 %v2967, %v2966
        %2984 = vmatprep.subr.bf16.mxu0 0
        %2985 = vmatpush1.bf16.msra.mxu0 %v2975
        %2986 = vmatprep.subr.bf16.mxu0 0
        %2987 = vmatpush1.bf16.msra.mxu0 %v2974
        %2988 = vmatprep.subr.bf16.mxu0 0
        %2989 = vmatpush1.bf16.msra.mxu0 %v2973
        %2990 = vmatprep.subr.bf16.mxu0 0
        %2991 = vmatpush1.bf16.msra.mxu0 %v2972
        %2992 = vmatprep.subr.bf16.mxu0 0
        %2993 = vmatpush1.bf16.msra.mxu0 %v2971
        %2994 = vmatprep.subr.bf16.mxu0 0
        %2995 = vmatpush1.bf16.msra.mxu0 %v2970
        %2996 = vmatprep.subr.bf16.mxu0 0
        %2997 = vmatpush1.bf16.msra.mxu0 %v2969
        %2998 = vmatprep.subr.bf16.mxu0 0
        %2999 = vmatpush1.bf16.msra.mxu0 %v2968
        %3000 = vmatprep.subr.bf16.mxu0 0
        %3001 = vmatpush2.bf16.msra.mxu0 0
        %3002 = vmatprep.subr.bf16.mxu0 0
        %3003 = vmatpush2.bf16.msra.mxu0 0
        %3004 = vmatprep.subr.bf16.mxu0 0
        %3005 = vmatpush2.bf16.msra.mxu0 0
        %3006 = vmatprep.subr.bf16.mxu0 0
        %3007 = vmatpush2.bf16.msra.mxu0 0
        %3008 = vmatprep.subr.bf16.mxu0 0
        %3009 = vmatpush2.bf16.msra.mxu0 0
        %3010 = vmatprep.subr.bf16.mxu0 0
        %3011 = vmatpush2.bf16.msra.mxu0 0
        %3012 = vmatprep.subr.bf16.mxu0 0
        %3013 = vmatpush2.bf16.msra.mxu0 0
        %3014 = vmatprep.subr.bf16.mxu0 0
        %3015 = vmatpush2.bf16.msra.mxu0 0
        %3016 = vmatprep.mubr.bf16.mxu0 0
        %3017 = vmatmul.mubr.bf16.gmra.mxu0 %v1988
        %v3018 = vpop.f32.mrf.mxu0
        %v3019 = vadd.f32 %v2934, %v3018
        %v3020 = vpop.f32.mrf.mxu0
        %v3021 = vpop.f32.mrf.mxu0
        %v3022 = vadd.f32 %v2933, %v3021
        %v3023 = vpop.f32.mrf.mxu0
        %3024 = vmatprep.mubr.bf16.mxu0 0
        %3025 = vmatmul.mubr.bf16.gmra.mxu0 %v1989
        %v3026 = vpop.f32.mrf.mxu0
        %v3027 = vadd.f32 %v2932, %v3026
        %v3028 = vpop.f32.mrf.mxu0
        %v3029 = vpop.f32.mrf.mxu0
        %v3030 = vadd.f32 %v2931, %v3029
        %v3031 = vpop.f32.mrf.mxu0
        %3032 = vmatprep.mubr.bf16.mxu0 0
        %3033 = vmatmul.mubr.bf16.gmra.mxu0 %v1990
        %v3034 = vpop.f32.mrf.mxu0
        %v3035 = vadd.f32 %v2930, %v3034
        %v3036 = vpop.f32.mrf.mxu0
        %v3037 = vpop.f32.mrf.mxu0
        %v3038 = vadd.f32 %v2929, %v3037
        %v3039 = vpop.f32.mrf.mxu0
        %3040 = vmatprep.mubr.bf16.mxu0 0
        %3041 = vmatmul.mubr.bf16.gmra.mxu0 %v1991
        %v3042 = vpop.f32.mrf.mxu0
        %v3043 = vadd.f32 %v2928, %v3042
        %v3044 = vpop.f32.mrf.mxu0
        %v3045 = vpop.f32.mrf.mxu0
        %v3046 = vadd.f32 %v2927, %v3045
        %v3047 = vpop.f32.mrf.mxu0
        %3048 = vmatprep.mubr.bf16.mxu0 0
        %3049 = vmatmul.mubr.bf16.gmra.mxu0 %v1992
        %v3050 = vpop.f32.mrf.mxu0
        %v3051 = vadd.f32 %v2926, %v3050
        %v3052 = vpop.f32.mrf.mxu0
        %v3053 = vpop.f32.mrf.mxu0
        %v3054 = vadd.f32 %v2925, %v3053
        %v3055 = vpop.f32.mrf.mxu0
        %3056 = vmatprep.mubr.bf16.mxu0 0
        %3057 = vmatmul.mubr.bf16.gmra.mxu0 %v1993
        %v3058 = vpop.f32.mrf.mxu0
        %v3059 = vadd.f32 %v2924, %v3058
        %v3060 = vpop.f32.mrf.mxu0
        %v3061 = vpop.f32.mrf.mxu0
        %v3062 = vadd.f32 %v2923, %v3061
        %v3063 = vpop.f32.mrf.mxu0
        %3064 = vmatprep.mubr.bf16.mxu0 0
        %3065 = vmatmul.mubr.bf16.gmra.mxu0 %v1994
        %v3066 = vpop.f32.mrf.mxu0
        %v3067 = vadd.f32 %v2922, %v3066
        %v3068 = vpop.f32.mrf.mxu0
        %v3069 = vpop.f32.mrf.mxu0
        %v3070 = vadd.f32 %v2921, %v3069
        %v3071 = vpop.f32.mrf.mxu0
        %3072 = vmatprep.mubr.bf16.mxu0 0
        %3073 = vmatmul.mubr.bf16.gmra.mxu0 %v1995
        %v3074 = vpop.f32.mrf.mxu0
        %v3075 = vadd.f32 %v2920, %v3074
        %v3076 = vpop.f32.mrf.mxu0
        %v3077 = vpop.f32.mrf.mxu0
        %v3078 = vadd.f32 %v2919, %v3077
        %v3079 = vpop.f32.mrf.mxu0
        %3080 = vmatprep.mubr.bf16.mxu0 0
        %3081 = vmatmul.mubr.bf16.gmra.mxu0 %v1996
        %v3082 = vpop.f32.mrf.mxu0
        %v3083 = vadd.f32 %v2918, %v3082
        %v3084 = vpop.f32.mrf.mxu0
        %v3085 = vpop.f32.mrf.mxu0
        %v3086 = vadd.f32 %v2917, %v3085
        %v3087 = vpop.f32.mrf.mxu0
        %3088 = vmatprep.mubr.bf16.mxu0 0
        %3089 = vmatmul.mubr.bf16.gmra.mxu0 %v1997
        %v3090 = vpop.f32.mrf.mxu0
        %v3091 = vadd.f32 %v2916, %v3090
        %v3092 = vpop.f32.mrf.mxu0
        %v3093 = vpop.f32.mrf.mxu0
        %v3094 = vadd.f32 %v2915, %v3093
        %v3095 = vpop.f32.mrf.mxu0
        %3096 = vmatprep.mubr.bf16.mxu0 0
        %3097 = vmatmul.mubr.bf16.gmra.mxu0 %v1998
        %v3098 = vpop.f32.mrf.mxu0
        %v3099 = vadd.f32 %v2914, %v3098
        %v3100 = vpop.f32.mrf.mxu0
        %v3101 = vpop.f32.mrf.mxu0
        %v3102 = vadd.f32 %v2913, %v3101
        %v3103 = vpop.f32.mrf.mxu0
        %3104 = vmatprep.mubr.bf16.mxu0 0
        %3105 = vmatmul.mubr.bf16.gmra.mxu0 %v1999
        %v3106 = vpop.f32.mrf.mxu0
        %v3107 = vadd.f32 %v2912, %v3106
        %v3108 = vpop.f32.mrf.mxu0
        %v3109 = vpop.f32.mrf.mxu0
        %v3110 = vadd.f32 %v2911, %v3109
        %v3111 = vpop.f32.mrf.mxu0
        %3112 = vmatprep.mubr.bf16.mxu0 0
        %3113 = vmatmul.mubr.bf16.gmra.mxu0 %v2000
        %v3114 = vpop.f32.mrf.mxu0
        %v3115 = vadd.f32 %v2910, %v3114
        %v3116 = vpop.f32.mrf.mxu0
        %v3117 = vpop.f32.mrf.mxu0
        %v3118 = vadd.f32 %v2909, %v3117
        %v3119 = vpop.f32.mrf.mxu0
        %3120 = vmatprep.mubr.bf16.mxu0 0
        %3121 = vmatmul.mubr.bf16.gmra.mxu0 %v2001
        %v3122 = vpop.f32.mrf.mxu0
        %v3123 = vadd.f32 %v2908, %v3122
        %v3124 = vpop.f32.mrf.mxu0
        %v3125 = vpop.f32.mrf.mxu0
        %v3126 = vadd.f32 %v2907, %v3125
        %v3127 = vpop.f32.mrf.mxu0
        %3128 = vmatprep.mubr.bf16.mxu0 0
        %3129 = vmatmul.mubr.bf16.gmra.mxu0 %v2002
        %v3130 = vpop.f32.mrf.mxu0
        %v3131 = vadd.f32 %v2906, %v3130
        %v3132 = vpop.f32.mrf.mxu0
        %v3133 = vpop.f32.mrf.mxu0
        %v3134 = vadd.f32 %v2905, %v3133
        %v3135 = vpop.f32.mrf.mxu0
        %3136 = vmatprep.mubr.bf16.mxu0 0
        %3137 = vmatmul.mubr.bf16.gmra.mxu0 %v2003
        %v3138 = vpop.f32.mrf.mxu0
        %v3139 = vadd.f32 %v2904, %v3138
        %v3140 = vpop.f32.mrf.mxu0
        %v3141 = vpop.f32.mrf.mxu0
        %v3142 = vadd.f32 %v2903, %v3141
        %v3143 = vpop.f32.mrf.mxu0
        %3144 = vmatprep.mubr.bf16.mxu0 0
        %3145 = vmatmul.mubr.bf16.gmra.mxu0 %v2004
        %v3146 = vpop.f32.mrf.mxu0
        %v3147 = vadd.f32 %v2902, %v3146
        %v3148 = vpop.f32.mrf.mxu0
        %v3149 = vpop.f32.mrf.mxu0
        %v3150 = vadd.f32 %v2901, %v3149
        %v3151 = vpop.f32.mrf.mxu0
        %3152 = vmatprep.mubr.bf16.mxu0 0
        %3153 = vmatmul.mubr.bf16.gmra.mxu0 %v2005
        %v3154 = vpop.f32.mrf.mxu0
        %v3155 = vadd.f32 %v2900, %v3154
        %v3156 = vpop.f32.mrf.mxu0
        %v3157 = vpop.f32.mrf.mxu0
        %v3158 = vadd.f32 %v2899, %v3157
        %v3159 = vpop.f32.mrf.mxu0
        %3160 = vmatprep.mubr.bf16.mxu0 0
        %3161 = vmatmul.mubr.bf16.gmra.mxu0 %v2006
        %v3162 = vpop.f32.mrf.mxu0
        %v3163 = vadd.f32 %v2898, %v3162
        %v3164 = vpop.f32.mrf.mxu0
        %v3165 = vpop.f32.mrf.mxu0
        %v3166 = vadd.f32 %v2897, %v3165
        %v3167 = vpop.f32.mrf.mxu0
        %3168 = vmatprep.mubr.bf16.mxu0 0
        %3169 = vmatmul.mubr.bf16.gmra.mxu0 %v2007
        %v3170 = vpop.f32.mrf.mxu0
        %v3171 = vadd.f32 %v2896, %v3170
        %v3172 = vpop.f32.mrf.mxu0
        %v3173 = vpop.f32.mrf.mxu0
        %v3174 = vadd.f32 %v2895, %v3173
        %v3175 = vpop.f32.mrf.mxu0
        %3176 = vmatprep.mubr.bf16.mxu0 0
        %3177 = vmatmul.mubr.bf16.gmra.mxu0 %v2008
        %v3178 = vpop.f32.mrf.mxu0
        %v3179 = vadd.f32 %v2894, %v3178
        %v3180 = vpop.f32.mrf.mxu0
        %v3181 = vpop.f32.mrf.mxu0
        %v3182 = vadd.f32 %v2893, %v3181
        %v3183 = vpop.f32.mrf.mxu0
        %3184 = vmatprep.mubr.bf16.mxu0 0
        %3185 = vmatmul.mubr.bf16.gmra.mxu0 %v2009
        %v3186 = vpop.f32.mrf.mxu0
        %v3187 = vadd.f32 %v2892, %v3186
        %v3188 = vpop.f32.mrf.mxu0
        %v3189 = vpop.f32.mrf.mxu0
        %v3190 = vadd.f32 %v2891, %v3189
        %v3191 = vpop.f32.mrf.mxu0
        %3192 = vmatprep.mubr.bf16.mxu0 0
        %3193 = vmatmul.mubr.bf16.gmra.mxu0 %v2010
        %v3194 = vpop.f32.mrf.mxu0
        %v3195 = vadd.f32 %v2890, %v3194
        %v3196 = vpop.f32.mrf.mxu0
        %v3197 = vpop.f32.mrf.mxu0
        %v3198 = vadd.f32 %v2889, %v3197
        %v3199 = vpop.f32.mrf.mxu0
        %3200 = vmatprep.mubr.bf16.mxu0 0
        %3201 = vmatmul.mubr.bf16.gmra.mxu0 %v2011
        %v3202 = vpop.f32.mrf.mxu0
        %v3203 = vadd.f32 %v2888, %v3202
        %v3204 = vpop.f32.mrf.mxu0
        %v3205 = vpop.f32.mrf.mxu0
        %v3206 = vadd.f32 %v2887, %v3205
        %v3207 = vpop.f32.mrf.mxu0
        %3208 = vmatprep.mubr.bf16.mxu0 0
        %3209 = vmatmul.mubr.bf16.gmra.mxu0 %v2012
        %v3210 = vpop.f32.mrf.mxu0
        %v3211 = vadd.f32 %v2886, %v3210
        %v3212 = vpop.f32.mrf.mxu0
        %v3213 = vpop.f32.mrf.mxu0
        %v3214 = vadd.f32 %v2885, %v3213
        %v3215 = vpop.f32.mrf.mxu0
        %3216 = vmatprep.mubr.bf16.mxu0 0
        %3217 = vmatmul.mubr.bf16.gmra.mxu0 %v2013
        %v3218 = vpop.f32.mrf.mxu0
        %v3219 = vadd.f32 %v2884, %v3218
        %v3220 = vpop.f32.mrf.mxu0
        %v3221 = vpop.f32.mrf.mxu0
        %v3222 = vadd.f32 %v2883, %v3221
        %v3223 = vpop.f32.mrf.mxu0
        %3224 = vmatprep.mubr.bf16.mxu0 0
        %3225 = vmatmul.mubr.bf16.gmra.mxu0 %v2014
        %v3226 = vpop.f32.mrf.mxu0
        %v3227 = vadd.f32 %v2882, %v3226
        %v3228 = vpop.f32.mrf.mxu0
        %v3229 = vpop.f32.mrf.mxu0
        %v3230 = vadd.f32 %v2881, %v3229
        %v3231 = vpop.f32.mrf.mxu0
        %3232 = vmatprep.mubr.bf16.mxu0 0
        %3233 = vmatmul.mubr.bf16.gmra.mxu0 %v2015
        %v3234 = vpop.f32.mrf.mxu0
        %v3235 = vadd.f32 %v2880, %v3234
        %v3236 = vpop.f32.mrf.mxu0
        %v3237 = vpop.f32.mrf.mxu0
        %v3238 = vadd.f32 %v2879, %v3237
        %v3239 = vpop.f32.mrf.mxu0
        %3240 = vmatprep.mubr.bf16.mxu0 0
        %3241 = vmatmul.mubr.bf16.gmra.mxu0 %v2016
        %v3242 = vpop.f32.mrf.mxu0
        %v3243 = vadd.f32 %v2878, %v3242
        %v3244 = vpop.f32.mrf.mxu0
        %v3245 = vpop.f32.mrf.mxu0
        %v3246 = vadd.f32 %v2877, %v3245
        %v3247 = vpop.f32.mrf.mxu0
        %3248 = vmatprep.mubr.bf16.mxu0 0
        %3249 = vmatmul.mubr.bf16.gmra.mxu0 %v2017
        %v3250 = vpop.f32.mrf.mxu0
        %v3251 = vadd.f32 %v2876, %v3250
        %v3252 = vpop.f32.mrf.mxu0
        %v3253 = vpop.f32.mrf.mxu0
        %v3254 = vadd.f32 %v2875, %v3253
        %v3255 = vpop.f32.mrf.mxu0
        %3256 = vmatprep.mubr.bf16.mxu0 0
        %3257 = vmatmul.mubr.bf16.gmra.mxu0 %v2018
        %v3258 = vpop.f32.mrf.mxu0
        %v3259 = vadd.f32 %v2874, %v3258
        %v3260 = vpop.f32.mrf.mxu0
        %v3261 = vpop.f32.mrf.mxu0
        %v3262 = vadd.f32 %v2873, %v3261
        %v3263 = vpop.f32.mrf.mxu0
        %3264 = vmatprep.mubr.bf16.mxu0 0
        %3265 = vmatmul.mubr.bf16.gmra.mxu0 %v2019
        %v3266 = vpop.f32.mrf.mxu0
        %v3267 = vadd.f32 %v2872, %v3266
        %v3268 = vpop.f32.mrf.mxu0
        %v3269 = vpop.f32.mrf.mxu0
        %v3270 = vadd.f32 %v2871, %v3269
        %v3271 = vpop.f32.mrf.mxu0
        %3272 = vmatprep.mubr.bf16.mxu0 0
        %3273 = vmatmul.mubr.bf16.gmra.mxu0 %v2020
        %v3274 = vpop.f32.mrf.mxu0
        %v3275 = vadd.f32 %v2870, %v3274
        %v3276 = vpop.f32.mrf.mxu0
        %v3277 = vpop.f32.mrf.mxu0
        %v3278 = vadd.f32 %v2869, %v3277
        %v3279 = vpop.f32.mrf.mxu0
        %3280 = vmatprep.mubr.bf16.mxu0 0
        %3281 = vmatmul.mubr.bf16.gmra.mxu0 %v2021
        %v3282 = vpop.f32.mrf.mxu0
        %v3283 = vadd.f32 %v2868, %v3282
        %v3284 = vpop.f32.mrf.mxu0
        %v3285 = vpop.f32.mrf.mxu0
        %v3286 = vadd.f32 %v2867, %v3285
        %v3287 = vpop.f32.mrf.mxu0
        %3288 = vmatprep.mubr.bf16.mxu0 0
        %3289 = vmatmul.mubr.bf16.gmra.mxu0 %v2022
        %v3290 = vpop.f32.mrf.mxu0
        %v3291 = vadd.f32 %v2866, %v3290
        %v3292 = vpop.f32.mrf.mxu0
        %v3293 = vpop.f32.mrf.mxu0
        %v3294 = vadd.f32 %v2865, %v3293
        %v3295 = vpop.f32.mrf.mxu0
        %3296 = vmatprep.mubr.bf16.mxu0 0
        %3297 = vmatmul.mubr.bf16.gmra.mxu0 %v2023
        %v3298 = vpop.f32.mrf.mxu0
        %v3299 = vadd.f32 %v2864, %v3298
        %v3300 = vpop.f32.mrf.mxu0
        %v3301 = vpop.f32.mrf.mxu0
        %v3302 = vadd.f32 %v2863, %v3301
        %v3303 = vpop.f32.mrf.mxu0
        %3304 = vmatprep.mubr.bf16.mxu0 0
        %3305 = vmatmul.mubr.bf16.gmra.mxu0 %v2024
        %v3306 = vpop.f32.mrf.mxu0
        %v3307 = vadd.f32 %v2862, %v3306
        %v3308 = vpop.f32.mrf.mxu0
        %v3309 = vpop.f32.mrf.mxu0
        %v3310 = vadd.f32 %v2861, %v3309
        %v3311 = vpop.f32.mrf.mxu0
        %3312 = vmatprep.mubr.bf16.mxu0 0
        %3313 = vmatmul.mubr.bf16.gmra.mxu0 %v2025
        %v3314 = vpop.f32.mrf.mxu0
        %v3315 = vadd.f32 %v2860, %v3314
        %v3316 = vpop.f32.mrf.mxu0
        %v3317 = vpop.f32.mrf.mxu0
        %v3318 = vadd.f32 %v2859, %v3317
        %v3319 = vpop.f32.mrf.mxu0
        %3320 = vmatprep.mubr.bf16.mxu0 0
        %3321 = vmatmul.mubr.bf16.gmra.mxu0 %v2026
        %v3322 = vpop.f32.mrf.mxu0
        %v3323 = vadd.f32 %v2858, %v3322
        %v3324 = vpop.f32.mrf.mxu0
        %v3325 = vpop.f32.mrf.mxu0
        %v3326 = vadd.f32 %v2857, %v3325
        %v3327 = vpop.f32.mrf.mxu0
        %3328 = vmatprep.mubr.bf16.mxu0 0
        %3329 = vmatmul.mubr.bf16.gmra.mxu0 %v2027
        %v3330 = vpop.f32.mrf.mxu0
        %v3331 = vadd.f32 %v2856, %v3330
        %v3332 = vpop.f32.mrf.mxu0
        %v3333 = vpop.f32.mrf.mxu0
        %v3334 = vadd.f32 %v2855, %v3333
        %v3335 = vpop.f32.mrf.mxu0
        %3336 = vmatprep.mubr.bf16.mxu0 0
        %3337 = vmatmul.mubr.bf16.gmra.mxu0 %v2028
        %v3338 = vpop.f32.mrf.mxu0
        %v3339 = vadd.f32 %v2854, %v3338
        %v3340 = vpop.f32.mrf.mxu0
        %v3341 = vpop.f32.mrf.mxu0
        %v3342 = vadd.f32 %v2853, %v3341
        %v3343 = vpop.f32.mrf.mxu0
        %3344 = vmatprep.mubr.bf16.mxu0 0
        %3345 = vmatmul.mubr.bf16.gmra.mxu0 %v2029
        %v3346 = vpop.f32.mrf.mxu0
        %v3347 = vadd.f32 %v2852, %v3346
        %v3348 = vpop.f32.mrf.mxu0
        %v3349 = vpop.f32.mrf.mxu0
        %v3350 = vadd.f32 %v2851, %v3349
        %v3351 = vpop.f32.mrf.mxu0
        %3352 = vmatprep.mubr.bf16.mxu0 0
        %3353 = vmatmul.mubr.bf16.gmra.mxu0 %v2030
        %v3354 = vpop.f32.mrf.mxu0
        %v3355 = vadd.f32 %v2850, %v3354
        %v3356 = vpop.f32.mrf.mxu0
        %v3357 = vpop.f32.mrf.mxu0
        %v3358 = vadd.f32 %v2849, %v3357
        %v3359 = vpop.f32.mrf.mxu0
        %3360 = vmatprep.mubr.bf16.mxu0 0
        %3361 = vmatmul.mubr.bf16.gmra.mxu0 %v2031
        %v3362 = vpop.f32.mrf.mxu0
        %v3363 = vadd.f32 %v2848, %v3362
        %v3364 = vpop.f32.mrf.mxu0
        %v3365 = vpop.f32.mrf.mxu0
        %v3366 = vadd.f32 %v2847, %v3365
        %v3367 = vpop.f32.mrf.mxu0
        %3368 = vmatprep.mubr.bf16.mxu0 0
        %3369 = vmatmul.mubr.bf16.gmra.mxu0 %v2032
        %v3370 = vpop.f32.mrf.mxu0
        %v3371 = vadd.f32 %v2846, %v3370
        %v3372 = vpop.f32.mrf.mxu0
        %v3373 = vpop.f32.mrf.mxu0
        %v3374 = vadd.f32 %v2845, %v3373
        %v3375 = vpop.f32.mrf.mxu0
        %3376 = vmatprep.mubr.bf16.mxu0 0
        %3377 = vmatmul.mubr.bf16.gmra.mxu0 %v2033
        %v3378 = vpop.f32.mrf.mxu0
        %v3379 = vadd.f32 %v2844, %v3378
        %v3380 = vpop.f32.mrf.mxu0
        %v3381 = vpop.f32.mrf.mxu0
        %v3382 = vadd.f32 %v2843, %v3381
        %v3383 = vpop.f32.mrf.mxu0
        %3384 = vmatprep.mubr.bf16.mxu0 0
        %3385 = vmatmul.mubr.bf16.gmra.mxu0 %v2034
        %v3386 = vpop.f32.mrf.mxu0
        %v3387 = vadd.f32 %v2842, %v3386
        %v3388 = vpop.f32.mrf.mxu0
        %v3389 = vpop.f32.mrf.mxu0
        %v3390 = vadd.f32 %v2841, %v3389
        %v3391 = vpop.f32.mrf.mxu0
        %3392 = vmatprep.mubr.bf16.mxu0 0
        %3393 = vmatmul.mubr.bf16.gmra.mxu0 %v2035
        %v3394 = vpop.f32.mrf.mxu0
        %v3395 = vadd.f32 %v2840, %v3394
        %v3396 = vpop.f32.mrf.mxu0
        %v3397 = vpop.f32.mrf.mxu0
        %v3398 = vadd.f32 %v2839, %v3397
        %v3399 = vpop.f32.mrf.mxu0
        %3400 = vmatprep.mubr.bf16.mxu0 0
        %3401 = vmatmul.mubr.bf16.gmra.mxu0 %v2036
        %v3402 = vpop.f32.mrf.mxu0
        %v3403 = vadd.f32 %v2838, %v3402
        %v3404 = vpop.f32.mrf.mxu0
        %v3405 = vpop.f32.mrf.mxu0
        %v3406 = vadd.f32 %v2837, %v3405
        %v3407 = vpop.f32.mrf.mxu0
        %3408 = vmatprep.mubr.bf16.mxu0 0
        %3409 = vmatmul.mubr.bf16.gmra.mxu0 %v2037
        %v3410 = vpop.f32.mrf.mxu0
        %v3411 = vadd.f32 %v2836, %v3410
        %v3412 = vpop.f32.mrf.mxu0
        %v3413 = vpop.f32.mrf.mxu0
        %v3414 = vadd.f32 %v2835, %v3413
        %v3415 = vpop.f32.mrf.mxu0
        %3416 = vmatprep.mubr.bf16.mxu0 0
        %3417 = vmatmul.mubr.bf16.gmra.mxu0 %v2038
        %v3418 = vpop.f32.mrf.mxu0
        %v3419 = vadd.f32 %v2834, %v3418
        %v3420 = vpop.f32.mrf.mxu0
        %v3421 = vpop.f32.mrf.mxu0
        %v3422 = vadd.f32 %v2833, %v3421
        %v3423 = vpop.f32.mrf.mxu0
        %3424 = vmatprep.mubr.bf16.mxu0 0
        %3425 = vmatmul.mubr.bf16.gmra.mxu0 %v2039
        %v3426 = vpop.f32.mrf.mxu0
        %v3427 = vadd.f32 %v2832, %v3426
        %v3428 = vpop.f32.mrf.mxu0
        %v3429 = vpop.f32.mrf.mxu0
        %v3430 = vadd.f32 %v2831, %v3429
        %v3431 = vpop.f32.mrf.mxu0
        %3432 = vmatprep.mubr.bf16.mxu0 0
        %3433 = vmatmul.mubr.bf16.gmra.mxu0 %v2040
        %v3434 = vpop.f32.mrf.mxu0
        %v3435 = vadd.f32 %v2830, %v3434
        %v3436 = vpop.f32.mrf.mxu0
        %v3437 = vpop.f32.mrf.mxu0
        %v3438 = vadd.f32 %v2829, %v3437
        %v3439 = vpop.f32.mrf.mxu0
        %3440 = vmatprep.mubr.bf16.mxu0 0
        %3441 = vmatmul.mubr.bf16.gmra.mxu0 %v2041
        %v3442 = vpop.f32.mrf.mxu0
        %v3443 = vadd.f32 %v2828, %v3442
        %v3444 = vpop.f32.mrf.mxu0
        %v3445 = vpop.f32.mrf.mxu0
        %v3446 = vadd.f32 %v2827, %v3445
        %v3447 = vpop.f32.mrf.mxu0
        %3448 = vmatprep.mubr.bf16.mxu0 0
        %3449 = vmatmul.mubr.bf16.gmra.mxu0 %v2042
        %v3450 = vpop.f32.mrf.mxu0
        %v3451 = vadd.f32 %v2826, %v3450
        %v3452 = vpop.f32.mrf.mxu0
        %v3453 = vpop.f32.mrf.mxu0
        %v3454 = vadd.f32 %v2825, %v3453
        %v3455 = vpop.f32.mrf.mxu0
        %3456 = vmatprep.mubr.bf16.mxu0 0
        %3457 = vmatmul.mubr.bf16.gmra.mxu0 %v2043
        %v3458 = vpop.f32.mrf.mxu0
        %v3459 = vadd.f32 %v2824, %v3458
        %v3460 = vpop.f32.mrf.mxu0
        %v3461 = vpop.f32.mrf.mxu0
        %v3462 = vadd.f32 %v2823, %v3461
        %v3463 = vpop.f32.mrf.mxu0
        %3464 = vmatprep.mubr.bf16.mxu0 0
        %3465 = vmatmul.mubr.bf16.gmra.mxu0 %v2044
        %v3466 = vpop.f32.mrf.mxu0
        %v3467 = vadd.f32 %v2822, %v3466
        %v3468 = vpop.f32.mrf.mxu0
        %v3469 = vpop.f32.mrf.mxu0
        %v3470 = vadd.f32 %v2821, %v3469
        %v3471 = vpop.f32.mrf.mxu0
        %3472 = vmatprep.mubr.bf16.mxu0 0
        %3473 = vmatmul.mubr.bf16.gmra.mxu0 %v2045
        %v3474 = vpop.f32.mrf.mxu0
        %v3475 = vadd.f32 %v2820, %v3474
        %v3476 = vpop.f32.mrf.mxu0
        %v3477 = vpop.f32.mrf.mxu0
        %v3478 = vadd.f32 %v2819, %v3477
        %v3479 = vpop.f32.mrf.mxu0
        %3480 = vmatprep.mubr.bf16.mxu0 0
        %3481 = vmatmul.mubr.bf16.gmra.mxu0 %v2046
        %v3482 = vpop.f32.mrf.mxu0
        %v3483 = vadd.f32 %v2818, %v3482
        %v3484 = vpop.f32.mrf.mxu0
        %v3485 = vpop.f32.mrf.mxu0
        %v3486 = vadd.f32 %v2817, %v3485
        %v3487 = vpop.f32.mrf.mxu0
        %3488 = vmatprep.mubr.bf16.mxu0 0
        %3489 = vmatmul.mubr.bf16.gmra.mxu0 %v2047
        %v3490 = vpop.f32.mrf.mxu0
        %v3491 = vadd.f32 %v2816, %v3490
        %v3492 = vpop.f32.mrf.mxu0
        %v3493 = vpop.f32.mrf.mxu0
        %v3494 = vadd.f32 %v2815, %v3493
        %v3495 = vpop.f32.mrf.mxu0
        %3496 = vmatprep.mubr.bf16.mxu0 0
        %3497 = vmatmul.mubr.bf16.gmra.mxu0 %v2048
        %v3498 = vpop.f32.mrf.mxu0
        %v3499 = vadd.f32 %v2814, %v3498
        %v3500 = vpop.f32.mrf.mxu0
        %v3501 = vpop.f32.mrf.mxu0
        %v3502 = vadd.f32 %v2813, %v3501
        %v3503 = vpop.f32.mrf.mxu0
        %3504 = vmatprep.mubr.bf16.mxu0 0
        %3505 = vmatmul.mubr.bf16.gmra.mxu0 %v2049
        %v3506 = vpop.f32.mrf.mxu0
        %v3507 = vadd.f32 %v2812, %v3506
        %v3508 = vpop.f32.mrf.mxu0
        %v3509 = vpop.f32.mrf.mxu0
        %v3510 = vadd.f32 %v2811, %v3509
        %v3511 = vpop.f32.mrf.mxu0
        %3512 = vmatprep.mubr.bf16.mxu0 0
        %3513 = vmatmul.mubr.bf16.gmra.mxu0 %v2050
        %v3514 = vpop.f32.mrf.mxu0
        %v3515 = vadd.f32 %v2810, %v3514
        %v3516 = vpop.f32.mrf.mxu0
        %v3517 = vpop.f32.mrf.mxu0
        %v3518 = vadd.f32 %v2809, %v3517
        %v3519 = vpop.f32.mrf.mxu0
        %3520 = vmatprep.mubr.bf16.mxu0 0
        %3521 = vmatmul.mubr.bf16.gmra.mxu0 %v2051
        %v3522 = vpop.f32.mrf.mxu0
        %v3523 = vadd.f32 %v2808, %v3522
        %v3524 = vpop.f32.mrf.mxu0
        %v3525 = vpop.f32.mrf.mxu0
        %v3526 = vadd.f32 %v2935, %v3525
        %v3527 = vpop.f32.mrf.mxu0
        %3528 = vdwg.mxu0
        %v3529 = vld [vmem:[#allocation2 + $0x8] sm:$0xf]
        %v3530 = vld [vmem:[#allocation2 + $0x1c] sm:$0xf]
        %v3531 = vld [vmem:[#allocation2 + $0x30] sm:$0xf]
        %v3532 = vld [vmem:[#allocation2 + $0x44] sm:$0xf]
        %v3533 = vld [vmem:[#allocation2 + $0x58] sm:$0xf]
        %v3534 = vld [vmem:[#allocation2 + $0x6c] sm:$0xf]
        %v3535 = vld [vmem:[#allocation2 + $0x80] sm:$0xf]
        %v3536 = vld [vmem:[#allocation2 + $0x94] sm:$0xf]
        %v3537 = vld [vmem:[#allocation2 + $0xa8] sm:$0xf]
        %v3538 = vld [vmem:[#allocation2 + $0xbc] sm:$0xf]
        %v3539 = vld [vmem:[#allocation2 + $0xd0] sm:$0xf]
        %v3540 = vld [vmem:[#allocation2 + $0xe4] sm:$0xf]
        %v3541 = vld [vmem:[#allocation2 + $0xf8] sm:$0xf]
        %v3542 = vld [vmem:[#allocation2 + $0x10c] sm:$0xf]
        %v3543 = vld [vmem:[#allocation2 + $0x120] sm:$0xf]
        %v3544 = vld [vmem:[#allocation2 + $0x134] sm:$0xf]
        %v3561 = vunpack.c.l.b16 %v3529
        %v3562 = vunpack.c.l.b16 %v3530
        %v3563 = vunpack.c.l.b16 %v3531
        %v3564 = vunpack.c.l.b16 %v3532
        %v3565 = vunpack.c.l.b16 %v3533
        %v3566 = vunpack.c.l.b16 %v3534
        %v3567 = vunpack.c.l.b16 %v3535
        %v3568 = vunpack.c.l.b16 %v3536
        %v3569 = vunpack.c.l.b16 %v3537
        %v3570 = vunpack.c.l.b16 %v3538
        %v3571 = vunpack.c.l.b16 %v3539
        %v3572 = vunpack.c.l.b16 %v3540
        %v3573 = vunpack.c.l.b16 %v3541
        %v3574 = vunpack.c.l.b16 %v3542
        %v3575 = vunpack.c.l.b16 %v3543
        %v3576 = vunpack.c.l.b16 %v3544
        %v3577 = vpack.c.b16 %v3562, %v3561
        %v3578 = vpack.c.b16 %v3564, %v3563
        %v3579 = vpack.c.b16 %v3566, %v3565
        %v3580 = vpack.c.b16 %v3568, %v3567
        %v3581 = vpack.c.b16 %v3570, %v3569
        %v3582 = vpack.c.b16 %v3572, %v3571
        %v3583 = vpack.c.b16 %v3574, %v3573
        %v3584 = vpack.c.b16 %v3576, %v3575
        %3593 = vmatprep.subr.bf16.mxu0 0
        %3594 = vmatpush1.bf16.msra.mxu0 %v3584
        %3595 = vmatprep.subr.bf16.mxu0 0
        %3596 = vmatpush1.bf16.msra.mxu0 %v3583
        %3597 = vmatprep.subr.bf16.mxu0 0
        %3598 = vmatpush1.bf16.msra.mxu0 %v3582
        %3599 = vmatprep.subr.bf16.mxu0 0
        %3600 = vmatpush1.bf16.msra.mxu0 %v3581
        %3601 = vmatprep.subr.bf16.mxu0 0
        %3602 = vmatpush1.bf16.msra.mxu0 %v3580
        %3603 = vmatprep.subr.bf16.mxu0 0
        %3604 = vmatpush1.bf16.msra.mxu0 %v3579
        %3605 = vmatprep.subr.bf16.mxu0 0
        %3606 = vmatpush1.bf16.msra.mxu0 %v3578
        %3607 = vmatprep.subr.bf16.mxu0 0
        %3608 = vmatpush1.bf16.msra.mxu0 %v3577
        %3609 = vmatprep.subr.bf16.mxu0 0
        %3610 = vmatpush2.bf16.msra.mxu0 0
        %3611 = vmatprep.subr.bf16.mxu0 0
        %3612 = vmatpush2.bf16.msra.mxu0 0
        %3613 = vmatprep.subr.bf16.mxu0 0
        %3614 = vmatpush2.bf16.msra.mxu0 0
        %3615 = vmatprep.subr.bf16.mxu0 0
        %3616 = vmatpush2.bf16.msra.mxu0 0
        %3617 = vmatprep.subr.bf16.mxu0 0
        %3618 = vmatpush2.bf16.msra.mxu0 0
        %3619 = vmatprep.subr.bf16.mxu0 0
        %3620 = vmatpush2.bf16.msra.mxu0 0
        %3621 = vmatprep.subr.bf16.mxu0 0
        %3622 = vmatpush2.bf16.msra.mxu0 0
        %3623 = vmatprep.subr.bf16.mxu0 0
        %3624 = vmatpush2.bf16.msra.mxu0 0
        %3625 = vmatprep.mubr.bf16.mxu0 0
        %3626 = vmatmul.mubr.bf16.gmra.mxu0 %v1988
        %v3627 = vpop.f32.mrf.mxu0
        %v3628 = vadd.f32 0.0, %v3627
        %v3629 = vpop.f32.mrf.mxu0
        %v3630 = vpop.f32.mrf.mxu0
        %v3631 = vadd.f32 0.0, %v3630
        %v3632 = vpop.f32.mrf.mxu0
        %3633 = vmatprep.mubr.bf16.mxu0 0
        %3634 = vmatmul.mubr.bf16.gmra.mxu0 %v1989
        %v3635 = vpop.f32.mrf.mxu0
        %v3636 = vadd.f32 0.0, %v3635
        %v3637 = vpop.f32.mrf.mxu0
        %v3638 = vpop.f32.mrf.mxu0
        %v3639 = vadd.f32 0.0, %v3638
        %v3640 = vpop.f32.mrf.mxu0
        %3641 = vmatprep.mubr.bf16.mxu0 0
        %3642 = vmatmul.mubr.bf16.gmra.mxu0 %v1990
        %v3643 = vpop.f32.mrf.mxu0
        %v3644 = vadd.f32 0.0, %v3643
        %v3645 = vpop.f32.mrf.mxu0
        %v3646 = vpop.f32.mrf.mxu0
        %v3647 = vadd.f32 0.0, %v3646
        %v3648 = vpop.f32.mrf.mxu0
        %3649 = vmatprep.mubr.bf16.mxu0 0
        %3650 = vmatmul.mubr.bf16.gmra.mxu0 %v1991
        %v3651 = vpop.f32.mrf.mxu0
        %v3652 = vadd.f32 0.0, %v3651
        %v3653 = vpop.f32.mrf.mxu0
        %v3654 = vpop.f32.mrf.mxu0
        %v3655 = vadd.f32 0.0, %v3654
        %v3656 = vpop.f32.mrf.mxu0
        %3657 = vmatprep.mubr.bf16.mxu0 0
        %3658 = vmatmul.mubr.bf16.gmra.mxu0 %v1992
        %v3659 = vpop.f32.mrf.mxu0
        %v3660 = vadd.f32 0.0, %v3659
        %v3661 = vpop.f32.mrf.mxu0
        %v3662 = vpop.f32.mrf.mxu0
        %v3663 = vadd.f32 0.0, %v3662
        %v3664 = vpop.f32.mrf.mxu0
        %3665 = vmatprep.mubr.bf16.mxu0 0
        %3666 = vmatmul.mubr.bf16.gmra.mxu0 %v1993
        %v3667 = vpop.f32.mrf.mxu0
        %v3668 = vadd.f32 0.0, %v3667
        %v3669 = vpop.f32.mrf.mxu0
        %v3670 = vpop.f32.mrf.mxu0
        %v3671 = vadd.f32 0.0, %v3670
        %v3672 = vpop.f32.mrf.mxu0
        %3673 = vmatprep.mubr.bf16.mxu0 0
        %3674 = vmatmul.mubr.bf16.gmra.mxu0 %v1994
        %v3675 = vpop.f32.mrf.mxu0
        %v3676 = vadd.f32 0.0, %v3675
        %v3677 = vpop.f32.mrf.mxu0
        %v3678 = vpop.f32.mrf.mxu0
        %v3679 = vadd.f32 0.0, %v3678
        %v3680 = vpop.f32.mrf.mxu0
        %3681 = vmatprep.mubr.bf16.mxu0 0
        %3682 = vmatmul.mubr.bf16.gmra.mxu0 %v1995
        %v3683 = vpop.f32.mrf.mxu0
        %v3684 = vadd.f32 0.0, %v3683
        %v3685 = vpop.f32.mrf.mxu0
        %v3686 = vpop.f32.mrf.mxu0
        %v3687 = vadd.f32 0.0, %v3686
        %v3688 = vpop.f32.mrf.mxu0
        %3689 = vmatprep.mubr.bf16.mxu0 0
        %3690 = vmatmul.mubr.bf16.gmra.mxu0 %v1996
        %v3691 = vpop.f32.mrf.mxu0
        %v3692 = vadd.f32 0.0, %v3691
        %v3693 = vpop.f32.mrf.mxu0
        %v3694 = vpop.f32.mrf.mxu0
        %v3695 = vadd.f32 0.0, %v3694
        %v3696 = vpop.f32.mrf.mxu0
        %3697 = vmatprep.mubr.bf16.mxu0 0
        %3698 = vmatmul.mubr.bf16.gmra.mxu0 %v1997
        %v3699 = vpop.f32.mrf.mxu0
        %v3700 = vadd.f32 0.0, %v3699
        %v3701 = vpop.f32.mrf.mxu0
        %v3702 = vpop.f32.mrf.mxu0
        %v3703 = vadd.f32 0.0, %v3702
        %v3704 = vpop.f32.mrf.mxu0
        %3705 = vmatprep.mubr.bf16.mxu0 0
        %3706 = vmatmul.mubr.bf16.gmra.mxu0 %v1998
        %v3707 = vpop.f32.mrf.mxu0
        %v3708 = vadd.f32 0.0, %v3707
        %v3709 = vpop.f32.mrf.mxu0
        %v3710 = vpop.f32.mrf.mxu0
        %v3711 = vadd.f32 0.0, %v3710
        %v3712 = vpop.f32.mrf.mxu0
        %3713 = vmatprep.mubr.bf16.mxu0 0
        %3714 = vmatmul.mubr.bf16.gmra.mxu0 %v1999
        %v3715 = vpop.f32.mrf.mxu0
        %v3716 = vadd.f32 0.0, %v3715
        %v3717 = vpop.f32.mrf.mxu0
        %v3718 = vpop.f32.mrf.mxu0
        %v3719 = vadd.f32 0.0, %v3718
        %v3720 = vpop.f32.mrf.mxu0
        %3721 = vmatprep.mubr.bf16.mxu0 0
        %3722 = vmatmul.mubr.bf16.gmra.mxu0 %v2000
        %v3723 = vpop.f32.mrf.mxu0
        %v3724 = vadd.f32 0.0, %v3723
        %v3725 = vpop.f32.mrf.mxu0
        %v3726 = vpop.f32.mrf.mxu0
        %v3727 = vadd.f32 0.0, %v3726
        %v3728 = vpop.f32.mrf.mxu0
        %3729 = vmatprep.mubr.bf16.mxu0 0
        %3730 = vmatmul.mubr.bf16.gmra.mxu0 %v2001
        %v3731 = vpop.f32.mrf.mxu0
        %v3732 = vadd.f32 0.0, %v3731
        %v3733 = vpop.f32.mrf.mxu0
        %v3734 = vpop.f32.mrf.mxu0
        %v3735 = vadd.f32 0.0, %v3734
        %v3736 = vpop.f32.mrf.mxu0
        %3737 = vmatprep.mubr.bf16.mxu0 0
        %3738 = vmatmul.mubr.bf16.gmra.mxu0 %v2002
        %v3739 = vpop.f32.mrf.mxu0
        %v3740 = vadd.f32 0.0, %v3739
        %v3741 = vpop.f32.mrf.mxu0
        %v3742 = vpop.f32.mrf.mxu0
        %v3743 = vadd.f32 0.0, %v3742
        %v3744 = vpop.f32.mrf.mxu0
        %3745 = vmatprep.mubr.bf16.mxu0 0
        %3746 = vmatmul.mubr.bf16.gmra.mxu0 %v2003
        %v3747 = vpop.f32.mrf.mxu0
        %v3748 = vadd.f32 0.0, %v3747
        %v3749 = vpop.f32.mrf.mxu0
        %v3750 = vpop.f32.mrf.mxu0
        %v3751 = vadd.f32 0.0, %v3750
        %v3752 = vpop.f32.mrf.mxu0
        %3753 = vmatprep.mubr.bf16.mxu0 0
        %3754 = vmatmul.mubr.bf16.gmra.mxu0 %v2004
        %v3755 = vpop.f32.mrf.mxu0
        %v3756 = vadd.f32 0.0, %v3755
        %v3757 = vpop.f32.mrf.mxu0
        %v3758 = vpop.f32.mrf.mxu0
        %v3759 = vadd.f32 0.0, %v3758
        %v3760 = vpop.f32.mrf.mxu0
        %3761 = vmatprep.mubr.bf16.mxu0 0
        %3762 = vmatmul.mubr.bf16.gmra.mxu0 %v2005
        %v3763 = vpop.f32.mrf.mxu0
        %v3764 = vadd.f32 0.0, %v3763
        %v3765 = vpop.f32.mrf.mxu0
        %v3766 = vpop.f32.mrf.mxu0
        %v3767 = vadd.f32 0.0, %v3766
        %v3768 = vpop.f32.mrf.mxu0
        %3769 = vmatprep.mubr.bf16.mxu0 0
        %3770 = vmatmul.mubr.bf16.gmra.mxu0 %v2006
        %v3771 = vpop.f32.mrf.mxu0
        %v3772 = vadd.f32 0.0, %v3771
        %v3773 = vpop.f32.mrf.mxu0
        %v3774 = vpop.f32.mrf.mxu0
        %v3775 = vadd.f32 0.0, %v3774
        %v3776 = vpop.f32.mrf.mxu0
        %3777 = vmatprep.mubr.bf16.mxu0 0
        %3778 = vmatmul.mubr.bf16.gmra.mxu0 %v2007
        %v3779 = vpop.f32.mrf.mxu0
        %v3780 = vadd.f32 0.0, %v3779
        %v3781 = vpop.f32.mrf.mxu0
        %v3782 = vpop.f32.mrf.mxu0
        %v3783 = vadd.f32 0.0, %v3782
        %v3784 = vpop.f32.mrf.mxu0
        %3785 = vmatprep.mubr.bf16.mxu0 0
        %3786 = vmatmul.mubr.bf16.gmra.mxu0 %v2008
        %v3787 = vpop.f32.mrf.mxu0
        %v3788 = vadd.f32 0.0, %v3787
        %v3789 = vpop.f32.mrf.mxu0
        %v3790 = vpop.f32.mrf.mxu0
        %v3791 = vadd.f32 0.0, %v3790
        %v3792 = vpop.f32.mrf.mxu0
        %3793 = vmatprep.mubr.bf16.mxu0 0
        %3794 = vmatmul.mubr.bf16.gmra.mxu0 %v2009
        %v3795 = vpop.f32.mrf.mxu0
        %v3796 = vadd.f32 0.0, %v3795
        %v3797 = vpop.f32.mrf.mxu0
        %v3798 = vpop.f32.mrf.mxu0
        %v3799 = vadd.f32 0.0, %v3798
        %v3800 = vpop.f32.mrf.mxu0
        %3801 = vmatprep.mubr.bf16.mxu0 0
        %3802 = vmatmul.mubr.bf16.gmra.mxu0 %v2010
        %v3803 = vpop.f32.mrf.mxu0
        %v3804 = vadd.f32 0.0, %v3803
        %v3805 = vpop.f32.mrf.mxu0
        %v3806 = vpop.f32.mrf.mxu0
        %v3807 = vadd.f32 0.0, %v3806
        %v3808 = vpop.f32.mrf.mxu0
        %3809 = vmatprep.mubr.bf16.mxu0 0
        %3810 = vmatmul.mubr.bf16.gmra.mxu0 %v2011
        %v3811 = vpop.f32.mrf.mxu0
        %v3812 = vadd.f32 0.0, %v3811
        %v3813 = vpop.f32.mrf.mxu0
        %v3814 = vpop.f32.mrf.mxu0
        %v3815 = vadd.f32 0.0, %v3814
        %v3816 = vpop.f32.mrf.mxu0
        %3817 = vmatprep.mubr.bf16.mxu0 0
        %3818 = vmatmul.mubr.bf16.gmra.mxu0 %v2012
        %v3819 = vpop.f32.mrf.mxu0
        %v3820 = vadd.f32 0.0, %v3819
        %v3821 = vpop.f32.mrf.mxu0
        %v3822 = vpop.f32.mrf.mxu0
        %v3823 = vadd.f32 0.0, %v3822
        %v3824 = vpop.f32.mrf.mxu0
        %3825 = vmatprep.mubr.bf16.mxu0 0
        %3826 = vmatmul.mubr.bf16.gmra.mxu0 %v2013
        %v3827 = vpop.f32.mrf.mxu0
        %v3828 = vadd.f32 0.0, %v3827
        %v3829 = vpop.f32.mrf.mxu0
        %v3830 = vpop.f32.mrf.mxu0
        %v3831 = vadd.f32 0.0, %v3830
        %v3832 = vpop.f32.mrf.mxu0
        %3833 = vmatprep.mubr.bf16.mxu0 0
        %3834 = vmatmul.mubr.bf16.gmra.mxu0 %v2014
        %v3835 = vpop.f32.mrf.mxu0
        %v3836 = vadd.f32 0.0, %v3835
        %v3837 = vpop.f32.mrf.mxu0
        %v3838 = vpop.f32.mrf.mxu0
        %v3839 = vadd.f32 0.0, %v3838
        %v3840 = vpop.f32.mrf.mxu0
        %3841 = vmatprep.mubr.bf16.mxu0 0
        %3842 = vmatmul.mubr.bf16.gmra.mxu0 %v2015
        %v3843 = vpop.f32.mrf.mxu0
        %v3844 = vadd.f32 0.0, %v3843
        %v3845 = vpop.f32.mrf.mxu0
        %v3846 = vpop.f32.mrf.mxu0
        %v3847 = vadd.f32 0.0, %v3846
        %v3848 = vpop.f32.mrf.mxu0
        %3849 = vmatprep.mubr.bf16.mxu0 0
        %3850 = vmatmul.mubr.bf16.gmra.mxu0 %v2016
        %v3851 = vpop.f32.mrf.mxu0
        %v3852 = vadd.f32 0.0, %v3851
        %v3853 = vpop.f32.mrf.mxu0
        %v3854 = vpop.f32.mrf.mxu0
        %v3855 = vadd.f32 0.0, %v3854
        %v3856 = vpop.f32.mrf.mxu0
        %3857 = vmatprep.mubr.bf16.mxu0 0
        %3858 = vmatmul.mubr.bf16.gmra.mxu0 %v2017
        %v3859 = vpop.f32.mrf.mxu0
        %v3860 = vadd.f32 0.0, %v3859
        %v3861 = vpop.f32.mrf.mxu0
        %v3862 = vpop.f32.mrf.mxu0
        %v3863 = vadd.f32 0.0, %v3862
        %v3864 = vpop.f32.mrf.mxu0
        %3865 = vmatprep.mubr.bf16.mxu0 0
        %3866 = vmatmul.mubr.bf16.gmra.mxu0 %v2018
        %v3867 = vpop.f32.mrf.mxu0
        %v3868 = vadd.f32 0.0, %v3867
        %v3869 = vpop.f32.mrf.mxu0
        %v3870 = vpop.f32.mrf.mxu0
        %v3871 = vadd.f32 0.0, %v3870
        %v3872 = vpop.f32.mrf.mxu0
        %3873 = vmatprep.mubr.bf16.mxu0 0
        %3874 = vmatmul.mubr.bf16.gmra.mxu0 %v2019
        %v3875 = vpop.f32.mrf.mxu0
        %v3876 = vadd.f32 0.0, %v3875
        %v3877 = vpop.f32.mrf.mxu0
        %v3878 = vpop.f32.mrf.mxu0
        %v3879 = vadd.f32 0.0, %v3878
        %v3880 = vpop.f32.mrf.mxu0
        %3881 = vmatprep.mubr.bf16.mxu0 0
        %3882 = vmatmul.mubr.bf16.gmra.mxu0 %v2020
        %v3883 = vpop.f32.mrf.mxu0
        %v3884 = vadd.f32 0.0, %v3883
        %v3885 = vpop.f32.mrf.mxu0
        %v3886 = vpop.f32.mrf.mxu0
        %v3887 = vadd.f32 0.0, %v3886
        %v3888 = vpop.f32.mrf.mxu0
        %3889 = vmatprep.mubr.bf16.mxu0 0
        %3890 = vmatmul.mubr.bf16.gmra.mxu0 %v2021
        %v3891 = vpop.f32.mrf.mxu0
        %v3892 = vadd.f32 0.0, %v3891
        %v3893 = vpop.f32.mrf.mxu0
        %v3894 = vpop.f32.mrf.mxu0
        %v3895 = vadd.f32 0.0, %v3894
        %v3896 = vpop.f32.mrf.mxu0
        %3897 = vmatprep.mubr.bf16.mxu0 0
        %3898 = vmatmul.mubr.bf16.gmra.mxu0 %v2022
        %v3899 = vpop.f32.mrf.mxu0
        %v3900 = vadd.f32 0.0, %v3899
        %v3901 = vpop.f32.mrf.mxu0
        %v3902 = vpop.f32.mrf.mxu0
        %v3903 = vadd.f32 0.0, %v3902
        %v3904 = vpop.f32.mrf.mxu0
        %3905 = vmatprep.mubr.bf16.mxu0 0
        %3906 = vmatmul.mubr.bf16.gmra.mxu0 %v2023
        %v3907 = vpop.f32.mrf.mxu0
        %v3908 = vadd.f32 0.0, %v3907
        %v3909 = vpop.f32.mrf.mxu0
        %v3910 = vpop.f32.mrf.mxu0
        %v3911 = vadd.f32 0.0, %v3910
        %v3912 = vpop.f32.mrf.mxu0
        %3913 = vmatprep.mubr.bf16.mxu0 0
        %3914 = vmatmul.mubr.bf16.gmra.mxu0 %v2024
        %v3915 = vpop.f32.mrf.mxu0
        %v3916 = vadd.f32 0.0, %v3915
        %v3917 = vpop.f32.mrf.mxu0
        %v3918 = vpop.f32.mrf.mxu0
        %v3919 = vadd.f32 0.0, %v3918
        %v3920 = vpop.f32.mrf.mxu0
        %3921 = vmatprep.mubr.bf16.mxu0 0
        %3922 = vmatmul.mubr.bf16.gmra.mxu0 %v2025
        %v3923 = vpop.f32.mrf.mxu0
        %v3924 = vadd.f32 0.0, %v3923
        %v3925 = vpop.f32.mrf.mxu0
        %v3926 = vpop.f32.mrf.mxu0
        %v3927 = vadd.f32 0.0, %v3926
        %v3928 = vpop.f32.mrf.mxu0
        %3929 = vmatprep.mubr.bf16.mxu0 0
        %3930 = vmatmul.mubr.bf16.gmra.mxu0 %v2026
        %v3931 = vpop.f32.mrf.mxu0
        %v3932 = vadd.f32 0.0, %v3931
        %v3933 = vpop.f32.mrf.mxu0
        %v3934 = vpop.f32.mrf.mxu0
        %v3935 = vadd.f32 0.0, %v3934
        %v3936 = vpop.f32.mrf.mxu0
        %3937 = vmatprep.mubr.bf16.mxu0 0
        %3938 = vmatmul.mubr.bf16.gmra.mxu0 %v2027
        %v3939 = vpop.f32.mrf.mxu0
        %v3940 = vadd.f32 0.0, %v3939
        %v3941 = vpop.f32.mrf.mxu0
        %v3942 = vpop.f32.mrf.mxu0
        %v3943 = vadd.f32 0.0, %v3942
        %v3944 = vpop.f32.mrf.mxu0
        %3945 = vmatprep.mubr.bf16.mxu0 0
        %3946 = vmatmul.mubr.bf16.gmra.mxu0 %v2028
        %v3947 = vpop.f32.mrf.mxu0
        %v3948 = vadd.f32 0.0, %v3947
        %v3949 = vpop.f32.mrf.mxu0
        %v3950 = vpop.f32.mrf.mxu0
        %v3951 = vadd.f32 0.0, %v3950
        %v3952 = vpop.f32.mrf.mxu0
        %3953 = vmatprep.mubr.bf16.mxu0 0
        %3954 = vmatmul.mubr.bf16.gmra.mxu0 %v2029
        %v3955 = vpop.f32.mrf.mxu0
        %v3956 = vadd.f32 0.0, %v3955
        %v3957 = vpop.f32.mrf.mxu0
        %v3958 = vpop.f32.mrf.mxu0
        %v3959 = vadd.f32 0.0, %v3958
        %v3960 = vpop.f32.mrf.mxu0
        %3961 = vmatprep.mubr.bf16.mxu0 0
        %3962 = vmatmul.mubr.bf16.gmra.mxu0 %v2030
        %v3963 = vpop.f32.mrf.mxu0
        %v3964 = vadd.f32 0.0, %v3963
        %v3965 = vpop.f32.mrf.mxu0
        %v3966 = vpop.f32.mrf.mxu0
        %v3967 = vadd.f32 0.0, %v3966
        %v3968 = vpop.f32.mrf.mxu0
        %3969 = vmatprep.mubr.bf16.mxu0 0
        %3970 = vmatmul.mubr.bf16.gmra.mxu0 %v2031
        %v3971 = vpop.f32.mrf.mxu0
        %v3972 = vadd.f32 0.0, %v3971
        %v3973 = vpop.f32.mrf.mxu0
        %v3974 = vpop.f32.mrf.mxu0
        %v3975 = vadd.f32 0.0, %v3974
        %v3976 = vpop.f32.mrf.mxu0
        %3977 = vmatprep.mubr.bf16.mxu0 0
        %3978 = vmatmul.mubr.bf16.gmra.mxu0 %v2032
        %v3979 = vpop.f32.mrf.mxu0
        %v3980 = vadd.f32 0.0, %v3979
        %v3981 = vpop.f32.mrf.mxu0
        %v3982 = vpop.f32.mrf.mxu0
        %v3983 = vadd.f32 0.0, %v3982
        %v3984 = vpop.f32.mrf.mxu0
        %3985 = vmatprep.mubr.bf16.mxu0 0
        %3986 = vmatmul.mubr.bf16.gmra.mxu0 %v2033
        %v3987 = vpop.f32.mrf.mxu0
        %v3988 = vadd.f32 0.0, %v3987
        %v3989 = vpop.f32.mrf.mxu0
        %v3990 = vpop.f32.mrf.mxu0
        %v3991 = vadd.f32 0.0, %v3990
        %v3992 = vpop.f32.mrf.mxu0
        %3993 = vmatprep.mubr.bf16.mxu0 0
        %3994 = vmatmul.mubr.bf16.gmra.mxu0 %v2034
        %v3995 = vpop.f32.mrf.mxu0
        %v3996 = vadd.f32 0.0, %v3995
        %v3997 = vpop.f32.mrf.mxu0
        %v3998 = vpop.f32.mrf.mxu0
        %v3999 = vadd.f32 0.0, %v3998
        %v4000 = vpop.f32.mrf.mxu0
        %4001 = vmatprep.mubr.bf16.mxu0 0
        %4002 = vmatmul.mubr.bf16.gmra.mxu0 %v2035
        %v4003 = vpop.f32.mrf.mxu0
        %v4004 = vadd.f32 0.0, %v4003
        %v4005 = vpop.f32.mrf.mxu0
        %v4006 = vpop.f32.mrf.mxu0
        %v4007 = vadd.f32 0.0, %v4006
        %v4008 = vpop.f32.mrf.mxu0
        %4009 = vmatprep.mubr.bf16.mxu0 0
        %4010 = vmatmul.mubr.bf16.gmra.mxu0 %v2036
        %v4011 = vpop.f32.mrf.mxu0
        %v4012 = vadd.f32 0.0, %v4011
        %v4013 = vpop.f32.mrf.mxu0
        %v4014 = vpop.f32.mrf.mxu0
        %v4015 = vadd.f32 0.0, %v4014
        %v4016 = vpop.f32.mrf.mxu0
        %4017 = vmatprep.mubr.bf16.mxu0 0
        %4018 = vmatmul.mubr.bf16.gmra.mxu0 %v2037
        %v4019 = vpop.f32.mrf.mxu0
        %v4020 = vadd.f32 0.0, %v4019
        %v4021 = vpop.f32.mrf.mxu0
        %v4022 = vpop.f32.mrf.mxu0
        %v4023 = vadd.f32 0.0, %v4022
        %v4024 = vpop.f32.mrf.mxu0
        %4025 = vmatprep.mubr.bf16.mxu0 0
        %4026 = vmatmul.mubr.bf16.gmra.mxu0 %v2038
        %v4027 = vpop.f32.mrf.mxu0
        %v4028 = vadd.f32 0.0, %v4027
        %v4029 = vpop.f32.mrf.mxu0
        %v4030 = vpop.f32.mrf.mxu0
        %v4031 = vadd.f32 0.0, %v4030
        %v4032 = vpop.f32.mrf.mxu0
        %4033 = vmatprep.mubr.bf16.mxu0 0
        %4034 = vmatmul.mubr.bf16.gmra.mxu0 %v2039
        %v4035 = vpop.f32.mrf.mxu0
        %v4036 = vadd.f32 0.0, %v4035
        %v4037 = vpop.f32.mrf.mxu0
        %v4038 = vpop.f32.mrf.mxu0
        %v4039 = vadd.f32 0.0, %v4038
        %v4040 = vpop.f32.mrf.mxu0
        %4041 = vmatprep.mubr.bf16.mxu0 0
        %4042 = vmatmul.mubr.bf16.gmra.mxu0 %v2040
        %v4043 = vpop.f32.mrf.mxu0
        %v4044 = vadd.f32 0.0, %v4043
        %v4045 = vpop.f32.mrf.mxu0
        %v4046 = vpop.f32.mrf.mxu0
        %v4047 = vadd.f32 0.0, %v4046
        %v4048 = vpop.f32.mrf.mxu0
        %4049 = vmatprep.mubr.bf16.mxu0 0
        %4050 = vmatmul.mubr.bf16.gmra.mxu0 %v2041
        %v4051 = vpop.f32.mrf.mxu0
        %v4052 = vadd.f32 0.0, %v4051
        %v4053 = vpop.f32.mrf.mxu0
        %v4054 = vpop.f32.mrf.mxu0
        %v4055 = vadd.f32 0.0, %v4054
        %v4056 = vpop.f32.mrf.mxu0
        %4057 = vmatprep.mubr.bf16.mxu0 0
        %4058 = vmatmul.mubr.bf16.gmra.mxu0 %v2042
        %v4059 = vpop.f32.mrf.mxu0
        %v4060 = vadd.f32 0.0, %v4059
        %v4061 = vpop.f32.mrf.mxu0
        %v4062 = vpop.f32.mrf.mxu0
        %v4063 = vadd.f32 0.0, %v4062
        %v4064 = vpop.f32.mrf.mxu0
        %4065 = vmatprep.mubr.bf16.mxu0 0
        %4066 = vmatmul.mubr.bf16.gmra.mxu0 %v2043
        %v4067 = vpop.f32.mrf.mxu0
        %v4068 = vadd.f32 0.0, %v4067
        %v4069 = vpop.f32.mrf.mxu0
        %v4070 = vpop.f32.mrf.mxu0
        %v4071 = vadd.f32 0.0, %v4070
        %v4072 = vpop.f32.mrf.mxu0
        %4073 = vmatprep.mubr.bf16.mxu0 0
        %4074 = vmatmul.mubr.bf16.gmra.mxu0 %v2044
        %v4075 = vpop.f32.mrf.mxu0
        %v4076 = vadd.f32 0.0, %v4075
        %v4077 = vpop.f32.mrf.mxu0
        %v4078 = vpop.f32.mrf.mxu0
        %v4079 = vadd.f32 0.0, %v4078
        %v4080 = vpop.f32.mrf.mxu0
        %4081 = vmatprep.mubr.bf16.mxu0 0
        %4082 = vmatmul.mubr.bf16.gmra.mxu0 %v2045
        %v4083 = vpop.f32.mrf.mxu0
        %v4084 = vadd.f32 0.0, %v4083
        %v4085 = vpop.f32.mrf.mxu0
        %v4086 = vpop.f32.mrf.mxu0
        %v4087 = vadd.f32 0.0, %v4086
        %v4088 = vpop.f32.mrf.mxu0
        %4089 = vmatprep.mubr.bf16.mxu0 0
        %4090 = vmatmul.mubr.bf16.gmra.mxu0 %v2046
        %v4091 = vpop.f32.mrf.mxu0
        %v4092 = vadd.f32 0.0, %v4091
        %v4093 = vpop.f32.mrf.mxu0
        %v4094 = vpop.f32.mrf.mxu0
        %v4095 = vadd.f32 0.0, %v4094
        %v4096 = vpop.f32.mrf.mxu0
        %4097 = vmatprep.mubr.bf16.mxu0 0
        %4098 = vmatmul.mubr.bf16.gmra.mxu0 %v2047
        %v4099 = vpop.f32.mrf.mxu0
        %v4100 = vadd.f32 0.0, %v4099
        %v4101 = vpop.f32.mrf.mxu0
        %v4102 = vpop.f32.mrf.mxu0
        %v4103 = vadd.f32 0.0, %v4102
        %v4104 = vpop.f32.mrf.mxu0
        %4105 = vmatprep.mubr.bf16.mxu0 0
        %4106 = vmatmul.mubr.bf16.gmra.mxu0 %v2048
        %v4107 = vpop.f32.mrf.mxu0
        %v4108 = vadd.f32 0.0, %v4107
        %v4109 = vpop.f32.mrf.mxu0
        %v4110 = vpop.f32.mrf.mxu0
        %v4111 = vadd.f32 0.0, %v4110
        %v4112 = vpop.f32.mrf.mxu0
        %4113 = vmatprep.mubr.bf16.mxu0 0
        %4114 = vmatmul.mubr.bf16.gmra.mxu0 %v2049
        %v4115 = vpop.f32.mrf.mxu0
        %v4116 = vadd.f32 0.0, %v4115
        %v4117 = vpop.f32.mrf.mxu0
        %v4118 = vpop.f32.mrf.mxu0
        %v4119 = vadd.f32 0.0, %v4118
        %v4120 = vpop.f32.mrf.mxu0
        %4121 = vmatprep.mubr.bf16.mxu0 0
        %4122 = vmatmul.mubr.bf16.gmra.mxu0 %v2050
        %v4123 = vpop.f32.mrf.mxu0
        %v4124 = vadd.f32 0.0, %v4123
        %v4125 = vpop.f32.mrf.mxu0
        %v4126 = vpop.f32.mrf.mxu0
        %v4127 = vadd.f32 0.0, %v4126
        %v4128 = vpop.f32.mrf.mxu0
        %4129 = vmatprep.mubr.bf16.mxu0 0
        %4130 = vmatmul.mubr.bf16.gmra.mxu0 %v2051
        %v4131 = vpop.f32.mrf.mxu0
        %v4132 = vadd.f32 0.0, %v4131
        %v4133 = vpop.f32.mrf.mxu0
        %v4134 = vpop.f32.mrf.mxu0
        %v4135 = vadd.f32 0.0, %v4134
        %v4136 = vpop.f32.mrf.mxu0
        %4137 = vdwg.mxu0
        %v4138 = vrot.slane %v3628, 2
        %v4139 = vrot.slane %v3631, 2
        %v4140 = vrot.slane %v3636, 2
        %v4141 = vrot.slane %v3639, 2
        %v4142 = vrot.slane %v3644, 2
        %v4143 = vrot.slane %v3647, 2
        %v4144 = vrot.slane %v3652, 2
        %v4145 = vrot.slane %v3655, 2
        %v4146 = vrot.slane %v3660, 2
        %v4147 = vrot.slane %v3663, 2
        %v4148 = vrot.slane %v3668, 2
        %v4149 = vrot.slane %v3671, 2
        %v4150 = vrot.slane %v3676, 2
        %v4151 = vrot.slane %v3679, 2
        %v4152 = vrot.slane %v3684, 2
        %v4153 = vrot.slane %v3687, 2
        %v4154 = vrot.slane %v3692, 2
        %v4155 = vrot.slane %v3695, 2
        %v4156 = vrot.slane %v3700, 2
        %v4157 = vrot.slane %v3703, 2
        %v4158 = vrot.slane %v3708, 2
        %v4159 = vrot.slane %v3711, 2
        %v4160 = vrot.slane %v3716, 2
        %v4161 = vrot.slane %v3719, 2
        %v4162 = vrot.slane %v3724, 2
        %v4163 = vrot.slane %v3727, 2
        %v4164 = vrot.slane %v3732, 2
        %v4165 = vrot.slane %v3735, 2
        %v4166 = vrot.slane %v3740, 2
        %v4167 = vrot.slane %v3743, 2
        %v4168 = vrot.slane %v3748, 2
        %v4169 = vrot.slane %v3751, 2
        %v4170 = vrot.slane %v3756, 2
        %v4171 = vrot.slane %v3759, 2
        %v4172 = vrot.slane %v3764, 2
        %v4173 = vrot.slane %v3767, 2
        %v4174 = vrot.slane %v3772, 2
        %v4175 = vrot.slane %v3775, 2
        %v4176 = vrot.slane %v3780, 2
        %v4177 = vrot.slane %v3783, 2
        %v4178 = vrot.slane %v3788, 2
        %v4179 = vrot.slane %v3791, 2
        %v4180 = vrot.slane %v3796, 2
        %v4181 = vrot.slane %v3799, 2
        %v4182 = vrot.slane %v3804, 2
        %v4183 = vrot.slane %v3807, 2
        %v4184 = vrot.slane %v3812, 2
        %v4185 = vrot.slane %v3815, 2
        %v4186 = vrot.slane %v3820, 2
        %v4187 = vrot.slane %v3823, 2
        %v4188 = vrot.slane %v3828, 2
        %v4189 = vrot.slane %v3831, 2
        %v4190 = vrot.slane %v3836, 2
        %v4191 = vrot.slane %v3839, 2
        %v4192 = vrot.slane %v3844, 2
        %v4193 = vrot.slane %v3847, 2
        %v4194 = vrot.slane %v3852, 2
        %v4195 = vrot.slane %v3855, 2
        %v4196 = vrot.slane %v3860, 2
        %v4197 = vrot.slane %v3863, 2
        %v4198 = vrot.slane %v3868, 2
        %v4199 = vrot.slane %v3871, 2
        %v4200 = vrot.slane %v3876, 2
        %v4201 = vrot.slane %v3879, 2
        %v4202 = vrot.slane %v3884, 2
        %v4203 = vrot.slane %v3887, 2
        %v4204 = vrot.slane %v3892, 2
        %v4205 = vrot.slane %v3895, 2
        %v4206 = vrot.slane %v3900, 2
        %v4207 = vrot.slane %v3903, 2
        %v4208 = vrot.slane %v3908, 2
        %v4209 = vrot.slane %v3911, 2
        %v4210 = vrot.slane %v3916, 2
        %v4211 = vrot.slane %v3919, 2
        %v4212 = vrot.slane %v3924, 2
        %v4213 = vrot.slane %v3927, 2
        %v4214 = vrot.slane %v3932, 2
        %v4215 = vrot.slane %v3935, 2
        %v4216 = vrot.slane %v3940, 2
        %v4217 = vrot.slane %v3943, 2
        %v4218 = vrot.slane %v3948, 2
        %v4219 = vrot.slane %v3951, 2
        %v4220 = vrot.slane %v3956, 2
        %v4221 = vrot.slane %v3959, 2
        %v4222 = vrot.slane %v3964, 2
        %v4223 = vrot.slane %v3967, 2
        %v4224 = vrot.slane %v3972, 2
        %v4225 = vrot.slane %v3975, 2
        %v4226 = vrot.slane %v3980, 2
        %v4227 = vrot.slane %v3983, 2
        %v4228 = vrot.slane %v3988, 2
        %v4229 = vrot.slane %v3991, 2
        %v4230 = vrot.slane %v3996, 2
        %v4231 = vrot.slane %v3999, 2
        %v4232 = vrot.slane %v4004, 2
        %v4233 = vrot.slane %v4007, 2
        %v4234 = vrot.slane %v4012, 2
        %v4235 = vrot.slane %v4015, 2
        %v4236 = vrot.slane %v4020, 2
        %v4237 = vrot.slane %v4023, 2
        %v4238 = vrot.slane %v4028, 2
        %v4239 = vrot.slane %v4031, 2
        %v4240 = vrot.slane %v4036, 2
        %v4241 = vrot.slane %v4039, 2
        %v4242 = vrot.slane %v4044, 2
        %v4243 = vrot.slane %v4047, 2
        %v4244 = vrot.slane %v4052, 2
        %v4245 = vrot.slane %v4055, 2
        %v4246 = vrot.slane %v4060, 2
        %v4247 = vrot.slane %v4063, 2
        %v4248 = vrot.slane %v4068, 2
        %v4249 = vrot.slane %v4071, 2
        %v4250 = vrot.slane %v4076, 2
        %v4251 = vrot.slane %v4079, 2
        %v4252 = vrot.slane %v4084, 2
        %v4253 = vrot.slane %v4087, 2
        %v4254 = vrot.slane %v4092, 2
        %v4255 = vrot.slane %v4095, 2
        %v4256 = vrot.slane %v4100, 2
        %v4257 = vrot.slane %v4103, 2
        %v4258 = vrot.slane %v4108, 2
        %v4259 = vrot.slane %v4111, 2
        %v4260 = vrot.slane %v4116, 2
        %v4261 = vrot.slane %v4119, 2
        %v4262 = vrot.slane %v4124, 2
        %v4263 = vrot.slane %v4127, 2
        %v4264 = vrot.slane %v4132, 2
        %v4265 = vrot.slane %v4135, 2
        %vm4266 = vcmp.lt.s32.totalorder %v2806, 6
        %v4267 = vsel %vm4266, %v4264, %v4265
        %v4268 = vsel %vm4266, %v4263, %v4264
        %v4269 = vsel %vm4266, %v4262, %v4263
        %v4270 = vsel %vm4266, %v4261, %v4262
        %v4271 = vsel %vm4266, %v4260, %v4261
        %v4272 = vsel %vm4266, %v4259, %v4260
        %v4273 = vsel %vm4266, %v4258, %v4259
        %v4274 = vsel %vm4266, %v4257, %v4258
        %v4275 = vsel %vm4266, %v4256, %v4257
        %v4276 = vsel %vm4266, %v4255, %v4256
        %v4277 = vsel %vm4266, %v4254, %v4255
        %v4278 = vsel %vm4266, %v4253, %v4254
        %v4279 = vsel %vm4266, %v4252, %v4253
        %v4280 = vsel %vm4266, %v4251, %v4252
        %v4281 = vsel %vm4266, %v4250, %v4251
        %v4282 = vsel %vm4266, %v4249, %v4250
        %v4283 = vsel %vm4266, %v4248, %v4249
        %v4284 = vsel %vm4266, %v4247, %v4248
        %v4285 = vsel %vm4266, %v4246, %v4247
        %v4286 = vsel %vm4266, %v4245, %v4246
        %v4287 = vsel %vm4266, %v4244, %v4245
        %v4288 = vsel %vm4266, %v4243, %v4244
        %v4289 = vsel %vm4266, %v4242, %v4243
        %v4290 = vsel %vm4266, %v4241, %v4242
        %v4291 = vsel %vm4266, %v4240, %v4241
        %v4292 = vsel %vm4266, %v4239, %v4240
        %v4293 = vsel %vm4266, %v4238, %v4239
        %v4294 = vsel %vm4266, %v4237, %v4238
        %v4295 = vsel %vm4266, %v4236, %v4237
        %v4296 = vsel %vm4266, %v4235, %v4236
        %v4297 = vsel %vm4266, %v4234, %v4235
        %v4298 = vsel %vm4266, %v4233, %v4234
        %v4299 = vsel %vm4266, %v4232, %v4233
        %v4300 = vsel %vm4266, %v4231, %v4232
        %v4301 = vsel %vm4266, %v4230, %v4231
        %v4302 = vsel %vm4266, %v4229, %v4230
        %v4303 = vsel %vm4266, %v4228, %v4229
        %v4304 = vsel %vm4266, %v4227, %v4228
        %v4305 = vsel %vm4266, %v4226, %v4227
        %v4306 = vsel %vm4266, %v4225, %v4226
        %v4307 = vsel %vm4266, %v4224, %v4225
        %v4308 = vsel %vm4266, %v4223, %v4224
        %v4309 = vsel %vm4266, %v4222, %v4223
        %v4310 = vsel %vm4266, %v4221, %v4222
        %v4311 = vsel %vm4266, %v4220, %v4221
        %v4312 = vsel %vm4266, %v4219, %v4220
        %v4313 = vsel %vm4266, %v4218, %v4219
        %v4314 = vsel %vm4266, %v4217, %v4218
        %v4315 = vsel %vm4266, %v4216, %v4217
        %v4316 = vsel %vm4266, %v4215, %v4216
        %v4317 = vsel %vm4266, %v4214, %v4215
        %v4318 = vsel %vm4266, %v4213, %v4214
        %v4319 = vsel %vm4266, %v4212, %v4213
        %v4320 = vsel %vm4266, %v4211, %v4212
        %v4321 = vsel %vm4266, %v4210, %v4211
        %v4322 = vsel %vm4266, %v4209, %v4210
        %v4323 = vsel %vm4266, %v4208, %v4209
        %v4324 = vsel %vm4266, %v4207, %v4208
        %v4325 = vsel %vm4266, %v4206, %v4207
        %v4326 = vsel %vm4266, %v4205, %v4206
        %v4327 = vsel %vm4266, %v4204, %v4205
        %v4328 = vsel %vm4266, %v4203, %v4204
        %v4329 = vsel %vm4266, %v4202, %v4203
        %v4330 = vsel %vm4266, %v4201, %v4202
        %v4331 = vsel %vm4266, %v4200, %v4201
        %v4332 = vsel %vm4266, %v4199, %v4200
        %v4333 = vsel %vm4266, %v4198, %v4199
        %v4334 = vsel %vm4266, %v4197, %v4198
        %v4335 = vsel %vm4266, %v4196, %v4197
        %v4336 = vsel %vm4266, %v4195, %v4196
        %v4337 = vsel %vm4266, %v4194, %v4195
        %v4338 = vsel %vm4266, %v4193, %v4194
        %v4339 = vsel %vm4266, %v4192, %v4193
        %v4340 = vsel %vm4266, %v4191, %v4192
        %v4341 = vsel %vm4266, %v4190, %v4191
        %v4342 = vsel %vm4266, %v4189, %v4190
        %v4343 = vsel %vm4266, %v4188, %v4189
        %v4344 = vsel %vm4266, %v4187, %v4188
        %v4345 = vsel %vm4266, %v4186, %v4187
        %v4346 = vsel %vm4266, %v4185, %v4186
        %v4347 = vsel %vm4266, %v4184, %v4185
        %v4348 = vsel %vm4266, %v4183, %v4184
        %v4349 = vsel %vm4266, %v4182, %v4183
        %v4350 = vsel %vm4266, %v4181, %v4182
        %v4351 = vsel %vm4266, %v4180, %v4181
        %v4352 = vsel %vm4266, %v4179, %v4180
        %v4353 = vsel %vm4266, %v4178, %v4179
        %v4354 = vsel %vm4266, %v4177, %v4178
        %v4355 = vsel %vm4266, %v4176, %v4177
        %v4356 = vsel %vm4266, %v4175, %v4176
        %v4357 = vsel %vm4266, %v4174, %v4175
        %v4358 = vsel %vm4266, %v4173, %v4174
        %v4359 = vsel %vm4266, %v4172, %v4173
        %v4360 = vsel %vm4266, %v4171, %v4172
        %v4361 = vsel %vm4266, %v4170, %v4171
        %v4362 = vsel %vm4266, %v4169, %v4170
        %v4363 = vsel %vm4266, %v4168, %v4169
        %v4364 = vsel %vm4266, %v4167, %v4168
        %v4365 = vsel %vm4266, %v4166, %v4167
        %v4366 = vsel %vm4266, %v4165, %v4166
        %v4367 = vsel %vm4266, %v4164, %v4165
        %v4368 = vsel %vm4266, %v4163, %v4164
        %v4369 = vsel %vm4266, %v4162, %v4163
        %v4370 = vsel %vm4266, %v4161, %v4162
        %v4371 = vsel %vm4266, %v4160, %v4161
        %v4372 = vsel %vm4266, %v4159, %v4160
        %v4373 = vsel %vm4266, %v4158, %v4159
        %v4374 = vsel %vm4266, %v4157, %v4158
        %v4375 = vsel %vm4266, %v4156, %v4157
        %v4376 = vsel %vm4266, %v4155, %v4156
        %v4377 = vsel %vm4266, %v4154, %v4155
        %v4378 = vsel %vm4266, %v4153, %v4154
        %v4379 = vsel %vm4266, %v4152, %v4153
        %v4380 = vsel %vm4266, %v4151, %v4152
        %v4381 = vsel %vm4266, %v4150, %v4151
        %v4382 = vsel %vm4266, %v4149, %v4150
        %v4383 = vsel %vm4266, %v4148, %v4149
        %v4384 = vsel %vm4266, %v4147, %v4148
        %v4385 = vsel %vm4266, %v4146, %v4147
        %v4386 = vsel %vm4266, %v4145, %v4146
        %v4387 = vsel %vm4266, %v4144, %v4145
        %v4388 = vsel %vm4266, %v4143, %v4144
        %v4389 = vsel %vm4266, %v4142, %v4143
        %v4390 = vsel %vm4266, %v4141, %v4142
        %v4391 = vsel %vm4266, %v4140, %v4141
        %v4392 = vsel %vm4266, %v4139, %v4140
        %v4393 = vsel %vm4266, %v4138, %v4139
        %v4394 = vsel %vm4266, %v4265, %v4138
        %v4395 = vadd.f32 %v3019, %v4393
        %v4396 = vadd.f32 %v3022, %v4392
        %v4397 = vadd.f32 %v3027, %v4391
        %v4398 = vadd.f32 %v3030, %v4390
        %v4399 = vadd.f32 %v3035, %v4389
        %v4400 = vadd.f32 %v3038, %v4388
        %v4401 = vadd.f32 %v3043, %v4387
        %v4402 = vadd.f32 %v3046, %v4386
        %v4403 = vadd.f32 %v3051, %v4385
        %v4404 = vadd.f32 %v3054, %v4384
        %v4405 = vadd.f32 %v3059, %v4383
        %v4406 = vadd.f32 %v3062, %v4382
        %v4407 = vadd.f32 %v3067, %v4381
        %v4408 = vadd.f32 %v3070, %v4380
        %v4409 = vadd.f32 %v3075, %v4379
        %v4410 = vadd.f32 %v3078, %v4378
        %v4411 = vadd.f32 %v3083, %v4377
        %v4412 = vadd.f32 %v3086, %v4376
        %v4413 = vadd.f32 %v3091, %v4375
        %v4414 = vadd.f32 %v3094, %v4374
        %v4415 = vadd.f32 %v3099, %v4373
        %v4416 = vadd.f32 %v3102, %v4372
        %v4417 = vadd.f32 %v3107, %v4371
        %v4418 = vadd.f32 %v3110, %v4370
        %v4419 = vadd.f32 %v3115, %v4369
        %v4420 = vadd.f32 %v3118, %v4368
        %v4421 = vadd.f32 %v3123, %v4367
        %v4422 = vadd.f32 %v3126, %v4366
        %v4423 = vadd.f32 %v3131, %v4365
        %v4424 = vadd.f32 %v3134, %v4364
        %v4425 = vadd.f32 %v3139, %v4363
        %v4426 = vadd.f32 %v3142, %v4362
        %v4427 = vadd.f32 %v3147, %v4361
        %v4428 = vadd.f32 %v3150, %v4360
        %v4429 = vadd.f32 %v3155, %v4359
        %v4430 = vadd.f32 %v3158, %v4358
        %v4431 = vadd.f32 %v3163, %v4357
        %v4432 = vadd.f32 %v3166, %v4356
        %v4433 = vadd.f32 %v3171, %v4355
        %v4434 = vadd.f32 %v3174, %v4354
        %v4435 = vadd.f32 %v3179, %v4353
        %v4436 = vadd.f32 %v3182, %v4352
        %v4437 = vadd.f32 %v3187, %v4351
        %v4438 = vadd.f32 %v3190, %v4350
        %v4439 = vadd.f32 %v3195, %v4349
        %v4440 = vadd.f32 %v3198, %v4348
        %v4441 = vadd.f32 %v3203, %v4347
        %v4442 = vadd.f32 %v3206, %v4346
        %v4443 = vadd.f32 %v3211, %v4345
        %v4444 = vadd.f32 %v3214, %v4344
        %v4445 = vadd.f32 %v3219, %v4343
        %v4446 = vadd.f32 %v3222, %v4342
        %v4447 = vadd.f32 %v3227, %v4341
        %v4448 = vadd.f32 %v3230, %v4340
        %v4449 = vadd.f32 %v3235, %v4339
        %v4450 = vadd.f32 %v3238, %v4338
        %v4451 = vadd.f32 %v3243, %v4337
        %v4452 = vadd.f32 %v3246, %v4336
        %v4453 = vadd.f32 %v3251, %v4335
        %v4454 = vadd.f32 %v3254, %v4334
        %v4455 = vadd.f32 %v3259, %v4333
        %v4456 = vadd.f32 %v3262, %v4332
        %v4457 = vadd.f32 %v3267, %v4331
        %v4458 = vadd.f32 %v3270, %v4330
        %v4459 = vadd.f32 %v3275, %v4329
        %v4460 = vadd.f32 %v3278, %v4328
        %v4461 = vadd.f32 %v3283, %v4327
        %v4462 = vadd.f32 %v3286, %v4326
        %v4463 = vadd.f32 %v3291, %v4325
        %v4464 = vadd.f32 %v3294, %v4324
        %v4465 = vadd.f32 %v3299, %v4323
        %v4466 = vadd.f32 %v3302, %v4322
        %v4467 = vadd.f32 %v3307, %v4321
        %v4468 = vadd.f32 %v3310, %v4320
        %v4469 = vadd.f32 %v3315, %v4319
        %v4470 = vadd.f32 %v3318, %v4318
        %v4471 = vadd.f32 %v3323, %v4317
        %v4472 = vadd.f32 %v3326, %v4316
        %v4473 = vadd.f32 %v3331, %v4315
        %v4474 = vadd.f32 %v3334, %v4314
        %v4475 = vadd.f32 %v3339, %v4313
        %v4476 = vadd.f32 %v3342, %v4312
        %v4477 = vadd.f32 %v3347, %v4311
        %v4478 = vadd.f32 %v3350, %v4310
        %v4479 = vadd.f32 %v3355, %v4309
        %v4480 = vadd.f32 %v3358, %v4308
        %v4481 = vadd.f32 %v3363, %v4307
        %v4482 = vadd.f32 %v3366, %v4306
        %v4483 = vadd.f32 %v3371, %v4305
        %v4484 = vadd.f32 %v3374, %v4304
        %v4485 = vadd.f32 %v3379, %v4303
        %v4486 = vadd.f32 %v3382, %v4302
        %v4487 = vadd.f32 %v3387, %v4301
        %v4488 = vadd.f32 %v3390, %v4300
        %v4489 = vadd.f32 %v3395, %v4299
        %v4490 = vadd.f32 %v3398, %v4298
        %v4491 = vadd.f32 %v3403, %v4297
        %v4492 = vadd.f32 %v3406, %v4296
        %v4493 = vadd.f32 %v3411, %v4295
        %v4494 = vadd.f32 %v3414, %v4294
        %v4495 = vadd.f32 %v3419, %v4293
        %v4496 = vadd.f32 %v3422, %v4292
        %v4497 = vadd.f32 %v3427, %v4291
        %v4498 = vadd.f32 %v3430, %v4290
        %v4499 = vadd.f32 %v3435, %v4289
        %v4500 = vadd.f32 %v3438, %v4288
        %v4501 = vadd.f32 %v3443, %v4287
        %v4502 = vadd.f32 %v3446, %v4286
        %v4503 = vadd.f32 %v3451, %v4285
        %v4504 = vadd.f32 %v3454, %v4284
        %v4505 = vadd.f32 %v3459, %v4283
        %v4506 = vadd.f32 %v3462, %v4282
        %v4507 = vadd.f32 %v3467, %v4281
        %v4508 = vadd.f32 %v3470, %v4280
        %v4509 = vadd.f32 %v3475, %v4279
        %v4510 = vadd.f32 %v3478, %v4278
        %v4511 = vadd.f32 %v3483, %v4277
        %v4512 = vadd.f32 %v3486, %v4276
        %v4513 = vadd.f32 %v3491, %v4275
        %v4514 = vadd.f32 %v3494, %v4274
        %v4515 = vadd.f32 %v3499, %v4273
        %v4516 = vadd.f32 %v3502, %v4272
        %v4517 = vadd.f32 %v3507, %v4271
        %v4518 = vadd.f32 %v3510, %v4270
        %v4519 = vadd.f32 %v3515, %v4269
        %v4520 = vadd.f32 %v3518, %v4268
        %v4521 = vadd.f32 %v3523, %v4267
        %v4522 = vadd.f32 %v3526, %v4394
        %v4523 = vld [vmem:[#allocation2 + $0xc] sm:$0xf]
        %v4524 = vld [vmem:[#allocation2 + $0x20] sm:$0xf]
        %v4525 = vld [vmem:[#allocation2 + $0x34] sm:$0xf]
        %v4526 = vld [vmem:[#allocation2 + $0x48] sm:$0xf]
        %v4527 = vld [vmem:[#allocation2 + $0x5c] sm:$0xf]
        %v4528 = vld [vmem:[#allocation2 + $0x70] sm:$0xf]
        %v4529 = vld [vmem:[#allocation2 + $0x84] sm:$0xf]
        %v4530 = vld [vmem:[#allocation2 + $0x98] sm:$0xf]
        %v4531 = vld [vmem:[#allocation2 + $0xac] sm:$0xf]
        %v4532 = vld [vmem:[#allocation2 + $0xc0] sm:$0xf]
        %v4533 = vld [vmem:[#allocation2 + $0xd4] sm:$0xf]
        %v4534 = vld [vmem:[#allocation2 + $0xe8] sm:$0xf]
        %v4535 = vld [vmem:[#allocation2 + $0xfc] sm:$0xf]
        %v4536 = vld [vmem:[#allocation2 + $0x110] sm:$0xf]
        %v4537 = vld [vmem:[#allocation2 + $0x124] sm:$0xf]
        %v4538 = vld [vmem:[#allocation2 + $0x138] sm:$0xf]
        %v4555 = vunpack.c.l.b16 %v4523
        %v4556 = vunpack.c.l.b16 %v4524
        %v4557 = vunpack.c.l.b16 %v4525
        %v4558 = vunpack.c.l.b16 %v4526
        %v4559 = vunpack.c.l.b16 %v4527
        %v4560 = vunpack.c.l.b16 %v4528
        %v4561 = vunpack.c.l.b16 %v4529
        %v4562 = vunpack.c.l.b16 %v4530
        %v4563 = vunpack.c.l.b16 %v4531
        %v4564 = vunpack.c.l.b16 %v4532
        %v4565 = vunpack.c.l.b16 %v4533
        %v4566 = vunpack.c.l.b16 %v4534
        %v4567 = vunpack.c.l.b16 %v4535
        %v4568 = vunpack.c.l.b16 %v4536
        %v4569 = vunpack.c.l.b16 %v4537
        %v4570 = vunpack.c.l.b16 %v4538
        %v4571 = vpack.c.b16 %v4556, %v4555
        %v4572 = vpack.c.b16 %v4558, %v4557
        %v4573 = vpack.c.b16 %v4560, %v4559
        %v4574 = vpack.c.b16 %v4562, %v4561
        %v4575 = vpack.c.b16 %v4564, %v4563
        %v4576 = vpack.c.b16 %v4566, %v4565
        %v4577 = vpack.c.b16 %v4568, %v4567
        %v4578 = vpack.c.b16 %v4570, %v4569
        %4587 = vmatprep.subr.bf16.mxu0 0
        %4588 = vmatpush1.bf16.msra.mxu0 %v4578
        %4589 = vmatprep.subr.bf16.mxu0 0
        %4590 = vmatpush1.bf16.msra.mxu0 %v4577
        %4591 = vmatprep.subr.bf16.mxu0 0
        %4592 = vmatpush1.bf16.msra.mxu0 %v4576
        %4593 = vmatprep.subr.bf16.mxu0 0
        %4594 = vmatpush1.bf16.msra.mxu0 %v4575
        %4595 = vmatprep.subr.bf16.mxu0 0
        %4596 = vmatpush1.bf16.msra.mxu0 %v4574
        %4597 = vmatprep.subr.bf16.mxu0 0
        %4598 = vmatpush1.bf16.msra.mxu0 %v4573
        %4599 = vmatprep.subr.bf16.mxu0 0
        %4600 = vmatpush1.bf16.msra.mxu0 %v4572
        %4601 = vmatprep.subr.bf16.mxu0 0
        %4602 = vmatpush1.bf16.msra.mxu0 %v4571
        %4603 = vmatprep.subr.bf16.mxu0 0
        %4604 = vmatpush2.bf16.msra.mxu0 0
        %4605 = vmatprep.subr.bf16.mxu0 0
        %4606 = vmatpush2.bf16.msra.mxu0 0
        %4607 = vmatprep.subr.bf16.mxu0 0
        %4608 = vmatpush2.bf16.msra.mxu0 0
        %4609 = vmatprep.subr.bf16.mxu0 0
        %4610 = vmatpush2.bf16.msra.mxu0 0
        %4611 = vmatprep.subr.bf16.mxu0 0
        %4612 = vmatpush2.bf16.msra.mxu0 0
        %4613 = vmatprep.subr.bf16.mxu0 0
        %4614 = vmatpush2.bf16.msra.mxu0 0
        %4615 = vmatprep.subr.bf16.mxu0 0
        %4616 = vmatpush2.bf16.msra.mxu0 0
        %4617 = vmatprep.subr.bf16.mxu0 0
        %4618 = vmatpush2.bf16.msra.mxu0 0
        %4619 = vmatprep.mubr.bf16.mxu0 0
        %4620 = vmatmul.mubr.bf16.gmra.mxu0 %v1988
        %v4621 = vpop.f32.mrf.mxu0
        %v4622 = vadd.f32 0.0, %v4621
        %v4623 = vpop.f32.mrf.mxu0
        %v4624 = vpop.f32.mrf.mxu0
        %v4625 = vadd.f32 0.0, %v4624
        %v4626 = vpop.f32.mrf.mxu0
        %4627 = vmatprep.mubr.bf16.mxu0 0
        %4628 = vmatmul.mubr.bf16.gmra.mxu0 %v1989
        %v4629 = vpop.f32.mrf.mxu0
        %v4630 = vadd.f32 0.0, %v4629
        %v4631 = vpop.f32.mrf.mxu0
        %v4632 = vpop.f32.mrf.mxu0
        %v4633 = vadd.f32 0.0, %v4632
        %v4634 = vpop.f32.mrf.mxu0
        %4635 = vmatprep.mubr.bf16.mxu0 0
        %4636 = vmatmul.mubr.bf16.gmra.mxu0 %v1990
        %v4637 = vpop.f32.mrf.mxu0
        %v4638 = vadd.f32 0.0, %v4637
        %v4639 = vpop.f32.mrf.mxu0
        %v4640 = vpop.f32.mrf.mxu0
        %v4641 = vadd.f32 0.0, %v4640
        %v4642 = vpop.f32.mrf.mxu0
        %4643 = vmatprep.mubr.bf16.mxu0 0
        %4644 = vmatmul.mubr.bf16.gmra.mxu0 %v1991
        %v4645 = vpop.f32.mrf.mxu0
        %v4646 = vadd.f32 0.0, %v4645
        %v4647 = vpop.f32.mrf.mxu0
        %v4648 = vpop.f32.mrf.mxu0
        %v4649 = vadd.f32 0.0, %v4648
        %v4650 = vpop.f32.mrf.mxu0
        %4651 = vmatprep.mubr.bf16.mxu0 0
        %4652 = vmatmul.mubr.bf16.gmra.mxu0 %v1992
        %v4653 = vpop.f32.mrf.mxu0
        %v4654 = vadd.f32 0.0, %v4653
        %v4655 = vpop.f32.mrf.mxu0
        %v4656 = vpop.f32.mrf.mxu0
        %v4657 = vadd.f32 0.0, %v4656
        %v4658 = vpop.f32.mrf.mxu0
        %4659 = vmatprep.mubr.bf16.mxu0 0
        %4660 = vmatmul.mubr.bf16.gmra.mxu0 %v1993
        %v4661 = vpop.f32.mrf.mxu0
        %v4662 = vadd.f32 0.0, %v4661
        %v4663 = vpop.f32.mrf.mxu0
        %v4664 = vpop.f32.mrf.mxu0
        %v4665 = vadd.f32 0.0, %v4664
        %v4666 = vpop.f32.mrf.mxu0
        %4667 = vmatprep.mubr.bf16.mxu0 0
        %4668 = vmatmul.mubr.bf16.gmra.mxu0 %v1994
        %v4669 = vpop.f32.mrf.mxu0
        %v4670 = vadd.f32 0.0, %v4669
        %v4671 = vpop.f32.mrf.mxu0
        %v4672 = vpop.f32.mrf.mxu0
        %v4673 = vadd.f32 0.0, %v4672
        %v4674 = vpop.f32.mrf.mxu0
        %4675 = vmatprep.mubr.bf16.mxu0 0
        %4676 = vmatmul.mubr.bf16.gmra.mxu0 %v1995
        %v4677 = vpop.f32.mrf.mxu0
        %v4678 = vadd.f32 0.0, %v4677
        %v4679 = vpop.f32.mrf.mxu0
        %v4680 = vpop.f32.mrf.mxu0
        %v4681 = vadd.f32 0.0, %v4680
        %v4682 = vpop.f32.mrf.mxu0
        %4683 = vmatprep.mubr.bf16.mxu0 0
        %4684 = vmatmul.mubr.bf16.gmra.mxu0 %v1996
        %v4685 = vpop.f32.mrf.mxu0
        %v4686 = vadd.f32 0.0, %v4685
        %v4687 = vpop.f32.mrf.mxu0
        %v4688 = vpop.f32.mrf.mxu0
        %v4689 = vadd.f32 0.0, %v4688
        %v4690 = vpop.f32.mrf.mxu0
        %4691 = vmatprep.mubr.bf16.mxu0 0
        %4692 = vmatmul.mubr.bf16.gmra.mxu0 %v1997
        %v4693 = vpop.f32.mrf.mxu0
        %v4694 = vadd.f32 0.0, %v4693
        %v4695 = vpop.f32.mrf.mxu0
        %v4696 = vpop.f32.mrf.mxu0
        %v4697 = vadd.f32 0.0, %v4696
        %v4698 = vpop.f32.mrf.mxu0
        %4699 = vmatprep.mubr.bf16.mxu0 0
        %4700 = vmatmul.mubr.bf16.gmra.mxu0 %v1998
        %v4701 = vpop.f32.mrf.mxu0
        %v4702 = vadd.f32 0.0, %v4701
        %v4703 = vpop.f32.mrf.mxu0
        %v4704 = vpop.f32.mrf.mxu0
        %v4705 = vadd.f32 0.0, %v4704
        %v4706 = vpop.f32.mrf.mxu0
        %4707 = vmatprep.mubr.bf16.mxu0 0
        %4708 = vmatmul.mubr.bf16.gmra.mxu0 %v1999
        %v4709 = vpop.f32.mrf.mxu0
        %v4710 = vadd.f32 0.0, %v4709
        %v4711 = vpop.f32.mrf.mxu0
        %v4712 = vpop.f32.mrf.mxu0
        %v4713 = vadd.f32 0.0, %v4712
        %v4714 = vpop.f32.mrf.mxu0
        %4715 = vmatprep.mubr.bf16.mxu0 0
        %4716 = vmatmul.mubr.bf16.gmra.mxu0 %v2000
        %v4717 = vpop.f32.mrf.mxu0
        %v4718 = vadd.f32 0.0, %v4717
        %v4719 = vpop.f32.mrf.mxu0
        %v4720 = vpop.f32.mrf.mxu0
        %v4721 = vadd.f32 0.0, %v4720
        %v4722 = vpop.f32.mrf.mxu0
        %4723 = vmatprep.mubr.bf16.mxu0 0
        %4724 = vmatmul.mubr.bf16.gmra.mxu0 %v2001
        %v4725 = vpop.f32.mrf.mxu0
        %v4726 = vadd.f32 0.0, %v4725
        %v4727 = vpop.f32.mrf.mxu0
        %v4728 = vpop.f32.mrf.mxu0
        %v4729 = vadd.f32 0.0, %v4728
        %v4730 = vpop.f32.mrf.mxu0
        %4731 = vmatprep.mubr.bf16.mxu0 0
        %4732 = vmatmul.mubr.bf16.gmra.mxu0 %v2002
        %v4733 = vpop.f32.mrf.mxu0
        %v4734 = vadd.f32 0.0, %v4733
        %v4735 = vpop.f32.mrf.mxu0
        %v4736 = vpop.f32.mrf.mxu0
        %v4737 = vadd.f32 0.0, %v4736
        %v4738 = vpop.f32.mrf.mxu0
        %4739 = vmatprep.mubr.bf16.mxu0 0
        %4740 = vmatmul.mubr.bf16.gmra.mxu0 %v2003
        %v4741 = vpop.f32.mrf.mxu0
        %v4742 = vadd.f32 0.0, %v4741
        %v4743 = vpop.f32.mrf.mxu0
        %v4744 = vpop.f32.mrf.mxu0
        %v4745 = vadd.f32 0.0, %v4744
        %v4746 = vpop.f32.mrf.mxu0
        %4747 = vmatprep.mubr.bf16.mxu0 0
        %4748 = vmatmul.mubr.bf16.gmra.mxu0 %v2004
        %v4749 = vpop.f32.mrf.mxu0
        %v4750 = vadd.f32 0.0, %v4749
        %v4751 = vpop.f32.mrf.mxu0
        %v4752 = vpop.f32.mrf.mxu0
        %v4753 = vadd.f32 0.0, %v4752
        %v4754 = vpop.f32.mrf.mxu0
        %4755 = vmatprep.mubr.bf16.mxu0 0
        %4756 = vmatmul.mubr.bf16.gmra.mxu0 %v2005
        %v4757 = vpop.f32.mrf.mxu0
        %v4758 = vadd.f32 0.0, %v4757
        %v4759 = vpop.f32.mrf.mxu0
        %v4760 = vpop.f32.mrf.mxu0
        %v4761 = vadd.f32 0.0, %v4760
        %v4762 = vpop.f32.mrf.mxu0
        %4763 = vmatprep.mubr.bf16.mxu0 0
        %4764 = vmatmul.mubr.bf16.gmra.mxu0 %v2006
        %v4765 = vpop.f32.mrf.mxu0
        %v4766 = vadd.f32 0.0, %v4765
        %v4767 = vpop.f32.mrf.mxu0
        %v4768 = vpop.f32.mrf.mxu0
        %v4769 = vadd.f32 0.0, %v4768
        %v4770 = vpop.f32.mrf.mxu0
        %4771 = vmatprep.mubr.bf16.mxu0 0
        %4772 = vmatmul.mubr.bf16.gmra.mxu0 %v2007
        %v4773 = vpop.f32.mrf.mxu0
        %v4774 = vadd.f32 0.0, %v4773
        %v4775 = vpop.f32.mrf.mxu0
        %v4776 = vpop.f32.mrf.mxu0
        %v4777 = vadd.f32 0.0, %v4776
        %v4778 = vpop.f32.mrf.mxu0
        %4779 = vmatprep.mubr.bf16.mxu0 0
        %4780 = vmatmul.mubr.bf16.gmra.mxu0 %v2008
        %v4781 = vpop.f32.mrf.mxu0
        %v4782 = vadd.f32 0.0, %v4781
        %v4783 = vpop.f32.mrf.mxu0
        %v4784 = vpop.f32.mrf.mxu0
        %v4785 = vadd.f32 0.0, %v4784
        %v4786 = vpop.f32.mrf.mxu0
        %4787 = vmatprep.mubr.bf16.mxu0 0
        %4788 = vmatmul.mubr.bf16.gmra.mxu0 %v2009
        %v4789 = vpop.f32.mrf.mxu0
        %v4790 = vadd.f32 0.0, %v4789
        %v4791 = vpop.f32.mrf.mxu0
        %v4792 = vpop.f32.mrf.mxu0
        %v4793 = vadd.f32 0.0, %v4792
        %v4794 = vpop.f32.mrf.mxu0
        %4795 = vmatprep.mubr.bf16.mxu0 0
        %4796 = vmatmul.mubr.bf16.gmra.mxu0 %v2010
        %v4797 = vpop.f32.mrf.mxu0
        %v4798 = vadd.f32 0.0, %v4797
        %v4799 = vpop.f32.mrf.mxu0
        %v4800 = vpop.f32.mrf.mxu0
        %v4801 = vadd.f32 0.0, %v4800
        %v4802 = vpop.f32.mrf.mxu0
        %4803 = vmatprep.mubr.bf16.mxu0 0
        %4804 = vmatmul.mubr.bf16.gmra.mxu0 %v2011
        %v4805 = vpop.f32.mrf.mxu0
        %v4806 = vadd.f32 0.0, %v4805
        %v4807 = vpop.f32.mrf.mxu0
        %v4808 = vpop.f32.mrf.mxu0
        %v4809 = vadd.f32 0.0, %v4808
        %v4810 = vpop.f32.mrf.mxu0
        %4811 = vmatprep.mubr.bf16.mxu0 0
        %4812 = vmatmul.mubr.bf16.gmra.mxu0 %v2012
        %v4813 = vpop.f32.mrf.mxu0
        %v4814 = vadd.f32 0.0, %v4813
        %v4815 = vpop.f32.mrf.mxu0
        %v4816 = vpop.f32.mrf.mxu0
        %v4817 = vadd.f32 0.0, %v4816
        %v4818 = vpop.f32.mrf.mxu0
        %4819 = vmatprep.mubr.bf16.mxu0 0
        %4820 = vmatmul.mubr.bf16.gmra.mxu0 %v2013
        %v4821 = vpop.f32.mrf.mxu0
        %v4822 = vadd.f32 0.0, %v4821
        %v4823 = vpop.f32.mrf.mxu0
        %v4824 = vpop.f32.mrf.mxu0
        %v4825 = vadd.f32 0.0, %v4824
        %v4826 = vpop.f32.mrf.mxu0
        %4827 = vmatprep.mubr.bf16.mxu0 0
        %4828 = vmatmul.mubr.bf16.gmra.mxu0 %v2014
        %v4829 = vpop.f32.mrf.mxu0
        %v4830 = vadd.f32 0.0, %v4829
        %v4831 = vpop.f32.mrf.mxu0
        %v4832 = vpop.f32.mrf.mxu0
        %v4833 = vadd.f32 0.0, %v4832
        %v4834 = vpop.f32.mrf.mxu0
        %4835 = vmatprep.mubr.bf16.mxu0 0
        %4836 = vmatmul.mubr.bf16.gmra.mxu0 %v2015
        %v4837 = vpop.f32.mrf.mxu0
        %v4838 = vadd.f32 0.0, %v4837
        %v4839 = vpop.f32.mrf.mxu0
        %v4840 = vpop.f32.mrf.mxu0
        %v4841 = vadd.f32 0.0, %v4840
        %v4842 = vpop.f32.mrf.mxu0
        %4843 = vmatprep.mubr.bf16.mxu0 0
        %4844 = vmatmul.mubr.bf16.gmra.mxu0 %v2016
        %v4845 = vpop.f32.mrf.mxu0
        %v4846 = vadd.f32 0.0, %v4845
        %v4847 = vpop.f32.mrf.mxu0
        %v4848 = vpop.f32.mrf.mxu0
        %v4849 = vadd.f32 0.0, %v4848
        %v4850 = vpop.f32.mrf.mxu0
        %4851 = vmatprep.mubr.bf16.mxu0 0
        %4852 = vmatmul.mubr.bf16.gmra.mxu0 %v2017
        %v4853 = vpop.f32.mrf.mxu0
        %v4854 = vadd.f32 0.0, %v4853
        %v4855 = vpop.f32.mrf.mxu0
        %v4856 = vpop.f32.mrf.mxu0
        %v4857 = vadd.f32 0.0, %v4856
        %v4858 = vpop.f32.mrf.mxu0
        %4859 = vmatprep.mubr.bf16.mxu0 0
        %4860 = vmatmul.mubr.bf16.gmra.mxu0 %v2018
        %v4861 = vpop.f32.mrf.mxu0
        %v4862 = vadd.f32 0.0, %v4861
        %v4863 = vpop.f32.mrf.mxu0
        %v4864 = vpop.f32.mrf.mxu0
        %v4865 = vadd.f32 0.0, %v4864
        %v4866 = vpop.f32.mrf.mxu0
        %4867 = vmatprep.mubr.bf16.mxu0 0
        %4868 = vmatmul.mubr.bf16.gmra.mxu0 %v2019
        %v4869 = vpop.f32.mrf.mxu0
        %v4870 = vadd.f32 0.0, %v4869
        %v4871 = vpop.f32.mrf.mxu0
        %v4872 = vpop.f32.mrf.mxu0
        %v4873 = vadd.f32 0.0, %v4872
        %v4874 = vpop.f32.mrf.mxu0
        %4875 = vmatprep.mubr.bf16.mxu0 0
        %4876 = vmatmul.mubr.bf16.gmra.mxu0 %v2020
        %v4877 = vpop.f32.mrf.mxu0
        %v4878 = vadd.f32 0.0, %v4877
        %v4879 = vpop.f32.mrf.mxu0
        %v4880 = vpop.f32.mrf.mxu0
        %v4881 = vadd.f32 0.0, %v4880
        %v4882 = vpop.f32.mrf.mxu0
        %4883 = vmatprep.mubr.bf16.mxu0 0
        %4884 = vmatmul.mubr.bf16.gmra.mxu0 %v2021
        %v4885 = vpop.f32.mrf.mxu0
        %v4886 = vadd.f32 0.0, %v4885
        %v4887 = vpop.f32.mrf.mxu0
        %v4888 = vpop.f32.mrf.mxu0
        %v4889 = vadd.f32 0.0, %v4888
        %v4890 = vpop.f32.mrf.mxu0
        %4891 = vmatprep.mubr.bf16.mxu0 0
        %4892 = vmatmul.mubr.bf16.gmra.mxu0 %v2022
        %v4893 = vpop.f32.mrf.mxu0
        %v4894 = vadd.f32 0.0, %v4893
        %v4895 = vpop.f32.mrf.mxu0
        %v4896 = vpop.f32.mrf.mxu0
        %v4897 = vadd.f32 0.0, %v4896
        %v4898 = vpop.f32.mrf.mxu0
        %4899 = vmatprep.mubr.bf16.mxu0 0
        %4900 = vmatmul.mubr.bf16.gmra.mxu0 %v2023
        %v4901 = vpop.f32.mrf.mxu0
        %v4902 = vadd.f32 0.0, %v4901
        %v4903 = vpop.f32.mrf.mxu0
        %v4904 = vpop.f32.mrf.mxu0
        %v4905 = vadd.f32 0.0, %v4904
        %v4906 = vpop.f32.mrf.mxu0
        %4907 = vmatprep.mubr.bf16.mxu0 0
        %4908 = vmatmul.mubr.bf16.gmra.mxu0 %v2024
        %v4909 = vpop.f32.mrf.mxu0
        %v4910 = vadd.f32 0.0, %v4909
        %v4911 = vpop.f32.mrf.mxu0
        %v4912 = vpop.f32.mrf.mxu0
        %v4913 = vadd.f32 0.0, %v4912
        %v4914 = vpop.f32.mrf.mxu0
        %4915 = vmatprep.mubr.bf16.mxu0 0
        %4916 = vmatmul.mubr.bf16.gmra.mxu0 %v2025
        %v4917 = vpop.f32.mrf.mxu0
        %v4918 = vadd.f32 0.0, %v4917
        %v4919 = vpop.f32.mrf.mxu0
        %v4920 = vpop.f32.mrf.mxu0
        %v4921 = vadd.f32 0.0, %v4920
        %v4922 = vpop.f32.mrf.mxu0
        %4923 = vmatprep.mubr.bf16.mxu0 0
        %4924 = vmatmul.mubr.bf16.gmra.mxu0 %v2026
        %v4925 = vpop.f32.mrf.mxu0
        %v4926 = vadd.f32 0.0, %v4925
        %v4927 = vpop.f32.mrf.mxu0
        %v4928 = vpop.f32.mrf.mxu0
        %v4929 = vadd.f32 0.0, %v4928
        %v4930 = vpop.f32.mrf.mxu0
        %4931 = vmatprep.mubr.bf16.mxu0 0
        %4932 = vmatmul.mubr.bf16.gmra.mxu0 %v2027
        %v4933 = vpop.f32.mrf.mxu0
        %v4934 = vadd.f32 0.0, %v4933
        %v4935 = vpop.f32.mrf.mxu0
        %v4936 = vpop.f32.mrf.mxu0
        %v4937 = vadd.f32 0.0, %v4936
        %v4938 = vpop.f32.mrf.mxu0
        %4939 = vmatprep.mubr.bf16.mxu0 0
        %4940 = vmatmul.mubr.bf16.gmra.mxu0 %v2028
        %v4941 = vpop.f32.mrf.mxu0
        %v4942 = vadd.f32 0.0, %v4941
        %v4943 = vpop.f32.mrf.mxu0
        %v4944 = vpop.f32.mrf.mxu0
        %v4945 = vadd.f32 0.0, %v4944
        %v4946 = vpop.f32.mrf.mxu0
        %4947 = vmatprep.mubr.bf16.mxu0 0
        %4948 = vmatmul.mubr.bf16.gmra.mxu0 %v2029
        %v4949 = vpop.f32.mrf.mxu0
        %v4950 = vadd.f32 0.0, %v4949
        %v4951 = vpop.f32.mrf.mxu0
        %v4952 = vpop.f32.mrf.mxu0
        %v4953 = vadd.f32 0.0, %v4952
        %v4954 = vpop.f32.mrf.mxu0
        %4955 = vmatprep.mubr.bf16.mxu0 0
        %4956 = vmatmul.mubr.bf16.gmra.mxu0 %v2030
        %v4957 = vpop.f32.mrf.mxu0
        %v4958 = vadd.f32 0.0, %v4957
        %v4959 = vpop.f32.mrf.mxu0
        %v4960 = vpop.f32.mrf.mxu0
        %v4961 = vadd.f32 0.0, %v4960
        %v4962 = vpop.f32.mrf.mxu0
        %4963 = vmatprep.mubr.bf16.mxu0 0
        %4964 = vmatmul.mubr.bf16.gmra.mxu0 %v2031
        %v4965 = vpop.f32.mrf.mxu0
        %v4966 = vadd.f32 0.0, %v4965
        %v4967 = vpop.f32.mrf.mxu0
        %v4968 = vpop.f32.mrf.mxu0
        %v4969 = vadd.f32 0.0, %v4968
        %v4970 = vpop.f32.mrf.mxu0
        %4971 = vmatprep.mubr.bf16.mxu0 0
        %4972 = vmatmul.mubr.bf16.gmra.mxu0 %v2032
        %v4973 = vpop.f32.mrf.mxu0
        %v4974 = vadd.f32 0.0, %v4973
        %v4975 = vpop.f32.mrf.mxu0
        %v4976 = vpop.f32.mrf.mxu0
        %v4977 = vadd.f32 0.0, %v4976
        %v4978 = vpop.f32.mrf.mxu0
        %4979 = vmatprep.mubr.bf16.mxu0 0
        %4980 = vmatmul.mubr.bf16.gmra.mxu0 %v2033
        %v4981 = vpop.f32.mrf.mxu0
        %v4982 = vadd.f32 0.0, %v4981
        %v4983 = vpop.f32.mrf.mxu0
        %v4984 = vpop.f32.mrf.mxu0
        %v4985 = vadd.f32 0.0, %v4984
        %v4986 = vpop.f32.mrf.mxu0
        %4987 = vmatprep.mubr.bf16.mxu0 0
        %4988 = vmatmul.mubr.bf16.gmra.mxu0 %v2034
        %v4989 = vpop.f32.mrf.mxu0
        %v4990 = vadd.f32 0.0, %v4989
        %v4991 = vpop.f32.mrf.mxu0
        %v4992 = vpop.f32.mrf.mxu0
        %v4993 = vadd.f32 0.0, %v4992
        %v4994 = vpop.f32.mrf.mxu0
        %4995 = vmatprep.mubr.bf16.mxu0 0
        %4996 = vmatmul.mubr.bf16.gmra.mxu0 %v2035
        %v4997 = vpop.f32.mrf.mxu0
        %v4998 = vadd.f32 0.0, %v4997
        %v4999 = vpop.f32.mrf.mxu0
        %v5000 = vpop.f32.mrf.mxu0
        %v5001 = vadd.f32 0.0, %v5000
        %v5002 = vpop.f32.mrf.mxu0
        %5003 = vmatprep.mubr.bf16.mxu0 0
        %5004 = vmatmul.mubr.bf16.gmra.mxu0 %v2036
        %v5005 = vpop.f32.mrf.mxu0
        %v5006 = vadd.f32 0.0, %v5005
        %v5007 = vpop.f32.mrf.mxu0
        %v5008 = vpop.f32.mrf.mxu0
        %v5009 = vadd.f32 0.0, %v5008
        %v5010 = vpop.f32.mrf.mxu0
        %5011 = vmatprep.mubr.bf16.mxu0 0
        %5012 = vmatmul.mubr.bf16.gmra.mxu0 %v2037
        %v5013 = vpop.f32.mrf.mxu0
        %v5014 = vadd.f32 0.0, %v5013
        %v5015 = vpop.f32.mrf.mxu0
        %v5016 = vpop.f32.mrf.mxu0
        %v5017 = vadd.f32 0.0, %v5016
        %v5018 = vpop.f32.mrf.mxu0
        %5019 = vmatprep.mubr.bf16.mxu0 0
        %5020 = vmatmul.mubr.bf16.gmra.mxu0 %v2038
        %v5021 = vpop.f32.mrf.mxu0
        %v5022 = vadd.f32 0.0, %v5021
        %v5023 = vpop.f32.mrf.mxu0
        %v5024 = vpop.f32.mrf.mxu0
        %v5025 = vadd.f32 0.0, %v5024
        %v5026 = vpop.f32.mrf.mxu0
        %5027 = vmatprep.mubr.bf16.mxu0 0
        %5028 = vmatmul.mubr.bf16.gmra.mxu0 %v2039
        %v5029 = vpop.f32.mrf.mxu0
        %v5030 = vadd.f32 0.0, %v5029
        %v5031 = vpop.f32.mrf.mxu0
        %v5032 = vpop.f32.mrf.mxu0
        %v5033 = vadd.f32 0.0, %v5032
        %v5034 = vpop.f32.mrf.mxu0
        %5035 = vmatprep.mubr.bf16.mxu0 0
        %5036 = vmatmul.mubr.bf16.gmra.mxu0 %v2040
        %v5037 = vpop.f32.mrf.mxu0
        %v5038 = vadd.f32 0.0, %v5037
        %v5039 = vpop.f32.mrf.mxu0
        %v5040 = vpop.f32.mrf.mxu0
        %v5041 = vadd.f32 0.0, %v5040
        %v5042 = vpop.f32.mrf.mxu0
        %5043 = vmatprep.mubr.bf16.mxu0 0
        %5044 = vmatmul.mubr.bf16.gmra.mxu0 %v2041
        %v5045 = vpop.f32.mrf.mxu0
        %v5046 = vadd.f32 0.0, %v5045
        %v5047 = vpop.f32.mrf.mxu0
        %v5048 = vpop.f32.mrf.mxu0
        %v5049 = vadd.f32 0.0, %v5048
        %v5050 = vpop.f32.mrf.mxu0
        %5051 = vmatprep.mubr.bf16.mxu0 0
        %5052 = vmatmul.mubr.bf16.gmra.mxu0 %v2042
        %v5053 = vpop.f32.mrf.mxu0
        %v5054 = vadd.f32 0.0, %v5053
        %v5055 = vpop.f32.mrf.mxu0
        %v5056 = vpop.f32.mrf.mxu0
        %v5057 = vadd.f32 0.0, %v5056
        %v5058 = vpop.f32.mrf.mxu0
        %5059 = vmatprep.mubr.bf16.mxu0 0
        %5060 = vmatmul.mubr.bf16.gmra.mxu0 %v2043
        %v5061 = vpop.f32.mrf.mxu0
        %v5062 = vadd.f32 0.0, %v5061
        %v5063 = vpop.f32.mrf.mxu0
        %v5064 = vpop.f32.mrf.mxu0
        %v5065 = vadd.f32 0.0, %v5064
        %v5066 = vpop.f32.mrf.mxu0
        %5067 = vmatprep.mubr.bf16.mxu0 0
        %5068 = vmatmul.mubr.bf16.gmra.mxu0 %v2044
        %v5069 = vpop.f32.mrf.mxu0
        %v5070 = vadd.f32 0.0, %v5069
        %v5071 = vpop.f32.mrf.mxu0
        %v5072 = vpop.f32.mrf.mxu0
        %v5073 = vadd.f32 0.0, %v5072
        %v5074 = vpop.f32.mrf.mxu0
        %5075 = vmatprep.mubr.bf16.mxu0 0
        %5076 = vmatmul.mubr.bf16.gmra.mxu0 %v2045
        %v5077 = vpop.f32.mrf.mxu0
        %v5078 = vadd.f32 0.0, %v5077
        %v5079 = vpop.f32.mrf.mxu0
        %v5080 = vpop.f32.mrf.mxu0
        %v5081 = vadd.f32 0.0, %v5080
        %v5082 = vpop.f32.mrf.mxu0
        %5083 = vmatprep.mubr.bf16.mxu0 0
        %5084 = vmatmul.mubr.bf16.gmra.mxu0 %v2046
        %v5085 = vpop.f32.mrf.mxu0
        %v5086 = vadd.f32 0.0, %v5085
        %v5087 = vpop.f32.mrf.mxu0
        %v5088 = vpop.f32.mrf.mxu0
        %v5089 = vadd.f32 0.0, %v5088
        %v5090 = vpop.f32.mrf.mxu0
        %5091 = vmatprep.mubr.bf16.mxu0 0
        %5092 = vmatmul.mubr.bf16.gmra.mxu0 %v2047
        %v5093 = vpop.f32.mrf.mxu0
        %v5094 = vadd.f32 0.0, %v5093
        %v5095 = vpop.f32.mrf.mxu0
        %v5096 = vpop.f32.mrf.mxu0
        %v5097 = vadd.f32 0.0, %v5096
        %v5098 = vpop.f32.mrf.mxu0
        %5099 = vmatprep.mubr.bf16.mxu0 0
        %5100 = vmatmul.mubr.bf16.gmra.mxu0 %v2048
        %v5101 = vpop.f32.mrf.mxu0
        %v5102 = vadd.f32 0.0, %v5101
        %v5103 = vpop.f32.mrf.mxu0
        %v5104 = vpop.f32.mrf.mxu0
        %v5105 = vadd.f32 0.0, %v5104
        %v5106 = vpop.f32.mrf.mxu0
        %5107 = vmatprep.mubr.bf16.mxu0 0
        %5108 = vmatmul.mubr.bf16.gmra.mxu0 %v2049
        %v5109 = vpop.f32.mrf.mxu0
        %v5110 = vadd.f32 0.0, %v5109
        %v5111 = vpop.f32.mrf.mxu0
        %v5112 = vpop.f32.mrf.mxu0
        %v5113 = vadd.f32 0.0, %v5112
        %v5114 = vpop.f32.mrf.mxu0
        %5115 = vmatprep.mubr.bf16.mxu0 0
        %5116 = vmatmul.mubr.bf16.gmra.mxu0 %v2050
        %v5117 = vpop.f32.mrf.mxu0
        %v5118 = vadd.f32 0.0, %v5117
        %v5119 = vpop.f32.mrf.mxu0
        %v5120 = vpop.f32.mrf.mxu0
        %v5121 = vadd.f32 0.0, %v5120
        %v5122 = vpop.f32.mrf.mxu0
        %5123 = vmatprep.mubr.bf16.mxu0 0
        %5124 = vmatmul.mubr.bf16.gmra.mxu0 %v2051
        %v5125 = vpop.f32.mrf.mxu0
        %v5126 = vadd.f32 0.0, %v5125
        %v5127 = vpop.f32.mrf.mxu0
        %v5128 = vpop.f32.mrf.mxu0
        %v5129 = vadd.f32 0.0, %v5128
        %v5130 = vpop.f32.mrf.mxu0
        %5131 = vdwg.mxu0
        %v5132 = vrot.slane %v4622, 3
        %v5133 = vrot.slane %v4625, 3
        %v5134 = vrot.slane %v4630, 3
        %v5135 = vrot.slane %v4633, 3
        %v5136 = vrot.slane %v4638, 3
        %v5137 = vrot.slane %v4641, 3
        %v5138 = vrot.slane %v4646, 3
        %v5139 = vrot.slane %v4649, 3
        %v5140 = vrot.slane %v4654, 3
        %v5141 = vrot.slane %v4657, 3
        %v5142 = vrot.slane %v4662, 3
        %v5143 = vrot.slane %v4665, 3
        %v5144 = vrot.slane %v4670, 3
        %v5145 = vrot.slane %v4673, 3
        %v5146 = vrot.slane %v4678, 3
        %v5147 = vrot.slane %v4681, 3
        %v5148 = vrot.slane %v4686, 3
        %v5149 = vrot.slane %v4689, 3
        %v5150 = vrot.slane %v4694, 3
        %v5151 = vrot.slane %v4697, 3
        %v5152 = vrot.slane %v4702, 3
        %v5153 = vrot.slane %v4705, 3
        %v5154 = vrot.slane %v4710, 3
        %v5155 = vrot.slane %v4713, 3
        %v5156 = vrot.slane %v4718, 3
        %v5157 = vrot.slane %v4721, 3
        %v5158 = vrot.slane %v4726, 3
        %v5159 = vrot.slane %v4729, 3
        %v5160 = vrot.slane %v4734, 3
        %v5161 = vrot.slane %v4737, 3
        %v5162 = vrot.slane %v4742, 3
        %v5163 = vrot.slane %v4745, 3
        %v5164 = vrot.slane %v4750, 3
        %v5165 = vrot.slane %v4753, 3
        %v5166 = vrot.slane %v4758, 3
        %v5167 = vrot.slane %v4761, 3
        %v5168 = vrot.slane %v4766, 3
        %v5169 = vrot.slane %v4769, 3
        %v5170 = vrot.slane %v4774, 3
        %v5171 = vrot.slane %v4777, 3
        %v5172 = vrot.slane %v4782, 3
        %v5173 = vrot.slane %v4785, 3
        %v5174 = vrot.slane %v4790, 3
        %v5175 = vrot.slane %v4793, 3
        %v5176 = vrot.slane %v4798, 3
        %v5177 = vrot.slane %v4801, 3
        %v5178 = vrot.slane %v4806, 3
        %v5179 = vrot.slane %v4809, 3
        %v5180 = vrot.slane %v4814, 3
        %v5181 = vrot.slane %v4817, 3
        %v5182 = vrot.slane %v4822, 3
        %v5183 = vrot.slane %v4825, 3
        %v5184 = vrot.slane %v4830, 3
        %v5185 = vrot.slane %v4833, 3
        %v5186 = vrot.slane %v4838, 3
        %v5187 = vrot.slane %v4841, 3
        %v5188 = vrot.slane %v4846, 3
        %v5189 = vrot.slane %v4849, 3
        %v5190 = vrot.slane %v4854, 3
        %v5191 = vrot.slane %v4857, 3
        %v5192 = vrot.slane %v4862, 3
        %v5193 = vrot.slane %v4865, 3
        %v5194 = vrot.slane %v4870, 3
        %v5195 = vrot.slane %v4873, 3
        %v5196 = vrot.slane %v4878, 3
        %v5197 = vrot.slane %v4881, 3
        %v5198 = vrot.slane %v4886, 3
        %v5199 = vrot.slane %v4889, 3
        %v5200 = vrot.slane %v4894, 3
        %v5201 = vrot.slane %v4897, 3
        %v5202 = vrot.slane %v4902, 3
        %v5203 = vrot.slane %v4905, 3
        %v5204 = vrot.slane %v4910, 3
        %v5205 = vrot.slane %v4913, 3
        %v5206 = vrot.slane %v4918, 3
        %v5207 = vrot.slane %v4921, 3
        %v5208 = vrot.slane %v4926, 3
        %v5209 = vrot.slane %v4929, 3
        %v5210 = vrot.slane %v4934, 3
        %v5211 = vrot.slane %v4937, 3
        %v5212 = vrot.slane %v4942, 3
        %v5213 = vrot.slane %v4945, 3
        %v5214 = vrot.slane %v4950, 3
        %v5215 = vrot.slane %v4953, 3
        %v5216 = vrot.slane %v4958, 3
        %v5217 = vrot.slane %v4961, 3
        %v5218 = vrot.slane %v4966, 3
        %v5219 = vrot.slane %v4969, 3
        %v5220 = vrot.slane %v4974, 3
        %v5221 = vrot.slane %v4977, 3
        %v5222 = vrot.slane %v4982, 3
        %v5223 = vrot.slane %v4985, 3
        %v5224 = vrot.slane %v4990, 3
        %v5225 = vrot.slane %v4993, 3
        %v5226 = vrot.slane %v4998, 3
        %v5227 = vrot.slane %v5001, 3
        %v5228 = vrot.slane %v5006, 3
        %v5229 = vrot.slane %v5009, 3
        %v5230 = vrot.slane %v5014, 3
        %v5231 = vrot.slane %v5017, 3
        %v5232 = vrot.slane %v5022, 3
        %v5233 = vrot.slane %v5025, 3
        %v5234 = vrot.slane %v5030, 3
        %v5235 = vrot.slane %v5033, 3
        %v5236 = vrot.slane %v5038, 3
        %v5237 = vrot.slane %v5041, 3
        %v5238 = vrot.slane %v5046, 3
        %v5239 = vrot.slane %v5049, 3
        %v5240 = vrot.slane %v5054, 3
        %v5241 = vrot.slane %v5057, 3
        %v5242 = vrot.slane %v5062, 3
        %v5243 = vrot.slane %v5065, 3
        %v5244 = vrot.slane %v5070, 3
        %v5245 = vrot.slane %v5073, 3
        %v5246 = vrot.slane %v5078, 3
        %v5247 = vrot.slane %v5081, 3
        %v5248 = vrot.slane %v5086, 3
        %v5249 = vrot.slane %v5089, 3
        %v5250 = vrot.slane %v5094, 3
        %v5251 = vrot.slane %v5097, 3
        %v5252 = vrot.slane %v5102, 3
        %v5253 = vrot.slane %v5105, 3
        %v5254 = vrot.slane %v5110, 3
        %v5255 = vrot.slane %v5113, 3
        %v5256 = vrot.slane %v5118, 3
        %v5257 = vrot.slane %v5121, 3
        %v5258 = vrot.slane %v5126, 3
        %v5259 = vrot.slane %v5129, 3
        %vm5260 = vcmp.lt.s32.totalorder %v2806, 5
        %v5261 = vsel %vm5260, %v5258, %v5259
        %v5262 = vsel %vm5260, %v5257, %v5258
        %v5263 = vsel %vm5260, %v5256, %v5257
        %v5264 = vsel %vm5260, %v5255, %v5256
        %v5265 = vsel %vm5260, %v5254, %v5255
        %v5266 = vsel %vm5260, %v5253, %v5254
        %v5267 = vsel %vm5260, %v5252, %v5253
        %v5268 = vsel %vm5260, %v5251, %v5252
        %v5269 = vsel %vm5260, %v5250, %v5251
        %v5270 = vsel %vm5260, %v5249, %v5250
        %v5271 = vsel %vm5260, %v5248, %v5249
        %v5272 = vsel %vm5260, %v5247, %v5248
        %v5273 = vsel %vm5260, %v5246, %v5247
        %v5274 = vsel %vm5260, %v5245, %v5246
        %v5275 = vsel %vm5260, %v5244, %v5245
        %v5276 = vsel %vm5260, %v5243, %v5244
        %v5277 = vsel %vm5260, %v5242, %v5243
        %v5278 = vsel %vm5260, %v5241, %v5242
        %v5279 = vsel %vm5260, %v5240, %v5241
        %v5280 = vsel %vm5260, %v5239, %v5240
        %v5281 = vsel %vm5260, %v5238, %v5239
        %v5282 = vsel %vm5260, %v5237, %v5238
        %v5283 = vsel %vm5260, %v5236, %v5237
        %v5284 = vsel %vm5260, %v5235, %v5236
        %v5285 = vsel %vm5260, %v5234, %v5235
        %v5286 = vsel %vm5260, %v5233, %v5234
        %v5287 = vsel %vm5260, %v5232, %v5233
        %v5288 = vsel %vm5260, %v5231, %v5232
        %v5289 = vsel %vm5260, %v5230, %v5231
        %v5290 = vsel %vm5260, %v5229, %v5230
        %v5291 = vsel %vm5260, %v5228, %v5229
        %v5292 = vsel %vm5260, %v5227, %v5228
        %v5293 = vsel %vm5260, %v5226, %v5227
        %v5294 = vsel %vm5260, %v5225, %v5226
        %v5295 = vsel %vm5260, %v5224, %v5225
        %v5296 = vsel %vm5260, %v5223, %v5224
        %v5297 = vsel %vm5260, %v5222, %v5223
        %v5298 = vsel %vm5260, %v5221, %v5222
        %v5299 = vsel %vm5260, %v5220, %v5221
        %v5300 = vsel %vm5260, %v5219, %v5220
        %v5301 = vsel %vm5260, %v5218, %v5219
        %v5302 = vsel %vm5260, %v5217, %v5218
        %v5303 = vsel %vm5260, %v5216, %v5217
        %v5304 = vsel %vm5260, %v5215, %v5216
        %v5305 = vsel %vm5260, %v5214, %v5215
        %v5306 = vsel %vm5260, %v5213, %v5214
        %v5307 = vsel %vm5260, %v5212, %v5213
        %v5308 = vsel %vm5260, %v5211, %v5212
        %v5309 = vsel %vm5260, %v5210, %v5211
        %v5310 = vsel %vm5260, %v5209, %v5210
        %v5311 = vsel %vm5260, %v5208, %v5209
        %v5312 = vsel %vm5260, %v5207, %v5208
        %v5313 = vsel %vm5260, %v5206, %v5207
        %v5314 = vsel %vm5260, %v5205, %v5206
        %v5315 = vsel %vm5260, %v5204, %v5205
        %v5316 = vsel %vm5260, %v5203, %v5204
        %v5317 = vsel %vm5260, %v5202, %v5203
        %v5318 = vsel %vm5260, %v5201, %v5202
        %v5319 = vsel %vm5260, %v5200, %v5201
        %v5320 = vsel %vm5260, %v5199, %v5200
        %v5321 = vsel %vm5260, %v5198, %v5199
        %v5322 = vsel %vm5260, %v5197, %v5198
        %v5323 = vsel %vm5260, %v5196, %v5197
        %v5324 = vsel %vm5260, %v5195, %v5196
        %v5325 = vsel %vm5260, %v5194, %v5195
        %v5326 = vsel %vm5260, %v5193, %v5194
        %v5327 = vsel %vm5260, %v5192, %v5193
        %v5328 = vsel %vm5260, %v5191, %v5192
        %v5329 = vsel %vm5260, %v5190, %v5191
        %v5330 = vsel %vm5260, %v5189, %v5190
        %v5331 = vsel %vm5260, %v5188, %v5189
        %v5332 = vsel %vm5260, %v5187, %v5188
        %v5333 = vsel %vm5260, %v5186, %v5187
        %v5334 = vsel %vm5260, %v5185, %v5186
        %v5335 = vsel %vm5260, %v5184, %v5185
        %v5336 = vsel %vm5260, %v5183, %v5184
        %v5337 = vsel %vm5260, %v5182, %v5183
        %v5338 = vsel %vm5260, %v5181, %v5182
        %v5339 = vsel %vm5260, %v5180, %v5181
        %v5340 = vsel %vm5260, %v5179, %v5180
        %v5341 = vsel %vm5260, %v5178, %v5179
        %v5342 = vsel %vm5260, %v5177, %v5178
        %v5343 = vsel %vm5260, %v5176, %v5177
        %v5344 = vsel %vm5260, %v5175, %v5176
        %v5345 = vsel %vm5260, %v5174, %v5175
        %v5346 = vsel %vm5260, %v5173, %v5174
        %v5347 = vsel %vm5260, %v5172, %v5173
        %v5348 = vsel %vm5260, %v5171, %v5172
        %v5349 = vsel %vm5260, %v5170, %v5171
        %v5350 = vsel %vm5260, %v5169, %v5170
        %v5351 = vsel %vm5260, %v5168, %v5169
        %v5352 = vsel %vm5260, %v5167, %v5168
        %v5353 = vsel %vm5260, %v5166, %v5167
        %v5354 = vsel %vm5260, %v5165, %v5166
        %v5355 = vsel %vm5260, %v5164, %v5165
        %v5356 = vsel %vm5260, %v5163, %v5164
        %v5357 = vsel %vm5260, %v5162, %v5163
        %v5358 = vsel %vm5260, %v5161, %v5162
        %v5359 = vsel %vm5260, %v5160, %v5161
        %v5360 = vsel %vm5260, %v5159, %v5160
        %v5361 = vsel %vm5260, %v5158, %v5159
        %v5362 = vsel %vm5260, %v5157, %v5158
        %v5363 = vsel %vm5260, %v5156, %v5157
        %v5364 = vsel %vm5260, %v5155, %v5156
        %v5365 = vsel %vm5260, %v5154, %v5155
        %v5366 = vsel %vm5260, %v5153, %v5154
        %v5367 = vsel %vm5260, %v5152, %v5153
        %v5368 = vsel %vm5260, %v5151, %v5152
        %v5369 = vsel %vm5260, %v5150, %v5151
        %v5370 = vsel %vm5260, %v5149, %v5150
        %v5371 = vsel %vm5260, %v5148, %v5149
        %v5372 = vsel %vm5260, %v5147, %v5148
        %v5373 = vsel %vm5260, %v5146, %v5147
        %v5374 = vsel %vm5260, %v5145, %v5146
        %v5375 = vsel %vm5260, %v5144, %v5145
        %v5376 = vsel %vm5260, %v5143, %v5144
        %v5377 = vsel %vm5260, %v5142, %v5143
        %v5378 = vsel %vm5260, %v5141, %v5142
        %v5379 = vsel %vm5260, %v5140, %v5141
        %v5380 = vsel %vm5260, %v5139, %v5140
        %v5381 = vsel %vm5260, %v5138, %v5139
        %v5382 = vsel %vm5260, %v5137, %v5138
        %v5383 = vsel %vm5260, %v5136, %v5137
        %v5384 = vsel %vm5260, %v5135, %v5136
        %v5385 = vsel %vm5260, %v5134, %v5135
        %v5386 = vsel %vm5260, %v5133, %v5134
        %v5387 = vsel %vm5260, %v5132, %v5133
        %v5388 = vsel %vm5260, %v5259, %v5132
        %v5389 = vadd.f32 %v4395, %v5387
        %v5390 = vadd.f32 %v4396, %v5386
        %v5391 = vadd.f32 %v4397, %v5385
        %v5392 = vadd.f32 %v4398, %v5384
        %v5393 = vadd.f32 %v4399, %v5383
        %v5394 = vadd.f32 %v4400, %v5382
        %v5395 = vadd.f32 %v4401, %v5381
        %v5396 = vadd.f32 %v4402, %v5380
        %v5397 = vadd.f32 %v4403, %v5379
        %v5398 = vadd.f32 %v4404, %v5378
        %v5399 = vadd.f32 %v4405, %v5377
        %v5400 = vadd.f32 %v4406, %v5376
        %v5401 = vadd.f32 %v4407, %v5375
        %v5402 = vadd.f32 %v4408, %v5374
        %v5403 = vadd.f32 %v4409, %v5373
        %v5404 = vadd.f32 %v4410, %v5372
        %v5405 = vadd.f32 %v4411, %v5371
        %v5406 = vadd.f32 %v4412, %v5370
        %v5407 = vadd.f32 %v4413, %v5369
        %v5408 = vadd.f32 %v4414, %v5368
        %v5409 = vadd.f32 %v4415, %v5367
        %v5410 = vadd.f32 %v4416, %v5366
        %v5411 = vadd.f32 %v4417, %v5365
        %v5412 = vadd.f32 %v4418, %v5364
        %v5413 = vadd.f32 %v4419, %v5363
        %v5414 = vadd.f32 %v4420, %v5362
        %v5415 = vadd.f32 %v4421, %v5361
        %v5416 = vadd.f32 %v4422, %v5360
        %v5417 = vadd.f32 %v4423, %v5359
        %v5418 = vadd.f32 %v4424, %v5358
        %v5419 = vadd.f32 %v4425, %v5357
        %v5420 = vadd.f32 %v4426, %v5356
        %v5421 = vadd.f32 %v4427, %v5355
        %v5422 = vadd.f32 %v4428, %v5354
        %v5423 = vadd.f32 %v4429, %v5353
        %v5424 = vadd.f32 %v4430, %v5352
        %v5425 = vadd.f32 %v4431, %v5351
        %v5426 = vadd.f32 %v4432, %v5350
        %v5427 = vadd.f32 %v4433, %v5349
        %v5428 = vadd.f32 %v4434, %v5348
        %v5429 = vadd.f32 %v4435, %v5347
        %v5430 = vadd.f32 %v4436, %v5346
        %v5431 = vadd.f32 %v4437, %v5345
        %v5432 = vadd.f32 %v4438, %v5344
        %v5433 = vadd.f32 %v4439, %v5343
        %v5434 = vadd.f32 %v4440, %v5342
        %v5435 = vadd.f32 %v4441, %v5341
        %v5436 = vadd.f32 %v4442, %v5340
        %v5437 = vadd.f32 %v4443, %v5339
        %v5438 = vadd.f32 %v4444, %v5338
        %v5439 = vadd.f32 %v4445, %v5337
        %v5440 = vadd.f32 %v4446, %v5336
        %v5441 = vadd.f32 %v4447, %v5335
        %v5442 = vadd.f32 %v4448, %v5334
        %v5443 = vadd.f32 %v4449, %v5333
        %v5444 = vadd.f32 %v4450, %v5332
        %v5445 = vadd.f32 %v4451, %v5331
        %v5446 = vadd.f32 %v4452, %v5330
        %v5447 = vadd.f32 %v4453, %v5329
        %v5448 = vadd.f32 %v4454, %v5328
        %v5449 = vadd.f32 %v4455, %v5327
        %v5450 = vadd.f32 %v4456, %v5326
        %v5451 = vadd.f32 %v4457, %v5325
        %v5452 = vadd.f32 %v4458, %v5324
        %v5453 = vadd.f32 %v4459, %v5323
        %v5454 = vadd.f32 %v4460, %v5322
        %v5455 = vadd.f32 %v4461, %v5321
        %v5456 = vadd.f32 %v4462, %v5320
        %v5457 = vadd.f32 %v4463, %v5319
        %v5458 = vadd.f32 %v4464, %v5318
        %v5459 = vadd.f32 %v4465, %v5317
        %v5460 = vadd.f32 %v4466, %v5316
        %v5461 = vadd.f32 %v4467, %v5315
        %v5462 = vadd.f32 %v4468, %v5314
        %v5463 = vadd.f32 %v4469, %v5313
        %v5464 = vadd.f32 %v4470, %v5312
        %v5465 = vadd.f32 %v4471, %v5311
        %v5466 = vadd.f32 %v4472, %v5310
        %v5467 = vadd.f32 %v4473, %v5309
        %v5468 = vadd.f32 %v4474, %v5308
        %v5469 = vadd.f32 %v4475, %v5307
        %v5470 = vadd.f32 %v4476, %v5306
        %v5471 = vadd.f32 %v4477, %v5305
        %v5472 = vadd.f32 %v4478, %v5304
        %v5473 = vadd.f32 %v4479, %v5303
        %v5474 = vadd.f32 %v4480, %v5302
        %v5475 = vadd.f32 %v4481, %v5301
        %v5476 = vadd.f32 %v4482, %v5300
        %v5477 = vadd.f32 %v4483, %v5299
        %v5478 = vadd.f32 %v4484, %v5298
        %v5479 = vadd.f32 %v4485, %v5297
        %v5480 = vadd.f32 %v4486, %v5296
        %v5481 = vadd.f32 %v4487, %v5295
        %v5482 = vadd.f32 %v4488, %v5294
        %v5483 = vadd.f32 %v4489, %v5293
        %v5484 = vadd.f32 %v4490, %v5292
        %v5485 = vadd.f32 %v4491, %v5291
        %v5486 = vadd.f32 %v4492, %v5290
        %v5487 = vadd.f32 %v4493, %v5289
        %v5488 = vadd.f32 %v4494, %v5288
        %v5489 = vadd.f32 %v4495, %v5287
        %v5490 = vadd.f32 %v4496, %v5286
        %v5491 = vadd.f32 %v4497, %v5285
        %v5492 = vadd.f32 %v4498, %v5284
        %v5493 = vadd.f32 %v4499, %v5283
        %v5494 = vadd.f32 %v4500, %v5282
        %v5495 = vadd.f32 %v4501, %v5281
        %v5496 = vadd.f32 %v4502, %v5280
        %v5497 = vadd.f32 %v4503, %v5279
        %v5498 = vadd.f32 %v4504, %v5278
        %v5499 = vadd.f32 %v4505, %v5277
        %v5500 = vadd.f32 %v4506, %v5276
        %v5501 = vadd.f32 %v4507, %v5275
        %v5502 = vadd.f32 %v4508, %v5274
        %v5503 = vadd.f32 %v4509, %v5273
        %v5504 = vadd.f32 %v4510, %v5272
        %v5505 = vadd.f32 %v4511, %v5271
        %v5506 = vadd.f32 %v4512, %v5270
        %v5507 = vadd.f32 %v4513, %v5269
        %v5508 = vadd.f32 %v4514, %v5268
        %v5509 = vadd.f32 %v4515, %v5267
        %v5510 = vadd.f32 %v4516, %v5266
        %v5511 = vadd.f32 %v4517, %v5265
        %v5512 = vadd.f32 %v4518, %v5264
        %v5513 = vadd.f32 %v4519, %v5263
        %v5514 = vadd.f32 %v4520, %v5262
        %v5515 = vadd.f32 %v4521, %v5261
        %v5516 = vadd.f32 %v4522, %v5388
        %v5517 = vld [vmem:[#allocation2 + $0x10] sm:$0xf]
        %v5518 = vld [vmem:[#allocation2 + $0x24] sm:$0xf]
        %v5519 = vld [vmem:[#allocation2 + $0x38] sm:$0xf]
        %v5520 = vld [vmem:[#allocation2 + $0x4c] sm:$0xf]
        %v5521 = vld [vmem:[#allocation2 + $0x60] sm:$0xf]
        %v5522 = vld [vmem:[#allocation2 + $0x74] sm:$0xf]
        %v5523 = vld [vmem:[#allocation2 + $0x88] sm:$0xf]
        %v5524 = vld [vmem:[#allocation2 + $0x9c] sm:$0xf]
        %v5525 = vld [vmem:[#allocation2 + $0xb0] sm:$0xf]
        %v5526 = vld [vmem:[#allocation2 + $0xc4] sm:$0xf]
        %v5527 = vld [vmem:[#allocation2 + $0xd8] sm:$0xf]
        %v5528 = vld [vmem:[#allocation2 + $0xec] sm:$0xf]
        %v5529 = vld [vmem:[#allocation2 + $0x100] sm:$0xf]
        %v5530 = vld [vmem:[#allocation2 + $0x114] sm:$0xf]
        %v5531 = vld [vmem:[#allocation2 + $0x128] sm:$0xf]
        %v5532 = vld [vmem:[#allocation2 + $0x13c] sm:$0xf]
        %v5549 = vunpack.c.l.b16 %v5517
        %v5550 = vunpack.c.l.b16 %v5518
        %v5551 = vunpack.c.l.b16 %v5519
        %v5552 = vunpack.c.l.b16 %v5520
        %v5553 = vunpack.c.l.b16 %v5521
        %v5554 = vunpack.c.l.b16 %v5522
        %v5555 = vunpack.c.l.b16 %v5523
        %v5556 = vunpack.c.l.b16 %v5524
        %v5557 = vunpack.c.l.b16 %v5525
        %v5558 = vunpack.c.l.b16 %v5526
        %v5559 = vunpack.c.l.b16 %v5527
        %v5560 = vunpack.c.l.b16 %v5528
        %v5561 = vunpack.c.l.b16 %v5529
        %v5562 = vunpack.c.l.b16 %v5530
        %v5563 = vunpack.c.l.b16 %v5531
        %v5564 = vunpack.c.l.b16 %v5532
        %v5565 = vpack.c.b16 %v5550, %v5549
        %v5566 = vpack.c.b16 %v5552, %v5551
        %v5567 = vpack.c.b16 %v5554, %v5553
        %v5568 = vpack.c.b16 %v5556, %v5555
        %v5569 = vpack.c.b16 %v5558, %v5557
        %v5570 = vpack.c.b16 %v5560, %v5559
        %v5571 = vpack.c.b16 %v5562, %v5561
        %v5572 = vpack.c.b16 %v5564, %v5563
        %5581 = vmatprep.subr.bf16.mxu0 0
        %5582 = vmatpush1.bf16.msra.mxu0 %v5572
        %5583 = vmatprep.subr.bf16.mxu0 0
        %5584 = vmatpush1.bf16.msra.mxu0 %v5571
        %5585 = vmatprep.subr.bf16.mxu0 0
        %5586 = vmatpush1.bf16.msra.mxu0 %v5570
        %5587 = vmatprep.subr.bf16.mxu0 0
        %5588 = vmatpush1.bf16.msra.mxu0 %v5569
        %5589 = vmatprep.subr.bf16.mxu0 0
        %5590 = vmatpush1.bf16.msra.mxu0 %v5568
        %5591 = vmatprep.subr.bf16.mxu0 0
        %5592 = vmatpush1.bf16.msra.mxu0 %v5567
        %5593 = vmatprep.subr.bf16.mxu0 0
        %5594 = vmatpush1.bf16.msra.mxu0 %v5566
        %5595 = vmatprep.subr.bf16.mxu0 0
        %5596 = vmatpush1.bf16.msra.mxu0 %v5565
        %5597 = vmatprep.subr.bf16.mxu0 0
        %5598 = vmatpush2.bf16.msra.mxu0 0
        %5599 = vmatprep.subr.bf16.mxu0 0
        %5600 = vmatpush2.bf16.msra.mxu0 0
        %5601 = vmatprep.subr.bf16.mxu0 0
        %5602 = vmatpush2.bf16.msra.mxu0 0
        %5603 = vmatprep.subr.bf16.mxu0 0
        %5604 = vmatpush2.bf16.msra.mxu0 0
        %5605 = vmatprep.subr.bf16.mxu0 0
        %5606 = vmatpush2.bf16.msra.mxu0 0
        %5607 = vmatprep.subr.bf16.mxu0 0
        %5608 = vmatpush2.bf16.msra.mxu0 0
        %5609 = vmatprep.subr.bf16.mxu0 0
        %5610 = vmatpush2.bf16.msra.mxu0 0
        %5611 = vmatprep.subr.bf16.mxu0 0
        %5612 = vmatpush2.bf16.msra.mxu0 0
        %5613 = vmatprep.mubr.bf16.mxu0 0
        %5614 = vmatmul.mubr.bf16.gmra.mxu0 %v1988
        %v5615 = vpop.f32.mrf.mxu0
        %v5616 = vadd.f32 0.0, %v5615
        %v5617 = vpop.f32.mrf.mxu0
        %v5618 = vpop.f32.mrf.mxu0
        %v5619 = vadd.f32 0.0, %v5618
        %v5620 = vpop.f32.mrf.mxu0
        %5621 = vmatprep.mubr.bf16.mxu0 0
        %5622 = vmatmul.mubr.bf16.gmra.mxu0 %v1989
        %v5623 = vpop.f32.mrf.mxu0
        %v5624 = vadd.f32 0.0, %v5623
        %v5625 = vpop.f32.mrf.mxu0
        %v5626 = vpop.f32.mrf.mxu0
        %v5627 = vadd.f32 0.0, %v5626
        %v5628 = vpop.f32.mrf.mxu0
        %5629 = vmatprep.mubr.bf16.mxu0 0
        %5630 = vmatmul.mubr.bf16.gmra.mxu0 %v1990
        %v5631 = vpop.f32.mrf.mxu0
        %v5632 = vadd.f32 0.0, %v5631
        %v5633 = vpop.f32.mrf.mxu0
        %v5634 = vpop.f32.mrf.mxu0
        %v5635 = vadd.f32 0.0, %v5634
        %v5636 = vpop.f32.mrf.mxu0
        %5637 = vmatprep.mubr.bf16.mxu0 0
        %5638 = vmatmul.mubr.bf16.gmra.mxu0 %v1991
        %v5639 = vpop.f32.mrf.mxu0
        %v5640 = vadd.f32 0.0, %v5639
        %v5641 = vpop.f32.mrf.mxu0
        %v5642 = vpop.f32.mrf.mxu0
        %v5643 = vadd.f32 0.0, %v5642
        %v5644 = vpop.f32.mrf.mxu0
        %5645 = vmatprep.mubr.bf16.mxu0 0
        %5646 = vmatmul.mubr.bf16.gmra.mxu0 %v1992
        %v5647 = vpop.f32.mrf.mxu0
        %v5648 = vadd.f32 0.0, %v5647
        %v5649 = vpop.f32.mrf.mxu0
        %v5650 = vpop.f32.mrf.mxu0
        %v5651 = vadd.f32 0.0, %v5650
        %v5652 = vpop.f32.mrf.mxu0
        %5653 = vmatprep.mubr.bf16.mxu0 0
        %5654 = vmatmul.mubr.bf16.gmra.mxu0 %v1993
        %v5655 = vpop.f32.mrf.mxu0
        %v5656 = vadd.f32 0.0, %v5655
        %v5657 = vpop.f32.mrf.mxu0
        %v5658 = vpop.f32.mrf.mxu0
        %v5659 = vadd.f32 0.0, %v5658
        %v5660 = vpop.f32.mrf.mxu0
        %5661 = vmatprep.mubr.bf16.mxu0 0
        %5662 = vmatmul.mubr.bf16.gmra.mxu0 %v1994
        %v5663 = vpop.f32.mrf.mxu0
        %v5664 = vadd.f32 0.0, %v5663
        %v5665 = vpop.f32.mrf.mxu0
        %v5666 = vpop.f32.mrf.mxu0
        %v5667 = vadd.f32 0.0, %v5666
        %v5668 = vpop.f32.mrf.mxu0
        %5669 = vmatprep.mubr.bf16.mxu0 0
        %5670 = vmatmul.mubr.bf16.gmra.mxu0 %v1995
        %v5671 = vpop.f32.mrf.mxu0
        %v5672 = vadd.f32 0.0, %v5671
        %v5673 = vpop.f32.mrf.mxu0
        %v5674 = vpop.f32.mrf.mxu0
        %v5675 = vadd.f32 0.0, %v5674
        %v5676 = vpop.f32.mrf.mxu0
        %5677 = vmatprep.mubr.bf16.mxu0 0
        %5678 = vmatmul.mubr.bf16.gmra.mxu0 %v1996
        %v5679 = vpop.f32.mrf.mxu0
        %v5680 = vadd.f32 0.0, %v5679
        %v5681 = vpop.f32.mrf.mxu0
        %v5682 = vpop.f32.mrf.mxu0
        %v5683 = vadd.f32 0.0, %v5682
        %v5684 = vpop.f32.mrf.mxu0
        %5685 = vmatprep.mubr.bf16.mxu0 0
        %5686 = vmatmul.mubr.bf16.gmra.mxu0 %v1997
        %v5687 = vpop.f32.mrf.mxu0
        %v5688 = vadd.f32 0.0, %v5687
        %v5689 = vpop.f32.mrf.mxu0
        %v5690 = vpop.f32.mrf.mxu0
        %v5691 = vadd.f32 0.0, %v5690
        %v5692 = vpop.f32.mrf.mxu0
        %5693 = vmatprep.mubr.bf16.mxu0 0
        %5694 = vmatmul.mubr.bf16.gmra.mxu0 %v1998
        %v5695 = vpop.f32.mrf.mxu0
        %v5696 = vadd.f32 0.0, %v5695
        %v5697 = vpop.f32.mrf.mxu0
        %v5698 = vpop.f32.mrf.mxu0
        %v5699 = vadd.f32 0.0, %v5698
        %v5700 = vpop.f32.mrf.mxu0
        %5701 = vmatprep.mubr.bf16.mxu0 0
        %5702 = vmatmul.mubr.bf16.gmra.mxu0 %v1999
        %v5703 = vpop.f32.mrf.mxu0
        %v5704 = vadd.f32 0.0, %v5703
        %v5705 = vpop.f32.mrf.mxu0
        %v5706 = vpop.f32.mrf.mxu0
        %v5707 = vadd.f32 0.0, %v5706
        %v5708 = vpop.f32.mrf.mxu0
        %5709 = vmatprep.mubr.bf16.mxu0 0
        %5710 = vmatmul.mubr.bf16.gmra.mxu0 %v2000
        %v5711 = vpop.f32.mrf.mxu0
        %v5712 = vadd.f32 0.0, %v5711
        %v5713 = vpop.f32.mrf.mxu0
        %v5714 = vpop.f32.mrf.mxu0
        %v5715 = vadd.f32 0.0, %v5714
        %v5716 = vpop.f32.mrf.mxu0
        %5717 = vmatprep.mubr.bf16.mxu0 0
        %5718 = vmatmul.mubr.bf16.gmra.mxu0 %v2001
        %v5719 = vpop.f32.mrf.mxu0
        %v5720 = vadd.f32 0.0, %v5719
        %v5721 = vpop.f32.mrf.mxu0
        %v5722 = vpop.f32.mrf.mxu0
        %v5723 = vadd.f32 0.0, %v5722
        %v5724 = vpop.f32.mrf.mxu0
        %5725 = vmatprep.mubr.bf16.mxu0 0
        %5726 = vmatmul.mubr.bf16.gmra.mxu0 %v2002
        %v5727 = vpop.f32.mrf.mxu0
        %v5728 = vadd.f32 0.0, %v5727
        %v5729 = vpop.f32.mrf.mxu0
        %v5730 = vpop.f32.mrf.mxu0
        %v5731 = vadd.f32 0.0, %v5730
        %v5732 = vpop.f32.mrf.mxu0
        %5733 = vmatprep.mubr.bf16.mxu0 0
        %5734 = vmatmul.mubr.bf16.gmra.mxu0 %v2003
        %v5735 = vpop.f32.mrf.mxu0
        %v5736 = vadd.f32 0.0, %v5735
        %v5737 = vpop.f32.mrf.mxu0
        %v5738 = vpop.f32.mrf.mxu0
        %v5739 = vadd.f32 0.0, %v5738
        %v5740 = vpop.f32.mrf.mxu0
        %5741 = vmatprep.mubr.bf16.mxu0 0
        %5742 = vmatmul.mubr.bf16.gmra.mxu0 %v2004
        %v5743 = vpop.f32.mrf.mxu0
        %v5744 = vadd.f32 0.0, %v5743
        %v5745 = vpop.f32.mrf.mxu0
        %v5746 = vpop.f32.mrf.mxu0
        %v5747 = vadd.f32 0.0, %v5746
        %v5748 = vpop.f32.mrf.mxu0
        %5749 = vmatprep.mubr.bf16.mxu0 0
        %5750 = vmatmul.mubr.bf16.gmra.mxu0 %v2005
        %v5751 = vpop.f32.mrf.mxu0
        %v5752 = vadd.f32 0.0, %v5751
        %v5753 = vpop.f32.mrf.mxu0
        %v5754 = vpop.f32.mrf.mxu0
        %v5755 = vadd.f32 0.0, %v5754
        %v5756 = vpop.f32.mrf.mxu0
        %5757 = vmatprep.mubr.bf16.mxu0 0
        %5758 = vmatmul.mubr.bf16.gmra.mxu0 %v2006
        %v5759 = vpop.f32.mrf.mxu0
        %v5760 = vadd.f32 0.0, %v5759
        %v5761 = vpop.f32.mrf.mxu0
        %v5762 = vpop.f32.mrf.mxu0
        %v5763 = vadd.f32 0.0, %v5762
        %v5764 = vpop.f32.mrf.mxu0
        %5765 = vmatprep.mubr.bf16.mxu0 0
        %5766 = vmatmul.mubr.bf16.gmra.mxu0 %v2007
        %v5767 = vpop.f32.mrf.mxu0
        %v5768 = vadd.f32 0.0, %v5767
        %v5769 = vpop.f32.mrf.mxu0
        %v5770 = vpop.f32.mrf.mxu0
        %v5771 = vadd.f32 0.0, %v5770
        %v5772 = vpop.f32.mrf.mxu0
        %5773 = vmatprep.mubr.bf16.mxu0 0
        %5774 = vmatmul.mubr.bf16.gmra.mxu0 %v2008
        %v5775 = vpop.f32.mrf.mxu0
        %v5776 = vadd.f32 0.0, %v5775
        %v5777 = vpop.f32.mrf.mxu0
        %v5778 = vpop.f32.mrf.mxu0
        %v5779 = vadd.f32 0.0, %v5778
        %v5780 = vpop.f32.mrf.mxu0
        %5781 = vmatprep.mubr.bf16.mxu0 0
        %5782 = vmatmul.mubr.bf16.gmra.mxu0 %v2009
        %v5783 = vpop.f32.mrf.mxu0
        %v5784 = vadd.f32 0.0, %v5783
        %v5785 = vpop.f32.mrf.mxu0
        %v5786 = vpop.f32.mrf.mxu0
        %v5787 = vadd.f32 0.0, %v5786
        %v5788 = vpop.f32.mrf.mxu0
        %5789 = vmatprep.mubr.bf16.mxu0 0
        %5790 = vmatmul.mubr.bf16.gmra.mxu0 %v2010
        %v5791 = vpop.f32.mrf.mxu0
        %v5792 = vadd.f32 0.0, %v5791
        %v5793 = vpop.f32.mrf.mxu0
        %v5794 = vpop.f32.mrf.mxu0
        %v5795 = vadd.f32 0.0, %v5794
        %v5796 = vpop.f32.mrf.mxu0
        %5797 = vmatprep.mubr.bf16.mxu0 0
        %5798 = vmatmul.mubr.bf16.gmra.mxu0 %v2011
        %v5799 = vpop.f32.mrf.mxu0
        %v5800 = vadd.f32 0.0, %v5799
        %v5801 = vpop.f32.mrf.mxu0
        %v5802 = vpop.f32.mrf.mxu0
        %v5803 = vadd.f32 0.0, %v5802
        %v5804 = vpop.f32.mrf.mxu0
        %5805 = vmatprep.mubr.bf16.mxu0 0
        %5806 = vmatmul.mubr.bf16.gmra.mxu0 %v2012
        %v5807 = vpop.f32.mrf.mxu0
        %v5808 = vadd.f32 0.0, %v5807
        %v5809 = vpop.f32.mrf.mxu0
        %v5810 = vpop.f32.mrf.mxu0
        %v5811 = vadd.f32 0.0, %v5810
        %v5812 = vpop.f32.mrf.mxu0
        %5813 = vmatprep.mubr.bf16.mxu0 0
        %5814 = vmatmul.mubr.bf16.gmra.mxu0 %v2013
        %v5815 = vpop.f32.mrf.mxu0
        %v5816 = vadd.f32 0.0, %v5815
        %v5817 = vpop.f32.mrf.mxu0
        %v5818 = vpop.f32.mrf.mxu0
        %v5819 = vadd.f32 0.0, %v5818
        %v5820 = vpop.f32.mrf.mxu0
        %5821 = vmatprep.mubr.bf16.mxu0 0
        %5822 = vmatmul.mubr.bf16.gmra.mxu0 %v2014
        %v5823 = vpop.f32.mrf.mxu0
        %v5824 = vadd.f32 0.0, %v5823
        %v5825 = vpop.f32.mrf.mxu0
        %v5826 = vpop.f32.mrf.mxu0
        %v5827 = vadd.f32 0.0, %v5826
        %v5828 = vpop.f32.mrf.mxu0
        %5829 = vmatprep.mubr.bf16.mxu0 0
        %5830 = vmatmul.mubr.bf16.gmra.mxu0 %v2015
        %v5831 = vpop.f32.mrf.mxu0
        %v5832 = vadd.f32 0.0, %v5831
        %v5833 = vpop.f32.mrf.mxu0
        %v5834 = vpop.f32.mrf.mxu0
        %v5835 = vadd.f32 0.0, %v5834
        %v5836 = vpop.f32.mrf.mxu0
        %5837 = vmatprep.mubr.bf16.mxu0 0
        %5838 = vmatmul.mubr.bf16.gmra.mxu0 %v2016
        %v5839 = vpop.f32.mrf.mxu0
        %v5840 = vadd.f32 0.0, %v5839
        %v5841 = vpop.f32.mrf.mxu0
        %v5842 = vpop.f32.mrf.mxu0
        %v5843 = vadd.f32 0.0, %v5842
        %v5844 = vpop.f32.mrf.mxu0
        %5845 = vmatprep.mubr.bf16.mxu0 0
        %5846 = vmatmul.mubr.bf16.gmra.mxu0 %v2017
        %v5847 = vpop.f32.mrf.mxu0
        %v5848 = vadd.f32 0.0, %v5847
        %v5849 = vpop.f32.mrf.mxu0
        %v5850 = vpop.f32.mrf.mxu0
        %v5851 = vadd.f32 0.0, %v5850
        %v5852 = vpop.f32.mrf.mxu0
        %5853 = vmatprep.mubr.bf16.mxu0 0
        %5854 = vmatmul.mubr.bf16.gmra.mxu0 %v2018
        %v5855 = vpop.f32.mrf.mxu0
        %v5856 = vadd.f32 0.0, %v5855
        %v5857 = vpop.f32.mrf.mxu0
        %v5858 = vpop.f32.mrf.mxu0
        %v5859 = vadd.f32 0.0, %v5858
        %v5860 = vpop.f32.mrf.mxu0
        %5861 = vmatprep.mubr.bf16.mxu0 0
        %5862 = vmatmul.mubr.bf16.gmra.mxu0 %v2019
        %v5863 = vpop.f32.mrf.mxu0
        %v5864 = vadd.f32 0.0, %v5863
        %v5865 = vpop.f32.mrf.mxu0
        %v5866 = vpop.f32.mrf.mxu0
        %v5867 = vadd.f32 0.0, %v5866
        %v5868 = vpop.f32.mrf.mxu0
        %5869 = vmatprep.mubr.bf16.mxu0 0
        %5870 = vmatmul.mubr.bf16.gmra.mxu0 %v2020
        %v5871 = vpop.f32.mrf.mxu0
        %v5872 = vadd.f32 0.0, %v5871
        %v5873 = vpop.f32.mrf.mxu0
        %v5874 = vpop.f32.mrf.mxu0
        %v5875 = vadd.f32 0.0, %v5874
        %v5876 = vpop.f32.mrf.mxu0
        %5877 = vmatprep.mubr.bf16.mxu0 0
        %5878 = vmatmul.mubr.bf16.gmra.mxu0 %v2021
        %v5879 = vpop.f32.mrf.mxu0
        %v5880 = vadd.f32 0.0, %v5879
        %v5881 = vpop.f32.mrf.mxu0
        %v5882 = vpop.f32.mrf.mxu0
        %v5883 = vadd.f32 0.0, %v5882
        %v5884 = vpop.f32.mrf.mxu0
        %5885 = vmatprep.mubr.bf16.mxu0 0
        %5886 = vmatmul.mubr.bf16.gmra.mxu0 %v2022
        %v5887 = vpop.f32.mrf.mxu0
        %v5888 = vadd.f32 0.0, %v5887
        %v5889 = vpop.f32.mrf.mxu0
        %v5890 = vpop.f32.mrf.mxu0
        %v5891 = vadd.f32 0.0, %v5890
        %v5892 = vpop.f32.mrf.mxu0
        %5893 = vmatprep.mubr.bf16.mxu0 0
        %5894 = vmatmul.mubr.bf16.gmra.mxu0 %v2023
        %v5895 = vpop.f32.mrf.mxu0
        %v5896 = vadd.f32 0.0, %v5895
        %v5897 = vpop.f32.mrf.mxu0
        %v5898 = vpop.f32.mrf.mxu0
        %v5899 = vadd.f32 0.0, %v5898
        %v5900 = vpop.f32.mrf.mxu0
        %5901 = vmatprep.mubr.bf16.mxu0 0
        %5902 = vmatmul.mubr.bf16.gmra.mxu0 %v2024
        %v5903 = vpop.f32.mrf.mxu0
        %v5904 = vadd.f32 0.0, %v5903
        %v5905 = vpop.f32.mrf.mxu0
        %v5906 = vpop.f32.mrf.mxu0
        %v5907 = vadd.f32 0.0, %v5906
        %v5908 = vpop.f32.mrf.mxu0
        %5909 = vmatprep.mubr.bf16.mxu0 0
        %5910 = vmatmul.mubr.bf16.gmra.mxu0 %v2025
        %v5911 = vpop.f32.mrf.mxu0
        %v5912 = vadd.f32 0.0, %v5911
        %v5913 = vpop.f32.mrf.mxu0
        %v5914 = vpop.f32.mrf.mxu0
        %v5915 = vadd.f32 0.0, %v5914
        %v5916 = vpop.f32.mrf.mxu0
        %5917 = vmatprep.mubr.bf16.mxu0 0
        %5918 = vmatmul.mubr.bf16.gmra.mxu0 %v2026
        %v5919 = vpop.f32.mrf.mxu0
        %v5920 = vadd.f32 0.0, %v5919
        %v5921 = vpop.f32.mrf.mxu0
        %v5922 = vpop.f32.mrf.mxu0
        %v5923 = vadd.f32 0.0, %v5922
        %v5924 = vpop.f32.mrf.mxu0
        %5925 = vmatprep.mubr.bf16.mxu0 0
        %5926 = vmatmul.mubr.bf16.gmra.mxu0 %v2027
        %v5927 = vpop.f32.mrf.mxu0
        %v5928 = vadd.f32 0.0, %v5927
        %v5929 = vpop.f32.mrf.mxu0
        %v5930 = vpop.f32.mrf.mxu0
        %v5931 = vadd.f32 0.0, %v5930
        %v5932 = vpop.f32.mrf.mxu0
        %5933 = vmatprep.mubr.bf16.mxu0 0
        %5934 = vmatmul.mubr.bf16.gmra.mxu0 %v2028
        %v5935 = vpop.f32.mrf.mxu0
        %v5936 = vadd.f32 0.0, %v5935
        %v5937 = vpop.f32.mrf.mxu0
        %v5938 = vpop.f32.mrf.mxu0
        %v5939 = vadd.f32 0.0, %v5938
        %v5940 = vpop.f32.mrf.mxu0
        %5941 = vmatprep.mubr.bf16.mxu0 0
        %5942 = vmatmul.mubr.bf16.gmra.mxu0 %v2029
        %v5943 = vpop.f32.mrf.mxu0
        %v5944 = vadd.f32 0.0, %v5943
        %v5945 = vpop.f32.mrf.mxu0
        %v5946 = vpop.f32.mrf.mxu0
        %v5947 = vadd.f32 0.0, %v5946
        %v5948 = vpop.f32.mrf.mxu0
        %5949 = vmatprep.mubr.bf16.mxu0 0
        %5950 = vmatmul.mubr.bf16.gmra.mxu0 %v2030
        %v5951 = vpop.f32.mrf.mxu0
        %v5952 = vadd.f32 0.0, %v5951
        %v5953 = vpop.f32.mrf.mxu0
        %v5954 = vpop.f32.mrf.mxu0
        %v5955 = vadd.f32 0.0, %v5954
        %v5956 = vpop.f32.mrf.mxu0
        %5957 = vmatprep.mubr.bf16.mxu0 0
        %5958 = vmatmul.mubr.bf16.gmra.mxu0 %v2031
        %v5959 = vpop.f32.mrf.mxu0
        %v5960 = vadd.f32 0.0, %v5959
        %v5961 = vpop.f32.mrf.mxu0
        %v5962 = vpop.f32.mrf.mxu0
        %v5963 = vadd.f32 0.0, %v5962
        %v5964 = vpop.f32.mrf.mxu0
        %5965 = vmatprep.mubr.bf16.mxu0 0
        %5966 = vmatmul.mubr.bf16.gmra.mxu0 %v2032
        %v5967 = vpop.f32.mrf.mxu0
        %v5968 = vadd.f32 0.0, %v5967
        %v5969 = vpop.f32.mrf.mxu0
        %v5970 = vpop.f32.mrf.mxu0
        %v5971 = vadd.f32 0.0, %v5970
        %v5972 = vpop.f32.mrf.mxu0
        %5973 = vmatprep.mubr.bf16.mxu0 0
        %5974 = vmatmul.mubr.bf16.gmra.mxu0 %v2033
        %v5975 = vpop.f32.mrf.mxu0
        %v5976 = vadd.f32 0.0, %v5975
        %v5977 = vpop.f32.mrf.mxu0
        %v5978 = vpop.f32.mrf.mxu0
        %v5979 = vadd.f32 0.0, %v5978
        %v5980 = vpop.f32.mrf.mxu0
        %5981 = vmatprep.mubr.bf16.mxu0 0
        %5982 = vmatmul.mubr.bf16.gmra.mxu0 %v2034
        %v5983 = vpop.f32.mrf.mxu0
        %v5984 = vadd.f32 0.0, %v5983
        %v5985 = vpop.f32.mrf.mxu0
        %v5986 = vpop.f32.mrf.mxu0
        %v5987 = vadd.f32 0.0, %v5986
        %v5988 = vpop.f32.mrf.mxu0
        %5989 = vmatprep.mubr.bf16.mxu0 0
        %5990 = vmatmul.mubr.bf16.gmra.mxu0 %v2035
        %v5991 = vpop.f32.mrf.mxu0
        %v5992 = vadd.f32 0.0, %v5991
        %v5993 = vpop.f32.mrf.mxu0
        %v5994 = vpop.f32.mrf.mxu0
        %v5995 = vadd.f32 0.0, %v5994
        %v5996 = vpop.f32.mrf.mxu0
        %5997 = vmatprep.mubr.bf16.mxu0 0
        %5998 = vmatmul.mubr.bf16.gmra.mxu0 %v2036
        %v5999 = vpop.f32.mrf.mxu0
        %v6000 = vadd.f32 0.0, %v5999
        %v6001 = vpop.f32.mrf.mxu0
        %v6002 = vpop.f32.mrf.mxu0
        %v6003 = vadd.f32 0.0, %v6002
        %v6004 = vpop.f32.mrf.mxu0
        %6005 = vmatprep.mubr.bf16.mxu0 0
        %6006 = vmatmul.mubr.bf16.gmra.mxu0 %v2037
        %v6007 = vpop.f32.mrf.mxu0
        %v6008 = vadd.f32 0.0, %v6007
        %v6009 = vpop.f32.mrf.mxu0
        %v6010 = vpop.f32.mrf.mxu0
        %v6011 = vadd.f32 0.0, %v6010
        %v6012 = vpop.f32.mrf.mxu0
        %6013 = vmatprep.mubr.bf16.mxu0 0
        %6014 = vmatmul.mubr.bf16.gmra.mxu0 %v2038
        %v6015 = vpop.f32.mrf.mxu0
        %v6016 = vadd.f32 0.0, %v6015
        %v6017 = vpop.f32.mrf.mxu0
        %v6018 = vpop.f32.mrf.mxu0
        %v6019 = vadd.f32 0.0, %v6018
        %v6020 = vpop.f32.mrf.mxu0
        %6021 = vmatprep.mubr.bf16.mxu0 0
        %6022 = vmatmul.mubr.bf16.gmra.mxu0 %v2039
        %v6023 = vpop.f32.mrf.mxu0
        %v6024 = vadd.f32 0.0, %v6023
        %v6025 = vpop.f32.mrf.mxu0
        %v6026 = vpop.f32.mrf.mxu0
        %v6027 = vadd.f32 0.0, %v6026
        %v6028 = vpop.f32.mrf.mxu0
        %6029 = vmatprep.mubr.bf16.mxu0 0
        %6030 = vmatmul.mubr.bf16.gmra.mxu0 %v2040
        %v6031 = vpop.f32.mrf.mxu0
        %v6032 = vadd.f32 0.0, %v6031
        %v6033 = vpop.f32.mrf.mxu0
        %v6034 = vpop.f32.mrf.mxu0
        %v6035 = vadd.f32 0.0, %v6034
        %v6036 = vpop.f32.mrf.mxu0
        %6037 = vmatprep.mubr.bf16.mxu0 0
        %6038 = vmatmul.mubr.bf16.gmra.mxu0 %v2041
        %v6039 = vpop.f32.mrf.mxu0
        %v6040 = vadd.f32 0.0, %v6039
        %v6041 = vpop.f32.mrf.mxu0
        %v6042 = vpop.f32.mrf.mxu0
        %v6043 = vadd.f32 0.0, %v6042
        %v6044 = vpop.f32.mrf.mxu0
        %6045 = vmatprep.mubr.bf16.mxu0 0
        %6046 = vmatmul.mubr.bf16.gmra.mxu0 %v2042
        %v6047 = vpop.f32.mrf.mxu0
        %v6048 = vadd.f32 0.0, %v6047
        %v6049 = vpop.f32.mrf.mxu0
        %v6050 = vpop.f32.mrf.mxu0
        %v6051 = vadd.f32 0.0, %v6050
        %v6052 = vpop.f32.mrf.mxu0
        %6053 = vmatprep.mubr.bf16.mxu0 0
        %6054 = vmatmul.mubr.bf16.gmra.mxu0 %v2043
        %v6055 = vpop.f32.mrf.mxu0
        %v6056 = vadd.f32 0.0, %v6055
        %v6057 = vpop.f32.mrf.mxu0
        %v6058 = vpop.f32.mrf.mxu0
        %v6059 = vadd.f32 0.0, %v6058
        %v6060 = vpop.f32.mrf.mxu0
        %6061 = vmatprep.mubr.bf16.mxu0 0
        %6062 = vmatmul.mubr.bf16.gmra.mxu0 %v2044
        %v6063 = vpop.f32.mrf.mxu0
        %v6064 = vadd.f32 0.0, %v6063
        %v6065 = vpop.f32.mrf.mxu0
        %v6066 = vpop.f32.mrf.mxu0
        %v6067 = vadd.f32 0.0, %v6066
        %v6068 = vpop.f32.mrf.mxu0
        %6069 = vmatprep.mubr.bf16.mxu0 0
        %6070 = vmatmul.mubr.bf16.gmra.mxu0 %v2045
        %v6071 = vpop.f32.mrf.mxu0
        %v6072 = vadd.f32 0.0, %v6071
        %v6073 = vpop.f32.mrf.mxu0
        %v6074 = vpop.f32.mrf.mxu0
        %v6075 = vadd.f32 0.0, %v6074
        %v6076 = vpop.f32.mrf.mxu0
        %6077 = vmatprep.mubr.bf16.mxu0 0
        %6078 = vmatmul.mubr.bf16.gmra.mxu0 %v2046
        %v6079 = vpop.f32.mrf.mxu0
        %v6080 = vadd.f32 0.0, %v6079
        %v6081 = vpop.f32.mrf.mxu0
        %v6082 = vpop.f32.mrf.mxu0
        %v6083 = vadd.f32 0.0, %v6082
        %v6084 = vpop.f32.mrf.mxu0
        %6085 = vmatprep.mubr.bf16.mxu0 0
        %6086 = vmatmul.mubr.bf16.gmra.mxu0 %v2047
        %v6087 = vpop.f32.mrf.mxu0
        %v6088 = vadd.f32 0.0, %v6087
        %v6089 = vpop.f32.mrf.mxu0
        %v6090 = vpop.f32.mrf.mxu0
        %v6091 = vadd.f32 0.0, %v6090
        %v6092 = vpop.f32.mrf.mxu0
        %6093 = vmatprep.mubr.bf16.mxu0 0
        %6094 = vmatmul.mubr.bf16.gmra.mxu0 %v2048
        %v6095 = vpop.f32.mrf.mxu0
        %v6096 = vadd.f32 0.0, %v6095
        %v6097 = vpop.f32.mrf.mxu0
        %v6098 = vpop.f32.mrf.mxu0
        %v6099 = vadd.f32 0.0, %v6098
        %v6100 = vpop.f32.mrf.mxu0
        %6101 = vmatprep.mubr.bf16.mxu0 0
        %6102 = vmatmul.mubr.bf16.gmra.mxu0 %v2049
        %v6103 = vpop.f32.mrf.mxu0
        %v6104 = vadd.f32 0.0, %v6103
        %v6105 = vpop.f32.mrf.mxu0
        %v6106 = vpop.f32.mrf.mxu0
        %v6107 = vadd.f32 0.0, %v6106
        %v6108 = vpop.f32.mrf.mxu0
        %6109 = vmatprep.mubr.bf16.mxu0 0
        %6110 = vmatmul.mubr.bf16.gmra.mxu0 %v2050
        %v6111 = vpop.f32.mrf.mxu0
        %v6112 = vadd.f32 0.0, %v6111
        %v6113 = vpop.f32.mrf.mxu0
        %v6114 = vpop.f32.mrf.mxu0
        %v6115 = vadd.f32 0.0, %v6114
        %v6116 = vpop.f32.mrf.mxu0
        %6117 = vmatprep.mubr.bf16.mxu0 0
        %6118 = vmatmul.mubr.bf16.gmra.mxu0 %v2051
        %v6119 = vpop.f32.mrf.mxu0
        %v6120 = vadd.f32 0.0, %v6119
        %v6121 = vpop.f32.mrf.mxu0
        %v6122 = vpop.f32.mrf.mxu0
        %v6123 = vadd.f32 0.0, %v6122
        %v6124 = vpop.f32.mrf.mxu0
        %6125 = vdwg.mxu0
        %v6126 = vrot.slane %v5616, 4
        %v6127 = vrot.slane %v5619, 4
        %v6128 = vrot.slane %v5624, 4
        %v6129 = vrot.slane %v5627, 4
        %v6130 = vrot.slane %v5632, 4
        %v6131 = vrot.slane %v5635, 4
        %v6132 = vrot.slane %v5640, 4
        %v6133 = vrot.slane %v5643, 4
        %v6134 = vrot.slane %v5648, 4
        %v6135 = vrot.slane %v5651, 4
        %v6136 = vrot.slane %v5656, 4
        %v6137 = vrot.slane %v5659, 4
        %v6138 = vrot.slane %v5664, 4
        %v6139 = vrot.slane %v5667, 4
        %v6140 = vrot.slane %v5672, 4
        %v6141 = vrot.slane %v5675, 4
        %v6142 = vrot.slane %v5680, 4
        %v6143 = vrot.slane %v5683, 4
        %v6144 = vrot.slane %v5688, 4
        %v6145 = vrot.slane %v5691, 4
        %v6146 = vrot.slane %v5696, 4
        %v6147 = vrot.slane %v5699, 4
        %v6148 = vrot.slane %v5704, 4
        %v6149 = vrot.slane %v5707, 4
        %v6150 = vrot.slane %v5712, 4
        %v6151 = vrot.slane %v5715, 4
        %v6152 = vrot.slane %v5720, 4
        %v6153 = vrot.slane %v5723, 4
        %v6154 = vrot.slane %v5728, 4
        %v6155 = vrot.slane %v5731, 4
        %v6156 = vrot.slane %v5736, 4
        %v6157 = vrot.slane %v5739, 4
        %v6158 = vrot.slane %v5744, 4
        %v6159 = vrot.slane %v5747, 4
        %v6160 = vrot.slane %v5752, 4
        %v6161 = vrot.slane %v5755, 4
        %v6162 = vrot.slane %v5760, 4
        %v6163 = vrot.slane %v5763, 4
        %v6164 = vrot.slane %v5768, 4
        %v6165 = vrot.slane %v5771, 4
        %v6166 = vrot.slane %v5776, 4
        %v6167 = vrot.slane %v5779, 4
        %v6168 = vrot.slane %v5784, 4
        %v6169 = vrot.slane %v5787, 4
        %v6170 = vrot.slane %v5792, 4
        %v6171 = vrot.slane %v5795, 4
        %v6172 = vrot.slane %v5800, 4
        %v6173 = vrot.slane %v5803, 4
        %v6174 = vrot.slane %v5808, 4
        %v6175 = vrot.slane %v5811, 4
        %v6176 = vrot.slane %v5816, 4
        %v6177 = vrot.slane %v5819, 4
        %v6178 = vrot.slane %v5824, 4
        %v6179 = vrot.slane %v5827, 4
        %v6180 = vrot.slane %v5832, 4
        %v6181 = vrot.slane %v5835, 4
        %v6182 = vrot.slane %v5840, 4
        %v6183 = vrot.slane %v5843, 4
        %v6184 = vrot.slane %v5848, 4
        %v6185 = vrot.slane %v5851, 4
        %v6186 = vrot.slane %v5856, 4
        %v6187 = vrot.slane %v5859, 4
        %v6188 = vrot.slane %v5864, 4
        %v6189 = vrot.slane %v5867, 4
        %v6190 = vrot.slane %v5872, 4
        %v6191 = vrot.slane %v5875, 4
        %v6192 = vrot.slane %v5880, 4
        %v6193 = vrot.slane %v5883, 4
        %v6194 = vrot.slane %v5888, 4
        %v6195 = vrot.slane %v5891, 4
        %v6196 = vrot.slane %v5896, 4
        %v6197 = vrot.slane %v5899, 4
        %v6198 = vrot.slane %v5904, 4
        %v6199 = vrot.slane %v5907, 4
        %v6200 = vrot.slane %v5912, 4
        %v6201 = vrot.slane %v5915, 4
        %v6202 = vrot.slane %v5920, 4
        %v6203 = vrot.slane %v5923, 4
        %v6204 = vrot.slane %v5928, 4
        %v6205 = vrot.slane %v5931, 4
        %v6206 = vrot.slane %v5936, 4
        %v6207 = vrot.slane %v5939, 4
        %v6208 = vrot.slane %v5944, 4
        %v6209 = vrot.slane %v5947, 4
        %v6210 = vrot.slane %v5952, 4
        %v6211 = vrot.slane %v5955, 4
        %v6212 = vrot.slane %v5960, 4
        %v6213 = vrot.slane %v5963, 4
        %v6214 = vrot.slane %v5968, 4
        %v6215 = vrot.slane %v5971, 4
        %v6216 = vrot.slane %v5976, 4
        %v6217 = vrot.slane %v5979, 4
        %v6218 = vrot.slane %v5984, 4
        %v6219 = vrot.slane %v5987, 4
        %v6220 = vrot.slane %v5992, 4
        %v6221 = vrot.slane %v5995, 4
        %v6222 = vrot.slane %v6000, 4
        %v6223 = vrot.slane %v6003, 4
        %v6224 = vrot.slane %v6008, 4
        %v6225 = vrot.slane %v6011, 4
        %v6226 = vrot.slane %v6016, 4
        %v6227 = vrot.slane %v6019, 4
        %v6228 = vrot.slane %v6024, 4
        %v6229 = vrot.slane %v6027, 4
        %v6230 = vrot.slane %v6032, 4
        %v6231 = vrot.slane %v6035, 4
        %v6232 = vrot.slane %v6040, 4
        %v6233 = vrot.slane %v6043, 4
        %v6234 = vrot.slane %v6048, 4
        %v6235 = vrot.slane %v6051, 4
        %v6236 = vrot.slane %v6056, 4
        %v6237 = vrot.slane %v6059, 4
        %v6238 = vrot.slane %v6064, 4
        %v6239 = vrot.slane %v6067, 4
        %v6240 = vrot.slane %v6072, 4
        %v6241 = vrot.slane %v6075, 4
        %v6242 = vrot.slane %v6080, 4
        %v6243 = vrot.slane %v6083, 4
        %v6244 = vrot.slane %v6088, 4
        %v6245 = vrot.slane %v6091, 4
        %v6246 = vrot.slane %v6096, 4
        %v6247 = vrot.slane %v6099, 4
        %v6248 = vrot.slane %v6104, 4
        %v6249 = vrot.slane %v6107, 4
        %v6250 = vrot.slane %v6112, 4
        %v6251 = vrot.slane %v6115, 4
        %v6252 = vrot.slane %v6120, 4
        %v6253 = vrot.slane %v6123, 4
        %vm6254 = vcmp.lt.s32.totalorder %v2806, 4
        %v6255 = vsel %vm6254, %v6252, %v6253
        %v6256 = vsel %vm6254, %v6251, %v6252
        %v6257 = vsel %vm6254, %v6250, %v6251
        %v6258 = vsel %vm6254, %v6249, %v6250
        %v6259 = vsel %vm6254, %v6248, %v6249
        %v6260 = vsel %vm6254, %v6247, %v6248
        %v6261 = vsel %vm6254, %v6246, %v6247
        %v6262 = vsel %vm6254, %v6245, %v6246
        %v6263 = vsel %vm6254, %v6244, %v6245
        %v6264 = vsel %vm6254, %v6243, %v6244
        %v6265 = vsel %vm6254, %v6242, %v6243
        %v6266 = vsel %vm6254, %v6241, %v6242
        %v6267 = vsel %vm6254, %v6240, %v6241
        %v6268 = vsel %vm6254, %v6239, %v6240
        %v6269 = vsel %vm6254, %v6238, %v6239
        %v6270 = vsel %vm6254, %v6237, %v6238
        %v6271 = vsel %vm6254, %v6236, %v6237
        %v6272 = vsel %vm6254, %v6235, %v6236
        %v6273 = vsel %vm6254, %v6234, %v6235
        %v6274 = vsel %vm6254, %v6233, %v6234
        %v6275 = vsel %vm6254, %v6232, %v6233
        %v6276 = vsel %vm6254, %v6231, %v6232
        %v6277 = vsel %vm6254, %v6230, %v6231
        %v6278 = vsel %vm6254, %v6229, %v6230
        %v6279 = vsel %vm6254, %v6228, %v6229
        %v6280 = vsel %vm6254, %v6227, %v6228
        %v6281 = vsel %vm6254, %v6226, %v6227
        %v6282 = vsel %vm6254, %v6225, %v6226
        %v6283 = vsel %vm6254, %v6224, %v6225
        %v6284 = vsel %vm6254, %v6223, %v6224
        %v6285 = vsel %vm6254, %v6222, %v6223
        %v6286 = vsel %vm6254, %v6221, %v6222
        %v6287 = vsel %vm6254, %v6220, %v6221
        %v6288 = vsel %vm6254, %v6219, %v6220
        %v6289 = vsel %vm6254, %v6218, %v6219
        %v6290 = vsel %vm6254, %v6217, %v6218
        %v6291 = vsel %vm6254, %v6216, %v6217
        %v6292 = vsel %vm6254, %v6215, %v6216
        %v6293 = vsel %vm6254, %v6214, %v6215
        %v6294 = vsel %vm6254, %v6213, %v6214
        %v6295 = vsel %vm6254, %v6212, %v6213
        %v6296 = vsel %vm6254, %v6211, %v6212
        %v6297 = vsel %vm6254, %v6210, %v6211
        %v6298 = vsel %vm6254, %v6209, %v6210
        %v6299 = vsel %vm6254, %v6208, %v6209
        %v6300 = vsel %vm6254, %v6207, %v6208
        %v6301 = vsel %vm6254, %v6206, %v6207
        %v6302 = vsel %vm6254, %v6205, %v6206
        %v6303 = vsel %vm6254, %v6204, %v6205
        %v6304 = vsel %vm6254, %v6203, %v6204
        %v6305 = vsel %vm6254, %v6202, %v6203
        %v6306 = vsel %vm6254, %v6201, %v6202
        %v6307 = vsel %vm6254, %v6200, %v6201
        %v6308 = vsel %vm6254, %v6199, %v6200
        %v6309 = vsel %vm6254, %v6198, %v6199
        %v6310 = vsel %vm6254, %v6197, %v6198
        %v6311 = vsel %vm6254, %v6196, %v6197
        %v6312 = vsel %vm6254, %v6195, %v6196
        %v6313 = vsel %vm6254, %v6194, %v6195
        %v6314 = vsel %vm6254, %v6193, %v6194
        %v6315 = vsel %vm6254, %v6192, %v6193
        %v6316 = vsel %vm6254, %v6191, %v6192
        %v6317 = vsel %vm6254, %v6190, %v6191
        %v6318 = vsel %vm6254, %v6189, %v6190
        %v6319 = vsel %vm6254, %v6188, %v6189
        %v6320 = vsel %vm6254, %v6187, %v6188
        %v6321 = vsel %vm6254, %v6186, %v6187
        %v6322 = vsel %vm6254, %v6185, %v6186
        %v6323 = vsel %vm6254, %v6184, %v6185
        %v6324 = vsel %vm6254, %v6183, %v6184
        %v6325 = vsel %vm6254, %v6182, %v6183
        %v6326 = vsel %vm6254, %v6181, %v6182
        %v6327 = vsel %vm6254, %v6180, %v6181
        %v6328 = vsel %vm6254, %v6179, %v6180
        %v6329 = vsel %vm6254, %v6178, %v6179
        %v6330 = vsel %vm6254, %v6177, %v6178
        %v6331 = vsel %vm6254, %v6176, %v6177
        %v6332 = vsel %vm6254, %v6175, %v6176
        %v6333 = vsel %vm6254, %v6174, %v6175
        %v6334 = vsel %vm6254, %v6173, %v6174
        %v6335 = vsel %vm6254, %v6172, %v6173
        %v6336 = vsel %vm6254, %v6171, %v6172
        %v6337 = vsel %vm6254, %v6170, %v6171
        %v6338 = vsel %vm6254, %v6169, %v6170
        %v6339 = vsel %vm6254, %v6168, %v6169
        %v6340 = vsel %vm6254, %v6167, %v6168
        %v6341 = vsel %vm6254, %v6166, %v6167
        %v6342 = vsel %vm6254, %v6165, %v6166
        %v6343 = vsel %vm6254, %v6164, %v6165
        %v6344 = vsel %vm6254, %v6163, %v6164
        %v6345 = vsel %vm6254, %v6162, %v6163
        %v6346 = vsel %vm6254, %v6161, %v6162
        %v6347 = vsel %vm6254, %v6160, %v6161
        %v6348 = vsel %vm6254, %v6159, %v6160
        %v6349 = vsel %vm6254, %v6158, %v6159
        %v6350 = vsel %vm6254, %v6157, %v6158
        %v6351 = vsel %vm6254, %v6156, %v6157
        %v6352 = vsel %vm6254, %v6155, %v6156
        %v6353 = vsel %vm6254, %v6154, %v6155
        %v6354 = vsel %vm6254, %v6153, %v6154
        %v6355 = vsel %vm6254, %v6152, %v6153
        %v6356 = vsel %vm6254, %v6151, %v6152
        %v6357 = vsel %vm6254, %v6150, %v6151
        %v6358 = vsel %vm6254, %v6149, %v6150
        %v6359 = vsel %vm6254, %v6148, %v6149
        %v6360 = vsel %vm6254, %v6147, %v6148
        %v6361 = vsel %vm6254, %v6146, %v6147
        %v6362 = vsel %vm6254, %v6145, %v6146
        %v6363 = vsel %vm6254, %v6144, %v6145
        %v6364 = vsel %vm6254, %v6143, %v6144
        %v6365 = vsel %vm6254, %v6142, %v6143
        %v6366 = vsel %vm6254, %v6141, %v6142
        %v6367 = vsel %vm6254, %v6140, %v6141
        %v6368 = vsel %vm6254, %v6139, %v6140
        %v6369 = vsel %vm6254, %v6138, %v6139
        %v6370 = vsel %vm6254, %v6137, %v6138
        %v6371 = vsel %vm6254, %v6136, %v6137
        %v6372 = vsel %vm6254, %v6135, %v6136
        %v6373 = vsel %vm6254, %v6134, %v6135
        %v6374 = vsel %vm6254, %v6133, %v6134
        %v6375 = vsel %vm6254, %v6132, %v6133
        %v6376 = vsel %vm6254, %v6131, %v6132
        %v6377 = vsel %vm6254, %v6130, %v6131
        %v6378 = vsel %vm6254, %v6129, %v6130
        %v6379 = vsel %vm6254, %v6128, %v6129
        %v6380 = vsel %vm6254, %v6127, %v6128
        %v6381 = vsel %vm6254, %v6126, %v6127
        %v6382 = vsel %vm6254, %v6253, %v6126
        %v6383 = vadd.f32 %v5389, %v6381
        %v6384 = vadd.f32 %v5390, %v6380
        %v6385 = vadd.f32 %v5391, %v6379
        %v6386 = vadd.f32 %v5392, %v6378
        %v6387 = vadd.f32 %v5393, %v6377
        %v6388 = vadd.f32 %v5394, %v6376
        %v6389 = vadd.f32 %v5395, %v6375
        %v6390 = vadd.f32 %v5396, %v6374
        %v6391 = vadd.f32 %v5397, %v6373
        %v6392 = vadd.f32 %v5398, %v6372
        %v6393 = vadd.f32 %v5399, %v6371
        %v6394 = vadd.f32 %v5400, %v6370
        %v6395 = vadd.f32 %v5401, %v6369
        %v6396 = vadd.f32 %v5402, %v6368
        %v6397 = vadd.f32 %v5403, %v6367
        %v6398 = vadd.f32 %v5404, %v6366
        %v6399 = vadd.f32 %v5405, %v6365
        %v6400 = vadd.f32 %v5406, %v6364
        %v6401 = vadd.f32 %v5407, %v6363
        %v6402 = vadd.f32 %v5408, %v6362
        %v6403 = vadd.f32 %v5409, %v6361
        %v6404 = vadd.f32 %v5410, %v6360
        %v6405 = vadd.f32 %v5411, %v6359
        %v6406 = vadd.f32 %v5412, %v6358
        %v6407 = vadd.f32 %v5413, %v6357
        %v6408 = vadd.f32 %v5414, %v6356
        %v6409 = vadd.f32 %v5415, %v6355
        %v6410 = vadd.f32 %v5416, %v6354
        %v6411 = vadd.f32 %v5417, %v6353
        %v6412 = vadd.f32 %v5418, %v6352
        %v6413 = vadd.f32 %v5419, %v6351
        %v6414 = vadd.f32 %v5420, %v6350
        %v6415 = vadd.f32 %v5421, %v6349
        %v6416 = vadd.f32 %v5422, %v6348
        %v6417 = vadd.f32 %v5423, %v6347
        %v6418 = vadd.f32 %v5424, %v6346
        %v6419 = vadd.f32 %v5425, %v6345
        %v6420 = vadd.f32 %v5426, %v6344
        %v6421 = vadd.f32 %v5427, %v6343
        %v6422 = vadd.f32 %v5428, %v6342
        %v6423 = vadd.f32 %v5429, %v6341
        %v6424 = vadd.f32 %v5430, %v6340
        %v6425 = vadd.f32 %v5431, %v6339
        %v6426 = vadd.f32 %v5432, %v6338
        %v6427 = vadd.f32 %v5433, %v6337
        %v6428 = vadd.f32 %v5434, %v6336
        %v6429 = vadd.f32 %v5435, %v6335
        %v6430 = vadd.f32 %v5436, %v6334
        %v6431 = vadd.f32 %v5437, %v6333
        %v6432 = vadd.f32 %v5438, %v6332
        %v6433 = vadd.f32 %v5439, %v6331
        %v6434 = vadd.f32 %v5440, %v6330
        %v6435 = vadd.f32 %v5441, %v6329
        %v6436 = vadd.f32 %v5442, %v6328
        %v6437 = vadd.f32 %v5443, %v6327
        %v6438 = vadd.f32 %v5444, %v6326
        %v6439 = vadd.f32 %v5445, %v6325
        %v6440 = vadd.f32 %v5446, %v6324
        %v6441 = vadd.f32 %v5447, %v6323
        %v6442 = vadd.f32 %v5448, %v6322
        %v6443 = vadd.f32 %v5449, %v6321
        %v6444 = vadd.f32 %v5450, %v6320
        %v6445 = vadd.f32 %v5451, %v6319
        %v6446 = vadd.f32 %v5452, %v6318
        %v6447 = vadd.f32 %v5453, %v6317
        %v6448 = vadd.f32 %v5454, %v6316
        %v6449 = vadd.f32 %v5455, %v6315
        %v6450 = vadd.f32 %v5456, %v6314
        %v6451 = vadd.f32 %v5457, %v6313
        %v6452 = vadd.f32 %v5458, %v6312
        %v6453 = vadd.f32 %v5459, %v6311
        %v6454 = vadd.f32 %v5460, %v6310
        %v6455 = vadd.f32 %v5461, %v6309
        %v6456 = vadd.f32 %v5462, %v6308
        %v6457 = vadd.f32 %v5463, %v6307
        %v6458 = vadd.f32 %v5464, %v6306
        %v6459 = vadd.f32 %v5465, %v6305
        %v6460 = vadd.f32 %v5466, %v6304
        %v6461 = vadd.f32 %v5467, %v6303
        %v6462 = vadd.f32 %v5468, %v6302
        %v6463 = vadd.f32 %v5469, %v6301
        %v6464 = vadd.f32 %v5470, %v6300
        %v6465 = vadd.f32 %v5471, %v6299
        %v6466 = vadd.f32 %v5472, %v6298
        %v6467 = vadd.f32 %v5473, %v6297
        %v6468 = vadd.f32 %v5474, %v6296
        %v6469 = vadd.f32 %v5475, %v6295
        %v6470 = vadd.f32 %v5476, %v6294
        %v6471 = vadd.f32 %v5477, %v6293
        %v6472 = vadd.f32 %v5478, %v6292
        %v6473 = vadd.f32 %v5479, %v6291
        %v6474 = vadd.f32 %v5480, %v6290
        %v6475 = vadd.f32 %v5481, %v6289
        %v6476 = vadd.f32 %v5482, %v6288
        %v6477 = vadd.f32 %v5483, %v6287
        %v6478 = vadd.f32 %v5484, %v6286
        %v6479 = vadd.f32 %v5485, %v6285
        %v6480 = vadd.f32 %v5486, %v6284
        %v6481 = vadd.f32 %v5487, %v6283
        %v6482 = vadd.f32 %v5488, %v6282
        %v6483 = vadd.f32 %v5489, %v6281
        %v6484 = vadd.f32 %v5490, %v6280
        %v6485 = vadd.f32 %v5491, %v6279
        %v6486 = vadd.f32 %v5492, %v6278
        %v6487 = vadd.f32 %v5493, %v6277
        %v6488 = vadd.f32 %v5494, %v6276
        %v6489 = vadd.f32 %v5495, %v6275
        %v6490 = vadd.f32 %v5496, %v6274
        %v6491 = vadd.f32 %v5497, %v6273
        %v6492 = vadd.f32 %v5498, %v6272
        %v6493 = vadd.f32 %v5499, %v6271
        %v6494 = vadd.f32 %v5500, %v6270
        %v6495 = vadd.f32 %v5501, %v6269
        %v6496 = vadd.f32 %v5502, %v6268
        %v6497 = vadd.f32 %v5503, %v6267
        %v6498 = vadd.f32 %v5504, %v6266
        %v6499 = vadd.f32 %v5505, %v6265
        %v6500 = vadd.f32 %v5506, %v6264
        %v6501 = vadd.f32 %v5507, %v6263
        %v6502 = vadd.f32 %v5508, %v6262
        %v6503 = vadd.f32 %v5509, %v6261
        %v6504 = vadd.f32 %v5510, %v6260
        %v6505 = vadd.f32 %v5511, %v6259
        %v6506 = vadd.f32 %v5512, %v6258
        %v6507 = vadd.f32 %v5513, %v6257
        %v6508 = vadd.f32 %v5514, %v6256
        %v6509 = vadd.f32 %v5515, %v6255
        %v6510 = vadd.f32 %v5516, %v6382
        %v6511 = vld [vmem:[%s3] sm:$0xff]
        %v6512 = vld [vmem:[%s3 + $0x8] sm:$0xff]
        %v6513 = vadd.f32 %v6383, %v6511
        %v6514 = vadd.f32 %v6384, %v6512
        %v6515 = vadd.f32 %v6385, %v6511
        %v6516 = vadd.f32 %v6386, %v6512
        %v6517 = vadd.f32 %v6387, %v6511
        %v6518 = vadd.f32 %v6388, %v6512
        %v6519 = vadd.f32 %v6389, %v6511
        %v6520 = vadd.f32 %v6390, %v6512
        %v6521 = vadd.f32 %v6391, %v6511
        %v6522 = vadd.f32 %v6392, %v6512
        %v6523 = vadd.f32 %v6393, %v6511
        %v6524 = vadd.f32 %v6394, %v6512
        %v6525 = vadd.f32 %v6395, %v6511
        %v6526 = vadd.f32 %v6396, %v6512
        %v6527 = vadd.f32 %v6397, %v6511
        %v6528 = vadd.f32 %v6398, %v6512
        %v6529 = vadd.f32 %v6399, %v6511
        %v6530 = vadd.f32 %v6400, %v6512
        %v6531 = vadd.f32 %v6401, %v6511
        %v6532 = vadd.f32 %v6402, %v6512
        %v6533 = vadd.f32 %v6403, %v6511
        %v6534 = vadd.f32 %v6404, %v6512
        %v6535 = vadd.f32 %v6405, %v6511
        %v6536 = vadd.f32 %v6406, %v6512
        %v6537 = vadd.f32 %v6407, %v6511
        %v6538 = vadd.f32 %v6408, %v6512
        %v6539 = vadd.f32 %v6409, %v6511
        %v6540 = vadd.f32 %v6410, %v6512
        %v6541 = vadd.f32 %v6411, %v6511
        %v6542 = vadd.f32 %v6412, %v6512
        %v6543 = vadd.f32 %v6413, %v6511
        %v6544 = vadd.f32 %v6414, %v6512
        %v6545 = vadd.f32 %v6415, %v6511
        %v6546 = vadd.f32 %v6416, %v6512
        %v6547 = vadd.f32 %v6417, %v6511
        %v6548 = vadd.f32 %v6418, %v6512
        %v6549 = vadd.f32 %v6419, %v6511
        %v6550 = vadd.f32 %v6420, %v6512
        %v6551 = vadd.f32 %v6421, %v6511
        %v6552 = vadd.f32 %v6422, %v6512
        %v6553 = vadd.f32 %v6423, %v6511
        %v6554 = vadd.f32 %v6424, %v6512
        %v6555 = vadd.f32 %v6425, %v6511
        %v6556 = vadd.f32 %v6426, %v6512
        %v6557 = vadd.f32 %v6427, %v6511
        %v6558 = vadd.f32 %v6428, %v6512
        %v6559 = vadd.f32 %v6429, %v6511
        %v6560 = vadd.f32 %v6430, %v6512
        %v6561 = vadd.f32 %v6431, %v6511
        %v6562 = vadd.f32 %v6432, %v6512
        %v6563 = vadd.f32 %v6433, %v6511
        %v6564 = vadd.f32 %v6434, %v6512
        %v6565 = vadd.f32 %v6435, %v6511
        %v6566 = vadd.f32 %v6436, %v6512
        %v6567 = vadd.f32 %v6437, %v6511
        %v6568 = vadd.f32 %v6438, %v6512
        %v6569 = vadd.f32 %v6439, %v6511
        %v6570 = vadd.f32 %v6440, %v6512
        %v6571 = vadd.f32 %v6441, %v6511
        %v6572 = vadd.f32 %v6442, %v6512
        %v6573 = vadd.f32 %v6443, %v6511
        %v6574 = vadd.f32 %v6444, %v6512
        %v6575 = vadd.f32 %v6445, %v6511
        %v6576 = vadd.f32 %v6446, %v6512
        %v6577 = vadd.f32 %v6447, %v6511
        %v6578 = vadd.f32 %v6448, %v6512
        %v6579 = vadd.f32 %v6449, %v6511
        %v6580 = vadd.f32 %v6450, %v6512
        %v6581 = vadd.f32 %v6451, %v6511
        %v6582 = vadd.f32 %v6452, %v6512
        %v6583 = vadd.f32 %v6453, %v6511
        %v6584 = vadd.f32 %v6454, %v6512
        %v6585 = vadd.f32 %v6455, %v6511
        %v6586 = vadd.f32 %v6456, %v6512
        %v6587 = vadd.f32 %v6457, %v6511
        %v6588 = vadd.f32 %v6458, %v6512
        %v6589 = vadd.f32 %v6459, %v6511
        %v6590 = vadd.f32 %v6460, %v6512
        %v6591 = vadd.f32 %v6461, %v6511
        %v6592 = vadd.f32 %v6462, %v6512
        %v6593 = vadd.f32 %v6463, %v6511
        %v6594 = vadd.f32 %v6464, %v6512
        %v6595 = vadd.f32 %v6465, %v6511
        %v6596 = vadd.f32 %v6466, %v6512
        %v6597 = vadd.f32 %v6467, %v6511
        %v6598 = vadd.f32 %v6468, %v6512
        %v6599 = vadd.f32 %v6469, %v6511
        %v6600 = vadd.f32 %v6470, %v6512
        %v6601 = vadd.f32 %v6471, %v6511
        %v6602 = vadd.f32 %v6472, %v6512
        %v6603 = vadd.f32 %v6473, %v6511
        %v6604 = vadd.f32 %v6474, %v6512
        %v6605 = vadd.f32 %v6475, %v6511
        %v6606 = vadd.f32 %v6476, %v6512
        %v6607 = vadd.f32 %v6477, %v6511
        %v6608 = vadd.f32 %v6478, %v6512
        %v6609 = vadd.f32 %v6479, %v6511
        %v6610 = vadd.f32 %v6480, %v6512
        %v6611 = vadd.f32 %v6481, %v6511
        %v6612 = vadd.f32 %v6482, %v6512
        %v6613 = vadd.f32 %v6483, %v6511
        %v6614 = vadd.f32 %v6484, %v6512
        %v6615 = vadd.f32 %v6485, %v6511
        %v6616 = vadd.f32 %v6486, %v6512
        %v6617 = vadd.f32 %v6487, %v6511
        %v6618 = vadd.f32 %v6488, %v6512
        %v6619 = vadd.f32 %v6489, %v6511
        %v6620 = vadd.f32 %v6490, %v6512
        %v6621 = vadd.f32 %v6491, %v6511
        %v6622 = vadd.f32 %v6492, %v6512
        %v6623 = vadd.f32 %v6493, %v6511
        %v6624 = vadd.f32 %v6494, %v6512
        %v6625 = vadd.f32 %v6495, %v6511
        %v6626 = vadd.f32 %v6496, %v6512
        %v6627 = vadd.f32 %v6497, %v6511
        %v6628 = vadd.f32 %v6498, %v6512
        %v6629 = vadd.f32 %v6499, %v6511
        %v6630 = vadd.f32 %v6500, %v6512
        %v6631 = vadd.f32 %v6501, %v6511
        %v6632 = vadd.f32 %v6502, %v6512
        %v6633 = vadd.f32 %v6503, %v6511
        %v6634 = vadd.f32 %v6504, %v6512
        %v6635 = vadd.f32 %v6505, %v6511
        %v6636 = vadd.f32 %v6506, %v6512
        %v6637 = vadd.f32 %v6507, %v6511
        %v6638 = vadd.f32 %v6508, %v6512
        %v6639 = vadd.f32 %v6509, %v6511
        %v6640 = vadd.f32 %v6510, %v6512
        %v6641 = vmax.f32 %v6513, %v6514
        %v6642 = vrot.slane %v6641, 4
        %v6643 = vmax.f32 %v6641, %v6642
        %v6644 = vrot.slane %v6643, 2
        %v6645 = vmax.f32 %v6643, %v6644
        %v6646 = vrot.slane %v6645, 1
        %v6647 = vmax.f32 %v6645, %v6646
        %v6648 = vmax.f32 %v6515, %v6516
        %v6649 = vrot.slane %v6648, 4
        %v6650 = vmax.f32 %v6648, %v6649
        %v6651 = vrot.slane %v6650, 2
        %v6652 = vmax.f32 %v6650, %v6651
        %v6653 = vrot.slane %v6652, 1
        %v6654 = vmax.f32 %v6652, %v6653
        %v6655 = vmax.f32 %v6517, %v6518
        %v6656 = vrot.slane %v6655, 4
        %v6657 = vmax.f32 %v6655, %v6656
        %v6658 = vrot.slane %v6657, 2
        %v6659 = vmax.f32 %v6657, %v6658
        %v6660 = vrot.slane %v6659, 1
        %v6661 = vmax.f32 %v6659, %v6660
        %v6662 = vmax.f32 %v6519, %v6520
        %v6663 = vrot.slane %v6662, 4
        %v6664 = vmax.f32 %v6662, %v6663
        %v6665 = vrot.slane %v6664, 2
        %v6666 = vmax.f32 %v6664, %v6665
        %v6667 = vrot.slane %v6666, 1
        %v6668 = vmax.f32 %v6666, %v6667
        %v6669 = vmax.f32 %v6521, %v6522
        %v6670 = vrot.slane %v6669, 4
        %v6671 = vmax.f32 %v6669, %v6670
        %v6672 = vrot.slane %v6671, 2
        %v6673 = vmax.f32 %v6671, %v6672
        %v6674 = vrot.slane %v6673, 1
        %v6675 = vmax.f32 %v6673, %v6674
        %v6676 = vmax.f32 %v6523, %v6524
        %v6677 = vrot.slane %v6676, 4
        %v6678 = vmax.f32 %v6676, %v6677
        %v6679 = vrot.slane %v6678, 2
        %v6680 = vmax.f32 %v6678, %v6679
        %v6681 = vrot.slane %v6680, 1
        %v6682 = vmax.f32 %v6680, %v6681
        %v6683 = vmax.f32 %v6525, %v6526
        %v6684 = vrot.slane %v6683, 4
        %v6685 = vmax.f32 %v6683, %v6684
        %v6686 = vrot.slane %v6685, 2
        %v6687 = vmax.f32 %v6685, %v6686
        %v6688 = vrot.slane %v6687, 1
        %v6689 = vmax.f32 %v6687, %v6688
        %v6690 = vmax.f32 %v6527, %v6528
        %v6691 = vrot.slane %v6690, 4
        %v6692 = vmax.f32 %v6690, %v6691
        %v6693 = vrot.slane %v6692, 2
        %v6694 = vmax.f32 %v6692, %v6693
        %v6695 = vrot.slane %v6694, 1
        %v6696 = vmax.f32 %v6694, %v6695
        %v6697 = vmax.f32 %v6529, %v6530
        %v6698 = vrot.slane %v6697, 4
        %v6699 = vmax.f32 %v6697, %v6698
        %v6700 = vrot.slane %v6699, 2
        %v6701 = vmax.f32 %v6699, %v6700
        %v6702 = vrot.slane %v6701, 1
        %v6703 = vmax.f32 %v6701, %v6702
        %v6704 = vmax.f32 %v6531, %v6532
        %v6705 = vrot.slane %v6704, 4
        %v6706 = vmax.f32 %v6704, %v6705
        %v6707 = vrot.slane %v6706, 2
        %v6708 = vmax.f32 %v6706, %v6707
        %v6709 = vrot.slane %v6708, 1
        %v6710 = vmax.f32 %v6708, %v6709
        %v6711 = vmax.f32 %v6533, %v6534
        %v6712 = vrot.slane %v6711, 4
        %v6713 = vmax.f32 %v6711, %v6712
        %v6714 = vrot.slane %v6713, 2
        %v6715 = vmax.f32 %v6713, %v6714
        %v6716 = vrot.slane %v6715, 1
        %v6717 = vmax.f32 %v6715, %v6716
        %v6718 = vmax.f32 %v6535, %v6536
        %v6719 = vrot.slane %v6718, 4
        %v6720 = vmax.f32 %v6718, %v6719
        %v6721 = vrot.slane %v6720, 2
        %v6722 = vmax.f32 %v6720, %v6721
        %v6723 = vrot.slane %v6722, 1
        %v6724 = vmax.f32 %v6722, %v6723
        %v6725 = vmax.f32 %v6537, %v6538
        %v6726 = vrot.slane %v6725, 4
        %v6727 = vmax.f32 %v6725, %v6726
        %v6728 = vrot.slane %v6727, 2
        %v6729 = vmax.f32 %v6727, %v6728
        %v6730 = vrot.slane %v6729, 1
        %v6731 = vmax.f32 %v6729, %v6730
        %v6732 = vmax.f32 %v6539, %v6540
        %v6733 = vrot.slane %v6732, 4
        %v6734 = vmax.f32 %v6732, %v6733
        %v6735 = vrot.slane %v6734, 2
        %v6736 = vmax.f32 %v6734, %v6735
        %v6737 = vrot.slane %v6736, 1
        %v6738 = vmax.f32 %v6736, %v6737
        %v6739 = vmax.f32 %v6541, %v6542
        %v6740 = vrot.slane %v6739, 4
        %v6741 = vmax.f32 %v6739, %v6740
        %v6742 = vrot.slane %v6741, 2
        %v6743 = vmax.f32 %v6741, %v6742
        %v6744 = vrot.slane %v6743, 1
        %v6745 = vmax.f32 %v6743, %v6744
        %v6746 = vmax.f32 %v6543, %v6544
        %v6747 = vrot.slane %v6746, 4
        %v6748 = vmax.f32 %v6746, %v6747
        %v6749 = vrot.slane %v6748, 2
        %v6750 = vmax.f32 %v6748, %v6749
        %v6751 = vrot.slane %v6750, 1
        %v6752 = vmax.f32 %v6750, %v6751
        %v6753 = vmax.f32 %v6545, %v6546
        %v6754 = vrot.slane %v6753, 4
        %v6755 = vmax.f32 %v6753, %v6754
        %v6756 = vrot.slane %v6755, 2
        %v6757 = vmax.f32 %v6755, %v6756
        %v6758 = vrot.slane %v6757, 1
        %v6759 = vmax.f32 %v6757, %v6758
        %v6760 = vmax.f32 %v6547, %v6548
        %v6761 = vrot.slane %v6760, 4
        %v6762 = vmax.f32 %v6760, %v6761
        %v6763 = vrot.slane %v6762, 2
        %v6764 = vmax.f32 %v6762, %v6763
        %v6765 = vrot.slane %v6764, 1
        %v6766 = vmax.f32 %v6764, %v6765
        %v6767 = vmax.f32 %v6549, %v6550
        %v6768 = vrot.slane %v6767, 4
        %v6769 = vmax.f32 %v6767, %v6768
        %v6770 = vrot.slane %v6769, 2
        %v6771 = vmax.f32 %v6769, %v6770
        %v6772 = vrot.slane %v6771, 1
        %v6773 = vmax.f32 %v6771, %v6772
        %v6774 = vmax.f32 %v6551, %v6552
        %v6775 = vrot.slane %v6774, 4
        %v6776 = vmax.f32 %v6774, %v6775
        %v6777 = vrot.slane %v6776, 2
        %v6778 = vmax.f32 %v6776, %v6777
        %v6779 = vrot.slane %v6778, 1
        %v6780 = vmax.f32 %v6778, %v6779
        %v6781 = vmax.f32 %v6553, %v6554
        %v6782 = vrot.slane %v6781, 4
        %v6783 = vmax.f32 %v6781, %v6782
        %v6784 = vrot.slane %v6783, 2
        %v6785 = vmax.f32 %v6783, %v6784
        %v6786 = vrot.slane %v6785, 1
        %v6787 = vmax.f32 %v6785, %v6786
        %v6788 = vmax.f32 %v6555, %v6556
        %v6789 = vrot.slane %v6788, 4
        %v6790 = vmax.f32 %v6788, %v6789
        %v6791 = vrot.slane %v6790, 2
        %v6792 = vmax.f32 %v6790, %v6791
        %v6793 = vrot.slane %v6792, 1
        %v6794 = vmax.f32 %v6792, %v6793
        %v6795 = vmax.f32 %v6557, %v6558
        %v6796 = vrot.slane %v6795, 4
        %v6797 = vmax.f32 %v6795, %v6796
        %v6798 = vrot.slane %v6797, 2
        %v6799 = vmax.f32 %v6797, %v6798
        %v6800 = vrot.slane %v6799, 1
        %v6801 = vmax.f32 %v6799, %v6800
        %v6802 = vmax.f32 %v6559, %v6560
        %v6803 = vrot.slane %v6802, 4
        %v6804 = vmax.f32 %v6802, %v6803
        %v6805 = vrot.slane %v6804, 2
        %v6806 = vmax.f32 %v6804, %v6805
        %v6807 = vrot.slane %v6806, 1
        %v6808 = vmax.f32 %v6806, %v6807
        %v6809 = vmax.f32 %v6561, %v6562
        %v6810 = vrot.slane %v6809, 4
        %v6811 = vmax.f32 %v6809, %v6810
        %v6812 = vrot.slane %v6811, 2
        %v6813 = vmax.f32 %v6811, %v6812
        %v6814 = vrot.slane %v6813, 1
        %v6815 = vmax.f32 %v6813, %v6814
        %v6816 = vmax.f32 %v6563, %v6564
        %v6817 = vrot.slane %v6816, 4
        %v6818 = vmax.f32 %v6816, %v6817
        %v6819 = vrot.slane %v6818, 2
        %v6820 = vmax.f32 %v6818, %v6819
        %v6821 = vrot.slane %v6820, 1
        %v6822 = vmax.f32 %v6820, %v6821
        %v6823 = vmax.f32 %v6565, %v6566
        %v6824 = vrot.slane %v6823, 4
        %v6825 = vmax.f32 %v6823, %v6824
        %v6826 = vrot.slane %v6825, 2
        %v6827 = vmax.f32 %v6825, %v6826
        %v6828 = vrot.slane %v6827, 1
        %v6829 = vmax.f32 %v6827, %v6828
        %v6830 = vmax.f32 %v6567, %v6568
        %v6831 = vrot.slane %v6830, 4
        %v6832 = vmax.f32 %v6830, %v6831
        %v6833 = vrot.slane %v6832, 2
        %v6834 = vmax.f32 %v6832, %v6833
        %v6835 = vrot.slane %v6834, 1
        %v6836 = vmax.f32 %v6834, %v6835
        %v6837 = vmax.f32 %v6569, %v6570
        %v6838 = vrot.slane %v6837, 4
        %v6839 = vmax.f32 %v6837, %v6838
        %v6840 = vrot.slane %v6839, 2
        %v6841 = vmax.f32 %v6839, %v6840
        %v6842 = vrot.slane %v6841, 1
        %v6843 = vmax.f32 %v6841, %v6842
        %v6844 = vmax.f32 %v6571, %v6572
        %v6845 = vrot.slane %v6844, 4
        %v6846 = vmax.f32 %v6844, %v6845
        %v6847 = vrot.slane %v6846, 2
        %v6848 = vmax.f32 %v6846, %v6847
        %v6849 = vrot.slane %v6848, 1
        %v6850 = vmax.f32 %v6848, %v6849
        %v6851 = vmax.f32 %v6573, %v6574
        %v6852 = vrot.slane %v6851, 4
        %v6853 = vmax.f32 %v6851, %v6852
        %v6854 = vrot.slane %v6853, 2
        %v6855 = vmax.f32 %v6853, %v6854
        %v6856 = vrot.slane %v6855, 1
        %v6857 = vmax.f32 %v6855, %v6856
        %v6858 = vmax.f32 %v6575, %v6576
        %v6859 = vrot.slane %v6858, 4
        %v6860 = vmax.f32 %v6858, %v6859
        %v6861 = vrot.slane %v6860, 2
        %v6862 = vmax.f32 %v6860, %v6861
        %v6863 = vrot.slane %v6862, 1
        %v6864 = vmax.f32 %v6862, %v6863
        %v6865 = vmax.f32 %v6577, %v6578
        %v6866 = vrot.slane %v6865, 4
        %v6867 = vmax.f32 %v6865, %v6866
        %v6868 = vrot.slane %v6867, 2
        %v6869 = vmax.f32 %v6867, %v6868
        %v6870 = vrot.slane %v6869, 1
        %v6871 = vmax.f32 %v6869, %v6870
        %v6872 = vmax.f32 %v6579, %v6580
        %v6873 = vrot.slane %v6872, 4
        %v6874 = vmax.f32 %v6872, %v6873
        %v6875 = vrot.slane %v6874, 2
        %v6876 = vmax.f32 %v6874, %v6875
        %v6877 = vrot.slane %v6876, 1
        %v6878 = vmax.f32 %v6876, %v6877
        %v6879 = vmax.f32 %v6581, %v6582
        %v6880 = vrot.slane %v6879, 4
        %v6881 = vmax.f32 %v6879, %v6880
        %v6882 = vrot.slane %v6881, 2
        %v6883 = vmax.f32 %v6881, %v6882
        %v6884 = vrot.slane %v6883, 1
        %v6885 = vmax.f32 %v6883, %v6884
        %v6886 = vmax.f32 %v6583, %v6584
        %v6887 = vrot.slane %v6886, 4
        %v6888 = vmax.f32 %v6886, %v6887
        %v6889 = vrot.slane %v6888, 2
        %v6890 = vmax.f32 %v6888, %v6889
        %v6891 = vrot.slane %v6890, 1
        %v6892 = vmax.f32 %v6890, %v6891
        %v6893 = vmax.f32 %v6585, %v6586
        %v6894 = vrot.slane %v6893, 4
        %v6895 = vmax.f32 %v6893, %v6894
        %v6896 = vrot.slane %v6895, 2
        %v6897 = vmax.f32 %v6895, %v6896
        %v6898 = vrot.slane %v6897, 1
        %v6899 = vmax.f32 %v6897, %v6898
        %v6900 = vmax.f32 %v6587, %v6588
        %v6901 = vrot.slane %v6900, 4
        %v6902 = vmax.f32 %v6900, %v6901
        %v6903 = vrot.slane %v6902, 2
        %v6904 = vmax.f32 %v6902, %v6903
        %v6905 = vrot.slane %v6904, 1
        %v6906 = vmax.f32 %v6904, %v6905
        %v6907 = vmax.f32 %v6589, %v6590
        %v6908 = vrot.slane %v6907, 4
        %v6909 = vmax.f32 %v6907, %v6908
        %v6910 = vrot.slane %v6909, 2
        %v6911 = vmax.f32 %v6909, %v6910
        %v6912 = vrot.slane %v6911, 1
        %v6913 = vmax.f32 %v6911, %v6912
        %v6914 = vmax.f32 %v6591, %v6592
        %v6915 = vrot.slane %v6914, 4
        %v6916 = vmax.f32 %v6914, %v6915
        %v6917 = vrot.slane %v6916, 2
        %v6918 = vmax.f32 %v6916, %v6917
        %v6919 = vrot.slane %v6918, 1
        %v6920 = vmax.f32 %v6918, %v6919
        %v6921 = vmax.f32 %v6593, %v6594
        %v6922 = vrot.slane %v6921, 4
        %v6923 = vmax.f32 %v6921, %v6922
        %v6924 = vrot.slane %v6923, 2
        %v6925 = vmax.f32 %v6923, %v6924
        %v6926 = vrot.slane %v6925, 1
        %v6927 = vmax.f32 %v6925, %v6926
        %v6928 = vmax.f32 %v6595, %v6596
        %v6929 = vrot.slane %v6928, 4
        %v6930 = vmax.f32 %v6928, %v6929
        %v6931 = vrot.slane %v6930, 2
        %v6932 = vmax.f32 %v6930, %v6931
        %v6933 = vrot.slane %v6932, 1
        %v6934 = vmax.f32 %v6932, %v6933
        %v6935 = vmax.f32 %v6597, %v6598
        %v6936 = vrot.slane %v6935, 4
        %v6937 = vmax.f32 %v6935, %v6936
        %v6938 = vrot.slane %v6937, 2
        %v6939 = vmax.f32 %v6937, %v6938
        %v6940 = vrot.slane %v6939, 1
        %v6941 = vmax.f32 %v6939, %v6940
        %v6942 = vmax.f32 %v6599, %v6600
        %v6943 = vrot.slane %v6942, 4
        %v6944 = vmax.f32 %v6942, %v6943
        %v6945 = vrot.slane %v6944, 2
        %v6946 = vmax.f32 %v6944, %v6945
        %v6947 = vrot.slane %v6946, 1
        %v6948 = vmax.f32 %v6946, %v6947
        %v6949 = vmax.f32 %v6601, %v6602
        %v6950 = vrot.slane %v6949, 4
        %v6951 = vmax.f32 %v6949, %v6950
        %v6952 = vrot.slane %v6951, 2
        %v6953 = vmax.f32 %v6951, %v6952
        %v6954 = vrot.slane %v6953, 1
        %v6955 = vmax.f32 %v6953, %v6954
        %v6956 = vmax.f32 %v6603, %v6604
        %v6957 = vrot.slane %v6956, 4
        %v6958 = vmax.f32 %v6956, %v6957
        %v6959 = vrot.slane %v6958, 2
        %v6960 = vmax.f32 %v6958, %v6959
        %v6961 = vrot.slane %v6960, 1
        %v6962 = vmax.f32 %v6960, %v6961
        %v6963 = vmax.f32 %v6605, %v6606
        %v6964 = vrot.slane %v6963, 4
        %v6965 = vmax.f32 %v6963, %v6964
        %v6966 = vrot.slane %v6965, 2
        %v6967 = vmax.f32 %v6965, %v6966
        %v6968 = vrot.slane %v6967, 1
        %v6969 = vmax.f32 %v6967, %v6968
        %v6970 = vmax.f32 %v6607, %v6608
        %v6971 = vrot.slane %v6970, 4
        %v6972 = vmax.f32 %v6970, %v6971
        %v6973 = vrot.slane %v6972, 2
        %v6974 = vmax.f32 %v6972, %v6973
        %v6975 = vrot.slane %v6974, 1
        %v6976 = vmax.f32 %v6974, %v6975
        %v6977 = vmax.f32 %v6609, %v6610
        %v6978 = vrot.slane %v6977, 4
        %v6979 = vmax.f32 %v6977, %v6978
        %v6980 = vrot.slane %v6979, 2
        %v6981 = vmax.f32 %v6979, %v6980
        %v6982 = vrot.slane %v6981, 1
        %v6983 = vmax.f32 %v6981, %v6982
        %v6984 = vmax.f32 %v6611, %v6612
        %v6985 = vrot.slane %v6984, 4
        %v6986 = vmax.f32 %v6984, %v6985
        %v6987 = vrot.slane %v6986, 2
        %v6988 = vmax.f32 %v6986, %v6987
        %v6989 = vrot.slane %v6988, 1
        %v6990 = vmax.f32 %v6988, %v6989
        %v6991 = vmax.f32 %v6613, %v6614
        %v6992 = vrot.slane %v6991, 4
        %v6993 = vmax.f32 %v6991, %v6992
        %v6994 = vrot.slane %v6993, 2
        %v6995 = vmax.f32 %v6993, %v6994
        %v6996 = vrot.slane %v6995, 1
        %v6997 = vmax.f32 %v6995, %v6996
        %v6998 = vmax.f32 %v6615, %v6616
        %v6999 = vrot.slane %v6998, 4
        %v7000 = vmax.f32 %v6998, %v6999
        %v7001 = vrot.slane %v7000, 2
        %v7002 = vmax.f32 %v7000, %v7001
        %v7003 = vrot.slane %v7002, 1
        %v7004 = vmax.f32 %v7002, %v7003
        %v7005 = vmax.f32 %v6617, %v6618
        %v7006 = vrot.slane %v7005, 4
        %v7007 = vmax.f32 %v7005, %v7006
        %v7008 = vrot.slane %v7007, 2
        %v7009 = vmax.f32 %v7007, %v7008
        %v7010 = vrot.slane %v7009, 1
        %v7011 = vmax.f32 %v7009, %v7010
        %v7012 = vmax.f32 %v6619, %v6620
        %v7013 = vrot.slane %v7012, 4
        %v7014 = vmax.f32 %v7012, %v7013
        %v7015 = vrot.slane %v7014, 2
        %v7016 = vmax.f32 %v7014, %v7015
        %v7017 = vrot.slane %v7016, 1
        %v7018 = vmax.f32 %v7016, %v7017
        %v7019 = vmax.f32 %v6621, %v6622
        %v7020 = vrot.slane %v7019, 4
        %v7021 = vmax.f32 %v7019, %v7020
        %v7022 = vrot.slane %v7021, 2
        %v7023 = vmax.f32 %v7021, %v7022
        %v7024 = vrot.slane %v7023, 1
        %v7025 = vmax.f32 %v7023, %v7024
        %v7026 = vmax.f32 %v6623, %v6624
        %v7027 = vrot.slane %v7026, 4
        %v7028 = vmax.f32 %v7026, %v7027
        %v7029 = vrot.slane %v7028, 2
        %v7030 = vmax.f32 %v7028, %v7029
        %v7031 = vrot.slane %v7030, 1
        %v7032 = vmax.f32 %v7030, %v7031
        %v7033 = vmax.f32 %v6625, %v6626
        %v7034 = vrot.slane %v7033, 4
        %v7035 = vmax.f32 %v7033, %v7034
        %v7036 = vrot.slane %v7035, 2
        %v7037 = vmax.f32 %v7035, %v7036
        %v7038 = vrot.slane %v7037, 1
        %v7039 = vmax.f32 %v7037, %v7038
        %v7040 = vmax.f32 %v6627, %v6628
        %v7041 = vrot.slane %v7040, 4
        %v7042 = vmax.f32 %v7040, %v7041
        %v7043 = vrot.slane %v7042, 2
        %v7044 = vmax.f32 %v7042, %v7043
        %v7045 = vrot.slane %v7044, 1
        %v7046 = vmax.f32 %v7044, %v7045
        %v7047 = vmax.f32 %v6629, %v6630
        %v7048 = vrot.slane %v7047, 4
        %v7049 = vmax.f32 %v7047, %v7048
        %v7050 = vrot.slane %v7049, 2
        %v7051 = vmax.f32 %v7049, %v7050
        %v7052 = vrot.slane %v7051, 1
        %v7053 = vmax.f32 %v7051, %v7052
        %v7054 = vmax.f32 %v6631, %v6632
        %v7055 = vrot.slane %v7054, 4
        %v7056 = vmax.f32 %v7054, %v7055
        %v7057 = vrot.slane %v7056, 2
        %v7058 = vmax.f32 %v7056, %v7057
        %v7059 = vrot.slane %v7058, 1
        %v7060 = vmax.f32 %v7058, %v7059
        %v7061 = vmax.f32 %v6633, %v6634
        %v7062 = vrot.slane %v7061, 4
        %v7063 = vmax.f32 %v7061, %v7062
        %v7064 = vrot.slane %v7063, 2
        %v7065 = vmax.f32 %v7063, %v7064
        %v7066 = vrot.slane %v7065, 1
        %v7067 = vmax.f32 %v7065, %v7066
        %v7068 = vmax.f32 %v6635, %v6636
        %v7069 = vrot.slane %v7068, 4
        %v7070 = vmax.f32 %v7068, %v7069
        %v7071 = vrot.slane %v7070, 2
        %v7072 = vmax.f32 %v7070, %v7071
        %v7073 = vrot.slane %v7072, 1
        %v7074 = vmax.f32 %v7072, %v7073
        %v7075 = vmax.f32 %v6637, %v6638
        %v7076 = vrot.slane %v7075, 4
        %v7077 = vmax.f32 %v7075, %v7076
        %v7078 = vrot.slane %v7077, 2
        %v7079 = vmax.f32 %v7077, %v7078
        %v7080 = vrot.slane %v7079, 1
        %v7081 = vmax.f32 %v7079, %v7080
        %v7082 = vmax.f32 %v6639, %v6640
        %v7083 = vrot.slane %v7082, 4
        %v7084 = vmax.f32 %v7082, %v7083
        %v7085 = vrot.slane %v7084, 2
        %v7086 = vmax.f32 %v7084, %v7085
        %v7087 = vrot.slane %v7086, 1
        %v7088 = vmax.f32 %v7086, %v7087
        %v7089 = vld [vmem:[%s4] sm:$0x1]
        %v7091 = vlaneseq
        %v7092 = vshrl.u32 %v7091, 7
        %v7093 = vsub.s32 0, %v7092
        %v7094 = vrot.slane %v7089, %v7093
        %v7096 = vadd.f32 %v6647, %v7094
        %v7097 = vadd.f32 %v6654, %v7094
        %v7098 = vadd.f32 %v6661, %v7094
        %v7099 = vadd.f32 %v6668, %v7094
        %v7100 = vadd.f32 %v6675, %v7094
        %v7101 = vadd.f32 %v6682, %v7094
        %v7102 = vadd.f32 %v6689, %v7094
        %v7103 = vadd.f32 %v6696, %v7094
        %v7104 = vadd.f32 %v6703, %v7094
        %v7105 = vadd.f32 %v6710, %v7094
        %v7106 = vadd.f32 %v6717, %v7094
        %v7107 = vadd.f32 %v6724, %v7094
        %v7108 = vadd.f32 %v6731, %v7094
        %v7109 = vadd.f32 %v6738, %v7094
        %v7110 = vadd.f32 %v6745, %v7094
        %v7111 = vadd.f32 %v6752, %v7094
        %v7112 = vadd.f32 %v6759, %v7094
        %v7113 = vadd.f32 %v6766, %v7094
        %v7114 = vadd.f32 %v6773, %v7094
        %v7115 = vadd.f32 %v6780, %v7094
        %v7116 = vadd.f32 %v6787, %v7094
        %v7117 = vadd.f32 %v6794, %v7094
        %v7118 = vadd.f32 %v6801, %v7094
        %v7119 = vadd.f32 %v6808, %v7094
        %v7120 = vadd.f32 %v6815, %v7094
        %v7121 = vadd.f32 %v6822, %v7094
        %v7122 = vadd.f32 %v6829, %v7094
        %v7123 = vadd.f32 %v6836, %v7094
        %v7124 = vadd.f32 %v6843, %v7094
        %v7125 = vadd.f32 %v6850, %v7094
        %v7126 = vadd.f32 %v6857, %v7094
        %v7127 = vadd.f32 %v6864, %v7094
        %v7128 = vadd.f32 %v6871, %v7094
        %v7129 = vadd.f32 %v6878, %v7094
        %v7130 = vadd.f32 %v6885, %v7094
        %v7131 = vadd.f32 %v6892, %v7094
        %v7132 = vadd.f32 %v6899, %v7094
        %v7133 = vadd.f32 %v6906, %v7094
        %v7134 = vadd.f32 %v6913, %v7094
        %v7135 = vadd.f32 %v6920, %v7094
        %v7136 = vadd.f32 %v6927, %v7094
        %v7137 = vadd.f32 %v6934, %v7094
        %v7138 = vadd.f32 %v6941, %v7094
        %v7139 = vadd.f32 %v6948, %v7094
        %v7140 = vadd.f32 %v6955, %v7094
        %v7141 = vadd.f32 %v6962, %v7094
        %v7142 = vadd.f32 %v6969, %v7094
        %v7143 = vadd.f32 %v6976, %v7094
        %v7144 = vadd.f32 %v6983, %v7094
        %v7145 = vadd.f32 %v6990, %v7094
        %v7146 = vadd.f32 %v6997, %v7094
        %v7147 = vadd.f32 %v7004, %v7094
        %v7148 = vadd.f32 %v7011, %v7094
        %v7149 = vadd.f32 %v7018, %v7094
        %v7150 = vadd.f32 %v7025, %v7094
        %v7151 = vadd.f32 %v7032, %v7094
        %v7152 = vadd.f32 %v7039, %v7094
        %v7153 = vadd.f32 %v7046, %v7094
        %v7154 = vadd.f32 %v7053, %v7094
        %v7155 = vadd.f32 %v7060, %v7094
        %v7156 = vadd.f32 %v7067, %v7094
        %v7157 = vadd.f32 %v7074, %v7094
        %v7158 = vadd.f32 %v7081, %v7094
        %v7159 = vadd.f32 %v7088, %v7094
        %v7160 = vmax.f32 %v7096, 0.0
        %v7161 = vmax.f32 %v7097, 0.0
        %v7162 = vmax.f32 %v7098, 0.0
        %v7163 = vmax.f32 %v7099, 0.0
        %v7164 = vmax.f32 %v7100, 0.0
        %v7165 = vmax.f32 %v7101, 0.0
        %v7166 = vmax.f32 %v7102, 0.0
        %v7167 = vmax.f32 %v7103, 0.0
        %v7168 = vmax.f32 %v7104, 0.0
        %v7169 = vmax.f32 %v7105, 0.0
        %v7170 = vmax.f32 %v7106, 0.0
        %v7171 = vmax.f32 %v7107, 0.0
        %v7172 = vmax.f32 %v7108, 0.0
        %v7173 = vmax.f32 %v7109, 0.0
        %v7174 = vmax.f32 %v7110, 0.0
        %v7175 = vmax.f32 %v7111, 0.0
        %v7176 = vmax.f32 %v7112, 0.0
        %v7177 = vmax.f32 %v7113, 0.0
        %v7178 = vmax.f32 %v7114, 0.0
        %v7179 = vmax.f32 %v7115, 0.0
        %v7180 = vmax.f32 %v7116, 0.0
        %v7181 = vmax.f32 %v7117, 0.0
        %v7182 = vmax.f32 %v7118, 0.0
        %v7183 = vmax.f32 %v7119, 0.0
        %v7184 = vmax.f32 %v7120, 0.0
        %v7185 = vmax.f32 %v7121, 0.0
        %v7186 = vmax.f32 %v7122, 0.0
        %v7187 = vmax.f32 %v7123, 0.0
        %v7188 = vmax.f32 %v7124, 0.0
        %v7189 = vmax.f32 %v7125, 0.0
        %v7190 = vmax.f32 %v7126, 0.0
        %v7191 = vmax.f32 %v7127, 0.0
        %v7192 = vmax.f32 %v7128, 0.0
        %v7193 = vmax.f32 %v7129, 0.0
        %v7194 = vmax.f32 %v7130, 0.0
        %v7195 = vmax.f32 %v7131, 0.0
        %v7196 = vmax.f32 %v7132, 0.0
        %v7197 = vmax.f32 %v7133, 0.0
        %v7198 = vmax.f32 %v7134, 0.0
        %v7199 = vmax.f32 %v7135, 0.0
        %v7200 = vmax.f32 %v7136, 0.0
        %v7201 = vmax.f32 %v7137, 0.0
        %v7202 = vmax.f32 %v7138, 0.0
        %v7203 = vmax.f32 %v7139, 0.0
        %v7204 = vmax.f32 %v7140, 0.0
        %v7205 = vmax.f32 %v7141, 0.0
        %v7206 = vmax.f32 %v7142, 0.0
        %v7207 = vmax.f32 %v7143, 0.0
        %v7208 = vmax.f32 %v7144, 0.0
        %v7209 = vmax.f32 %v7145, 0.0
        %v7210 = vmax.f32 %v7146, 0.0
        %v7211 = vmax.f32 %v7147, 0.0
        %v7212 = vmax.f32 %v7148, 0.0
        %v7213 = vmax.f32 %v7149, 0.0
        %v7214 = vmax.f32 %v7150, 0.0
        %v7215 = vmax.f32 %v7151, 0.0
        %v7216 = vmax.f32 %v7152, 0.0
        %v7217 = vmax.f32 %v7153, 0.0
        %v7218 = vmax.f32 %v7154, 0.0
        %v7219 = vmax.f32 %v7155, 0.0
        %v7220 = vmax.f32 %v7156, 0.0
        %v7221 = vmax.f32 %v7157, 0.0
        %v7222 = vmax.f32 %v7158, 0.0
        %v7223 = vmax.f32 %v7159, 0.0
        %v7224 = vpack.c.bf16 %v7160, %v7160
        %v7225 = vpack.c.bf16 %v7161, %v7161
        %v7226 = vpack.c.bf16 %v7162, %v7162
        %v7227 = vpack.c.bf16 %v7163, %v7163
        %v7228 = vpack.c.bf16 %v7164, %v7164
        %v7229 = vpack.c.bf16 %v7165, %v7165
        %v7230 = vpack.c.bf16 %v7166, %v7166
        %v7231 = vpack.c.bf16 %v7167, %v7167
        %v7232 = vpack.c.bf16 %v7168, %v7168
        %v7233 = vpack.c.bf16 %v7169, %v7169
        %v7234 = vpack.c.bf16 %v7170, %v7170
        %v7235 = vpack.c.bf16 %v7171, %v7171
        %v7236 = vpack.c.bf16 %v7172, %v7172
        %v7237 = vpack.c.bf16 %v7173, %v7173
        %v7238 = vpack.c.bf16 %v7174, %v7174
        %v7239 = vpack.c.bf16 %v7175, %v7175
        %v7240 = vpack.c.bf16 %v7176, %v7176
        %v7241 = vpack.c.bf16 %v7177, %v7177
        %v7242 = vpack.c.bf16 %v7178, %v7178
        %v7243 = vpack.c.bf16 %v7179, %v7179
        %v7244 = vpack.c.bf16 %v7180, %v7180
        %v7245 = vpack.c.bf16 %v7181, %v7181
        %v7246 = vpack.c.bf16 %v7182, %v7182
        %v7247 = vpack.c.bf16 %v7183, %v7183
        %v7248 = vpack.c.bf16 %v7184, %v7184
        %v7249 = vpack.c.bf16 %v7185, %v7185
        %v7250 = vpack.c.bf16 %v7186, %v7186
        %v7251 = vpack.c.bf16 %v7187, %v7187
        %v7252 = vpack.c.bf16 %v7188, %v7188
        %v7253 = vpack.c.bf16 %v7189, %v7189
        %v7254 = vpack.c.bf16 %v7190, %v7190
        %v7255 = vpack.c.bf16 %v7191, %v7191
        %v7256 = vpack.c.bf16 %v7192, %v7192
        %v7257 = vpack.c.bf16 %v7193, %v7193
        %v7258 = vpack.c.bf16 %v7194, %v7194
        %v7259 = vpack.c.bf16 %v7195, %v7195
        %v7260 = vpack.c.bf16 %v7196, %v7196
        %v7261 = vpack.c.bf16 %v7197, %v7197
        %v7262 = vpack.c.bf16 %v7198, %v7198
        %v7263 = vpack.c.bf16 %v7199, %v7199
        %v7264 = vpack.c.bf16 %v7200, %v7200
        %v7265 = vpack.c.bf16 %v7201, %v7201
        %v7266 = vpack.c.bf16 %v7202, %v7202
        %v7267 = vpack.c.bf16 %v7203, %v7203
        %v7268 = vpack.c.bf16 %v7204, %v7204
        %v7269 = vpack.c.bf16 %v7205, %v7205
        %v7270 = vpack.c.bf16 %v7206, %v7206
        %v7271 = vpack.c.bf16 %v7207, %v7207
        %v7272 = vpack.c.bf16 %v7208, %v7208
        %v7273 = vpack.c.bf16 %v7209, %v7209
        %v7274 = vpack.c.bf16 %v7210, %v7210
        %v7275 = vpack.c.bf16 %v7211, %v7211
        %v7276 = vpack.c.bf16 %v7212, %v7212
        %v7277 = vpack.c.bf16 %v7213, %v7213
        %v7278 = vpack.c.bf16 %v7214, %v7214
        %v7279 = vpack.c.bf16 %v7215, %v7215
        %v7280 = vpack.c.bf16 %v7216, %v7216
        %v7281 = vpack.c.bf16 %v7217, %v7217
        %v7282 = vpack.c.bf16 %v7218, %v7218
        %v7283 = vpack.c.bf16 %v7219, %v7219
        %v7284 = vpack.c.bf16 %v7220, %v7220
        %v7285 = vpack.c.bf16 %v7221, %v7221
        %v7286 = vpack.c.bf16 %v7222, %v7222
        %v7287 = vpack.c.bf16 %v7223, %v7223
        %v7288 = vld [vmem:[%s5] sm:$0xf]
        %v7289 = vld [vmem:[%s5 + $0x4] sm:$0xf]
        %v7290 = vld [vmem:[%s5 + $0x8] sm:$0xf]
        %v7291 = vld [vmem:[%s5 + $0xc] sm:$0xf]
        %v7292 = vld [vmem:[%s5 + $0x10] sm:$0xf]
        %v7293 = vld [vmem:[%s5 + $0x14] sm:$0xf]
        %v7294 = vld [vmem:[%s5 + $0x18] sm:$0xf]
        %v7295 = vld [vmem:[%s5 + $0x1c] sm:$0xf]
        %v7296 = vld [vmem:[%s5 + $0x20] sm:$0xf]
        %v7297 = vld [vmem:[%s5 + $0x24] sm:$0xf]
        %v7298 = vld [vmem:[%s5 + $0x28] sm:$0xf]
        %v7299 = vld [vmem:[%s5 + $0x2c] sm:$0xf]
        %v7300 = vld [vmem:[%s5 + $0x30] sm:$0xf]
        %v7301 = vld [vmem:[%s5 + $0x34] sm:$0xf]
        %v7302 = vld [vmem:[%s5 + $0x38] sm:$0xf]
        %v7303 = vld [vmem:[%s5 + $0x3c] sm:$0xf]
        %v7304 = vld [vmem:[%s6] sm:$0x1]
        %v7306 = vlaneseq
        %v7307 = vshrl.u32 %v7306, 7
        %v7308 = vsub.s32 0, %v7307
        %v7309 = vrot.slane %v7304, %v7308
        %v7375 = vunpack.c.l.b16 %v7224
        %v7376 = vunpack.c.l.b16 %v7225
        %v7377 = vunpack.c.l.b16 %v7226
        %v7378 = vunpack.c.l.b16 %v7227
        %v7379 = vunpack.c.l.b16 %v7228
        %v7380 = vunpack.c.l.b16 %v7229
        %v7381 = vunpack.c.l.b16 %v7230
        %v7382 = vunpack.c.l.b16 %v7231
        %v7383 = vunpack.c.l.b16 %v7232
        %v7384 = vunpack.c.l.b16 %v7233
        %v7385 = vunpack.c.l.b16 %v7234
        %v7386 = vunpack.c.l.b16 %v7235
        %v7387 = vunpack.c.l.b16 %v7236
        %v7388 = vunpack.c.l.b16 %v7237
        %v7389 = vunpack.c.l.b16 %v7238
        %v7390 = vunpack.c.l.b16 %v7239
        %v7391 = vunpack.c.l.b16 %v7240
        %v7392 = vunpack.c.l.b16 %v7241
        %v7393 = vunpack.c.l.b16 %v7242
        %v7394 = vunpack.c.l.b16 %v7243
        %v7395 = vunpack.c.l.b16 %v7244
        %v7396 = vunpack.c.l.b16 %v7245
        %v7397 = vunpack.c.l.b16 %v7246
        %v7398 = vunpack.c.l.b16 %v7247
        %v7399 = vunpack.c.l.b16 %v7248
        %v7400 = vunpack.c.l.b16 %v7249
        %v7401 = vunpack.c.l.b16 %v7250
        %v7402 = vunpack.c.l.b16 %v7251
        %v7403 = vunpack.c.l.b16 %v7252
        %v7404 = vunpack.c.l.b16 %v7253
        %v7405 = vunpack.c.l.b16 %v7254
        %v7406 = vunpack.c.l.b16 %v7255
        %v7407 = vunpack.c.l.b16 %v7256
        %v7408 = vunpack.c.l.b16 %v7257
        %v7409 = vunpack.c.l.b16 %v7258
        %v7410 = vunpack.c.l.b16 %v7259
        %v7411 = vunpack.c.l.b16 %v7260
        %v7412 = vunpack.c.l.b16 %v7261
        %v7413 = vunpack.c.l.b16 %v7262
        %v7414 = vunpack.c.l.b16 %v7263
        %v7415 = vunpack.c.l.b16 %v7264
        %v7416 = vunpack.c.l.b16 %v7265
        %v7417 = vunpack.c.l.b16 %v7266
        %v7418 = vunpack.c.l.b16 %v7267
        %v7419 = vunpack.c.l.b16 %v7268
        %v7420 = vunpack.c.l.b16 %v7269
        %v7421 = vunpack.c.l.b16 %v7270
        %v7422 = vunpack.c.l.b16 %v7271
        %v7423 = vunpack.c.l.b16 %v7272
        %v7424 = vunpack.c.l.b16 %v7273
        %v7425 = vunpack.c.l.b16 %v7274
        %v7426 = vunpack.c.l.b16 %v7275
        %v7427 = vunpack.c.l.b16 %v7276
        %v7428 = vunpack.c.l.b16 %v7277
        %v7429 = vunpack.c.l.b16 %v7278
        %v7430 = vunpack.c.l.b16 %v7279
        %v7431 = vunpack.c.l.b16 %v7280
        %v7432 = vunpack.c.l.b16 %v7281
        %v7433 = vunpack.c.l.b16 %v7282
        %v7434 = vunpack.c.l.b16 %v7283
        %v7435 = vunpack.c.l.b16 %v7284
        %v7436 = vunpack.c.l.b16 %v7285
        %v7437 = vunpack.c.l.b16 %v7286
        %v7438 = vunpack.c.l.b16 %v7287
        %v7439 = vrot.slane %v7376, 7
        %vm7440 = vcmask 1041409
        %v7441 = vsel %vm7440, %v7439, %v7375
        %v7442 = vrot.slane %v7377, 6
        %vm7443 = vcmask 1042434
        %v7444 = vsel %vm7443, %v7442, %v7441
        %v7445 = vrot.slane %v7378, 5
        %vm7446 = vcmask 1043459
        %v7447 = vsel %vm7446, %v7445, %v7444
        %v7448 = vrot.slane %v7379, 4
        %vm7449 = vcmask 1044484
        %v7450 = vsel %vm7449, %v7448, %v7447
        %v7451 = vrot.slane %v7380, 3
        %vm7452 = vcmask 1045509
        %v7453 = vsel %vm7452, %v7451, %v7450
        %v7454 = vrot.slane %v7381, 2
        %vm7455 = vcmask 1046534
        %v7456 = vsel %vm7455, %v7454, %v7453
        %v7457 = vrot.slane %v7382, 1
        %vm7458 = vcmask 1047559
        %v7459 = vsel %vm7458, %v7457, %v7456
        %v7460 = vrot.slane %v7384, 7
        %v7461 = vsel %vm7440, %v7460, %v7383
        %v7462 = vrot.slane %v7385, 6
        %v7463 = vsel %vm7443, %v7462, %v7461
        %v7464 = vrot.slane %v7386, 5
        %v7465 = vsel %vm7446, %v7464, %v7463
        %v7466 = vrot.slane %v7387, 4
        %v7467 = vsel %vm7449, %v7466, %v7465
        %v7468 = vrot.slane %v7388, 3
        %v7469 = vsel %vm7452, %v7468, %v7467
        %v7470 = vrot.slane %v7389, 2
        %v7471 = vsel %vm7455, %v7470, %v7469
        %v7472 = vrot.slane %v7390, 1
        %v7473 = vsel %vm7458, %v7472, %v7471
        %v7474 = vrot.slane %v7392, 7
        %v7475 = vsel %vm7440, %v7474, %v7391
        %v7476 = vrot.slane %v7393, 6
        %v7477 = vsel %vm7443, %v7476, %v7475
        %v7478 = vrot.slane %v7394, 5
        %v7479 = vsel %vm7446, %v7478, %v7477
        %v7480 = vrot.slane %v7395, 4
        %v7481 = vsel %vm7449, %v7480, %v7479
        %v7482 = vrot.slane %v7396, 3
        %v7483 = vsel %vm7452, %v7482, %v7481
        %v7484 = vrot.slane %v7397, 2
        %v7485 = vsel %vm7455, %v7484, %v7483
        %v7486 = vrot.slane %v7398, 1
        %v7487 = vsel %vm7458, %v7486, %v7485
        %v7488 = vrot.slane %v7400, 7
        %v7489 = vsel %vm7440, %v7488, %v7399
        %v7490 = vrot.slane %v7401, 6
        %v7491 = vsel %vm7443, %v7490, %v7489
        %v7492 = vrot.slane %v7402, 5
        %v7493 = vsel %vm7446, %v7492, %v7491
        %v7494 = vrot.slane %v7403, 4
        %v7495 = vsel %vm7449, %v7494, %v7493
        %v7496 = vrot.slane %v7404, 3
        %v7497 = vsel %vm7452, %v7496, %v7495
        %v7498 = vrot.slane %v7405, 2
        %v7499 = vsel %vm7455, %v7498, %v7497
        %v7500 = vrot.slane %v7406, 1
        %v7501 = vsel %vm7458, %v7500, %v7499
        %v7502 = vrot.slane %v7408, 7
        %v7503 = vsel %vm7440, %v7502, %v7407
        %v7504 = vrot.slane %v7409, 6
        %v7505 = vsel %vm7443, %v7504, %v7503
        %v7506 = vrot.slane %v7410, 5
        %v7507 = vsel %vm7446, %v7506, %v7505
        %v7508 = vrot.slane %v7411, 4
        %v7509 = vsel %vm7449, %v7508, %v7507
        %v7510 = vrot.slane %v7412, 3
        %v7511 = vsel %vm7452, %v7510, %v7509
        %v7512 = vrot.slane %v7413, 2
        %v7513 = vsel %vm7455, %v7512, %v7511
        %v7514 = vrot.slane %v7414, 1
        %v7515 = vsel %vm7458, %v7514, %v7513
        %v7516 = vrot.slane %v7416, 7
        %v7517 = vsel %vm7440, %v7516, %v7415
        %v7518 = vrot.slane %v7417, 6
        %v7519 = vsel %vm7443, %v7518, %v7517
        %v7520 = vrot.slane %v7418, 5
        %v7521 = vsel %vm7446, %v7520, %v7519
        %v7522 = vrot.slane %v7419, 4
        %v7523 = vsel %vm7449, %v7522, %v7521
        %v7524 = vrot.slane %v7420, 3
        %v7525 = vsel %vm7452, %v7524, %v7523
        %v7526 = vrot.slane %v7421, 2
        %v7527 = vsel %vm7455, %v7526, %v7525
        %v7528 = vrot.slane %v7422, 1
        %v7529 = vsel %vm7458, %v7528, %v7527
        %v7530 = vrot.slane %v7424, 7
        %v7531 = vsel %vm7440, %v7530, %v7423
        %v7532 = vrot.slane %v7425, 6
        %v7533 = vsel %vm7443, %v7532, %v7531
        %v7534 = vrot.slane %v7426, 5
        %v7535 = vsel %vm7446, %v7534, %v7533
        %v7536 = vrot.slane %v7427, 4
        %v7537 = vsel %vm7449, %v7536, %v7535
        %v7538 = vrot.slane %v7428, 3
        %v7539 = vsel %vm7452, %v7538, %v7537
        %v7540 = vrot.slane %v7429, 2
        %v7541 = vsel %vm7455, %v7540, %v7539
        %v7542 = vrot.slane %v7430, 1
        %v7543 = vsel %vm7458, %v7542, %v7541
        %v7544 = vrot.slane %v7432, 7
        %v7545 = vsel %vm7440, %v7544, %v7431
        %v7546 = vrot.slane %v7433, 6
        %v7547 = vsel %vm7443, %v7546, %v7545
        %v7548 = vrot.slane %v7434, 5
        %v7549 = vsel %vm7446, %v7548, %v7547
        %v7550 = vrot.slane %v7435, 4
        %v7551 = vsel %vm7449, %v7550, %v7549
        %v7552 = vrot.slane %v7436, 3
        %v7553 = vsel %vm7452, %v7552, %v7551
        %v7554 = vrot.slane %v7437, 2
        %v7555 = vsel %vm7455, %v7554, %v7553
        %v7556 = vrot.slane %v7438, 1
        %v7557 = vsel %vm7458, %v7556, %v7555
        %v7558 = vpack.c.b16 %v7473, %v7459
        %v7559 = vpack.c.b16 %v7501, %v7487
        %v7560 = vpack.c.b16 %v7529, %v7515
        %v7561 = vpack.c.b16 %v7557, %v7543
        %v7582 = vunpack.c.l.b16 %v7288
        %v7583 = vunpack.c.l.b16 %v7289
        %v7584 = vunpack.c.l.b16 %v7290
        %v7585 = vunpack.c.l.b16 %v7291
        %v7586 = vunpack.c.l.b16 %v7292
        %v7587 = vunpack.c.l.b16 %v7293
        %v7588 = vunpack.c.l.b16 %v7294
        %v7589 = vunpack.c.l.b16 %v7295
        %v7590 = vunpack.c.l.b16 %v7296
        %v7591 = vunpack.c.l.b16 %v7297
        %v7592 = vunpack.c.l.b16 %v7298
        %v7593 = vunpack.c.l.b16 %v7299
        %v7594 = vunpack.c.l.b16 %v7300
        %v7595 = vunpack.c.l.b16 %v7301
        %v7596 = vunpack.c.l.b16 %v7302
        %v7597 = vunpack.c.l.b16 %v7303
        %v7598 = vpack.c.b16 %v7583, %v7582
        %v7599 = vpack.c.b16 %v7585, %v7584
        %v7600 = vpack.c.b16 %v7587, %v7586
        %v7601 = vpack.c.b16 %v7589, %v7588
        %v7602 = vpack.c.b16 %v7591, %v7590
        %v7603 = vpack.c.b16 %v7593, %v7592
        %v7604 = vpack.c.b16 %v7595, %v7594
        %v7605 = vpack.c.b16 %v7597, %v7596
        %7614 = vmatprep.subr.bf16.mxu0 0
        %7615 = vmatpush1.bf16.msra.mxu0 %v7605
        %7616 = vmatprep.subr.bf16.mxu0 0
        %7617 = vmatpush1.bf16.msra.mxu0 %v7604
        %7618 = vmatprep.subr.bf16.mxu0 0
        %7619 = vmatpush1.bf16.msra.mxu0 %v7603
        %7620 = vmatprep.subr.bf16.mxu0 0
        %7621 = vmatpush1.bf16.msra.mxu0 %v7602
        %7622 = vmatprep.subr.bf16.mxu0 0
        %7623 = vmatpush1.bf16.msra.mxu0 %v7601
        %7624 = vmatprep.subr.bf16.mxu0 0
        %7625 = vmatpush1.bf16.msra.mxu0 %v7600
        %7626 = vmatprep.subr.bf16.mxu0 0
        %7627 = vmatpush1.bf16.msra.mxu0 %v7599
        %7628 = vmatprep.subr.bf16.mxu0 0
        %7629 = vmatpush1.bf16.msra.mxu0 %v7598
        %7630 = vmatprep.subr.bf16.mxu0 0
        %7631 = vmatpush2.bf16.msra.mxu0 0
        %7632 = vmatprep.subr.bf16.mxu0 0
        %7633 = vmatpush2.bf16.msra.mxu0 0
        %7634 = vmatprep.subr.bf16.mxu0 0
        %7635 = vmatpush2.bf16.msra.mxu0 0
        %7636 = vmatprep.subr.bf16.mxu0 0
        %7637 = vmatpush2.bf16.msra.mxu0 0
        %7638 = vmatprep.subr.bf16.mxu0 0
        %7639 = vmatpush2.bf16.msra.mxu0 0
        %7640 = vmatprep.subr.bf16.mxu0 0
        %7641 = vmatpush2.bf16.msra.mxu0 0
        %7642 = vmatprep.subr.bf16.mxu0 0
        %7643 = vmatpush2.bf16.msra.mxu0 0
        %7644 = vmatprep.subr.bf16.mxu0 0
        %7645 = vmatpush2.bf16.msra.mxu0 0
        %7646 = vmatprep.mubr.bf16.mxu0 0
        %7647 = vmatmul.mubr.bf16.gmra.mxu0 %v7558
        %v7648 = vpop.f32.mrf.mxu0
        %v7649 = vadd.f32 %v7309, %v7648
        %v7650 = vpop.f32.mrf.mxu0
        %v7651 = vpop.f32.mrf.mxu0
        %v7652 = vadd.f32 %v7309, %v7651
        %v7653 = vpop.f32.mrf.mxu0
        %7654 = vmatprep.mubr.bf16.mxu0 0
        %7655 = vmatmul.mubr.bf16.gmra.mxu0 %v7559
        %v7656 = vpop.f32.mrf.mxu0
        %v7657 = vadd.f32 %v7309, %v7656
        %v7658 = vpop.f32.mrf.mxu0
        %v7659 = vpop.f32.mrf.mxu0
        %v7660 = vadd.f32 %v7309, %v7659
        %v7661 = vpop.f32.mrf.mxu0
        %7662 = vmatprep.mubr.bf16.mxu0 0
        %7663 = vmatmul.mubr.bf16.gmra.mxu0 %v7560
        %v7664 = vpop.f32.mrf.mxu0
        %v7665 = vadd.f32 %v7309, %v7664
        %v7666 = vpop.f32.mrf.mxu0
        %v7667 = vpop.f32.mrf.mxu0
        %v7668 = vadd.f32 %v7309, %v7667
        %v7669 = vpop.f32.mrf.mxu0
        %7670 = vmatprep.mubr.bf16.mxu0 0
        %7671 = vmatmul.mubr.bf16.gmra.mxu0 %v7561
        %v7672 = vpop.f32.mrf.mxu0
        %v7673 = vadd.f32 %v7309, %v7672
        %v7674 = vpop.f32.mrf.mxu0
        %v7675 = vpop.f32.mrf.mxu0
        %v7676 = vadd.f32 %v7309, %v7675
        %v7677 = vpop.f32.mrf.mxu0
        %7678 = vdwg.mxu0
        %v7679 = vmax.f32 %v7649, 0.0
        %v7680 = vmax.f32 %v7652, 0.0
        %v7681 = vmax.f32 %v7657, 0.0
        %v7682 = vmax.f32 %v7660, 0.0
        %v7683 = vmax.f32 %v7665, 0.0
        %v7684 = vmax.f32 %v7668, 0.0
        %v7685 = vmax.f32 %v7673, 0.0
        %v7686 = vmax.f32 %v7676, 0.0
        %v7687 = vld [vmem:[%s341] sm:$0xff]
        %v7688 = vld [vmem:[%s341 + $0x8] sm:$0xff]
        %v7689 = vld [vmem:[%s341 + $0x10] sm:$0xff]
        %v7690 = vld [vmem:[%s341 + $0x18] sm:$0xff]
        %v7691 = vld [vmem:[%s341 + $0x20] sm:$0xff]
        %v7692 = vld [vmem:[%s341 + $0x28] sm:$0xff]
        %v7693 = vld [vmem:[%s341 + $0x30] sm:$0xff]
        %v7694 = vld [vmem:[%s341 + $0x38] sm:$0xff]
        %7696 = vset.pattern.permute.xlu0 0
        %7697 = vperm.xlu0 %7696, %v7687
        %v7698 = vpop.permute.xlu0 %7697
        %7701 = vset.pattern.permute.xlu0 0
        %7702 = vperm.xlu0 %7701, %v7688
        %v7703 = vpop.permute.xlu0 %7702
        %7706 = vset.pattern.permute.xlu0 0
        %7707 = vperm.xlu0 %7706, %v7689
        %v7708 = vpop.permute.xlu0 %7707
        %7711 = vset.pattern.permute.xlu0 0
        %7712 = vperm.xlu0 %7711, %v7690
        %v7713 = vpop.permute.xlu0 %7712
        %7716 = vset.pattern.permute.xlu0 0
        %7717 = vperm.xlu0 %7716, %v7691
        %v7718 = vpop.permute.xlu0 %7717
        %7721 = vset.pattern.permute.xlu0 0
        %7722 = vperm.xlu0 %7721, %v7692
        %v7723 = vpop.permute.xlu0 %7722
        %7726 = vset.pattern.permute.xlu0 0
        %7727 = vperm.xlu0 %7726, %v7693
        %v7728 = vpop.permute.xlu0 %7727
        %7731 = vset.pattern.permute.xlu0 0
        %7732 = vperm.xlu0 %7731, %v7694
        %v7733 = vpop.permute.xlu0 %7732
        %v7735 = vmul.f32 %v7679, %v7698
        %v7736 = vmul.f32 %v7680, %v7703
        %v7737 = vmul.f32 %v7681, %v7708
        %v7738 = vmul.f32 %v7682, %v7713
        %v7739 = vmul.f32 %v7683, %v7718
        %v7740 = vmul.f32 %v7684, %v7723
        %v7741 = vmul.f32 %v7685, %v7728
        %v7742 = vmul.f32 %v7686, %v7733
        %7743 = vst [vmem:[%s330] sm:$0xff] %v7735
        %7744 = vst [vmem:[%s330 + $0x8] sm:$0xff] %v7736
        %7745 = vst [vmem:[%s330 + $0x10] sm:$0xff] %v7737
        %7746 = vst [vmem:[%s330 + $0x18] sm:$0xff] %v7738
        %7747 = vst [vmem:[%s330 + $0x20] sm:$0xff] %v7739
        %7748 = vst [vmem:[%s330 + $0x28] sm:$0xff] %v7740
        %7749 = vst [vmem:[%s330 + $0x30] sm:$0xff] %v7741
        %7750 = vst [vmem:[%s330 + $0x38] sm:$0xff] %v7742
        %s7751 = sand.u32 %s209, 1
        %s7752 = scalar_lea.sflag [#allocation4], %s7751
        %s7753 = sand.u32 %s209, 1
        %s7754 = smul.addr %s7753, 64
        %s7755 = scalar_lea.vmem [#allocation5], %s7754
        // Predicated region
        $region57: #{tpu_custom_call.1} parent=51 // pred_check
          %p7756 = pneg %p219
        $region58: #{tpu_custom_call.1} parent=51 // pred_check_branch
          %7758 = sbr.rel (%p7756) target = $region60
        $region59: #{tpu_custom_call.1} parent=51 // pred_region
          %s7759 = smul.u32 8, %s23
          %s7761 = ssub.s32 1024, 1024
          %7762 = vsyncadd %s7752, %s7761
          %s7763 = smul.addr %s7759, 128
          %s7764 = scalar_lea.hbm %s8, %s7763
          %s7765 = sshll.u32 %s7755, 4
          %s7766 = int_to_ptr.vmem [resolvable:$true] %s7765
          %7771 = dma.vmem_to_hbm [thread:$0]  %s7766, 1024, %s7764, %s7752, 128, 128, 8
        $region60: #{tpu_custom_call.1} parent=51 // pred_fallthru
          _
      $region52: #{tpu_custom_call.1} parent=5 // pred_fallthru
        _
      %p7772 = scmp.le.s32.totalorder 2, %s18
      // Predicated region
      $region61: #{tpu_custom_call.1} parent=5 // pred_check
        %p7773 = pneg %p7772
      $region62: #{tpu_custom_call.1} parent=5 // pred_check_branch
        %7775 = sbr.rel (%p7773) target = $region64
      $region63: #{tpu_custom_call.1} parent=5 // pred_region
        %s7776 = ssub.s32 %s18, 2
        // Predicated region
        $region65: #{tpu_custom_call.1} parent=63 // pred_check
          %p7777 = pneg %p225
        $region66: #{tpu_custom_call.1} parent=63 // pred_check_branch
          %7779 = sbr.rel (%p7777) target = $region68
        $region67: #{tpu_custom_call.1} parent=63 // pred_region
          %s7780 = sand.u32 %s210, 1
          %s7781 = scalar_lea.sflag [#allocation4], %s7780
          %s7782 = sand.u32 %s210, 1
          %s7783 = smul.addr %s7782, 64
          %s7784 = scalar_lea.vmem [#allocation5], %s7783
          %7785 = dma.done %s7781, 1024
        $region68: #{tpu_custom_call.1} parent=63 // pred_fallthru
          _
      $region64: #{tpu_custom_call.1} parent=5 // pred_fallthru
        _
    $region6: #{tpu_custom_call.1} parent=1 // loop_footer
      %s22 = sadd.s32 1, %s18
    $region7: #{tpu_custom_call.1} parent=1 // loop_footer_branch
      %17 = sbr.rel target = $region3
    $region8: #{tpu_custom_call.1} parent=1 // loop_exit
      _
    %7786 = vsyncpa [#allocation3], 1
    %s7787 = scalar_lea.sflag [#allocation3], 1
    %7788 = vsyncpa %s7787, 1
    %7789 = vsyncpa [#allocation4], 1
    %s7790 = scalar_lea.sflag [#allocation4], 1
    %7791 = vsyncpa %s7790, 1

</llo_original>
